<compile_context>
chip_gen: v6e
topology: v6e:2x2x1
jax: 0.10.0
libtpu: 0.0.40
codegen_flags: <defaults>
</compile_context>

<pallas_src>
from math import sqrt

import jax
import jax.numpy as jnp
from jax.experimental import pallas as pl
from jax.experimental.pallas import tpu as pltpu

NUM_RECURSIONS = 25


def _drrn_kernel(x_ref, w_in_ref, w1_ref, w2_ref, w_out_ref, o_ref,
                 xpad_s, inp_s, outp_s, midp_s, q_s):
    """Whole DRRN forward for one batch element, state resident in VMEM.

    x_ref:     (1, H, W)      single-channel input image (W on the lane axis)
    w_in_ref:  (9, 1, C)      input conv weights, tap-major (ky*3+kx, cin, cout)
    w1_ref:    (3, 3C, C)     conv1, ky-major, (kx, cin) packed on dim 1
    w2_ref:    (3, 3C, C)     conv2, same packing
    w_out_ref: (3, 3C)        output conv (cout=1 squeezed), same packing
    o_ref:     (1, H, W)      output image
    xpad_s:    (H+2, W+2, 1)  zero-padded relu(x)
    inp_s:     (H, W, C)      RAW `inputs` (needed for the residual adds)
    outp_s:    (H+2, W+2, C)  zero-padded relu(out)
    midp_s:    (H+2, W+2, C)  zero-padded relu(conv1 result)
    q_s:       (H+2, W, 3C)   kx-packed activation (three W-shifted views)
    """
    H, W = o_ref.shape[1], o_ref.shape[2]
    C = inp_s.shape[-1]

    def pack_kx(pad_ref):
        # Pack the three W-shifted views of the (already relu'd) padded
        # activation side by side on the lane axis.  Lane offsets 0/C/2C are
        # full 128-lane tiles, so the stores are aligned; only the two
        # kx-shifted *reads* touch a sublane offset, once each per conv.
        q_s[:, :, 0:C] = pad_ref[:, 0:W, :]
        q_s[:, :, C:2 * C] = pad_ref[:, 1:W + 1, :]
        q_s[:, :, 2 * C:3 * C] = pad_ref[:, 2:W + 2, :]

    def conv3x3(pad_ref, w_ref, acc=None):
        # 3x3 conv over an already-relu'd zero-padded ref: 3 MXU matmuls with
        # K = 3*C; each ky tap is an aligned leading-axis slice of q_s.
        pack_kx(pad_ref)
        for ky in range(3):
            d = jax.lax.dot_general(
                q_s[ky:ky + H], w_ref[ky],
                dimension_numbers=(((2,), (0,)), ((), ())),
                preferred_element_type=jnp.float32)
            acc = d if acc is None else acc + d
        return acc

    # ---- halo init (ring only; interiors are fully overwritten every conv) --
    xpad_s[...] = jnp.zeros_like(xpad_s)                       # tiny: C == 1
    zrow = jnp.zeros((1, W + 2, C), jnp.float32)
    zcol = jnp.zeros((H, 1, C), jnp.float32)
    for buf in (outp_s, midp_s):
        buf[0:1, :, :] = zrow
        buf[H + 1:H + 2, :, :] = zrow
        buf[1:H + 1, 0:1, :] = zcol
        buf[1:H + 1, W + 1:W + 2, :] = zcol

    # ---- input conv (Cin = 1 -> VPU broadcast FMAs): inputs = conv_in(relu(x))
    xpad_s[1:H + 1, 1:W + 1, :] = jnp.maximum(x_ref[0], 0.0)[:, :, None]
    inputs = None
    for k in range(9):
        ky, kx = divmod(k, 3)
        t = xpad_s[ky:ky + H, kx:kx + W, :] * w_in_ref[k]      # (H,W,1)*(1,C)
        inputs = t if inputs is None else inputs + t
    inp_s[...] = inputs                                        # RAW, for residual
    outp_s[1:H + 1, 1:W + 1, :] = jnp.maximum(inputs, 0.0)     # ReLU at store time

    # ---- 25 shared-weight recursions: out = conv2(relu(conv1(relu(out)))) + inputs
    @pl.loop(0, NUM_RECURSIONS)
    def _(step):
        mid = conv3x3(outp_s, w1_ref)                          # conv1(relu(out))
        midp_s[1:H + 1, 1:W + 1, :] = jnp.maximum(mid, 0.0)    # ReLU at store time
        out_new = conv3x3(midp_s, w2_ref, inp_s[...])          # + raw inputs, fused
        outp_s[1:H + 1, 1:W + 1, :] = jnp.maximum(out_new, 0.0)

    # ---- output conv (Cout = 1) + global residual ----------------------------
    # Channel reduction lands the result as (H, W) with W on lanes (lane-dense
    # final store); reuse the kx-packed buffer so it is 3 passes, not 9.
    pack_kx(outp_s)                                            # relu(out), packed
    acc2d = None
    for ky in range(3):
        t = jnp.sum(q_s[ky:ky + H] * w_out_ref[ky], axis=-1)   # VPU mul + XLU reduce
        acc2d = t if acc2d is None else acc2d + t
    o_ref[0] = (acc2d + x_ref[0]).astype(o_ref.dtype)


def init_drrn_params(key):
    """weight ~ N(0, sqrt(2/(k*k*Cout))) like the PyTorch init; tap-major (9, Cin, Cout)."""
    def conv_w(k, cin, cout):
        std = sqrt(2.0 / (3 * 3 * cout))
        return std * jax.random.normal(k, (9, cin, cout), dtype=jnp.float32)

    k0, k1, k2, k3 = jax.random.split(key, 4)
    return {
        "input":  conv_w(k0, 1, 128),
        "conv1":  conv_w(k1, 128, 128),
        "conv2":  conv_w(k2, 128, 128),
        "output": conv_w(k3, 128, 1),
    }


def _vmem_limit_bytes(H, W, C):
    f32 = 4
    scratch = ((H + 2) * (W + 2) * (2 * C + 1)      # outp_s, midp_s, xpad_s
               + H * W * C                          # inp_s
               + (H + 2) * W * 3 * C) * f32         # q_s (kx-packed)
    weights = (9 * C + 2 * 3 * 3 * C * C + 3 * 3 * C) * f32
    io = 2 * H * W * f32
    temps = 4 * H * W * C * f32                     # dot results / value accumulators
    need = scratch + 2 * (weights + io) + temps + (4 << 20)   # headroom
    # >= 32 MiB keeps margin over the estimate; <= 56 MiB stays inside v7x's
    # 64 MiB physical VMEM (v5e/v6e have 128 MiB physical).
    return int(min(max(need, 32 << 20), 56 << 20))


@jax.jit
def drrn_forward(x_nchw, params):
    """DRRN forward, NCHW in / NCHW out (matches the PyTorch module)."""
    N, _, H, W = x_nchw.shape
    C = params["conv1"].shape[1]
    x = x_nchw[:, 0, :, :]                          # (N, H, W): drop the size-1 channel
    # kx-pack the 128->128 weights: (9, C, C) -> (3, 3C, C) with dim 1 ordered
    # [kx=0 channels | kx=1 channels | kx=2 channels] to match the kernel's q_s.
    w1 = params["conv1"].reshape(3, 3 * C, C)
    w2 = params["conv2"].reshape(3, 3 * C, C)
    w_out = params["output"][:, :, 0].reshape(3, 3 * C)

    out = pl.pallas_call(
        _drrn_kernel,
        out_shape=jax.ShapeDtypeStruct((N, H, W), x_nchw.dtype),
        grid=(N,),
        in_specs=[
            pl.BlockSpec((1, H, W), lambda n: (n, 0, 0)),
            pl.BlockSpec((9, 1, C), lambda n: (0, 0, 0)),
            pl.BlockSpec((3, 3 * C, C), lambda n: (0, 0, 0)),
            pl.BlockSpec((3, 3 * C, C), lambda n: (0, 0, 0)),
            pl.BlockSpec((3, 3 * C), lambda n: (0, 0)),
        ],
        out_specs=pl.BlockSpec((1, H, W), lambda n: (n, 0, 0)),
        scratch_shapes=[
            pltpu.VMEM((H + 2, W + 2, 1), jnp.float32),   # padded relu(x)
            pltpu.VMEM((H, W, C), jnp.float32),           # raw inputs (residual)
            pltpu.VMEM((H + 2, W + 2, C), jnp.float32),   # padded relu(out)
            pltpu.VMEM((H + 2, W + 2, C), jnp.float32),   # padded relu(conv1 result)
            pltpu.VMEM((H + 2, W, 3 * C), jnp.float32),   # kx-packed activation
        ],
        compiler_params=pltpu.CompilerParams(
            dimension_semantics=("parallel",),
            vmem_limit_bytes=_vmem_limit_bytes(H, W, C)),
    )(x, params["input"], w1, w2, w_out)
    return out[:, None, :, :]                       # -> NCHW (N, 1, H, W)


def _reference_forward(x_nchw, params):
    """Pure-JAX reference (lax.conv) for correctness checking."""
    def conv(x_nhwc, w9):
        cin, cout = w9.shape[1], w9.shape[2]
        w = w9.reshape(3, 3, cin, cout)              # HWIO
        return jax.lax.conv_general_dilated(
            jnp.maximum(x_nhwc, 0.0), w, window_strides=(1, 1), padding="SAME",
            dimension_numbers=("NHWC", "HWIO", "NHWC"))

    x = jnp.transpose(x_nchw, (0, 2, 3, 1))
    residual = x
    inputs = conv(x, params["input"])
    out = inputs
    for _ in range(NUM_RECURSIONS):
        out = conv(conv(out, params["conv1"]), params["conv2"]) + inputs
    out = conv(out, params["output"]) + residual
    return jnp.transpose(out, (0, 3, 1, 2))


if __name__ == "__main__":
    key = jax.random.PRNGKey(0)
    kx_, kp = jax.random.split(key)
    x = jax.random.normal(kx_, (2, 1, 16, 16), dtype=jnp.float32)   # NCHW like PyTorch
    params = init_drrn_params(kp)

    out = jax.block_until_ready(drrn_forward(x, params))
    assert out.shape == (2, 1, 16, 16) and out.dtype == jnp.float32

    ref = jax.block_until_ready(_reference_forward(x, params))
    assert jnp.allclose(out, ref, rtol=2e-3, atol=2e-3), "mismatch vs JAX reference"

    print("KERNEL_OK")
</pallas_src>

<mosaic_0001>
module attributes {stable_mosaic.version = 11 : i64} {
  func.func @_drrn_kernel(%arg0: i32, %arg1: memref<1x16x16xf32, #tpu.memory_space<vmem>>, %arg2: memref<9x1x128xf32, #tpu.memory_space<vmem>>, %arg3: memref<3x384x128xf32, #tpu.memory_space<vmem>>, %arg4: memref<3x384x128xf32, #tpu.memory_space<vmem>>, %arg5: memref<3x384xf32, #tpu.memory_space<vmem>>, %arg6: memref<1x16x16xf32, #tpu.memory_space<vmem>>, %arg7: memref<18x18x1xf32, #tpu.memory_space<vmem>>, %arg8: memref<16x16x128xf32, #tpu.memory_space<vmem>>, %arg9: memref<18x18x128xf32, #tpu.memory_space<vmem>>, %arg10: memref<18x18x128xf32, #tpu.memory_space<vmem>>, %arg11: memref<18x16x384xf32, #tpu.memory_space<vmem>>) attributes {dimension_semantics = [#tpu.dimension_semantics<parallel>], iteration_bounds = array<i64: 2>, scalar_prefetch = 0 : i64, scratch_operands = 5 : i64, tpu.core_type = #tpu.core_type<tc>, window_params = [{transform_indices = @transform_0, window_bounds = array<i64: 1, 16, 16>}, {pipeline_mode = #tpu.pipeline_mode<synchronous>, transform_indices = @transform_1, window_bounds = array<i64: 9, 1, 128>}, {pipeline_mode = #tpu.pipeline_mode<synchronous>, transform_indices = @transform_2, window_bounds = array<i64: 3, 384, 128>}, {pipeline_mode = #tpu.pipeline_mode<synchronous>, transform_indices = @transform_3, window_bounds = array<i64: 3, 384, 128>}, {pipeline_mode = #tpu.pipeline_mode<synchronous>, transform_indices = @transform_4, window_bounds = array<i64: 3, 384>}, {transform_indices = @transform_5, window_bounds = array<i64: 1, 16, 16>}]} {
    %cst = arith.constant 0.000000e+00 : f32
    %0 = vector.broadcast %cst : f32 to vector<18x18x1xf32>
    %c0 = arith.constant 0 : index
    %c0_0 = arith.constant 0 : index
    %c0_1 = arith.constant 0 : index
    %1 = vector.load %arg7[%c0, %c0_0, %c0_1] : memref<18x18x1xf32, #tpu.memory_space<vmem>>, vector<18x18x1xf32>
    tpu.vector_store %arg7[%c0, %c0_0, %c0_1], %0 {strides = array<i32>} : memref<18x18x1xf32, #tpu.memory_space<vmem>>, vector<18x18x1xf32>,
    %cst_2 = arith.constant 0.000000e+00 : f32
    %2 = vector.broadcast %cst_2 : f32 to vector<1x18x128xf32>
    %cst_3 = arith.constant 0.000000e+00 : f32
    %3 = vector.broadcast %cst_3 : f32 to vector<16x1x128xf32>
    %c0_4 = arith.constant 0 : index
    %c0_5 = arith.constant 0 : index
    %c0_6 = arith.constant 0 : index
    %4 = vector.load %arg9[%c0_4, %c0_5, %c0_6] : memref<18x18x128xf32, #tpu.memory_space<vmem>>, vector<1x18x128xf32>
    tpu.vector_store %arg9[%c0_4, %c0_5, %c0_6], %2 {strides = array<i32>} : memref<18x18x128xf32, #tpu.memory_space<vmem>>, vector<1x18x128xf32>,
    %c17 = arith.constant 17 : index
    %c0_7 = arith.constant 0 : index
    %c0_8 = arith.constant 0 : index
    %5 = vector.load %arg9[%c17, %c0_7, %c0_8] : memref<18x18x128xf32, #tpu.memory_space<vmem>>, vector<1x18x128xf32>
    tpu.vector_store %arg9[%c17, %c0_7, %c0_8], %2 {strides = array<i32>} : memref<18x18x128xf32, #tpu.memory_space<vmem>>, vector<1x18x128xf32>,
    %c1 = arith.constant 1 : index
    %c0_9 = arith.constant 0 : index
    %c0_10 = arith.constant 0 : index
    %6 = vector.load %arg9[%c1, %c0_9, %c0_10] : memref<18x18x128xf32, #tpu.memory_space<vmem>>, vector<16x1x128xf32>
    tpu.vector_store %arg9[%c1, %c0_9, %c0_10], %3 {strides = array<i32>} : memref<18x18x128xf32, #tpu.memory_space<vmem>>, vector<16x1x128xf32>,
    %c1_11 = arith.constant 1 : index
    %c17_12 = arith.constant 17 : index
    %c0_13 = arith.constant 0 : index
    %7 = vector.load %arg9[%c1_11, %c17_12, %c0_13] : memref<18x18x128xf32, #tpu.memory_space<vmem>>, vector<16x1x128xf32>
    tpu.vector_store %arg9[%c1_11, %c17_12, %c0_13], %3 {strides = array<i32>} : memref<18x18x128xf32, #tpu.memory_space<vmem>>, vector<16x1x128xf32>,
    %c0_14 = arith.constant 0 : index
    %c0_15 = arith.constant 0 : index
    %c0_16 = arith.constant 0 : index
    %8 = vector.load %arg10[%c0_14, %c0_15, %c0_16] : memref<18x18x128xf32, #tpu.memory_space<vmem>>, vector<1x18x128xf32>
    tpu.vector_store %arg10[%c0_14, %c0_15, %c0_16], %2 {strides = array<i32>} : memref<18x18x128xf32, #tpu.memory_space<vmem>>, vector<1x18x128xf32>,
    %c17_17 = arith.constant 17 : index
    %c0_18 = arith.constant 0 : index
    %c0_19 = arith.constant 0 : index
    %9 = vector.load %arg10[%c17_17, %c0_18, %c0_19] : memref<18x18x128xf32, #tpu.memory_space<vmem>>, vector<1x18x128xf32>
    tpu.vector_store %arg10[%c17_17, %c0_18, %c0_19], %2 {strides = array<i32>} : memref<18x18x128xf32, #tpu.memory_space<vmem>>, vector<1x18x128xf32>,
    %c1_20 = arith.constant 1 : index
    %c0_21 = arith.constant 0 : index
    %c0_22 = arith.constant 0 : index
    %10 = vector.load %arg10[%c1_20, %c0_21, %c0_22] : memref<18x18x128xf32, #tpu.memory_space<vmem>>, vector<16x1x128xf32>
    tpu.vector_store %arg10[%c1_20, %c0_21, %c0_22], %3 {strides = array<i32>} : memref<18x18x128xf32, #tpu.memory_space<vmem>>, vector<16x1x128xf32>,
    %c1_23 = arith.constant 1 : index
    %c17_24 = arith.constant 17 : index
    %c0_25 = arith.constant 0 : index
    %11 = vector.load %arg10[%c1_23, %c17_24, %c0_25] : memref<18x18x128xf32, #tpu.memory_space<vmem>>, vector<16x1x128xf32>
    tpu.vector_store %arg10[%c1_23, %c17_24, %c0_25], %3 {strides = array<i32>} : memref<18x18x128xf32, #tpu.memory_space<vmem>>, vector<16x1x128xf32>,
    %c0_26 = arith.constant 0 : index
    %c0_27 = arith.constant 0 : index
    %c0_28 = arith.constant 0 : index
    %12 = vector.load %arg1[%c0_26, %c0_27, %c0_28] : memref<1x16x16xf32, #tpu.memory_space<vmem>>, vector<1x16x16xf32>
    %13 = vector.shape_cast %12 : vector<1x16x16xf32> to vector<16x16xf32>
    %cst_29 = arith.constant 0.000000e+00 : f32
    %14 = vector.broadcast %cst_29 : f32 to vector<16x16xf32>
    %15 = arith.maximumf %13, %14 : vector<16x16xf32>
    %16 = vector.shape_cast %15 : vector<16x16xf32> to vector<16x16x1xf32>
    %c1_30 = arith.constant 1 : index
    %c1_31 = arith.constant 1 : index
    %c0_32 = arith.constant 0 : index
    %17 = vector.load %arg7[%c1_30, %c1_31, %c0_32] : memref<18x18x1xf32, #tpu.memory_space<vmem>>, vector<16x16x1xf32>
    tpu.vector_store %arg7[%c1_30, %c1_31, %c0_32], %16 {strides = array<i32>} : memref<18x18x1xf32, #tpu.memory_space<vmem>>, vector<16x16x1xf32>,
    %c0_33 = arith.constant 0 : index
    %c0_34 = arith.constant 0 : index
    %c0_35 = arith.constant 0 : index
    %18 = vector.load %arg7[%c0_33, %c0_34, %c0_35] : memref<18x18x1xf32, #tpu.memory_space<vmem>>, vector<16x16x1xf32>
    %c0_36 = arith.constant 0 : index
    %c0_37 = arith.constant 0 : index
    %c0_38 = arith.constant 0 : index
    %19 = vector.load %arg2[%c0_36, %c0_37, %c0_38] : memref<9x1x128xf32, #tpu.memory_space<vmem>>, vector<1x1x128xf32>
    %20 = vector.shape_cast %19 : vector<1x1x128xf32> to vector<1x128xf32>
    %21 = vector.shape_cast %20 : vector<1x128xf32> to vector<1x1x128xf32>
    %22 = vector.broadcast %18 : vector<16x16x1xf32> to vector<16x16x128xf32>
    %23 = vector.broadcast %21 : vector<1x1x128xf32> to vector<16x16x128xf32>
    %24 = arith.mulf %22, %23 : vector<16x16x128xf32>
    %c0_39 = arith.constant 0 : index
    %c1_40 = arith.constant 1 : index
    %c0_41 = arith.constant 0 : index
    %25 = vector.load %arg7[%c0_39, %c1_40, %c0_41] : memref<18x18x1xf32, #tpu.memory_space<vmem>>, vector<16x16x1xf32>
    %c1_42 = arith.constant 1 : index
    %c0_43 = arith.constant 0 : index
    %c0_44 = arith.constant 0 : index
    %26 = vector.load %arg2[%c1_42, %c0_43, %c0_44] : memref<9x1x128xf32, #tpu.memory_space<vmem>>, vector<1x1x128xf32>
    %27 = vector.shape_cast %26 : vector<1x1x128xf32> to vector<1x128xf32>
    %28 = vector.shape_cast %27 : vector<1x128xf32> to vector<1x1x128xf32>
    %29 = vector.broadcast %25 : vector<16x16x1xf32> to vector<16x16x128xf32>
    %30 = vector.broadcast %28 : vector<1x1x128xf32> to vector<16x16x128xf32>
    %31 = arith.mulf %29, %30 : vector<16x16x128xf32>
    %32 = arith.addf %24, %31 : vector<16x16x128xf32>
    %c0_45 = arith.constant 0 : index
    %c2 = arith.constant 2 : index
    %c0_46 = arith.constant 0 : index
    %33 = vector.load %arg7[%c0_45, %c2, %c0_46] : memref<18x18x1xf32, #tpu.memory_space<vmem>>, vector<16x16x1xf32>
    %c2_47 = arith.constant 2 : index
    %c0_48 = arith.constant 0 : index
    %c0_49 = arith.constant 0 : index
    %34 = vector.load %arg2[%c2_47, %c0_48, %c0_49] : memref<9x1x128xf32, #tpu.memory_space<vmem>>, vector<1x1x128xf32>
    %35 = vector.shape_cast %34 : vector<1x1x128xf32> to vector<1x128xf32>
    %36 = vector.shape_cast %35 : vector<1x128xf32> to vector<1x1x128xf32>
    %37 = vector.broadcast %33 : vector<16x16x1xf32> to vector<16x16x128xf32>
    %38 = vector.broadcast %36 : vector<1x1x128xf32> to vector<16x16x128xf32>
    %39 = arith.mulf %37, %38 : vector<16x16x128xf32>
    %40 = arith.addf %32, %39 : vector<16x16x128xf32>
    %c1_50 = arith.constant 1 : index
    %c0_51 = arith.constant 0 : index
    %c0_52 = arith.constant 0 : index
    %41 = vector.load %arg7[%c1_50, %c0_51, %c0_52] : memref<18x18x1xf32, #tpu.memory_space<vmem>>, vector<16x16x1xf32>
    %c3 = arith.constant 3 : index
    %c0_53 = arith.constant 0 : index
    %c0_54 = arith.constant 0 : index
    %42 = vector.load %arg2[%c3, %c0_53, %c0_54] : memref<9x1x128xf32, #tpu.memory_space<vmem>>, vector<1x1x128xf32>
    %43 = vector.shape_cast %42 : vector<1x1x128xf32> to vector<1x128xf32>
    %44 = vector.shape_cast %43 : vector<1x128xf32> to vector<1x1x128xf32>
    %45 = vector.broadcast %41 : vector<16x16x1xf32> to vector<16x16x128xf32>
    %46 = vector.broadcast %44 : vector<1x1x128xf32> to vector<16x16x128xf32>
    %47 = arith.mulf %45, %46 : vector<16x16x128xf32>
    %48 = arith.addf %40, %47 : vector<16x16x128xf32>
    %c1_55 = arith.constant 1 : index
    %c1_56 = arith.constant 1 : index
    %c0_57 = arith.constant 0 : index
    %49 = vector.load %arg7[%c1_55, %c1_56, %c0_57] : memref<18x18x1xf32, #tpu.memory_space<vmem>>, vector<16x16x1xf32>
    %c4 = arith.constant 4 : index
    %c0_58 = arith.constant 0 : index
    %c0_59 = arith.constant 0 : index
    %50 = vector.load %arg2[%c4, %c0_58, %c0_59] : memref<9x1x128xf32, #tpu.memory_space<vmem>>, vector<1x1x128xf32>
    %51 = vector.shape_cast %50 : vector<1x1x128xf32> to vector<1x128xf32>
    %52 = vector.shape_cast %51 : vector<1x128xf32> to vector<1x1x128xf32>
    %53 = vector.broadcast %49 : vector<16x16x1xf32> to vector<16x16x128xf32>
    %54 = vector.broadcast %52 : vector<1x1x128xf32> to vector<16x16x128xf32>
    %55 = arith.mulf %53, %54 : vector<16x16x128xf32>
    %56 = arith.addf %48, %55 : vector<16x16x128xf32>
    %c1_60 = arith.constant 1 : index
    %c2_61 = arith.constant 2 : index
    %c0_62 = arith.constant 0 : index
    %57 = vector.load %arg7[%c1_60, %c2_61, %c0_62] : memref<18x18x1xf32, #tpu.memory_space<vmem>>, vector<16x16x1xf32>
    %c5 = arith.constant 5 : index
    %c0_63 = arith.constant 0 : index
    %c0_64 = arith.constant 0 : index
    %58 = vector.load %arg2[%c5, %c0_63, %c0_64] : memref<9x1x128xf32, #tpu.memory_space<vmem>>, vector<1x1x128xf32>
    %59 = vector.shape_cast %58 : vector<1x1x128xf32> to vector<1x128xf32>
    %60 = vector.shape_cast %59 : vector<1x128xf32> to vector<1x1x128xf32>
    %61 = vector.broadcast %57 : vector<16x16x1xf32> to vector<16x16x128xf32>
    %62 = vector.broadcast %60 : vector<1x1x128xf32> to vector<16x16x128xf32>
    %63 = arith.mulf %61, %62 : vector<16x16x128xf32>
    %64 = arith.addf %56, %63 : vector<16x16x128xf32>
    %c2_65 = arith.constant 2 : index
    %c0_66 = arith.constant 0 : index
    %c0_67 = arith.constant 0 : index
    %65 = vector.load %arg7[%c2_65, %c0_66, %c0_67] : memref<18x18x1xf32, #tpu.memory_space<vmem>>, vector<16x16x1xf32>
    %c6 = arith.constant 6 : index
    %c0_68 = arith.constant 0 : index
    %c0_69 = arith.constant 0 : index
    %66 = vector.load %arg2[%c6, %c0_68, %c0_69] : memref<9x1x128xf32, #tpu.memory_space<vmem>>, vector<1x1x128xf32>
    %67 = vector.shape_cast %66 : vector<1x1x128xf32> to vector<1x128xf32>
    %68 = vector.shape_cast %67 : vector<1x128xf32> to vector<1x1x128xf32>
    %69 = vector.broadcast %65 : vector<16x16x1xf32> to vector<16x16x128xf32>
    %70 = vector.broadcast %68 : vector<1x1x128xf32> to vector<16x16x128xf32>
    %71 = arith.mulf %69, %70 : vector<16x16x128xf32>
    %72 = arith.addf %64, %71 : vector<16x16x128xf32>
    %c2_70 = arith.constant 2 : index
    %c1_71 = arith.constant 1 : index
    %c0_72 = arith.constant 0 : index
    %73 = vector.load %arg7[%c2_70, %c1_71, %c0_72] : memref<18x18x1xf32, #tpu.memory_space<vmem>>, vector<16x16x1xf32>
    %c7 = arith.constant 7 : index
    %c0_73 = arith.constant 0 : index
    %c0_74 = arith.constant 0 : index
    %74 = vector.load %arg2[%c7, %c0_73, %c0_74] : memref<9x1x128xf32, #tpu.memory_space<vmem>>, vector<1x1x128xf32>
    %75 = vector.shape_cast %74 : vector<1x1x128xf32> to vector<1x128xf32>
    %76 = vector.shape_cast %75 : vector<1x128xf32> to vector<1x1x128xf32>
    %77 = vector.broadcast %73 : vector<16x16x1xf32> to vector<16x16x128xf32>
    %78 = vector.broadcast %76 : vector<1x1x128xf32> to vector<16x16x128xf32>
    %79 = arith.mulf %77, %78 : vector<16x16x128xf32>
    %80 = arith.addf %72, %79 : vector<16x16x128xf32>
    %c2_75 = arith.constant 2 : index
    %c2_76 = arith.constant 2 : index
    %c0_77 = arith.constant 0 : index
    %81 = vector.load %arg7[%c2_75, %c2_76, %c0_77] : memref<18x18x1xf32, #tpu.memory_space<vmem>>, vector<16x16x1xf32>
    %c8 = arith.constant 8 : index
    %c0_78 = arith.constant 0 : index
    %c0_79 = arith.constant 0 : index
    %82 = vector.load %arg2[%c8, %c0_78, %c0_79] : memref<9x1x128xf32, #tpu.memory_space<vmem>>, vector<1x1x128xf32>
    %83 = vector.shape_cast %82 : vector<1x1x128xf32> to vector<1x128xf32>
    %84 = vector.shape_cast %83 : vector<1x128xf32> to vector<1x1x128xf32>
    %85 = vector.broadcast %81 : vector<16x16x1xf32> to vector<16x16x128xf32>
    %86 = vector.broadcast %84 : vector<1x1x128xf32> to vector<16x16x128xf32>
    %87 = arith.mulf %85, %86 : vector<16x16x128xf32>
    %88 = arith.addf %80, %87 : vector<16x16x128xf32>
    %c0_80 = arith.constant 0 : index
    %c0_81 = arith.constant 0 : index
    %c0_82 = arith.constant 0 : index
    %89 = vector.load %arg8[%c0_80, %c0_81, %c0_82] : memref<16x16x128xf32, #tpu.memory_space<vmem>>, vector<16x16x128xf32>
    tpu.vector_store %arg8[%c0_80, %c0_81, %c0_82], %88 {strides = array<i32>} : memref<16x16x128xf32, #tpu.memory_space<vmem>>, vector<16x16x128xf32>,
    %cst_83 = arith.constant 0.000000e+00 : f32
    %90 = vector.broadcast %cst_83 : f32 to vector<16x16x128xf32>
    %91 = arith.maximumf %88, %90 : vector<16x16x128xf32>
    %c1_84 = arith.constant 1 : index
    %c1_85 = arith.constant 1 : index
    %c0_86 = arith.constant 0 : index
    %92 = vector.load %arg9[%c1_84, %c1_85, %c0_86] : memref<18x18x128xf32, #tpu.memory_space<vmem>>, vector<16x16x128xf32>
    tpu.vector_store %arg9[%c1_84, %c1_85, %c0_86], %91 {strides = array<i32>} : memref<18x18x128xf32, #tpu.memory_space<vmem>>, vector<16x16x128xf32>,
    %c0_i32 = arith.constant 0 : i32
    %c25_i32 = arith.constant 25 : i32
    %93 = arith.addi %c0_i32, %c25_i32 : i32
    %c1_i32 = arith.constant 1 : i32
    scf.for %arg12 = %c0_i32 to %93 step %c1_i32  : i32 {
      %c0_127 = arith.constant 0 : index
      %c0_128 = arith.constant 0 : index
      %c0_129 = arith.constant 0 : index
      %129 = vector.load %arg9[%c0_127, %c0_128, %c0_129] : memref<18x18x128xf32, #tpu.memory_space<vmem>>, vector<18x16x128xf32>
      %c0_130 = arith.constant 0 : index
      %c0_131 = arith.constant 0 : index
      %c0_132 = arith.constant 0 : index
      %130 = vector.load %arg11[%c0_130, %c0_131, %c0_132] : memref<18x16x384xf32, #tpu.memory_space<vmem>>, vector<18x16x128xf32>
      tpu.vector_store %arg11[%c0_130, %c0_131, %c0_132], %129 {strides = array<i32>} : memref<18x16x384xf32, #tpu.memory_space<vmem>>, vector<18x16x128xf32>,
      %c0_133 = arith.constant 0 : index
      %c1_134 = arith.constant 1 : index
      %c0_135 = arith.constant 0 : index
      %131 = vector.load %arg9[%c0_133, %c1_134, %c0_135] : memref<18x18x128xf32, #tpu.memory_space<vmem>>, vector<18x16x128xf32>
      %c0_136 = arith.constant 0 : index
      %c0_137 = arith.constant 0 : index
      %c128_138 = arith.constant 128 : index
      %132 = vector.load %arg11[%c0_136, %c0_137, %c128_138] : memref<18x16x384xf32, #tpu.memory_space<vmem>>, vector<18x16x128xf32>
      tpu.vector_store %arg11[%c0_136, %c0_137, %c128_138], %131 {strides = array<i32>} : memref<18x16x384xf32, #tpu.memory_space<vmem>>, vector<18x16x128xf32>,
      %c0_139 = arith.constant 0 : index
      %c2_140 = arith.constant 2 : index
      %c0_141 = arith.constant 0 : index
      %133 = vector.load %arg9[%c0_139, %c2_140, %c0_141] : memref<18x18x128xf32, #tpu.memory_space<vmem>>, vector<18x16x128xf32>
      %c0_142 = arith.constant 0 : index
      %c0_143 = arith.constant 0 : index
      %c256_144 = arith.constant 256 : index
      %134 = vector.load %arg11[%c0_142, %c0_143, %c256_144] : memref<18x16x384xf32, #tpu.memory_space<vmem>>, vector<18x16x128xf32>
      tpu.vector_store %arg11[%c0_142, %c0_143, %c256_144], %133 {strides = array<i32>} : memref<18x16x384xf32, #tpu.memory_space<vmem>>, vector<18x16x128xf32>,
      %c0_145 = arith.constant 0 : index
      %c0_146 = arith.constant 0 : index
      %c0_147 = arith.constant 0 : index
      %135 = vector.load %arg11[%c0_145, %c0_146, %c0_147] : memref<18x16x384xf32, #tpu.memory_space<vmem>>, vector<16x16x384xf32>
      %c0_148 = arith.constant 0 : index
      %c0_149 = arith.constant 0 : index
      %c0_150 = arith.constant 0 : index
      %136 = vector.load %arg3[%c0_148, %c0_149, %c0_150] : memref<3x384x128xf32, #tpu.memory_space<vmem>>, vector<1x384x128xf32>
      %137 = vector.shape_cast %136 : vector<1x384x128xf32> to vector<384x128xf32>
      %cst_151 = arith.constant dense<0.000000e+00> : vector<16x16x128xf32>
      %138 = tpu.matmul %135, %137, %cst_151 {dimension_numbers = #tpu.dot_dimension_numbers<[2], [0], [0, 1], [1], [0, 0, 0, 1, 1, 1], [], []>} : vector<16x16x384xf32>, vector<384x128xf32>, vector<16x16x128xf32> -> vector<16x16x128xf32>
      %c1_152 = arith.constant 1 : index
      %c0_153 = arith.constant 0 : index
      %c0_154 = arith.constant 0 : index
      %139 = vector.load %arg11[%c1_152, %c0_153, %c0_154] : memref<18x16x384xf32, #tpu.memory_space<vmem>>, vector<16x16x384xf32>
      %c1_155 = arith.constant 1 : index
      %c0_156 = arith.constant 0 : index
      %c0_157 = arith.constant 0 : index
      %140 = vector.load %arg3[%c1_155, %c0_156, %c0_157] : memref<3x384x128xf32, #tpu.memory_space<vmem>>, vector<1x384x128xf32>
      %141 = vector.shape_cast %140 : vector<1x384x128xf32> to vector<384x128xf32>
      %cst_158 = arith.constant dense<0.000000e+00> : vector<16x16x128xf32>
      %142 = tpu.matmul %139, %141, %cst_158 {dimension_numbers = #tpu.dot_dimension_numbers<[2], [0], [0, 1], [1], [0, 0, 0, 1, 1, 1], [], []>} : vector<16x16x384xf32>, vector<384x128xf32>, vector<16x16x128xf32> -> vector<16x16x128xf32>
      %143 = arith.addf %138, %142 : vector<16x16x128xf32>
      %c2_159 = arith.constant 2 : index
      %c0_160 = arith.constant 0 : index
      %c0_161 = arith.constant 0 : index
      %144 = vector.load %arg11[%c2_159, %c0_160, %c0_161] : memref<18x16x384xf32, #tpu.memory_space<vmem>>, vector<16x16x384xf32>
      %c2_162 = arith.constant 2 : index
      %c0_163 = arith.constant 0 : index
      %c0_164 = arith.constant 0 : index
      %145 = vector.load %arg3[%c2_162, %c0_163, %c0_164] : memref<3x384x128xf32, #tpu.memory_space<vmem>>, vector<1x384x128xf32>
      %146 = vector.shape_cast %145 : vector<1x384x128xf32> to vector<384x128xf32>
      %cst_165 = arith.constant dense<0.000000e+00> : vector<16x16x128xf32>
      %147 = tpu.matmul %144, %146, %cst_165 {dimension_numbers = #tpu.dot_dimension_numbers<[2], [0], [0, 1], [1], [0, 0, 0, 1, 1, 1], [], []>} : vector<16x16x384xf32>, vector<384x128xf32>, vector<16x16x128xf32> -> vector<16x16x128xf32>
      %148 = arith.addf %143, %147 : vector<16x16x128xf32>
      %cst_166 = arith.constant 0.000000e+00 : f32
      %149 = vector.broadcast %cst_166 : f32 to vector<16x16x128xf32>
      %150 = arith.maximumf %148, %149 : vector<16x16x128xf32>
      %c1_167 = arith.constant 1 : index
      %c1_168 = arith.constant 1 : index
      %c0_169 = arith.constant 0 : index
      %151 = vector.load %arg10[%c1_167, %c1_168, %c0_169] : memref<18x18x128xf32, #tpu.memory_space<vmem>>, vector<16x16x128xf32>
      tpu.vector_store %arg10[%c1_167, %c1_168, %c0_169], %150 {strides = array<i32>} : memref<18x18x128xf32, #tpu.memory_space<vmem>>, vector<16x16x128xf32>,
      %c0_170 = arith.constant 0 : index
      %c0_171 = arith.constant 0 : index
      %c0_172 = arith.constant 0 : index
      %152 = vector.load %arg8[%c0_170, %c0_171, %c0_172] : memref<16x16x128xf32, #tpu.memory_space<vmem>>, vector<16x16x128xf32>
      %c0_173 = arith.constant 0 : index
      %c0_174 = arith.constant 0 : index
      %c0_175 = arith.constant 0 : index
      %153 = vector.load %arg10[%c0_173, %c0_174, %c0_175] : memref<18x18x128xf32, #tpu.memory_space<vmem>>, vector<18x16x128xf32>
      %c0_176 = arith.constant 0 : index
      %c0_177 = arith.constant 0 : index
      %c0_178 = arith.constant 0 : index
      %154 = vector.load %arg11[%c0_176, %c0_177, %c0_178] : memref<18x16x384xf32, #tpu.memory_space<vmem>>, vector<18x16x128xf32>
      tpu.vector_store %arg11[%c0_176, %c0_177, %c0_178], %153 {strides = array<i32>} : memref<18x16x384xf32, #tpu.memory_space<vmem>>, vector<18x16x128xf32>,
      %c0_179 = arith.constant 0 : index
      %c1_180 = arith.constant 1 : index
      %c0_181 = arith.constant 0 : index
      %155 = vector.load %arg10[%c0_179, %c1_180, %c0_181] : memref<18x18x128xf32, #tpu.memory_space<vmem>>, vector<18x16x128xf32>
      %c0_182 = arith.constant 0 : index
      %c0_183 = arith.constant 0 : index
      %c128_184 = arith.constant 128 : index
      %156 = vector.load %arg11[%c0_182, %c0_183, %c128_184] : memref<18x16x384xf32, #tpu.memory_space<vmem>>, vector<18x16x128xf32>
      tpu.vector_store %arg11[%c0_182, %c0_183, %c128_184], %155 {strides = array<i32>} : memref<18x16x384xf32, #tpu.memory_space<vmem>>, vector<18x16x128xf32>,
      %c0_185 = arith.constant 0 : index
      %c2_186 = arith.constant 2 : index
      %c0_187 = arith.constant 0 : index
      %157 = vector.load %arg10[%c0_185, %c2_186, %c0_187] : memref<18x18x128xf32, #tpu.memory_space<vmem>>, vector<18x16x128xf32>
      %c0_188 = arith.constant 0 : index
      %c0_189 = arith.constant 0 : index
      %c256_190 = arith.constant 256 : index
      %158 = vector.load %arg11[%c0_188, %c0_189, %c256_190] : memref<18x16x384xf32, #tpu.memory_space<vmem>>, vector<18x16x128xf32>
      tpu.vector_store %arg11[%c0_188, %c0_189, %c256_190], %157 {strides = array<i32>} : memref<18x16x384xf32, #tpu.memory_space<vmem>>, vector<18x16x128xf32>,
      %c0_191 = arith.constant 0 : index
      %c0_192 = arith.constant 0 : index
      %c0_193 = arith.constant 0 : index
      %159 = vector.load %arg11[%c0_191, %c0_192, %c0_193] : memref<18x16x384xf32, #tpu.memory_space<vmem>>, vector<16x16x384xf32>
      %c0_194 = arith.constant 0 : index
      %c0_195 = arith.constant 0 : index
      %c0_196 = arith.constant 0 : index
      %160 = vector.load %arg4[%c0_194, %c0_195, %c0_196] : memref<3x384x128xf32, #tpu.memory_space<vmem>>, vector<1x384x128xf32>
      %161 = vector.shape_cast %160 : vector<1x384x128xf32> to vector<384x128xf32>
      %cst_197 = arith.constant dense<0.000000e+00> : vector<16x16x128xf32>
      %162 = tpu.matmul %159, %161, %cst_197 {dimension_numbers = #tpu.dot_dimension_numbers<[2], [0], [0, 1], [1], [0, 0, 0, 1, 1, 1], [], []>} : vector<16x16x384xf32>, vector<384x128xf32>, vector<16x16x128xf32> -> vector<16x16x128xf32>
      %163 = arith.addf %152, %162 : vector<16x16x128xf32>
      %c1_198 = arith.constant 1 : index
      %c0_199 = arith.constant 0 : index
      %c0_200 = arith.constant 0 : index
      %164 = vector.load %arg11[%c1_198, %c0_199, %c0_200] : memref<18x16x384xf32, #tpu.memory_space<vmem>>, vector<16x16x384xf32>
      %c1_201 = arith.constant 1 : index
      %c0_202 = arith.constant 0 : index
      %c0_203 = arith.constant 0 : index
      %165 = vector.load %arg4[%c1_201, %c0_202, %c0_203] : memref<3x384x128xf32, #tpu.memory_space<vmem>>, vector<1x384x128xf32>
      %166 = vector.shape_cast %165 : vector<1x384x128xf32> to vector<384x128xf32>
      %cst_204 = arith.constant dense<0.000000e+00> : vector<16x16x128xf32>
      %167 = tpu.matmul %164, %166, %cst_204 {dimension_numbers = #tpu.dot_dimension_numbers<[2], [0], [0, 1], [1], [0, 0, 0, 1, 1, 1], [], []>} : vector<16x16x384xf32>, vector<384x128xf32>, vector<16x16x128xf32> -> vector<16x16x128xf32>
      %168 = arith.addf %163, %167 : vector<16x16x128xf32>
      %c2_205 = arith.constant 2 : index
      %c0_206 = arith.constant 0 : index
      %c0_207 = arith.constant 0 : index
      %169 = vector.load %arg11[%c2_205, %c0_206, %c0_207] : memref<18x16x384xf32, #tpu.memory_space<vmem>>, vector<16x16x384xf32>
      %c2_208 = arith.constant 2 : index
      %c0_209 = arith.constant 0 : index
      %c0_210 = arith.constant 0 : index
      %170 = vector.load %arg4[%c2_208, %c0_209, %c0_210] : memref<3x384x128xf32, #tpu.memory_space<vmem>>, vector<1x384x128xf32>
      %171 = vector.shape_cast %170 : vector<1x384x128xf32> to vector<384x128xf32>
      %cst_211 = arith.constant dense<0.000000e+00> : vector<16x16x128xf32>
      %172 = tpu.matmul %169, %171, %cst_211 {dimension_numbers = #tpu.dot_dimension_numbers<[2], [0], [0, 1], [1], [0, 0, 0, 1, 1, 1], [], []>} : vector<16x16x384xf32>, vector<384x128xf32>, vector<16x16x128xf32> -> vector<16x16x128xf32>
      %173 = arith.addf %168, %172 : vector<16x16x128xf32>
      %cst_212 = arith.constant 0.000000e+00 : f32
      %174 = vector.broadcast %cst_212 : f32 to vector<16x16x128xf32>
      %175 = arith.maximumf %173, %174 : vector<16x16x128xf32>
      %c1_213 = arith.constant 1 : index
      %c1_214 = arith.constant 1 : index
      %c0_215 = arith.constant 0 : index
      %176 = vector.load %arg9[%c1_213, %c1_214, %c0_215] : memref<18x18x128xf32, #tpu.memory_space<vmem>>, vector<16x16x128xf32>
      tpu.vector_store %arg9[%c1_213, %c1_214, %c0_215], %175 {strides = array<i32>} : memref<18x18x128xf32, #tpu.memory_space<vmem>>, vector<16x16x128xf32>,
    }
    %c0_87 = arith.constant 0 : index
    %c0_88 = arith.constant 0 : index
    %c0_89 = arith.constant 0 : index
    %94 = vector.load %arg9[%c0_87, %c0_88, %c0_89] : memref<18x18x128xf32, #tpu.memory_space<vmem>>, vector<18x16x128xf32>
    %c0_90 = arith.constant 0 : index
    %c0_91 = arith.constant 0 : index
    %c0_92 = arith.constant 0 : index
    %95 = vector.load %arg11[%c0_90, %c0_91, %c0_92] : memref<18x16x384xf32, #tpu.memory_space<vmem>>, vector<18x16x128xf32>
    tpu.vector_store %arg11[%c0_90, %c0_91, %c0_92], %94 {strides = array<i32>} : memref<18x16x384xf32, #tpu.memory_space<vmem>>, vector<18x16x128xf32>,
    %c0_93 = arith.constant 0 : index
    %c1_94 = arith.constant 1 : index
    %c0_95 = arith.constant 0 : index
    %96 = vector.load %arg9[%c0_93, %c1_94, %c0_95] : memref<18x18x128xf32, #tpu.memory_space<vmem>>, vector<18x16x128xf32>
    %c0_96 = arith.constant 0 : index
    %c0_97 = arith.constant 0 : index
    %c128 = arith.constant 128 : index
    %97 = vector.load %arg11[%c0_96, %c0_97, %c128] : memref<18x16x384xf32, #tpu.memory_space<vmem>>, vector<18x16x128xf32>
    tpu.vector_store %arg11[%c0_96, %c0_97, %c128], %96 {strides = array<i32>} : memref<18x16x384xf32, #tpu.memory_space<vmem>>, vector<18x16x128xf32>,
    %c0_98 = arith.constant 0 : index
    %c2_99 = arith.constant 2 : index
    %c0_100 = arith.constant 0 : index
    %98 = vector.load %arg9[%c0_98, %c2_99, %c0_100] : memref<18x18x128xf32, #tpu.memory_space<vmem>>, vector<18x16x128xf32>
    %c0_101 = arith.constant 0 : index
    %c0_102 = arith.constant 0 : index
    %c256 = arith.constant 256 : index
    %99 = vector.load %arg11[%c0_101, %c0_102, %c256] : memref<18x16x384xf32, #tpu.memory_space<vmem>>, vector<18x16x128xf32>
    tpu.vector_store %arg11[%c0_101, %c0_102, %c256], %98 {strides = array<i32>} : memref<18x16x384xf32, #tpu.memory_space<vmem>>, vector<18x16x128xf32>,
    %c0_103 = arith.constant 0 : index
    %c0_104 = arith.constant 0 : index
    %c0_105 = arith.constant 0 : index
    %100 = vector.load %arg11[%c0_103, %c0_104, %c0_105] : memref<18x16x384xf32, #tpu.memory_space<vmem>>, vector<16x16x384xf32>
    %c0_106 = arith.constant 0 : index
    %c0_107 = arith.constant 0 : index
    %101 = vector.load %arg5[%c0_106, %c0_107] : memref<3x384xf32, #tpu.memory_space<vmem>>, vector<1x384xf32>
    %102 = vector.shape_cast %101 : vector<1x384xf32> to vector<384xf32>
    %103 = vector.shape_cast %102 : vector<384xf32> to vector<1x1x384xf32>
    %104 = vector.broadcast %103 : vector<1x1x384xf32> to vector<16x16x384xf32>
    %105 = arith.mulf %100, %104 : vector<16x16x384xf32>
    %cst_108 = arith.constant dense<0.000000e+00> : vector<16x16xf32>
    %106 = vector.multi_reduction <add>, %105, %cst_108 [2] : vector<16x16x384xf32> to vector<16x16xf32>
    %c1_109 = arith.constant 1 : index
    %c0_110 = arith.constant 0 : index
    %c0_111 = arith.constant 0 : index
    %107 = vector.load %arg11[%c1_109, %c0_110, %c0_111] : memref<18x16x384xf32, #tpu.memory_space<vmem>>, vector<16x16x384xf32>
    %c1_112 = arith.constant 1 : index
    %c0_113 = arith.constant 0 : index
    %108 = vector.load %arg5[%c1_112, %c0_113] : memref<3x384xf32, #tpu.memory_space<vmem>>, vector<1x384xf32>
    %109 = vector.shape_cast %108 : vector<1x384xf32> to vector<384xf32>
    %110 = vector.shape_cast %109 : vector<384xf32> to vector<1x1x384xf32>
    %111 = vector.broadcast %110 : vector<1x1x384xf32> to vector<16x16x384xf32>
    %112 = arith.mulf %107, %111 : vector<16x16x384xf32>
    %cst_114 = arith.constant dense<0.000000e+00> : vector<16x16xf32>
    %113 = vector.multi_reduction <add>, %112, %cst_114 [2] : vector<16x16x384xf32> to vector<16x16xf32>
    %114 = arith.addf %106, %113 : vector<16x16xf32>
    %c2_115 = arith.constant 2 : index
    %c0_116 = arith.constant 0 : index
    %c0_117 = arith.constant 0 : index
    %115 = vector.load %arg11[%c2_115, %c0_116, %c0_117] : memref<18x16x384xf32, #tpu.memory_space<vmem>>, vector<16x16x384xf32>
    %c2_118 = arith.constant 2 : index
    %c0_119 = arith.constant 0 : index
    %116 = vector.load %arg5[%c2_118, %c0_119] : memref<3x384xf32, #tpu.memory_space<vmem>>, vector<1x384xf32>
    %117 = vector.shape_cast %116 : vector<1x384xf32> to vector<384xf32>
    %118 = vector.shape_cast %117 : vector<384xf32> to vector<1x1x384xf32>
    %119 = vector.broadcast %118 : vector<1x1x384xf32> to vector<16x16x384xf32>
    %120 = arith.mulf %115, %119 : vector<16x16x384xf32>
    %cst_120 = arith.constant dense<0.000000e+00> : vector<16x16xf32>
    %121 = vector.multi_reduction <add>, %120, %cst_120 [2] : vector<16x16x384xf32> to vector<16x16xf32>
    %122 = arith.addf %114, %121 : vector<16x16xf32>
    %c0_121 = arith.constant 0 : index
    %c0_122 = arith.constant 0 : index
    %c0_123 = arith.constant 0 : index
    %123 = vector.load %arg1[%c0_121, %c0_122, %c0_123] : memref<1x16x16xf32, #tpu.memory_space<vmem>>, vector<1x16x16xf32>
    %124 = vector.shape_cast %123 : vector<1x16x16xf32> to vector<16x16xf32>
    %125 = arith.addf %122, %124 : vector<16x16xf32>
    %c0_124 = arith.constant 0 : index
    %c0_125 = arith.constant 0 : index
    %c0_126 = arith.constant 0 : index
    %126 = vector.load %arg6[%c0_124, %c0_125, %c0_126] : memref<1x16x16xf32, #tpu.memory_space<vmem>>, vector<1x16x16xf32>
    %127 = vector.shape_cast %126 : vector<1x16x16xf32> to vector<16x16xf32>
    %128 = vector.shape_cast %125 : vector<16x16xf32> to vector<1x16x16xf32>
    tpu.vector_store %arg6[%c0_124, %c0_125, %c0_126], %128 {strides = array<i32>} : memref<1x16x16xf32, #tpu.memory_space<vmem>>, vector<1x16x16xf32>,
    return
  }
  func.func @transform_0(%arg0: i32) -> (i32, i32, i32) {
    %c0_i32 = arith.constant 0 : i32
    %c0_i32_0 = arith.constant 0 : i32
    %c0_i32_1 = arith.constant 0 : i32
    return %arg0, %c0_i32, %c0_i32_0 : i32, i32, i32
  }
  func.func @transform_1(%arg0: i32) -> (i32, i32, i32) {
    %c0_i32 = arith.constant 0 : i32
    %c0_i32_0 = arith.constant 0 : i32
    %c0_i32_1 = arith.constant 0 : i32
    %c0_i32_2 = arith.constant 0 : i32
    return %c0_i32, %c0_i32_0, %c0_i32_1 : i32, i32, i32
  }
  func.func @transform_2(%arg0: i32) -> (i32, i32, i32) {
    %c0_i32 = arith.constant 0 : i32
    %c0_i32_0 = arith.constant 0 : i32
    %c0_i32_1 = arith.constant 0 : i32
    %c0_i32_2 = arith.constant 0 : i32
    return %c0_i32, %c0_i32_0, %c0_i32_1 : i32, i32, i32
  }
  func.func @transform_3(%arg0: i32) -> (i32, i32, i32) {
    %c0_i32 = arith.constant 0 : i32
    %c0_i32_0 = arith.constant 0 : i32
    %c0_i32_1 = arith.constant 0 : i32
    %c0_i32_2 = arith.constant 0 : i32
    return %c0_i32, %c0_i32_0, %c0_i32_1 : i32, i32, i32
  }
  func.func @transform_4(%arg0: i32) -> (i32, i32) {
    %c0_i32 = arith.constant 0 : i32
    %c0_i32_0 = arith.constant 0 : i32
    %c0_i32_1 = arith.constant 0 : i32
    return %c0_i32, %c0_i32_0 : i32, i32
  }
  func.func @transform_5(%arg0: i32) -> (i32, i32, i32) {
    %c0_i32 = arith.constant 0 : i32
    %c0_i32_0 = arith.constant 0 : i32
    %c0_i32_1 = arith.constant 0 : i32
    return %arg0, %c0_i32, %c0_i32_0 : i32, i32, i32
  }
}

</mosaic_0001>

<llo_original>
// kernel: squeeze.3
$region0: #{squeeze.3}
  %s0 = inlined_call_operand.vmem [shape: f32[9,128], index: 0, kind: input, shape index: {}]
  %s1 = inlined_call_operand.vmem [shape: f32[3,384], index: 1, kind: output, shape index: {}]
  $region1: #{squeeze.3} parent=0
    #allocation0 [shape = 'u8[12288]{0}', space=vmem, size = 0x3000, scoped, tag = 'scoped mem for output reshape']
    %v2 = vld [vmem:[%s0] sm:$0xff]
    %3 = vst [vmem:[#allocation0] ss:$8 sm:$0x7] %v2
    %s4 = scalar_lea.vmem [#allocation0], 4294967273
    %5 = vst [vmem:[%s4] ss:$8 sm:$0x38] %v2
    %s6 = scalar_lea.vmem [#allocation0], 4294967250
    %7 = vst [vmem:[%s6] ss:$8 sm:$0xc0] %v2
    %s8 = scalar_lea.vmem %s0, 8
    %v9 = vld [vmem:[%s8] sm:$0x1]
    %s10 = scalar_lea.vmem [#allocation0], 18
    %11 = vst [vmem:[%s10] sm:$0x1] %v9
    %s13 = sshll.u32 1, 4
    %s14 = ssub.s32 %s13, 1
    %v16 = vld [vmem:[#allocation0] sm:%s14]
    %s17 = sshll.u32 1, 4
    %s18 = ssub.s32 %s17, 1
    %19 = vst [vmem:[%s1] sm:%s18] %v16
    %s20 = scalar_lea.vmem [#allocation0], 8
    %v21 = vld [vmem:[%s20] sm:%s14]
    %s22 = sshll.u32 1, 4
    %s23 = ssub.s32 %s22, 1
    %s24 = scalar_lea.vmem %s1, 4
    %25 = vst [vmem:[%s24] sm:%s23] %v21
    %s26 = scalar_lea.vmem [#allocation0], 16
    %v27 = vld [vmem:[%s26] sm:%s14]
    %s28 = sshll.u32 1, 4
    %s29 = ssub.s32 %s28, 1
    %s30 = smul.addr 4, 2
    %s31 = scalar_lea.vmem %s1, %s30
    %32 = vst [vmem:[%s31] sm:%s29] %v27

// kernel: drrn_forward.1
$region0: #{drrn_forward.1}
  #allocation0 [shape = 'u32[]', space=smem, size = 0x4, offset = 0x4, fixed_abs, tag = 'smem constant byte address 0x4 - core index']
  #allocation1 [shape = 'u32[144,128]{1,0:T(1,128)}', space=vmem, size = 0x12000, scoped, tag = 'internal scratch']
  #allocation2 [shape = 'f32[18,18,1]{2,1,0:T(8,128)}', space=vmem, size = 0x36000, scoped, tag = 'scratch operand']
  #allocation3 [shape = 'f32[16,16,128]{2,1,0:T(8,128)}', space=vmem, size = 0x20000, scoped, tag = 'scratch operand']
  #allocation4 [shape = 'f32[18,18,128]{2,1,0:T(8,128)}', space=vmem, size = 0x36000, scoped, tag = 'scratch operand']
  #allocation5 [shape = 'f32[18,18,128]{2,1,0:T(8,128)}', space=vmem, size = 0x36000, scoped, tag = 'scratch operand']
  #allocation6 [shape = 'f32[18,16,384]{2,1,0:T(8,128)}', space=vmem, size = 0x6c000, scoped, tag = 'scratch operand']
  %s0 = inlined_call_operand.vmem [shape: f32[2,16,16], index: 0, kind: input, shape index: {}]
  %s1 = inlined_call_operand.vmem [shape: f32[9,1,128], index: 1, kind: input, shape index: {}]
  %s2 = inlined_call_operand.hbm [shape: f32[3,384,128], index: 2, kind: input, shape index: {}]
  %s3 = inlined_call_operand.hbm [shape: f32[3,384,128], index: 3, kind: input, shape index: {}]
  %s4 = inlined_call_operand.vmem [shape: f32[3,384], index: 4, kind: input, shape index: {}]
  %s5 = inlined_call_operand.hbm [shape: f32[2,16,16], index: 5, kind: output, shape index: {}]
  %s6 = sld [smem:[#allocation0]]
  $region68: #{drrn_forward.1} parent=0
    _
  %s8 = ssub.s32 1, %s6
  %s9 = scalar_select 0, %s8, %s6
  $region1: #{drrn_forward.1} parent=0
    #allocation7 [shape = 'u8[589824]{0}', space=vmem, size = 0x90000, scoped, tag = 'input window, operand 2, single buffered']
    #allocation8 [shape = 's32[2]{0}', space=sflag, size = 0x8, scoped, tag = 'scoped memory for drrn_forward.1']
    #allocation9 [shape = 's32[2]{0}', space=sflag, size = 0x8, scoped, tag = 'scoped memory for drrn_forward.1']
    #allocation10 [shape = 'u8[589824]{0}', space=vmem, size = 0x90000, scoped, tag = 'input window, operand 3, single buffered']
    #allocation11 [shape = 's32[1]{0}', space=sflag, size = 0x4, scoped, tag = 'scoped memory for drrn_forward.1']
    #allocation12 [shape = 'u8[16384]{0}', space=vmem, size = 0x4000, scoped, tag = 'output window, operand 0']
    %10 = vsyncpa [#allocation8], 0
    %11 = vsyncpa [#allocation11], 0
    %12 = vsyncpa [#allocation9], 0
    %s13 = scalar_lea.sflag [#allocation9], 1
    %14 = vsyncpa %s13, 0
    loop: start=0, step=1, limit=4
    $region2: #{drrn_forward.1} parent=1 // loop_pre_header
      _
    $region3: #{drrn_forward.1} parent=1 // loop_header
      %s16 = sphi 0, %s20
      %p17 = scmp.ge.s32.totalorder %s16, 4
      %s26 = sphi 0, %s28
      %s29 = sphi 0, %s26
      %s30 = sphi 0, %s29
      %s46 = sphi 0, %s30
      %s50 = sphi 0, %s50
      %s52 = sphi 0, %s50
      %s53 = sphi 0, %s52
      %s67 = sphi 0, %s53
      %s71 = sphi 0, %s71
      %s73 = sphi 0, %s71
      %s74 = sphi 0, %s73
      %s88 = sphi 0, %s74
      %s92 = sphi 0, %s92
      %s94 = sphi 0, %s92
      %s95 = sphi 0, %s94
      %s109 = sphi 0, %s95
      %s113 = sphi 0, %s113
      %s115 = sphi 0, %s113
      %s116 = sphi 0, %s115
      %s130 = sphi 0, %s116
      %s136 = sphi 0, %s138
      %s139 = sphi 0, %s136
      %s140 = sphi 0, %s139
      %s156 = sphi 0, %s140
    $region4: #{drrn_forward.1} parent=1 // loop_header_branch
      %19 = sbr.rel (%p17) target = $region8
    $region5: #{drrn_forward.1} parent=1 // loop_body
      %s21 = ssub.s32 %s16, 1
      %s22 = ssub.s32 %s16, 2
      %s23 = sadd.s32 %s16, 1
      %s24 = ssub.s32 %s16, %s23
      %p25 = scmp.eq.s32.totalorder %s24, 0
      %s27 = sadd.s32 %s26, 1
      %s28 = scalar_select %p25, %s26, %s27
      %p31 = pneg %p25
      %p32 = scmp.eq.s32.totalorder %s16, 1
      %p33 = por %p31, %p32
      %p34 = scmp.ne.s32.totalorder %s26, %s29
      %p35 = scmp.eq.s32.totalorder %s16, 0
      %p36 = por %p34, %p35
      %p37 = scmp.ne.s32.totalorder %s26, %s29
      %p38 = scmp.eq.s32.totalorder %s21, 1
      %p39 = por %p37, %p38
      %p40 = scmp.ne.s32.totalorder %s29, %s30
      %p41 = scmp.eq.s32.totalorder %s21, 0
      %p42 = por %p40, %p41
      %p43 = scmp.ne.s32.totalorder %s29, %s30
      %p44 = scmp.eq.s32.totalorder %s22, 1
      %p45 = por %p43, %p44
      %p47 = scmp.ne.s32.totalorder %s30, %s46
      %p48 = scmp.eq.s32.totalorder %s22, 0
      %p49 = por %p47, %p48
      %s51 = sadd.s32 %s50, 1
      %p54 = scmp.eq.s32.totalorder %s16, 1
      %p55 = scmp.ne.s32.totalorder %s50, %s52
      %p56 = scmp.eq.s32.totalorder %s16, 0
      %p57 = por %p55, %p56
      %p58 = scmp.ne.s32.totalorder %s50, %s52
      %p59 = scmp.eq.s32.totalorder %s21, 1
      %p60 = por %p58, %p59
      %p61 = scmp.ne.s32.totalorder %s52, %s53
      %p62 = scmp.eq.s32.totalorder %s21, 0
      %p63 = por %p61, %p62
      %p64 = scmp.ne.s32.totalorder %s52, %s53
      %p65 = scmp.eq.s32.totalorder %s22, 1
      %p66 = por %p64, %p65
      %p68 = scmp.ne.s32.totalorder %s53, %s67
      %p69 = scmp.eq.s32.totalorder %s22, 0
      %p70 = por %p68, %p69
      %s72 = sadd.s32 %s71, 1
      %p75 = scmp.eq.s32.totalorder %s16, 1
      %p76 = scmp.ne.s32.totalorder %s71, %s73
      %p77 = scmp.eq.s32.totalorder %s16, 0
      %p78 = por %p76, %p77
      %p79 = scmp.ne.s32.totalorder %s71, %s73
      %p80 = scmp.eq.s32.totalorder %s21, 1
      %p81 = por %p79, %p80
      %p82 = scmp.ne.s32.totalorder %s73, %s74
      %p83 = scmp.eq.s32.totalorder %s21, 0
      %p84 = por %p82, %p83
      %p85 = scmp.ne.s32.totalorder %s73, %s74
      %p86 = scmp.eq.s32.totalorder %s22, 1
      %p87 = por %p85, %p86
      %p89 = scmp.ne.s32.totalorder %s74, %s88
      %p90 = scmp.eq.s32.totalorder %s22, 0
      %p91 = por %p89, %p90
      %s93 = sadd.s32 %s92, 1
      %p96 = scmp.eq.s32.totalorder %s16, 1
      %p97 = scmp.ne.s32.totalorder %s92, %s94
      %p98 = scmp.eq.s32.totalorder %s16, 0
      %p99 = por %p97, %p98
      %p100 = scmp.ne.s32.totalorder %s92, %s94
      %p101 = scmp.eq.s32.totalorder %s21, 1
      %p102 = por %p100, %p101
      %p103 = scmp.ne.s32.totalorder %s94, %s95
      %p104 = scmp.eq.s32.totalorder %s21, 0
      %p105 = por %p103, %p104
      %p106 = scmp.ne.s32.totalorder %s94, %s95
      %p107 = scmp.eq.s32.totalorder %s22, 1
      %p108 = por %p106, %p107
      %p110 = scmp.ne.s32.totalorder %s95, %s109
      %p111 = scmp.eq.s32.totalorder %s22, 0
      %p112 = por %p110, %p111
      %s114 = sadd.s32 %s113, 1
      %p117 = scmp.eq.s32.totalorder %s16, 1
      %p118 = scmp.ne.s32.totalorder %s113, %s115
      %p119 = scmp.eq.s32.totalorder %s16, 0
      %p120 = por %p118, %p119
      %p121 = scmp.ne.s32.totalorder %s113, %s115
      %p122 = scmp.eq.s32.totalorder %s21, 1
      %p123 = por %p121, %p122
      %p124 = scmp.ne.s32.totalorder %s115, %s116
      %p125 = scmp.eq.s32.totalorder %s21, 0
      %p126 = por %p124, %p125
      %p127 = scmp.ne.s32.totalorder %s115, %s116
      %p128 = scmp.eq.s32.totalorder %s22, 1
      %p129 = por %p127, %p128
      %p131 = scmp.ne.s32.totalorder %s116, %s130
      %p132 = scmp.eq.s32.totalorder %s22, 0
      %p133 = por %p131, %p132
      %s134 = ssub.s32 %s16, %s23
      %p135 = scmp.eq.s32.totalorder %s134, 0
      %s137 = sadd.s32 %s136, 1
      %s138 = scalar_select %p135, %s136, %s137
      %p141 = pneg %p135
      %p142 = scmp.eq.s32.totalorder %s16, 1
      %p143 = por %p141, %p142
      %p144 = scmp.ne.s32.totalorder %s136, %s139
      %p145 = scmp.eq.s32.totalorder %s16, 0
      %p146 = por %p144, %p145
      %p147 = scmp.ne.s32.totalorder %s136, %s139
      %p148 = scmp.eq.s32.totalorder %s21, 1
      %p149 = por %p147, %p148
      %p150 = scmp.ne.s32.totalorder %s139, %s140
      %p151 = scmp.eq.s32.totalorder %s21, 0
      %p152 = por %p150, %p151
      %p153 = scmp.ne.s32.totalorder %s139, %s140
      %p154 = scmp.eq.s32.totalorder %s22, 1
      %p155 = por %p153, %p154
      %p157 = scmp.ne.s32.totalorder %s140, %s156
      %p158 = scmp.eq.s32.totalorder %s22, 0
      %p159 = por %p157, %p158
      %p160 = scmp.le.s32.totalorder 1, %s16
      %p161 = scmp.lt.s32.totalorder %s16, 3
      %p162 = pnand %p160, %p161
      %p163 = pneg %p162
      // Predicated region
      $region9: #{drrn_forward.1} parent=5 // pred_check
        _
      $region10: #{drrn_forward.1} parent=5 // pred_check_branch
        %165 = sbr.rel (%p162) target = $region12
      $region11: #{drrn_forward.1} parent=5 // pred_region
        %s166 = ssub.s32 %s16, 1
        // Predicated region
        $region13: #{drrn_forward.1} parent=11 // pred_check
          %p167 = pneg %p63
        $region14: #{drrn_forward.1} parent=11 // pred_check_branch
          %169 = sbr.rel (%p167) target = $region16
        $region15: #{drrn_forward.1} parent=11 // pred_region
          _
        $region16: #{drrn_forward.1} parent=11 // pred_fallthru
          _
        // Predicated region
        $region17: #{drrn_forward.1} parent=11 // pred_check
          %p170 = pneg %p84
        $region18: #{drrn_forward.1} parent=11 // pred_check_branch
          %172 = sbr.rel (%p170) target = $region20
        $region19: #{drrn_forward.1} parent=11 // pred_region
          %s174 = ssub.s32 18432, 18432
          %175 = vsyncadd [#allocation8], %s174
          %s176 = sshll.u32 [#allocation7], 4
          %s177 = int_to_ptr.vmem [resolvable:$true] %s176
          %182 = dma.hbm_to_vmem [thread:$0]  %s2, 18432, %s177, [#allocation8], 128, 128, 8
        $region20: #{drrn_forward.1} parent=11 // pred_fallthru
          _
        // Predicated region
        $region21: #{drrn_forward.1} parent=11 // pred_check
          %p183 = pneg %p105
        $region22: #{drrn_forward.1} parent=11 // pred_check_branch
          %185 = sbr.rel (%p183) target = $region24
        $region23: #{drrn_forward.1} parent=11 // pred_region
          %s187 = ssub.s32 18432, 18432
          %188 = vsyncadd [#allocation11], %s187
          %s189 = sshll.u32 [#allocation10], 4
          %s190 = int_to_ptr.vmem [resolvable:$true] %s189
          %195 = dma.hbm_to_vmem [thread:$0]  %s3, 18432, %s190, [#allocation11], 128, 128, 8
        $region24: #{drrn_forward.1} parent=11 // pred_fallthru
          _
        // Predicated region
        $region25: #{drrn_forward.1} parent=11 // pred_check
          %p196 = pneg %p126
        $region26: #{drrn_forward.1} parent=11 // pred_check_branch
          %198 = sbr.rel (%p196) target = $region28
        $region27: #{drrn_forward.1} parent=11 // pred_region
          _
        $region28: #{drrn_forward.1} parent=11 // pred_fallthru
          _
      $region12: #{drrn_forward.1} parent=5 // pred_fallthru
        _
      %p199 = scmp.lt.s32.totalorder %s16, 2
      // Predicated region
      $region29: #{drrn_forward.1} parent=5 // pred_check
        %p200 = pneg %p199
      $region30: #{drrn_forward.1} parent=5 // pred_check_branch
        %202 = sbr.rel (%p200) target = $region32
      $region31: #{drrn_forward.1} parent=5 // pred_region
        // Predicated region
        $region33: #{drrn_forward.1} parent=31 // pred_check
          %p203 = pneg %p36
        $region34: #{drrn_forward.1} parent=31 // pred_check_branch
          %205 = sbr.rel (%p203) target = $region36
        $region35: #{drrn_forward.1} parent=31 // pred_region
          %p206 = scmp.lt.s32.totalorder %s16, 1
          %s207 = scalar_select %p206, %s16, 1
          %s208 = smul.addr %s207, 2
          %s209 = smul.addr %s208, 8
          %s210 = scalar_lea.vmem %s0, %s209
        $region36: #{drrn_forward.1} parent=31 // pred_fallthru
          _
      $region32: #{drrn_forward.1} parent=5 // pred_fallthru
        _
      %p211 = scmp.le.s32.totalorder 1, %s16
      %p212 = scmp.lt.s32.totalorder %s16, 3
      %p213 = pnand %p211, %p212
      %p214 = pneg %p213
      // Predicated region
      $region37: #{drrn_forward.1} parent=5 // pred_check
        _
      $region38: #{drrn_forward.1} parent=5 // pred_check_branch
        %216 = sbr.rel (%p213) target = $region40
      $region39: #{drrn_forward.1} parent=5 // pred_region
        %s217 = ssub.s32 %s16, 1
        // Predicated region
        $region41: #{drrn_forward.1} parent=39 // pred_check
          %p218 = pneg %p84
        $region42: #{drrn_forward.1} parent=39 // pred_check_branch
          %220 = sbr.rel (%p218) target = $region44
        $region43: #{drrn_forward.1} parent=39 // pred_region
          %221 = dma.done [#allocation8], 18432
        $region44: #{drrn_forward.1} parent=39 // pred_fallthru
          _
        // Predicated region
        $region45: #{drrn_forward.1} parent=39 // pred_check
          %p222 = pneg %p105
        $region46: #{drrn_forward.1} parent=39 // pred_check_branch
          %224 = sbr.rel (%p222) target = $region48
        $region47: #{drrn_forward.1} parent=39 // pred_region
          %225 = dma.done [#allocation11], 18432
        $region48: #{drrn_forward.1} parent=39 // pred_fallthru
          _
        %p226 = scmp.lt.s32.totalorder %s21, 1
        %s227 = scalar_select %p226, %s21, 1
        %s228 = smul.addr %s227, 2
        %s229 = smul.addr %s228, 8
        %s230 = scalar_lea.vmem %s0, %s229
        %p231 = pneg %p42
        %p232 = pneg %p39
        %p233 = pneg %p63
        %p234 = pneg %p60
        %p235 = pneg %p84
        %p236 = pneg %p81
        %p237 = pneg %p105
        %p238 = pneg %p102
        %p239 = pneg %p126
        %p240 = pneg %p123
        %p241 = pneg %p152
        %p242 = pneg %p149
        %s243 = sand.u32 %s139, 1
        %s244 = scalar_lea.sflag [#allocation9], %s243
        %s245 = sand.u32 %s139, 1
        %s246 = smul.addr %s245, 16
        %s247 = scalar_lea.vmem [#allocation12], %s246
        %p248 = scmp.lt.s32.totalorder %s21, 1
        %s249 = scalar_select %p248, %s21, 1
        %s250 = smul.addr %s249, 2
        %s251 = smul.addr %s250, 8
        %s252 = scalar_lea.vmem %s0, %s251
        %vm253 = vcmask 7168
        %254 = vst.msk [vmem:[#allocation2] sm:$0xff] %vm253, 0.0
        %255 = vst.msk [vmem:[#allocation2 + $0x8] sm:$0xff] %vm253, 0.0
        %vm256 = vcmask 1024
        %257 = vst.msk [vmem:[#allocation2 + $0x10] sm:$0x3] %vm256, 0.0
        %258 = vst.msk [vmem:[#allocation2 + $0x18] sm:$0xff] %vm253, 0.0
        %259 = vst.msk [vmem:[#allocation2 + $0x20] sm:$0xff] %vm253, 0.0
        %260 = vst.msk [vmem:[#allocation2 + $0x28] sm:$0x3] %vm256, 0.0
        %261 = vst.msk [vmem:[#allocation2 + $0x30] sm:$0xff] %vm253, 0.0
        %262 = vst.msk [vmem:[#allocation2 + $0x38] sm:$0xff] %vm253, 0.0
        %263 = vst.msk [vmem:[#allocation2 + $0x40] sm:$0x3] %vm256, 0.0
        %264 = vst.msk [vmem:[#allocation2 + $0x48] sm:$0xff] %vm253, 0.0
        %265 = vst.msk [vmem:[#allocation2 + $0x50] sm:$0xff] %vm253, 0.0
        %266 = vst.msk [vmem:[#allocation2 + $0x58] sm:$0x3] %vm256, 0.0
        %267 = vst.msk [vmem:[#allocation2 + $0x60] sm:$0xff] %vm253, 0.0
        %268 = vst.msk [vmem:[#allocation2 + $0x68] sm:$0xff] %vm253, 0.0
        %269 = vst.msk [vmem:[#allocation2 + $0x70] sm:$0x3] %vm256, 0.0
        %270 = vst.msk [vmem:[#allocation2 + $0x78] sm:$0xff] %vm253, 0.0
        %271 = vst.msk [vmem:[#allocation2 + $0x80] sm:$0xff] %vm253, 0.0
        %272 = vst.msk [vmem:[#allocation2 + $0x88] sm:$0x3] %vm256, 0.0
        %273 = vst.msk [vmem:[#allocation2 + $0x90] sm:$0xff] %vm253, 0.0
        %274 = vst.msk [vmem:[#allocation2 + $0x98] sm:$0xff] %vm253, 0.0
        %275 = vst.msk [vmem:[#allocation2 + $0xa0] sm:$0x3] %vm256, 0.0
        %276 = vst.msk [vmem:[#allocation2 + $0xa8] sm:$0xff] %vm253, 0.0
        %277 = vst.msk [vmem:[#allocation2 + $0xb0] sm:$0xff] %vm253, 0.0
        %278 = vst.msk [vmem:[#allocation2 + $0xb8] sm:$0x3] %vm256, 0.0
        %279 = vst.msk [vmem:[#allocation2 + $0xc0] sm:$0xff] %vm253, 0.0
        %280 = vst.msk [vmem:[#allocation2 + $0xc8] sm:$0xff] %vm253, 0.0
        %281 = vst.msk [vmem:[#allocation2 + $0xd0] sm:$0x3] %vm256, 0.0
        %282 = vst.msk [vmem:[#allocation2 + $0xd8] sm:$0xff] %vm253, 0.0
        %283 = vst.msk [vmem:[#allocation2 + $0xe0] sm:$0xff] %vm253, 0.0
        %284 = vst.msk [vmem:[#allocation2 + $0xe8] sm:$0x3] %vm256, 0.0
        %285 = vst.msk [vmem:[#allocation2 + $0xf0] sm:$0xff] %vm253, 0.0
        %286 = vst.msk [vmem:[#allocation2 + $0xf8] sm:$0xff] %vm253, 0.0
        %287 = vst.msk [vmem:[#allocation2 + $0x100] sm:$0x3] %vm256, 0.0
        %288 = vst.msk [vmem:[#allocation2 + $0x108] sm:$0xff] %vm253, 0.0
        %289 = vst.msk [vmem:[#allocation2 + $0x110] sm:$0xff] %vm253, 0.0
        %290 = vst.msk [vmem:[#allocation2 + $0x118] sm:$0x3] %vm256, 0.0
        %291 = vst.msk [vmem:[#allocation2 + $0x120] sm:$0xff] %vm253, 0.0
        %292 = vst.msk [vmem:[#allocation2 + $0x128] sm:$0xff] %vm253, 0.0
        %293 = vst.msk [vmem:[#allocation2 + $0x130] sm:$0x3] %vm256, 0.0
        %294 = vst.msk [vmem:[#allocation2 + $0x138] sm:$0xff] %vm253, 0.0
        %295 = vst.msk [vmem:[#allocation2 + $0x140] sm:$0xff] %vm253, 0.0
        %296 = vst.msk [vmem:[#allocation2 + $0x148] sm:$0x3] %vm256, 0.0
        %297 = vst.msk [vmem:[#allocation2 + $0x150] sm:$0xff] %vm253, 0.0
        %298 = vst.msk [vmem:[#allocation2 + $0x158] sm:$0xff] %vm253, 0.0
        %299 = vst.msk [vmem:[#allocation2 + $0x160] sm:$0x3] %vm256, 0.0
        %300 = vst.msk [vmem:[#allocation2 + $0x168] sm:$0xff] %vm253, 0.0
        %301 = vst.msk [vmem:[#allocation2 + $0x170] sm:$0xff] %vm253, 0.0
        %302 = vst.msk [vmem:[#allocation2 + $0x178] sm:$0x3] %vm256, 0.0
        %303 = vst.msk [vmem:[#allocation2 + $0x180] sm:$0xff] %vm253, 0.0
        %304 = vst.msk [vmem:[#allocation2 + $0x188] sm:$0xff] %vm253, 0.0
        %305 = vst.msk [vmem:[#allocation2 + $0x190] sm:$0x3] %vm256, 0.0
        %306 = vst.msk [vmem:[#allocation2 + $0x198] sm:$0xff] %vm253, 0.0
        %307 = vst.msk [vmem:[#allocation2 + $0x1a0] sm:$0xff] %vm253, 0.0
        %308 = vst.msk [vmem:[#allocation2 + $0x1a8] sm:$0x3] %vm256, 0.0
        %309 = vst [vmem:[#allocation4] sm:$0xff] 0.0
        %310 = vst [vmem:[#allocation4 + $0x8] sm:$0xff] 0.0
        %311 = vst [vmem:[#allocation4 + $0x10] sm:$0x3] 0.0
        %s312 = scalar_lea.vmem [#allocation4], 408
        %313 = vst [vmem:[%s312] sm:$0xff] 0.0
        %314 = vst [vmem:[%s312 + $0x8] sm:$0xff] 0.0
        %315 = vst [vmem:[%s312 + $0x10] sm:$0x3] 0.0
        %s316 = scalar_lea.vmem [#allocation4], 24
        %317 = vst [vmem:[%s316] sm:$0x1] 0.0
        %318 = vst [vmem:[%s316 + $0x18] sm:$0x1] 0.0
        %319 = vst [vmem:[%s316 + $0x30] sm:$0x1] 0.0
        %320 = vst [vmem:[%s316 + $0x48] sm:$0x1] 0.0
        %321 = vst [vmem:[%s316 + $0x60] sm:$0x1] 0.0
        %322 = vst [vmem:[%s316 + $0x78] sm:$0x1] 0.0
        %323 = vst [vmem:[%s316 + $0x90] sm:$0x1] 0.0
        %324 = vst [vmem:[%s316 + $0xa8] sm:$0x1] 0.0
        %325 = vst [vmem:[%s316 + $0xc0] sm:$0x1] 0.0
        %326 = vst [vmem:[%s316 + $0xd8] sm:$0x1] 0.0
        %327 = vst [vmem:[%s316 + $0xf0] sm:$0x1] 0.0
        %328 = vst [vmem:[%s316 + $0x108] sm:$0x1] 0.0
        %329 = vst [vmem:[%s316 + $0x120] sm:$0x1] 0.0
        %330 = vst [vmem:[%s316 + $0x138] sm:$0x1] 0.0
        %331 = vst [vmem:[%s316 + $0x150] sm:$0x1] 0.0
        %332 = vst [vmem:[%s316 + $0x168] sm:$0x1] 0.0
        %333 = vst [vmem:[%s316 + $0x11] sm:$0x1] 0.0
        %334 = vst [vmem:[%s316 + $0x29] sm:$0x1] 0.0
        %335 = vst [vmem:[%s316 + $0x41] sm:$0x1] 0.0
        %336 = vst [vmem:[%s316 + $0x59] sm:$0x1] 0.0
        %337 = vst [vmem:[%s316 + $0x71] sm:$0x1] 0.0
        %338 = vst [vmem:[%s316 + $0x89] sm:$0x1] 0.0
        %339 = vst [vmem:[%s316 + $0xa1] sm:$0x1] 0.0
        %340 = vst [vmem:[%s316 + $0xb9] sm:$0x1] 0.0
        %341 = vst [vmem:[%s316 + $0xd1] sm:$0x1] 0.0
        %342 = vst [vmem:[%s316 + $0xe9] sm:$0x1] 0.0
        %343 = vst [vmem:[%s316 + $0x101] sm:$0x1] 0.0
        %344 = vst [vmem:[%s316 + $0x119] sm:$0x1] 0.0
        %345 = vst [vmem:[%s316 + $0x131] sm:$0x1] 0.0
        %346 = vst [vmem:[%s316 + $0x149] sm:$0x1] 0.0
        %347 = vst [vmem:[%s316 + $0x161] sm:$0x1] 0.0
        %348 = vst [vmem:[%s316 + $0x179] sm:$0x1] 0.0
        %349 = vst [vmem:[#allocation5] sm:$0xff] 0.0
        %350 = vst [vmem:[#allocation5 + $0x8] sm:$0xff] 0.0
        %351 = vst [vmem:[#allocation5 + $0x10] sm:$0x3] 0.0
        %s352 = scalar_lea.vmem [#allocation5], 408
        %353 = vst [vmem:[%s352] sm:$0xff] 0.0
        %354 = vst [vmem:[%s352 + $0x8] sm:$0xff] 0.0
        %355 = vst [vmem:[%s352 + $0x10] sm:$0x3] 0.0
        %s356 = scalar_lea.vmem [#allocation5], 24
        %357 = vst [vmem:[%s356] sm:$0x1] 0.0
        %358 = vst [vmem:[%s356 + $0x18] sm:$0x1] 0.0
        %359 = vst [vmem:[%s356 + $0x30] sm:$0x1] 0.0
        %360 = vst [vmem:[%s356 + $0x48] sm:$0x1] 0.0
        %361 = vst [vmem:[%s356 + $0x60] sm:$0x1] 0.0
        %362 = vst [vmem:[%s356 + $0x78] sm:$0x1] 0.0
        %363 = vst [vmem:[%s356 + $0x90] sm:$0x1] 0.0
        %364 = vst [vmem:[%s356 + $0xa8] sm:$0x1] 0.0
        %365 = vst [vmem:[%s356 + $0xc0] sm:$0x1] 0.0
        %366 = vst [vmem:[%s356 + $0xd8] sm:$0x1] 0.0
        %367 = vst [vmem:[%s356 + $0xf0] sm:$0x1] 0.0
        %368 = vst [vmem:[%s356 + $0x108] sm:$0x1] 0.0
        %369 = vst [vmem:[%s356 + $0x120] sm:$0x1] 0.0
        %370 = vst [vmem:[%s356 + $0x138] sm:$0x1] 0.0
        %371 = vst [vmem:[%s356 + $0x150] sm:$0x1] 0.0
        %372 = vst [vmem:[%s356 + $0x168] sm:$0x1] 0.0
        %373 = vst [vmem:[%s356 + $0x11] sm:$0x1] 0.0
        %374 = vst [vmem:[%s356 + $0x29] sm:$0x1] 0.0
        %375 = vst [vmem:[%s356 + $0x41] sm:$0x1] 0.0
        %376 = vst [vmem:[%s356 + $0x59] sm:$0x1] 0.0
        %377 = vst [vmem:[%s356 + $0x71] sm:$0x1] 0.0
        %378 = vst [vmem:[%s356 + $0x89] sm:$0x1] 0.0
        %379 = vst [vmem:[%s356 + $0xa1] sm:$0x1] 0.0
        %380 = vst [vmem:[%s356 + $0xb9] sm:$0x1] 0.0
        %381 = vst [vmem:[%s356 + $0xd1] sm:$0x1] 0.0
        %382 = vst [vmem:[%s356 + $0xe9] sm:$0x1] 0.0
        %383 = vst [vmem:[%s356 + $0x101] sm:$0x1] 0.0
        %384 = vst [vmem:[%s356 + $0x119] sm:$0x1] 0.0
        %385 = vst [vmem:[%s356 + $0x131] sm:$0x1] 0.0
        %386 = vst [vmem:[%s356 + $0x149] sm:$0x1] 0.0
        %387 = vst [vmem:[%s356 + $0x161] sm:$0x1] 0.0
        %388 = vst [vmem:[%s356 + $0x179] sm:$0x1] 0.0
        %v389 = vld [vmem:[%s252] sm:$0xff]
        %v390 = vld [vmem:[%s252 + $0x8] sm:$0xff]
        %v391 = vmax.f32 %v389, 0.0
        %v392 = vmax.f32 %v390, 0.0
        %v393 = vlaneseq
        %v394 = vshrl.u32 %v393, 7
        %v395 = vsub.s32 0, %v394
        %v396 = vrot.slane %v391, %v395
        %398 = vbcast.lane.b32.xlu0 %v396, 256
        %v399 = vpop.permute.xlu0 %398
        %s401 = sor.u32 256, 8
        %402 = vbcast.lane.b32.xlu0 %v396, %s401
        %v403 = vpop.permute.xlu0 %402
        %v404 = vlaneseq
        %v405 = vshrl.u32 %v404, 7
        %v406 = vsub.s32 1, %v405
        %v407 = vrot.slane %v391, %v406
        %409 = vbcast.lane.b32.xlu0 %v407, 256
        %v410 = vpop.permute.xlu0 %409
        %s412 = sor.u32 256, 8
        %413 = vbcast.lane.b32.xlu0 %v407, %s412
        %v414 = vpop.permute.xlu0 %413
        %v415 = vlaneseq
        %v416 = vshrl.u32 %v415, 7
        %v417 = vsub.s32 2, %v416
        %v418 = vrot.slane %v391, %v417
        %420 = vbcast.lane.b32.xlu0 %v418, 256
        %v421 = vpop.permute.xlu0 %420
        %s423 = sor.u32 256, 8
        %424 = vbcast.lane.b32.xlu0 %v418, %s423
        %v425 = vpop.permute.xlu0 %424
        %v426 = vlaneseq
        %v427 = vshrl.u32 %v426, 7
        %v428 = vsub.s32 3, %v427
        %v429 = vrot.slane %v391, %v428
        %431 = vbcast.lane.b32.xlu0 %v429, 256
        %v432 = vpop.permute.xlu0 %431
        %s434 = sor.u32 256, 8
        %435 = vbcast.lane.b32.xlu0 %v429, %s434
        %v436 = vpop.permute.xlu0 %435
        %v437 = vlaneseq
        %v438 = vshrl.u32 %v437, 7
        %v439 = vsub.s32 4, %v438
        %v440 = vrot.slane %v391, %v439
        %442 = vbcast.lane.b32.xlu0 %v440, 256
        %v443 = vpop.permute.xlu0 %442
        %s445 = sor.u32 256, 8
        %446 = vbcast.lane.b32.xlu0 %v440, %s445
        %v447 = vpop.permute.xlu0 %446
        %v448 = vlaneseq
        %v449 = vshrl.u32 %v448, 7
        %v450 = vsub.s32 5, %v449
        %v451 = vrot.slane %v391, %v450
        %453 = vbcast.lane.b32.xlu0 %v451, 256
        %v454 = vpop.permute.xlu0 %453
        %s456 = sor.u32 256, 8
        %457 = vbcast.lane.b32.xlu0 %v451, %s456
        %v458 = vpop.permute.xlu0 %457
        %v459 = vlaneseq
        %v460 = vshrl.u32 %v459, 7
        %v461 = vsub.s32 6, %v460
        %v462 = vrot.slane %v391, %v461
        %464 = vbcast.lane.b32.xlu0 %v462, 256
        %v465 = vpop.permute.xlu0 %464
        %s467 = sor.u32 256, 8
        %468 = vbcast.lane.b32.xlu0 %v462, %s467
        %v469 = vpop.permute.xlu0 %468
        %v470 = vlaneseq
        %v471 = vshrl.u32 %v470, 7
        %v472 = vsub.s32 7, %v471
        %v473 = vrot.slane %v391, %v472
        %475 = vbcast.lane.b32.xlu0 %v473, 256
        %v476 = vpop.permute.xlu0 %475
        %s478 = sor.u32 256, 8
        %479 = vbcast.lane.b32.xlu0 %v473, %s478
        %v480 = vpop.permute.xlu0 %479
        %v481 = vlaneseq
        %v482 = vshrl.u32 %v481, 7
        %v483 = vsub.s32 0, %v482
        %v484 = vrot.slane %v392, %v483
        %486 = vbcast.lane.b32.xlu0 %v484, 256
        %v487 = vpop.permute.xlu0 %486
        %s489 = sor.u32 256, 8
        %490 = vbcast.lane.b32.xlu0 %v484, %s489
        %v491 = vpop.permute.xlu0 %490
        %v492 = vlaneseq
        %v493 = vshrl.u32 %v492, 7
        %v494 = vsub.s32 1, %v493
        %v495 = vrot.slane %v392, %v494
        %497 = vbcast.lane.b32.xlu0 %v495, 256
        %v498 = vpop.permute.xlu0 %497
        %s500 = sor.u32 256, 8
        %501 = vbcast.lane.b32.xlu0 %v495, %s500
        %v502 = vpop.permute.xlu0 %501
        %v503 = vlaneseq
        %v504 = vshrl.u32 %v503, 7
        %v505 = vsub.s32 2, %v504
        %v506 = vrot.slane %v392, %v505
        %508 = vbcast.lane.b32.xlu0 %v506, 256
        %v509 = vpop.permute.xlu0 %508
        %s511 = sor.u32 256, 8
        %512 = vbcast.lane.b32.xlu0 %v506, %s511
        %v513 = vpop.permute.xlu0 %512
        %v514 = vlaneseq
        %v515 = vshrl.u32 %v514, 7
        %v516 = vsub.s32 3, %v515
        %v517 = vrot.slane %v392, %v516
        %519 = vbcast.lane.b32.xlu0 %v517, 256
        %v520 = vpop.permute.xlu0 %519
        %s522 = sor.u32 256, 8
        %523 = vbcast.lane.b32.xlu0 %v517, %s522
        %v524 = vpop.permute.xlu0 %523
        %v525 = vlaneseq
        %v526 = vshrl.u32 %v525, 7
        %v527 = vsub.s32 4, %v526
        %v528 = vrot.slane %v392, %v527
        %530 = vbcast.lane.b32.xlu0 %v528, 256
        %v531 = vpop.permute.xlu0 %530
        %s533 = sor.u32 256, 8
        %534 = vbcast.lane.b32.xlu0 %v528, %s533
        %v535 = vpop.permute.xlu0 %534
        %v536 = vlaneseq
        %v537 = vshrl.u32 %v536, 7
        %v538 = vsub.s32 5, %v537
        %v539 = vrot.slane %v392, %v538
        %541 = vbcast.lane.b32.xlu0 %v539, 256
        %v542 = vpop.permute.xlu0 %541
        %s544 = sor.u32 256, 8
        %545 = vbcast.lane.b32.xlu0 %v539, %s544
        %v546 = vpop.permute.xlu0 %545
        %v547 = vlaneseq
        %v548 = vshrl.u32 %v547, 7
        %v549 = vsub.s32 6, %v548
        %v550 = vrot.slane %v392, %v549
        %552 = vbcast.lane.b32.xlu0 %v550, 256
        %v553 = vpop.permute.xlu0 %552
        %s555 = sor.u32 256, 8
        %556 = vbcast.lane.b32.xlu0 %v550, %s555
        %v557 = vpop.permute.xlu0 %556
        %v558 = vlaneseq
        %v559 = vshrl.u32 %v558, 7
        %v560 = vsub.s32 7, %v559
        %v561 = vrot.slane %v392, %v560
        %563 = vbcast.lane.b32.xlu0 %v561, 256
        %v564 = vpop.permute.xlu0 %563
        %s566 = sor.u32 256, 8
        %567 = vbcast.lane.b32.xlu0 %v561, %s566
        %v568 = vpop.permute.xlu0 %567
        %s569 = scalar_lea.vmem [#allocation2], 24
        %570 = vst.msk [vmem:[%s569 + $0x1] sm:$0xff] %vm253, %v399
        %571 = vst.msk [vmem:[%s569 + $0x9] sm:$0xff] %vm253, %v403
        %572 = vst.msk [vmem:[%s569 + $0x19] sm:$0xff] %vm253, %v410
        %573 = vst.msk [vmem:[%s569 + $0x21] sm:$0xff] %vm253, %v414
        %574 = vst.msk [vmem:[%s569 + $0x31] sm:$0xff] %vm253, %v421
        %575 = vst.msk [vmem:[%s569 + $0x39] sm:$0xff] %vm253, %v425
        %576 = vst.msk [vmem:[%s569 + $0x49] sm:$0xff] %vm253, %v432
        %577 = vst.msk [vmem:[%s569 + $0x51] sm:$0xff] %vm253, %v436
        %578 = vst.msk [vmem:[%s569 + $0x61] sm:$0xff] %vm253, %v443
        %579 = vst.msk [vmem:[%s569 + $0x69] sm:$0xff] %vm253, %v447
        %580 = vst.msk [vmem:[%s569 + $0x79] sm:$0xff] %vm253, %v454
        %581 = vst.msk [vmem:[%s569 + $0x81] sm:$0xff] %vm253, %v458
        %582 = vst.msk [vmem:[%s569 + $0x91] sm:$0xff] %vm253, %v465
        %583 = vst.msk [vmem:[%s569 + $0x99] sm:$0xff] %vm253, %v469
        %584 = vst.msk [vmem:[%s569 + $0xa9] sm:$0xff] %vm253, %v476
        %585 = vst.msk [vmem:[%s569 + $0xb1] sm:$0xff] %vm253, %v480
        %586 = vst.msk [vmem:[%s569 + $0xc1] sm:$0xff] %vm253, %v487
        %587 = vst.msk [vmem:[%s569 + $0xc9] sm:$0xff] %vm253, %v491
        %588 = vst.msk [vmem:[%s569 + $0xd9] sm:$0xff] %vm253, %v498
        %589 = vst.msk [vmem:[%s569 + $0xe1] sm:$0xff] %vm253, %v502
        %590 = vst.msk [vmem:[%s569 + $0xf1] sm:$0xff] %vm253, %v509
        %591 = vst.msk [vmem:[%s569 + $0xf9] sm:$0xff] %vm253, %v513
        %592 = vst.msk [vmem:[%s569 + $0x109] sm:$0xff] %vm253, %v520
        %593 = vst.msk [vmem:[%s569 + $0x111] sm:$0xff] %vm253, %v524
        %594 = vst.msk [vmem:[%s569 + $0x121] sm:$0xff] %vm253, %v531
        %595 = vst.msk [vmem:[%s569 + $0x129] sm:$0xff] %vm253, %v535
        %596 = vst.msk [vmem:[%s569 + $0x139] sm:$0xff] %vm253, %v542
        %597 = vst.msk [vmem:[%s569 + $0x141] sm:$0xff] %vm253, %v546
        %598 = vst.msk [vmem:[%s569 + $0x151] sm:$0xff] %vm253, %v553
        %599 = vst.msk [vmem:[%s569 + $0x159] sm:$0xff] %vm253, %v557
        %600 = vst.msk [vmem:[%s569 + $0x169] sm:$0xff] %vm253, %v564
        %601 = vst.msk [vmem:[%s569 + $0x171] sm:$0xff] %vm253, %v568
        %v602 = vld [vmem:[#allocation2] sm:$0xff]
        %v603 = vld [vmem:[#allocation2 + $0x8] sm:$0xff]
        %v604 = vld [vmem:[#allocation2 + $0x18] sm:$0xff]
        %v605 = vld [vmem:[#allocation2 + $0x20] sm:$0xff]
        %v606 = vld [vmem:[#allocation2 + $0x30] sm:$0xff]
        %v607 = vld [vmem:[#allocation2 + $0x38] sm:$0xff]
        %v608 = vld [vmem:[#allocation2 + $0x48] sm:$0xff]
        %v609 = vld [vmem:[#allocation2 + $0x50] sm:$0xff]
        %v610 = vld [vmem:[#allocation2 + $0x60] sm:$0xff]
        %v611 = vld [vmem:[#allocation2 + $0x68] sm:$0xff]
        %v612 = vld [vmem:[#allocation2 + $0x78] sm:$0xff]
        %v613 = vld [vmem:[#allocation2 + $0x80] sm:$0xff]
        %v614 = vld [vmem:[#allocation2 + $0x90] sm:$0xff]
        %v615 = vld [vmem:[#allocation2 + $0x98] sm:$0xff]
        %v616 = vld [vmem:[#allocation2 + $0xa8] sm:$0xff]
        %v617 = vld [vmem:[#allocation2 + $0xb0] sm:$0xff]
        %v618 = vld [vmem:[#allocation2 + $0xc0] sm:$0xff]
        %v619 = vld [vmem:[#allocation2 + $0xc8] sm:$0xff]
        %v620 = vld [vmem:[#allocation2 + $0xd8] sm:$0xff]
        %v621 = vld [vmem:[#allocation2 + $0xe0] sm:$0xff]
        %v622 = vld [vmem:[#allocation2 + $0xf0] sm:$0xff]
        %v623 = vld [vmem:[#allocation2 + $0xf8] sm:$0xff]
        %v624 = vld [vmem:[#allocation2 + $0x108] sm:$0xff]
        %v625 = vld [vmem:[#allocation2 + $0x110] sm:$0xff]
        %v626 = vld [vmem:[#allocation2 + $0x120] sm:$0xff]
        %v627 = vld [vmem:[#allocation2 + $0x128] sm:$0xff]
        %v628 = vld [vmem:[#allocation2 + $0x138] sm:$0xff]
        %v629 = vld [vmem:[#allocation2 + $0x140] sm:$0xff]
        %v630 = vld [vmem:[#allocation2 + $0x150] sm:$0xff]
        %v631 = vld [vmem:[#allocation2 + $0x158] sm:$0xff]
        %v632 = vld [vmem:[#allocation2 + $0x168] sm:$0xff]
        %v633 = vld [vmem:[#allocation2 + $0x170] sm:$0xff]
        %v634 = vld [vmem:[%s1] sm:$0x1]
        %636 = vset.pattern.permute.xlu0 0
        %637 = vperm.xlu0 %636, %v602
        %v638 = vpop.permute.xlu0 %637
        %641 = vset.pattern.permute.xlu0 0
        %642 = vperm.xlu0 %641, %v603
        %v643 = vpop.permute.xlu0 %642
        %646 = vset.pattern.permute.xlu0 0
        %647 = vperm.xlu0 %646, %v604
        %v648 = vpop.permute.xlu0 %647
        %651 = vset.pattern.permute.xlu0 0
        %652 = vperm.xlu0 %651, %v605
        %v653 = vpop.permute.xlu0 %652
        %656 = vset.pattern.permute.xlu0 0
        %657 = vperm.xlu0 %656, %v606
        %v658 = vpop.permute.xlu0 %657
        %661 = vset.pattern.permute.xlu0 0
        %662 = vperm.xlu0 %661, %v607
        %v663 = vpop.permute.xlu0 %662
        %666 = vset.pattern.permute.xlu0 0
        %667 = vperm.xlu0 %666, %v608
        %v668 = vpop.permute.xlu0 %667
        %671 = vset.pattern.permute.xlu0 0
        %672 = vperm.xlu0 %671, %v609
        %v673 = vpop.permute.xlu0 %672
        %676 = vset.pattern.permute.xlu0 0
        %677 = vperm.xlu0 %676, %v610
        %v678 = vpop.permute.xlu0 %677
        %681 = vset.pattern.permute.xlu0 0
        %682 = vperm.xlu0 %681, %v611
        %v683 = vpop.permute.xlu0 %682
        %686 = vset.pattern.permute.xlu0 0
        %687 = vperm.xlu0 %686, %v612
        %v688 = vpop.permute.xlu0 %687
        %691 = vset.pattern.permute.xlu0 0
        %692 = vperm.xlu0 %691, %v613
        %v693 = vpop.permute.xlu0 %692
        %696 = vset.pattern.permute.xlu0 0
        %697 = vperm.xlu0 %696, %v614
        %v698 = vpop.permute.xlu0 %697
        %701 = vset.pattern.permute.xlu0 0
        %702 = vperm.xlu0 %701, %v615
        %v703 = vpop.permute.xlu0 %702
        %706 = vset.pattern.permute.xlu0 0
        %707 = vperm.xlu0 %706, %v616
        %v708 = vpop.permute.xlu0 %707
        %711 = vset.pattern.permute.xlu0 0
        %712 = vperm.xlu0 %711, %v617
        %v713 = vpop.permute.xlu0 %712
        %716 = vset.pattern.permute.xlu0 0
        %717 = vperm.xlu0 %716, %v618
        %v718 = vpop.permute.xlu0 %717
        %721 = vset.pattern.permute.xlu0 0
        %722 = vperm.xlu0 %721, %v619
        %v723 = vpop.permute.xlu0 %722
        %726 = vset.pattern.permute.xlu0 0
        %727 = vperm.xlu0 %726, %v620
        %v728 = vpop.permute.xlu0 %727
        %731 = vset.pattern.permute.xlu0 0
        %732 = vperm.xlu0 %731, %v621
        %v733 = vpop.permute.xlu0 %732
        %736 = vset.pattern.permute.xlu0 0
        %737 = vperm.xlu0 %736, %v622
        %v738 = vpop.permute.xlu0 %737
        %741 = vset.pattern.permute.xlu0 0
        %742 = vperm.xlu0 %741, %v623
        %v743 = vpop.permute.xlu0 %742
        %746 = vset.pattern.permute.xlu0 0
        %747 = vperm.xlu0 %746, %v624
        %v748 = vpop.permute.xlu0 %747
        %751 = vset.pattern.permute.xlu0 0
        %752 = vperm.xlu0 %751, %v625
        %v753 = vpop.permute.xlu0 %752
        %756 = vset.pattern.permute.xlu0 0
        %757 = vperm.xlu0 %756, %v626
        %v758 = vpop.permute.xlu0 %757
        %761 = vset.pattern.permute.xlu0 0
        %762 = vperm.xlu0 %761, %v627
        %v763 = vpop.permute.xlu0 %762
        %766 = vset.pattern.permute.xlu0 0
        %767 = vperm.xlu0 %766, %v628
        %v768 = vpop.permute.xlu0 %767
        %771 = vset.pattern.permute.xlu0 0
        %772 = vperm.xlu0 %771, %v629
        %v773 = vpop.permute.xlu0 %772
        %776 = vset.pattern.permute.xlu0 0
        %777 = vperm.xlu0 %776, %v630
        %v778 = vpop.permute.xlu0 %777
        %781 = vset.pattern.permute.xlu0 0
        %782 = vperm.xlu0 %781, %v631
        %v783 = vpop.permute.xlu0 %782
        %786 = vset.pattern.permute.xlu0 0
        %787 = vperm.xlu0 %786, %v632
        %v788 = vpop.permute.xlu0 %787
        %791 = vset.pattern.permute.xlu0 0
        %792 = vperm.xlu0 %791, %v633
        %v793 = vpop.permute.xlu0 %792
        %v796 = vlaneseq
        %v797 = vshrl.u32 %v796, 7
        %v798 = vsub.s32 0, %v797
        %v799 = vrot.slane %v634, %v798
        %v801 = vmul.f32 %v638, %v799
        %v802 = vmul.f32 %v643, %v799
        %v803 = vmul.f32 %v648, %v799
        %v804 = vmul.f32 %v653, %v799
        %v805 = vmul.f32 %v658, %v799
        %v806 = vmul.f32 %v663, %v799
        %v807 = vmul.f32 %v668, %v799
        %v808 = vmul.f32 %v673, %v799
        %v809 = vmul.f32 %v678, %v799
        %v810 = vmul.f32 %v683, %v799
        %v811 = vmul.f32 %v688, %v799
        %v812 = vmul.f32 %v693, %v799
        %v813 = vmul.f32 %v698, %v799
        %v814 = vmul.f32 %v703, %v799
        %v815 = vmul.f32 %v708, %v799
        %v816 = vmul.f32 %v713, %v799
        %v817 = vmul.f32 %v718, %v799
        %v818 = vmul.f32 %v723, %v799
        %v819 = vmul.f32 %v728, %v799
        %v820 = vmul.f32 %v733, %v799
        %v821 = vmul.f32 %v738, %v799
        %v822 = vmul.f32 %v743, %v799
        %v823 = vmul.f32 %v748, %v799
        %v824 = vmul.f32 %v753, %v799
        %v825 = vmul.f32 %v758, %v799
        %v826 = vmul.f32 %v763, %v799
        %v827 = vmul.f32 %v768, %v799
        %v828 = vmul.f32 %v773, %v799
        %v829 = vmul.f32 %v778, %v799
        %v830 = vmul.f32 %v783, %v799
        %v831 = vmul.f32 %v788, %v799
        %v832 = vmul.f32 %v793, %v799
        %v833 = vld [vmem:[#allocation2 + $0x1] sm:$0xff]
        %v834 = vld [vmem:[#allocation2 + $0x9] sm:$0xff]
        %v835 = vld [vmem:[#allocation2 + $0x19] sm:$0xff]
        %v836 = vld [vmem:[#allocation2 + $0x21] sm:$0xff]
        %v837 = vld [vmem:[#allocation2 + $0x31] sm:$0xff]
        %v838 = vld [vmem:[#allocation2 + $0x39] sm:$0xff]
        %v839 = vld [vmem:[#allocation2 + $0x49] sm:$0xff]
        %v840 = vld [vmem:[#allocation2 + $0x51] sm:$0xff]
        %v841 = vld [vmem:[#allocation2 + $0x61] sm:$0xff]
        %v842 = vld [vmem:[#allocation2 + $0x69] sm:$0xff]
        %v843 = vld [vmem:[#allocation2 + $0x79] sm:$0xff]
        %v844 = vld [vmem:[#allocation2 + $0x81] sm:$0xff]
        %v845 = vld [vmem:[#allocation2 + $0x91] sm:$0xff]
        %v846 = vld [vmem:[#allocation2 + $0x99] sm:$0xff]
        %v847 = vld [vmem:[#allocation2 + $0xa9] sm:$0xff]
        %v848 = vld [vmem:[#allocation2 + $0xb1] sm:$0xff]
        %v849 = vld [vmem:[#allocation2 + $0xc1] sm:$0xff]
        %v850 = vld [vmem:[#allocation2 + $0xc9] sm:$0xff]
        %v851 = vld [vmem:[#allocation2 + $0xd9] sm:$0xff]
        %v852 = vld [vmem:[#allocation2 + $0xe1] sm:$0xff]
        %v853 = vld [vmem:[#allocation2 + $0xf1] sm:$0xff]
        %v854 = vld [vmem:[#allocation2 + $0xf9] sm:$0xff]
        %v855 = vld [vmem:[#allocation2 + $0x109] sm:$0xff]
        %v856 = vld [vmem:[#allocation2 + $0x111] sm:$0xff]
        %v857 = vld [vmem:[#allocation2 + $0x121] sm:$0xff]
        %v858 = vld [vmem:[#allocation2 + $0x129] sm:$0xff]
        %v859 = vld [vmem:[#allocation2 + $0x139] sm:$0xff]
        %v860 = vld [vmem:[#allocation2 + $0x141] sm:$0xff]
        %v861 = vld [vmem:[#allocation2 + $0x151] sm:$0xff]
        %v862 = vld [vmem:[#allocation2 + $0x159] sm:$0xff]
        %v863 = vld [vmem:[#allocation2 + $0x169] sm:$0xff]
        %v864 = vld [vmem:[#allocation2 + $0x171] sm:$0xff]
        %s865 = scalar_lea.vmem %s1, 1
        %v866 = vld [vmem:[%s865] sm:$0x1]
        %868 = vset.pattern.permute.xlu0 0
        %869 = vperm.xlu0 %868, %v833
        %v870 = vpop.permute.xlu0 %869
        %873 = vset.pattern.permute.xlu0 0
        %874 = vperm.xlu0 %873, %v834
        %v875 = vpop.permute.xlu0 %874
        %878 = vset.pattern.permute.xlu0 0
        %879 = vperm.xlu0 %878, %v835
        %v880 = vpop.permute.xlu0 %879
        %883 = vset.pattern.permute.xlu0 0
        %884 = vperm.xlu0 %883, %v836
        %v885 = vpop.permute.xlu0 %884
        %888 = vset.pattern.permute.xlu0 0
        %889 = vperm.xlu0 %888, %v837
        %v890 = vpop.permute.xlu0 %889
        %893 = vset.pattern.permute.xlu0 0
        %894 = vperm.xlu0 %893, %v838
        %v895 = vpop.permute.xlu0 %894
        %898 = vset.pattern.permute.xlu0 0
        %899 = vperm.xlu0 %898, %v839
        %v900 = vpop.permute.xlu0 %899
        %903 = vset.pattern.permute.xlu0 0
        %904 = vperm.xlu0 %903, %v840
        %v905 = vpop.permute.xlu0 %904
        %908 = vset.pattern.permute.xlu0 0
        %909 = vperm.xlu0 %908, %v841
        %v910 = vpop.permute.xlu0 %909
        %913 = vset.pattern.permute.xlu0 0
        %914 = vperm.xlu0 %913, %v842
        %v915 = vpop.permute.xlu0 %914
        %918 = vset.pattern.permute.xlu0 0
        %919 = vperm.xlu0 %918, %v843
        %v920 = vpop.permute.xlu0 %919
        %923 = vset.pattern.permute.xlu0 0
        %924 = vperm.xlu0 %923, %v844
        %v925 = vpop.permute.xlu0 %924
        %928 = vset.pattern.permute.xlu0 0
        %929 = vperm.xlu0 %928, %v845
        %v930 = vpop.permute.xlu0 %929
        %933 = vset.pattern.permute.xlu0 0
        %934 = vperm.xlu0 %933, %v846
        %v935 = vpop.permute.xlu0 %934
        %938 = vset.pattern.permute.xlu0 0
        %939 = vperm.xlu0 %938, %v847
        %v940 = vpop.permute.xlu0 %939
        %943 = vset.pattern.permute.xlu0 0
        %944 = vperm.xlu0 %943, %v848
        %v945 = vpop.permute.xlu0 %944
        %948 = vset.pattern.permute.xlu0 0
        %949 = vperm.xlu0 %948, %v849
        %v950 = vpop.permute.xlu0 %949
        %953 = vset.pattern.permute.xlu0 0
        %954 = vperm.xlu0 %953, %v850
        %v955 = vpop.permute.xlu0 %954
        %958 = vset.pattern.permute.xlu0 0
        %959 = vperm.xlu0 %958, %v851
        %v960 = vpop.permute.xlu0 %959
        %963 = vset.pattern.permute.xlu0 0
        %964 = vperm.xlu0 %963, %v852
        %v965 = vpop.permute.xlu0 %964
        %968 = vset.pattern.permute.xlu0 0
        %969 = vperm.xlu0 %968, %v853
        %v970 = vpop.permute.xlu0 %969
        %973 = vset.pattern.permute.xlu0 0
        %974 = vperm.xlu0 %973, %v854
        %v975 = vpop.permute.xlu0 %974
        %978 = vset.pattern.permute.xlu0 0
        %979 = vperm.xlu0 %978, %v855
        %v980 = vpop.permute.xlu0 %979
        %983 = vset.pattern.permute.xlu0 0
        %984 = vperm.xlu0 %983, %v856
        %v985 = vpop.permute.xlu0 %984
        %988 = vset.pattern.permute.xlu0 0
        %989 = vperm.xlu0 %988, %v857
        %v990 = vpop.permute.xlu0 %989
        %993 = vset.pattern.permute.xlu0 0
        %994 = vperm.xlu0 %993, %v858
        %v995 = vpop.permute.xlu0 %994
        %998 = vset.pattern.permute.xlu0 0
        %999 = vperm.xlu0 %998, %v859
        %v1000 = vpop.permute.xlu0 %999
        %1003 = vset.pattern.permute.xlu0 0
        %1004 = vperm.xlu0 %1003, %v860
        %v1005 = vpop.permute.xlu0 %1004
        %1008 = vset.pattern.permute.xlu0 0
        %1009 = vperm.xlu0 %1008, %v861
        %v1010 = vpop.permute.xlu0 %1009
        %1013 = vset.pattern.permute.xlu0 0
        %1014 = vperm.xlu0 %1013, %v862
        %v1015 = vpop.permute.xlu0 %1014
        %1018 = vset.pattern.permute.xlu0 0
        %1019 = vperm.xlu0 %1018, %v863
        %v1020 = vpop.permute.xlu0 %1019
        %1023 = vset.pattern.permute.xlu0 0
        %1024 = vperm.xlu0 %1023, %v864
        %v1025 = vpop.permute.xlu0 %1024
        %v1028 = vlaneseq
        %v1029 = vshrl.u32 %v1028, 7
        %v1030 = vsub.s32 0, %v1029
        %v1031 = vrot.slane %v866, %v1030
        %v1033 = vmul.f32 %v870, %v1031
        %v1034 = vmul.f32 %v875, %v1031
        %v1035 = vmul.f32 %v880, %v1031
        %v1036 = vmul.f32 %v885, %v1031
        %v1037 = vmul.f32 %v890, %v1031
        %v1038 = vmul.f32 %v895, %v1031
        %v1039 = vmul.f32 %v900, %v1031
        %v1040 = vmul.f32 %v905, %v1031
        %v1041 = vmul.f32 %v910, %v1031
        %v1042 = vmul.f32 %v915, %v1031
        %v1043 = vmul.f32 %v920, %v1031
        %v1044 = vmul.f32 %v925, %v1031
        %v1045 = vmul.f32 %v930, %v1031
        %v1046 = vmul.f32 %v935, %v1031
        %v1047 = vmul.f32 %v940, %v1031
        %v1048 = vmul.f32 %v945, %v1031
        %v1049 = vmul.f32 %v950, %v1031
        %v1050 = vmul.f32 %v955, %v1031
        %v1051 = vmul.f32 %v960, %v1031
        %v1052 = vmul.f32 %v965, %v1031
        %v1053 = vmul.f32 %v970, %v1031
        %v1054 = vmul.f32 %v975, %v1031
        %v1055 = vmul.f32 %v980, %v1031
        %v1056 = vmul.f32 %v985, %v1031
        %v1057 = vmul.f32 %v990, %v1031
        %v1058 = vmul.f32 %v995, %v1031
        %v1059 = vmul.f32 %v1000, %v1031
        %v1060 = vmul.f32 %v1005, %v1031
        %v1061 = vmul.f32 %v1010, %v1031
        %v1062 = vmul.f32 %v1015, %v1031
        %v1063 = vmul.f32 %v1020, %v1031
        %v1064 = vmul.f32 %v1025, %v1031
        %v1065 = vadd.f32 %v801, %v1033
        %v1066 = vadd.f32 %v802, %v1034
        %v1067 = vadd.f32 %v803, %v1035
        %v1068 = vadd.f32 %v804, %v1036
        %v1069 = vadd.f32 %v805, %v1037
        %v1070 = vadd.f32 %v806, %v1038
        %v1071 = vadd.f32 %v807, %v1039
        %v1072 = vadd.f32 %v808, %v1040
        %v1073 = vadd.f32 %v809, %v1041
        %v1074 = vadd.f32 %v810, %v1042
        %v1075 = vadd.f32 %v811, %v1043
        %v1076 = vadd.f32 %v812, %v1044
        %v1077 = vadd.f32 %v813, %v1045
        %v1078 = vadd.f32 %v814, %v1046
        %v1079 = vadd.f32 %v815, %v1047
        %v1080 = vadd.f32 %v816, %v1048
        %v1081 = vadd.f32 %v817, %v1049
        %v1082 = vadd.f32 %v818, %v1050
        %v1083 = vadd.f32 %v819, %v1051
        %v1084 = vadd.f32 %v820, %v1052
        %v1085 = vadd.f32 %v821, %v1053
        %v1086 = vadd.f32 %v822, %v1054
        %v1087 = vadd.f32 %v823, %v1055
        %v1088 = vadd.f32 %v824, %v1056
        %v1089 = vadd.f32 %v825, %v1057
        %v1090 = vadd.f32 %v826, %v1058
        %v1091 = vadd.f32 %v827, %v1059
        %v1092 = vadd.f32 %v828, %v1060
        %v1093 = vadd.f32 %v829, %v1061
        %v1094 = vadd.f32 %v830, %v1062
        %v1095 = vadd.f32 %v831, %v1063
        %v1096 = vadd.f32 %v832, %v1064
        %v1097 = vld [vmem:[#allocation2 + $0x2] sm:$0xff]
        %v1098 = vld [vmem:[#allocation2 + $0xa] sm:$0xff]
        %v1099 = vld [vmem:[#allocation2 + $0x1a] sm:$0xff]
        %v1100 = vld [vmem:[#allocation2 + $0x22] sm:$0xff]
        %v1101 = vld [vmem:[#allocation2 + $0x32] sm:$0xff]
        %v1102 = vld [vmem:[#allocation2 + $0x3a] sm:$0xff]
        %v1103 = vld [vmem:[#allocation2 + $0x4a] sm:$0xff]
        %v1104 = vld [vmem:[#allocation2 + $0x52] sm:$0xff]
        %v1105 = vld [vmem:[#allocation2 + $0x62] sm:$0xff]
        %v1106 = vld [vmem:[#allocation2 + $0x6a] sm:$0xff]
        %v1107 = vld [vmem:[#allocation2 + $0x7a] sm:$0xff]
        %v1108 = vld [vmem:[#allocation2 + $0x82] sm:$0xff]
        %v1109 = vld [vmem:[#allocation2 + $0x92] sm:$0xff]
        %v1110 = vld [vmem:[#allocation2 + $0x9a] sm:$0xff]
        %v1111 = vld [vmem:[#allocation2 + $0xaa] sm:$0xff]
        %v1112 = vld [vmem:[#allocation2 + $0xb2] sm:$0xff]
        %v1113 = vld [vmem:[#allocation2 + $0xc2] sm:$0xff]
        %v1114 = vld [vmem:[#allocation2 + $0xca] sm:$0xff]
        %v1115 = vld [vmem:[#allocation2 + $0xda] sm:$0xff]
        %v1116 = vld [vmem:[#allocation2 + $0xe2] sm:$0xff]
        %v1117 = vld [vmem:[#allocation2 + $0xf2] sm:$0xff]
        %v1118 = vld [vmem:[#allocation2 + $0xfa] sm:$0xff]
        %v1119 = vld [vmem:[#allocation2 + $0x10a] sm:$0xff]
        %v1120 = vld [vmem:[#allocation2 + $0x112] sm:$0xff]
        %v1121 = vld [vmem:[#allocation2 + $0x122] sm:$0xff]
        %v1122 = vld [vmem:[#allocation2 + $0x12a] sm:$0xff]
        %v1123 = vld [vmem:[#allocation2 + $0x13a] sm:$0xff]
        %v1124 = vld [vmem:[#allocation2 + $0x142] sm:$0xff]
        %v1125 = vld [vmem:[#allocation2 + $0x152] sm:$0xff]
        %v1126 = vld [vmem:[#allocation2 + $0x15a] sm:$0xff]
        %v1127 = vld [vmem:[#allocation2 + $0x16a] sm:$0xff]
        %v1128 = vld [vmem:[#allocation2 + $0x172] sm:$0xff]
        %s1129 = scalar_lea.vmem %s1, 2
        %v1130 = vld [vmem:[%s1129] sm:$0x1]
        %1132 = vset.pattern.permute.xlu0 0
        %1133 = vperm.xlu0 %1132, %v1097
        %v1134 = vpop.permute.xlu0 %1133
        %1137 = vset.pattern.permute.xlu0 0
        %1138 = vperm.xlu0 %1137, %v1098
        %v1139 = vpop.permute.xlu0 %1138
        %1142 = vset.pattern.permute.xlu0 0
        %1143 = vperm.xlu0 %1142, %v1099
        %v1144 = vpop.permute.xlu0 %1143
        %1147 = vset.pattern.permute.xlu0 0
        %1148 = vperm.xlu0 %1147, %v1100
        %v1149 = vpop.permute.xlu0 %1148
        %1152 = vset.pattern.permute.xlu0 0
        %1153 = vperm.xlu0 %1152, %v1101
        %v1154 = vpop.permute.xlu0 %1153
        %1157 = vset.pattern.permute.xlu0 0
        %1158 = vperm.xlu0 %1157, %v1102
        %v1159 = vpop.permute.xlu0 %1158
        %1162 = vset.pattern.permute.xlu0 0
        %1163 = vperm.xlu0 %1162, %v1103
        %v1164 = vpop.permute.xlu0 %1163
        %1167 = vset.pattern.permute.xlu0 0
        %1168 = vperm.xlu0 %1167, %v1104
        %v1169 = vpop.permute.xlu0 %1168
        %1172 = vset.pattern.permute.xlu0 0
        %1173 = vperm.xlu0 %1172, %v1105
        %v1174 = vpop.permute.xlu0 %1173
        %1177 = vset.pattern.permute.xlu0 0
        %1178 = vperm.xlu0 %1177, %v1106
        %v1179 = vpop.permute.xlu0 %1178
        %1182 = vset.pattern.permute.xlu0 0
        %1183 = vperm.xlu0 %1182, %v1107
        %v1184 = vpop.permute.xlu0 %1183
        %1187 = vset.pattern.permute.xlu0 0
        %1188 = vperm.xlu0 %1187, %v1108
        %v1189 = vpop.permute.xlu0 %1188
        %1192 = vset.pattern.permute.xlu0 0
        %1193 = vperm.xlu0 %1192, %v1109
        %v1194 = vpop.permute.xlu0 %1193
        %1197 = vset.pattern.permute.xlu0 0
        %1198 = vperm.xlu0 %1197, %v1110
        %v1199 = vpop.permute.xlu0 %1198
        %1202 = vset.pattern.permute.xlu0 0
        %1203 = vperm.xlu0 %1202, %v1111
        %v1204 = vpop.permute.xlu0 %1203
        %1207 = vset.pattern.permute.xlu0 0
        %1208 = vperm.xlu0 %1207, %v1112
        %v1209 = vpop.permute.xlu0 %1208
        %1212 = vset.pattern.permute.xlu0 0
        %1213 = vperm.xlu0 %1212, %v1113
        %v1214 = vpop.permute.xlu0 %1213
        %1217 = vset.pattern.permute.xlu0 0
        %1218 = vperm.xlu0 %1217, %v1114
        %v1219 = vpop.permute.xlu0 %1218
        %1222 = vset.pattern.permute.xlu0 0
        %1223 = vperm.xlu0 %1222, %v1115
        %v1224 = vpop.permute.xlu0 %1223
        %1227 = vset.pattern.permute.xlu0 0
        %1228 = vperm.xlu0 %1227, %v1116
        %v1229 = vpop.permute.xlu0 %1228
        %1232 = vset.pattern.permute.xlu0 0
        %1233 = vperm.xlu0 %1232, %v1117
        %v1234 = vpop.permute.xlu0 %1233
        %1237 = vset.pattern.permute.xlu0 0
        %1238 = vperm.xlu0 %1237, %v1118
        %v1239 = vpop.permute.xlu0 %1238
        %1242 = vset.pattern.permute.xlu0 0
        %1243 = vperm.xlu0 %1242, %v1119
        %v1244 = vpop.permute.xlu0 %1243
        %1247 = vset.pattern.permute.xlu0 0
        %1248 = vperm.xlu0 %1247, %v1120
        %v1249 = vpop.permute.xlu0 %1248
        %1252 = vset.pattern.permute.xlu0 0
        %1253 = vperm.xlu0 %1252, %v1121
        %v1254 = vpop.permute.xlu0 %1253
        %1257 = vset.pattern.permute.xlu0 0
        %1258 = vperm.xlu0 %1257, %v1122
        %v1259 = vpop.permute.xlu0 %1258
        %1262 = vset.pattern.permute.xlu0 0
        %1263 = vperm.xlu0 %1262, %v1123
        %v1264 = vpop.permute.xlu0 %1263
        %1267 = vset.pattern.permute.xlu0 0
        %1268 = vperm.xlu0 %1267, %v1124
        %v1269 = vpop.permute.xlu0 %1268
        %1272 = vset.pattern.permute.xlu0 0
        %1273 = vperm.xlu0 %1272, %v1125
        %v1274 = vpop.permute.xlu0 %1273
        %1277 = vset.pattern.permute.xlu0 0
        %1278 = vperm.xlu0 %1277, %v1126
        %v1279 = vpop.permute.xlu0 %1278
        %1282 = vset.pattern.permute.xlu0 0
        %1283 = vperm.xlu0 %1282, %v1127
        %v1284 = vpop.permute.xlu0 %1283
        %1287 = vset.pattern.permute.xlu0 0
        %1288 = vperm.xlu0 %1287, %v1128
        %v1289 = vpop.permute.xlu0 %1288
        %v1292 = vlaneseq
        %v1293 = vshrl.u32 %v1292, 7
        %v1294 = vsub.s32 0, %v1293
        %v1295 = vrot.slane %v1130, %v1294
        %v1297 = vmul.f32 %v1134, %v1295
        %v1298 = vmul.f32 %v1139, %v1295
        %v1299 = vmul.f32 %v1144, %v1295
        %v1300 = vmul.f32 %v1149, %v1295
        %v1301 = vmul.f32 %v1154, %v1295
        %v1302 = vmul.f32 %v1159, %v1295
        %v1303 = vmul.f32 %v1164, %v1295
        %v1304 = vmul.f32 %v1169, %v1295
        %v1305 = vmul.f32 %v1174, %v1295
        %v1306 = vmul.f32 %v1179, %v1295
        %v1307 = vmul.f32 %v1184, %v1295
        %v1308 = vmul.f32 %v1189, %v1295
        %v1309 = vmul.f32 %v1194, %v1295
        %v1310 = vmul.f32 %v1199, %v1295
        %v1311 = vmul.f32 %v1204, %v1295
        %v1312 = vmul.f32 %v1209, %v1295
        %v1313 = vmul.f32 %v1214, %v1295
        %v1314 = vmul.f32 %v1219, %v1295
        %v1315 = vmul.f32 %v1224, %v1295
        %v1316 = vmul.f32 %v1229, %v1295
        %v1317 = vmul.f32 %v1234, %v1295
        %v1318 = vmul.f32 %v1239, %v1295
        %v1319 = vmul.f32 %v1244, %v1295
        %v1320 = vmul.f32 %v1249, %v1295
        %v1321 = vmul.f32 %v1254, %v1295
        %v1322 = vmul.f32 %v1259, %v1295
        %v1323 = vmul.f32 %v1264, %v1295
        %v1324 = vmul.f32 %v1269, %v1295
        %v1325 = vmul.f32 %v1274, %v1295
        %v1326 = vmul.f32 %v1279, %v1295
        %v1327 = vmul.f32 %v1284, %v1295
        %v1328 = vmul.f32 %v1289, %v1295
        %v1329 = vadd.f32 %v1065, %v1297
        %v1330 = vadd.f32 %v1066, %v1298
        %v1331 = vadd.f32 %v1067, %v1299
        %v1332 = vadd.f32 %v1068, %v1300
        %v1333 = vadd.f32 %v1069, %v1301
        %v1334 = vadd.f32 %v1070, %v1302
        %v1335 = vadd.f32 %v1071, %v1303
        %v1336 = vadd.f32 %v1072, %v1304
        %v1337 = vadd.f32 %v1073, %v1305
        %v1338 = vadd.f32 %v1074, %v1306
        %v1339 = vadd.f32 %v1075, %v1307
        %v1340 = vadd.f32 %v1076, %v1308
        %v1341 = vadd.f32 %v1077, %v1309
        %v1342 = vadd.f32 %v1078, %v1310
        %v1343 = vadd.f32 %v1079, %v1311
        %v1344 = vadd.f32 %v1080, %v1312
        %v1345 = vadd.f32 %v1081, %v1313
        %v1346 = vadd.f32 %v1082, %v1314
        %v1347 = vadd.f32 %v1083, %v1315
        %v1348 = vadd.f32 %v1084, %v1316
        %v1349 = vadd.f32 %v1085, %v1317
        %v1350 = vadd.f32 %v1086, %v1318
        %v1351 = vadd.f32 %v1087, %v1319
        %v1352 = vadd.f32 %v1088, %v1320
        %v1353 = vadd.f32 %v1089, %v1321
        %v1354 = vadd.f32 %v1090, %v1322
        %v1355 = vadd.f32 %v1091, %v1323
        %v1356 = vadd.f32 %v1092, %v1324
        %v1357 = vadd.f32 %v1093, %v1325
        %v1358 = vadd.f32 %v1094, %v1326
        %v1359 = vadd.f32 %v1095, %v1327
        %v1360 = vadd.f32 %v1096, %v1328
        %v1361 = vld [vmem:[%s569] sm:$0xff]
        %v1362 = vld [vmem:[%s569 + $0x8] sm:$0xff]
        %v1363 = vld [vmem:[%s569 + $0x18] sm:$0xff]
        %v1364 = vld [vmem:[%s569 + $0x20] sm:$0xff]
        %v1365 = vld [vmem:[%s569 + $0x30] sm:$0xff]
        %v1366 = vld [vmem:[%s569 + $0x38] sm:$0xff]
        %v1367 = vld [vmem:[%s569 + $0x48] sm:$0xff]
        %v1368 = vld [vmem:[%s569 + $0x50] sm:$0xff]
        %v1369 = vld [vmem:[%s569 + $0x60] sm:$0xff]
        %v1370 = vld [vmem:[%s569 + $0x68] sm:$0xff]
        %v1371 = vld [vmem:[%s569 + $0x78] sm:$0xff]
        %v1372 = vld [vmem:[%s569 + $0x80] sm:$0xff]
        %v1373 = vld [vmem:[%s569 + $0x90] sm:$0xff]
        %v1374 = vld [vmem:[%s569 + $0x98] sm:$0xff]
        %v1375 = vld [vmem:[%s569 + $0xa8] sm:$0xff]
        %v1376 = vld [vmem:[%s569 + $0xb0] sm:$0xff]
        %v1377 = vld [vmem:[%s569 + $0xc0] sm:$0xff]
        %v1378 = vld [vmem:[%s569 + $0xc8] sm:$0xff]
        %v1379 = vld [vmem:[%s569 + $0xd8] sm:$0xff]
        %v1380 = vld [vmem:[%s569 + $0xe0] sm:$0xff]
        %v1381 = vld [vmem:[%s569 + $0xf0] sm:$0xff]
        %v1382 = vld [vmem:[%s569 + $0xf8] sm:$0xff]
        %v1383 = vld [vmem:[%s569 + $0x108] sm:$0xff]
        %v1384 = vld [vmem:[%s569 + $0x110] sm:$0xff]
        %v1385 = vld [vmem:[%s569 + $0x120] sm:$0xff]
        %v1386 = vld [vmem:[%s569 + $0x128] sm:$0xff]
        %v1387 = vld [vmem:[%s569 + $0x138] sm:$0xff]
        %v1388 = vld [vmem:[%s569 + $0x140] sm:$0xff]
        %v1389 = vld [vmem:[%s569 + $0x150] sm:$0xff]
        %v1390 = vld [vmem:[%s569 + $0x158] sm:$0xff]
        %v1391 = vld [vmem:[%s569 + $0x168] sm:$0xff]
        %v1392 = vld [vmem:[%s569 + $0x170] sm:$0xff]
        %s1393 = scalar_lea.vmem %s1, 3
        %v1394 = vld [vmem:[%s1393] sm:$0x1]
        %1396 = vset.pattern.permute.xlu0 0
        %1397 = vperm.xlu0 %1396, %v1361
        %v1398 = vpop.permute.xlu0 %1397
        %1401 = vset.pattern.permute.xlu0 0
        %1402 = vperm.xlu0 %1401, %v1362
        %v1403 = vpop.permute.xlu0 %1402
        %1406 = vset.pattern.permute.xlu0 0
        %1407 = vperm.xlu0 %1406, %v1363
        %v1408 = vpop.permute.xlu0 %1407
        %1411 = vset.pattern.permute.xlu0 0
        %1412 = vperm.xlu0 %1411, %v1364
        %v1413 = vpop.permute.xlu0 %1412
        %1416 = vset.pattern.permute.xlu0 0
        %1417 = vperm.xlu0 %1416, %v1365
        %v1418 = vpop.permute.xlu0 %1417
        %1421 = vset.pattern.permute.xlu0 0
        %1422 = vperm.xlu0 %1421, %v1366
        %v1423 = vpop.permute.xlu0 %1422
        %1426 = vset.pattern.permute.xlu0 0
        %1427 = vperm.xlu0 %1426, %v1367
        %v1428 = vpop.permute.xlu0 %1427
        %1431 = vset.pattern.permute.xlu0 0
        %1432 = vperm.xlu0 %1431, %v1368
        %v1433 = vpop.permute.xlu0 %1432
        %1436 = vset.pattern.permute.xlu0 0
        %1437 = vperm.xlu0 %1436, %v1369
        %v1438 = vpop.permute.xlu0 %1437
        %1441 = vset.pattern.permute.xlu0 0
        %1442 = vperm.xlu0 %1441, %v1370
        %v1443 = vpop.permute.xlu0 %1442
        %1446 = vset.pattern.permute.xlu0 0
        %1447 = vperm.xlu0 %1446, %v1371
        %v1448 = vpop.permute.xlu0 %1447
        %1451 = vset.pattern.permute.xlu0 0
        %1452 = vperm.xlu0 %1451, %v1372
        %v1453 = vpop.permute.xlu0 %1452
        %1456 = vset.pattern.permute.xlu0 0
        %1457 = vperm.xlu0 %1456, %v1373
        %v1458 = vpop.permute.xlu0 %1457
        %1461 = vset.pattern.permute.xlu0 0
        %1462 = vperm.xlu0 %1461, %v1374
        %v1463 = vpop.permute.xlu0 %1462
        %1466 = vset.pattern.permute.xlu0 0
        %1467 = vperm.xlu0 %1466, %v1375
        %v1468 = vpop.permute.xlu0 %1467
        %1471 = vset.pattern.permute.xlu0 0
        %1472 = vperm.xlu0 %1471, %v1376
        %v1473 = vpop.permute.xlu0 %1472
        %1476 = vset.pattern.permute.xlu0 0
        %1477 = vperm.xlu0 %1476, %v1377
        %v1478 = vpop.permute.xlu0 %1477
        %1481 = vset.pattern.permute.xlu0 0
        %1482 = vperm.xlu0 %1481, %v1378
        %v1483 = vpop.permute.xlu0 %1482
        %1486 = vset.pattern.permute.xlu0 0
        %1487 = vperm.xlu0 %1486, %v1379
        %v1488 = vpop.permute.xlu0 %1487
        %1491 = vset.pattern.permute.xlu0 0
        %1492 = vperm.xlu0 %1491, %v1380
        %v1493 = vpop.permute.xlu0 %1492
        %1496 = vset.pattern.permute.xlu0 0
        %1497 = vperm.xlu0 %1496, %v1381
        %v1498 = vpop.permute.xlu0 %1497
        %1501 = vset.pattern.permute.xlu0 0
        %1502 = vperm.xlu0 %1501, %v1382
        %v1503 = vpop.permute.xlu0 %1502
        %1506 = vset.pattern.permute.xlu0 0
        %1507 = vperm.xlu0 %1506, %v1383
        %v1508 = vpop.permute.xlu0 %1507
        %1511 = vset.pattern.permute.xlu0 0
        %1512 = vperm.xlu0 %1511, %v1384
        %v1513 = vpop.permute.xlu0 %1512
        %1516 = vset.pattern.permute.xlu0 0
        %1517 = vperm.xlu0 %1516, %v1385
        %v1518 = vpop.permute.xlu0 %1517
        %1521 = vset.pattern.permute.xlu0 0
        %1522 = vperm.xlu0 %1521, %v1386
        %v1523 = vpop.permute.xlu0 %1522
        %1526 = vset.pattern.permute.xlu0 0
        %1527 = vperm.xlu0 %1526, %v1387
        %v1528 = vpop.permute.xlu0 %1527
        %1531 = vset.pattern.permute.xlu0 0
        %1532 = vperm.xlu0 %1531, %v1388
        %v1533 = vpop.permute.xlu0 %1532
        %1536 = vset.pattern.permute.xlu0 0
        %1537 = vperm.xlu0 %1536, %v1389
        %v1538 = vpop.permute.xlu0 %1537
        %1541 = vset.pattern.permute.xlu0 0
        %1542 = vperm.xlu0 %1541, %v1390
        %v1543 = vpop.permute.xlu0 %1542
        %1546 = vset.pattern.permute.xlu0 0
        %1547 = vperm.xlu0 %1546, %v1391
        %v1548 = vpop.permute.xlu0 %1547
        %1551 = vset.pattern.permute.xlu0 0
        %1552 = vperm.xlu0 %1551, %v1392
        %v1553 = vpop.permute.xlu0 %1552
        %v1556 = vlaneseq
        %v1557 = vshrl.u32 %v1556, 7
        %v1558 = vsub.s32 0, %v1557
        %v1559 = vrot.slane %v1394, %v1558
        %v1561 = vmul.f32 %v1398, %v1559
        %v1562 = vmul.f32 %v1403, %v1559
        %v1563 = vmul.f32 %v1408, %v1559
        %v1564 = vmul.f32 %v1413, %v1559
        %v1565 = vmul.f32 %v1418, %v1559
        %v1566 = vmul.f32 %v1423, %v1559
        %v1567 = vmul.f32 %v1428, %v1559
        %v1568 = vmul.f32 %v1433, %v1559
        %v1569 = vmul.f32 %v1438, %v1559
        %v1570 = vmul.f32 %v1443, %v1559
        %v1571 = vmul.f32 %v1448, %v1559
        %v1572 = vmul.f32 %v1453, %v1559
        %v1573 = vmul.f32 %v1458, %v1559
        %v1574 = vmul.f32 %v1463, %v1559
        %v1575 = vmul.f32 %v1468, %v1559
        %v1576 = vmul.f32 %v1473, %v1559
        %v1577 = vmul.f32 %v1478, %v1559
        %v1578 = vmul.f32 %v1483, %v1559
        %v1579 = vmul.f32 %v1488, %v1559
        %v1580 = vmul.f32 %v1493, %v1559
        %v1581 = vmul.f32 %v1498, %v1559
        %v1582 = vmul.f32 %v1503, %v1559
        %v1583 = vmul.f32 %v1508, %v1559
        %v1584 = vmul.f32 %v1513, %v1559
        %v1585 = vmul.f32 %v1518, %v1559
        %v1586 = vmul.f32 %v1523, %v1559
        %v1587 = vmul.f32 %v1528, %v1559
        %v1588 = vmul.f32 %v1533, %v1559
        %v1589 = vmul.f32 %v1538, %v1559
        %v1590 = vmul.f32 %v1543, %v1559
        %v1591 = vmul.f32 %v1548, %v1559
        %v1592 = vmul.f32 %v1553, %v1559
        %v1593 = vadd.f32 %v1329, %v1561
        %v1594 = vadd.f32 %v1330, %v1562
        %v1595 = vadd.f32 %v1331, %v1563
        %v1596 = vadd.f32 %v1332, %v1564
        %v1597 = vadd.f32 %v1333, %v1565
        %v1598 = vadd.f32 %v1334, %v1566
        %v1599 = vadd.f32 %v1335, %v1567
        %v1600 = vadd.f32 %v1336, %v1568
        %v1601 = vadd.f32 %v1337, %v1569
        %v1602 = vadd.f32 %v1338, %v1570
        %v1603 = vadd.f32 %v1339, %v1571
        %v1604 = vadd.f32 %v1340, %v1572
        %v1605 = vadd.f32 %v1341, %v1573
        %v1606 = vadd.f32 %v1342, %v1574
        %v1607 = vadd.f32 %v1343, %v1575
        %v1608 = vadd.f32 %v1344, %v1576
        %v1609 = vadd.f32 %v1345, %v1577
        %v1610 = vadd.f32 %v1346, %v1578
        %v1611 = vadd.f32 %v1347, %v1579
        %v1612 = vadd.f32 %v1348, %v1580
        %v1613 = vadd.f32 %v1349, %v1581
        %v1614 = vadd.f32 %v1350, %v1582
        %v1615 = vadd.f32 %v1351, %v1583
        %v1616 = vadd.f32 %v1352, %v1584
        %v1617 = vadd.f32 %v1353, %v1585
        %v1618 = vadd.f32 %v1354, %v1586
        %v1619 = vadd.f32 %v1355, %v1587
        %v1620 = vadd.f32 %v1356, %v1588
        %v1621 = vadd.f32 %v1357, %v1589
        %v1622 = vadd.f32 %v1358, %v1590
        %v1623 = vadd.f32 %v1359, %v1591
        %v1624 = vadd.f32 %v1360, %v1592
        %v1625 = vld [vmem:[%s569 + $0x1] sm:$0xff]
        %v1626 = vld [vmem:[%s569 + $0x9] sm:$0xff]
        %v1627 = vld [vmem:[%s569 + $0x19] sm:$0xff]
        %v1628 = vld [vmem:[%s569 + $0x21] sm:$0xff]
        %v1629 = vld [vmem:[%s569 + $0x31] sm:$0xff]
        %v1630 = vld [vmem:[%s569 + $0x39] sm:$0xff]
        %v1631 = vld [vmem:[%s569 + $0x49] sm:$0xff]
        %v1632 = vld [vmem:[%s569 + $0x51] sm:$0xff]
        %v1633 = vld [vmem:[%s569 + $0x61] sm:$0xff]
        %v1634 = vld [vmem:[%s569 + $0x69] sm:$0xff]
        %v1635 = vld [vmem:[%s569 + $0x79] sm:$0xff]
        %v1636 = vld [vmem:[%s569 + $0x81] sm:$0xff]
        %v1637 = vld [vmem:[%s569 + $0x91] sm:$0xff]
        %v1638 = vld [vmem:[%s569 + $0x99] sm:$0xff]
        %v1639 = vld [vmem:[%s569 + $0xa9] sm:$0xff]
        %v1640 = vld [vmem:[%s569 + $0xb1] sm:$0xff]
        %v1641 = vld [vmem:[%s569 + $0xc1] sm:$0xff]
        %v1642 = vld [vmem:[%s569 + $0xc9] sm:$0xff]
        %v1643 = vld [vmem:[%s569 + $0xd9] sm:$0xff]
        %v1644 = vld [vmem:[%s569 + $0xe1] sm:$0xff]
        %v1645 = vld [vmem:[%s569 + $0xf1] sm:$0xff]
        %v1646 = vld [vmem:[%s569 + $0xf9] sm:$0xff]
        %v1647 = vld [vmem:[%s569 + $0x109] sm:$0xff]
        %v1648 = vld [vmem:[%s569 + $0x111] sm:$0xff]
        %v1649 = vld [vmem:[%s569 + $0x121] sm:$0xff]
        %v1650 = vld [vmem:[%s569 + $0x129] sm:$0xff]
        %v1651 = vld [vmem:[%s569 + $0x139] sm:$0xff]
        %v1652 = vld [vmem:[%s569 + $0x141] sm:$0xff]
        %v1653 = vld [vmem:[%s569 + $0x151] sm:$0xff]
        %v1654 = vld [vmem:[%s569 + $0x159] sm:$0xff]
        %v1655 = vld [vmem:[%s569 + $0x169] sm:$0xff]
        %v1656 = vld [vmem:[%s569 + $0x171] sm:$0xff]
        %s1657 = scalar_lea.vmem %s1, 4
        %v1658 = vld [vmem:[%s1657] sm:$0x1]
        %1660 = vset.pattern.permute.xlu0 0
        %1661 = vperm.xlu0 %1660, %v1625
        %v1662 = vpop.permute.xlu0 %1661
        %1665 = vset.pattern.permute.xlu0 0
        %1666 = vperm.xlu0 %1665, %v1626
        %v1667 = vpop.permute.xlu0 %1666
        %1670 = vset.pattern.permute.xlu0 0
        %1671 = vperm.xlu0 %1670, %v1627
        %v1672 = vpop.permute.xlu0 %1671
        %1675 = vset.pattern.permute.xlu0 0
        %1676 = vperm.xlu0 %1675, %v1628
        %v1677 = vpop.permute.xlu0 %1676
        %1680 = vset.pattern.permute.xlu0 0
        %1681 = vperm.xlu0 %1680, %v1629
        %v1682 = vpop.permute.xlu0 %1681
        %1685 = vset.pattern.permute.xlu0 0
        %1686 = vperm.xlu0 %1685, %v1630
        %v1687 = vpop.permute.xlu0 %1686
        %1690 = vset.pattern.permute.xlu0 0
        %1691 = vperm.xlu0 %1690, %v1631
        %v1692 = vpop.permute.xlu0 %1691
        %1695 = vset.pattern.permute.xlu0 0
        %1696 = vperm.xlu0 %1695, %v1632
        %v1697 = vpop.permute.xlu0 %1696
        %1700 = vset.pattern.permute.xlu0 0
        %1701 = vperm.xlu0 %1700, %v1633
        %v1702 = vpop.permute.xlu0 %1701
        %1705 = vset.pattern.permute.xlu0 0
        %1706 = vperm.xlu0 %1705, %v1634
        %v1707 = vpop.permute.xlu0 %1706
        %1710 = vset.pattern.permute.xlu0 0
        %1711 = vperm.xlu0 %1710, %v1635
        %v1712 = vpop.permute.xlu0 %1711
        %1715 = vset.pattern.permute.xlu0 0
        %1716 = vperm.xlu0 %1715, %v1636
        %v1717 = vpop.permute.xlu0 %1716
        %1720 = vset.pattern.permute.xlu0 0
        %1721 = vperm.xlu0 %1720, %v1637
        %v1722 = vpop.permute.xlu0 %1721
        %1725 = vset.pattern.permute.xlu0 0
        %1726 = vperm.xlu0 %1725, %v1638
        %v1727 = vpop.permute.xlu0 %1726
        %1730 = vset.pattern.permute.xlu0 0
        %1731 = vperm.xlu0 %1730, %v1639
        %v1732 = vpop.permute.xlu0 %1731
        %1735 = vset.pattern.permute.xlu0 0
        %1736 = vperm.xlu0 %1735, %v1640
        %v1737 = vpop.permute.xlu0 %1736
        %1740 = vset.pattern.permute.xlu0 0
        %1741 = vperm.xlu0 %1740, %v1641
        %v1742 = vpop.permute.xlu0 %1741
        %1745 = vset.pattern.permute.xlu0 0
        %1746 = vperm.xlu0 %1745, %v1642
        %v1747 = vpop.permute.xlu0 %1746
        %1750 = vset.pattern.permute.xlu0 0
        %1751 = vperm.xlu0 %1750, %v1643
        %v1752 = vpop.permute.xlu0 %1751
        %1755 = vset.pattern.permute.xlu0 0
        %1756 = vperm.xlu0 %1755, %v1644
        %v1757 = vpop.permute.xlu0 %1756
        %1760 = vset.pattern.permute.xlu0 0
        %1761 = vperm.xlu0 %1760, %v1645
        %v1762 = vpop.permute.xlu0 %1761
        %1765 = vset.pattern.permute.xlu0 0
        %1766 = vperm.xlu0 %1765, %v1646
        %v1767 = vpop.permute.xlu0 %1766
        %1770 = vset.pattern.permute.xlu0 0
        %1771 = vperm.xlu0 %1770, %v1647
        %v1772 = vpop.permute.xlu0 %1771
        %1775 = vset.pattern.permute.xlu0 0
        %1776 = vperm.xlu0 %1775, %v1648
        %v1777 = vpop.permute.xlu0 %1776
        %1780 = vset.pattern.permute.xlu0 0
        %1781 = vperm.xlu0 %1780, %v1649
        %v1782 = vpop.permute.xlu0 %1781
        %1785 = vset.pattern.permute.xlu0 0
        %1786 = vperm.xlu0 %1785, %v1650
        %v1787 = vpop.permute.xlu0 %1786
        %1790 = vset.pattern.permute.xlu0 0
        %1791 = vperm.xlu0 %1790, %v1651
        %v1792 = vpop.permute.xlu0 %1791
        %1795 = vset.pattern.permute.xlu0 0
        %1796 = vperm.xlu0 %1795, %v1652
        %v1797 = vpop.permute.xlu0 %1796
        %1800 = vset.pattern.permute.xlu0 0
        %1801 = vperm.xlu0 %1800, %v1653
        %v1802 = vpop.permute.xlu0 %1801
        %1805 = vset.pattern.permute.xlu0 0
        %1806 = vperm.xlu0 %1805, %v1654
        %v1807 = vpop.permute.xlu0 %1806
        %1810 = vset.pattern.permute.xlu0 0
        %1811 = vperm.xlu0 %1810, %v1655
        %v1812 = vpop.permute.xlu0 %1811
        %1815 = vset.pattern.permute.xlu0 0
        %1816 = vperm.xlu0 %1815, %v1656
        %v1817 = vpop.permute.xlu0 %1816
        %v1820 = vlaneseq
        %v1821 = vshrl.u32 %v1820, 7
        %v1822 = vsub.s32 0, %v1821
        %v1823 = vrot.slane %v1658, %v1822
        %v1825 = vmul.f32 %v1662, %v1823
        %v1826 = vmul.f32 %v1667, %v1823
        %v1827 = vmul.f32 %v1672, %v1823
        %v1828 = vmul.f32 %v1677, %v1823
        %v1829 = vmul.f32 %v1682, %v1823
        %v1830 = vmul.f32 %v1687, %v1823
        %v1831 = vmul.f32 %v1692, %v1823
        %v1832 = vmul.f32 %v1697, %v1823
        %v1833 = vmul.f32 %v1702, %v1823
        %v1834 = vmul.f32 %v1707, %v1823
        %v1835 = vmul.f32 %v1712, %v1823
        %v1836 = vmul.f32 %v1717, %v1823
        %v1837 = vmul.f32 %v1722, %v1823
        %v1838 = vmul.f32 %v1727, %v1823
        %v1839 = vmul.f32 %v1732, %v1823
        %v1840 = vmul.f32 %v1737, %v1823
        %v1841 = vmul.f32 %v1742, %v1823
        %v1842 = vmul.f32 %v1747, %v1823
        %v1843 = vmul.f32 %v1752, %v1823
        %v1844 = vmul.f32 %v1757, %v1823
        %v1845 = vmul.f32 %v1762, %v1823
        %v1846 = vmul.f32 %v1767, %v1823
        %v1847 = vmul.f32 %v1772, %v1823
        %v1848 = vmul.f32 %v1777, %v1823
        %v1849 = vmul.f32 %v1782, %v1823
        %v1850 = vmul.f32 %v1787, %v1823
        %v1851 = vmul.f32 %v1792, %v1823
        %v1852 = vmul.f32 %v1797, %v1823
        %v1853 = vmul.f32 %v1802, %v1823
        %v1854 = vmul.f32 %v1807, %v1823
        %v1855 = vmul.f32 %v1812, %v1823
        %v1856 = vmul.f32 %v1817, %v1823
        %v1857 = vadd.f32 %v1593, %v1825
        %v1858 = vadd.f32 %v1594, %v1826
        %v1859 = vadd.f32 %v1595, %v1827
        %v1860 = vadd.f32 %v1596, %v1828
        %v1861 = vadd.f32 %v1597, %v1829
        %v1862 = vadd.f32 %v1598, %v1830
        %v1863 = vadd.f32 %v1599, %v1831
        %v1864 = vadd.f32 %v1600, %v1832
        %v1865 = vadd.f32 %v1601, %v1833
        %v1866 = vadd.f32 %v1602, %v1834
        %v1867 = vadd.f32 %v1603, %v1835
        %v1868 = vadd.f32 %v1604, %v1836
        %v1869 = vadd.f32 %v1605, %v1837
        %v1870 = vadd.f32 %v1606, %v1838
        %v1871 = vadd.f32 %v1607, %v1839
        %v1872 = vadd.f32 %v1608, %v1840
        %v1873 = vadd.f32 %v1609, %v1841
        %v1874 = vadd.f32 %v1610, %v1842
        %v1875 = vadd.f32 %v1611, %v1843
        %v1876 = vadd.f32 %v1612, %v1844
        %v1877 = vadd.f32 %v1613, %v1845
        %v1878 = vadd.f32 %v1614, %v1846
        %v1879 = vadd.f32 %v1615, %v1847
        %v1880 = vadd.f32 %v1616, %v1848
        %v1881 = vadd.f32 %v1617, %v1849
        %v1882 = vadd.f32 %v1618, %v1850
        %v1883 = vadd.f32 %v1619, %v1851
        %v1884 = vadd.f32 %v1620, %v1852
        %v1885 = vadd.f32 %v1621, %v1853
        %v1886 = vadd.f32 %v1622, %v1854
        %v1887 = vadd.f32 %v1623, %v1855
        %v1888 = vadd.f32 %v1624, %v1856
        %v1889 = vld [vmem:[%s569 + $0x2] sm:$0xff]
        %v1890 = vld [vmem:[%s569 + $0xa] sm:$0xff]
        %v1891 = vld [vmem:[%s569 + $0x1a] sm:$0xff]
        %v1892 = vld [vmem:[%s569 + $0x22] sm:$0xff]
        %v1893 = vld [vmem:[%s569 + $0x32] sm:$0xff]
        %v1894 = vld [vmem:[%s569 + $0x3a] sm:$0xff]
        %v1895 = vld [vmem:[%s569 + $0x4a] sm:$0xff]
        %v1896 = vld [vmem:[%s569 + $0x52] sm:$0xff]
        %v1897 = vld [vmem:[%s569 + $0x62] sm:$0xff]
        %v1898 = vld [vmem:[%s569 + $0x6a] sm:$0xff]
        %v1899 = vld [vmem:[%s569 + $0x7a] sm:$0xff]
        %v1900 = vld [vmem:[%s569 + $0x82] sm:$0xff]
        %v1901 = vld [vmem:[%s569 + $0x92] sm:$0xff]
        %v1902 = vld [vmem:[%s569 + $0x9a] sm:$0xff]
        %v1903 = vld [vmem:[%s569 + $0xaa] sm:$0xff]
        %v1904 = vld [vmem:[%s569 + $0xb2] sm:$0xff]
        %v1905 = vld [vmem:[%s569 + $0xc2] sm:$0xff]
        %v1906 = vld [vmem:[%s569 + $0xca] sm:$0xff]
        %v1907 = vld [vmem:[%s569 + $0xda] sm:$0xff]
        %v1908 = vld [vmem:[%s569 + $0xe2] sm:$0xff]
        %v1909 = vld [vmem:[%s569 + $0xf2] sm:$0xff]
        %v1910 = vld [vmem:[%s569 + $0xfa] sm:$0xff]
        %v1911 = vld [vmem:[%s569 + $0x10a] sm:$0xff]
        %v1912 = vld [vmem:[%s569 + $0x112] sm:$0xff]
        %v1913 = vld [vmem:[%s569 + $0x122] sm:$0xff]
        %v1914 = vld [vmem:[%s569 + $0x12a] sm:$0xff]
        %v1915 = vld [vmem:[%s569 + $0x13a] sm:$0xff]
        %v1916 = vld [vmem:[%s569 + $0x142] sm:$0xff]
        %v1917 = vld [vmem:[%s569 + $0x152] sm:$0xff]
        %v1918 = vld [vmem:[%s569 + $0x15a] sm:$0xff]
        %v1919 = vld [vmem:[%s569 + $0x16a] sm:$0xff]
        %v1920 = vld [vmem:[%s569 + $0x172] sm:$0xff]
        %s1921 = scalar_lea.vmem %s1, 5
        %v1922 = vld [vmem:[%s1921] sm:$0x1]
        %1924 = vset.pattern.permute.xlu0 0
        %1925 = vperm.xlu0 %1924, %v1889
        %v1926 = vpop.permute.xlu0 %1925
        %1929 = vset.pattern.permute.xlu0 0
        %1930 = vperm.xlu0 %1929, %v1890
        %v1931 = vpop.permute.xlu0 %1930
        %1934 = vset.pattern.permute.xlu0 0
        %1935 = vperm.xlu0 %1934, %v1891
        %v1936 = vpop.permute.xlu0 %1935
        %1939 = vset.pattern.permute.xlu0 0
        %1940 = vperm.xlu0 %1939, %v1892
        %v1941 = vpop.permute.xlu0 %1940
        %1944 = vset.pattern.permute.xlu0 0
        %1945 = vperm.xlu0 %1944, %v1893
        %v1946 = vpop.permute.xlu0 %1945
        %1949 = vset.pattern.permute.xlu0 0
        %1950 = vperm.xlu0 %1949, %v1894
        %v1951 = vpop.permute.xlu0 %1950
        %1954 = vset.pattern.permute.xlu0 0
        %1955 = vperm.xlu0 %1954, %v1895
        %v1956 = vpop.permute.xlu0 %1955
        %1959 = vset.pattern.permute.xlu0 0
        %1960 = vperm.xlu0 %1959, %v1896
        %v1961 = vpop.permute.xlu0 %1960
        %1964 = vset.pattern.permute.xlu0 0
        %1965 = vperm.xlu0 %1964, %v1897
        %v1966 = vpop.permute.xlu0 %1965
        %1969 = vset.pattern.permute.xlu0 0
        %1970 = vperm.xlu0 %1969, %v1898
        %v1971 = vpop.permute.xlu0 %1970
        %1974 = vset.pattern.permute.xlu0 0
        %1975 = vperm.xlu0 %1974, %v1899
        %v1976 = vpop.permute.xlu0 %1975
        %1979 = vset.pattern.permute.xlu0 0
        %1980 = vperm.xlu0 %1979, %v1900
        %v1981 = vpop.permute.xlu0 %1980
        %1984 = vset.pattern.permute.xlu0 0
        %1985 = vperm.xlu0 %1984, %v1901
        %v1986 = vpop.permute.xlu0 %1985
        %1989 = vset.pattern.permute.xlu0 0
        %1990 = vperm.xlu0 %1989, %v1902
        %v1991 = vpop.permute.xlu0 %1990
        %1994 = vset.pattern.permute.xlu0 0
        %1995 = vperm.xlu0 %1994, %v1903
        %v1996 = vpop.permute.xlu0 %1995
        %1999 = vset.pattern.permute.xlu0 0
        %2000 = vperm.xlu0 %1999, %v1904
        %v2001 = vpop.permute.xlu0 %2000
        %2004 = vset.pattern.permute.xlu0 0
        %2005 = vperm.xlu0 %2004, %v1905
        %v2006 = vpop.permute.xlu0 %2005
        %2009 = vset.pattern.permute.xlu0 0
        %2010 = vperm.xlu0 %2009, %v1906
        %v2011 = vpop.permute.xlu0 %2010
        %2014 = vset.pattern.permute.xlu0 0
        %2015 = vperm.xlu0 %2014, %v1907
        %v2016 = vpop.permute.xlu0 %2015
        %2019 = vset.pattern.permute.xlu0 0
        %2020 = vperm.xlu0 %2019, %v1908
        %v2021 = vpop.permute.xlu0 %2020
        %2024 = vset.pattern.permute.xlu0 0
        %2025 = vperm.xlu0 %2024, %v1909
        %v2026 = vpop.permute.xlu0 %2025
        %2029 = vset.pattern.permute.xlu0 0
        %2030 = vperm.xlu0 %2029, %v1910
        %v2031 = vpop.permute.xlu0 %2030
        %2034 = vset.pattern.permute.xlu0 0
        %2035 = vperm.xlu0 %2034, %v1911
        %v2036 = vpop.permute.xlu0 %2035
        %2039 = vset.pattern.permute.xlu0 0
        %2040 = vperm.xlu0 %2039, %v1912
        %v2041 = vpop.permute.xlu0 %2040
        %2044 = vset.pattern.permute.xlu0 0
        %2045 = vperm.xlu0 %2044, %v1913
        %v2046 = vpop.permute.xlu0 %2045
        %2049 = vset.pattern.permute.xlu0 0
        %2050 = vperm.xlu0 %2049, %v1914
        %v2051 = vpop.permute.xlu0 %2050
        %2054 = vset.pattern.permute.xlu0 0
        %2055 = vperm.xlu0 %2054, %v1915
        %v2056 = vpop.permute.xlu0 %2055
        %2059 = vset.pattern.permute.xlu0 0
        %2060 = vperm.xlu0 %2059, %v1916
        %v2061 = vpop.permute.xlu0 %2060
        %2064 = vset.pattern.permute.xlu0 0
        %2065 = vperm.xlu0 %2064, %v1917
        %v2066 = vpop.permute.xlu0 %2065
        %2069 = vset.pattern.permute.xlu0 0
        %2070 = vperm.xlu0 %2069, %v1918
        %v2071 = vpop.permute.xlu0 %2070
        %2074 = vset.pattern.permute.xlu0 0
        %2075 = vperm.xlu0 %2074, %v1919
        %v2076 = vpop.permute.xlu0 %2075
        %2079 = vset.pattern.permute.xlu0 0
        %2080 = vperm.xlu0 %2079, %v1920
        %v2081 = vpop.permute.xlu0 %2080
        %v2084 = vlaneseq
        %v2085 = vshrl.u32 %v2084, 7
        %v2086 = vsub.s32 0, %v2085
        %v2087 = vrot.slane %v1922, %v2086
        %v2089 = vmul.f32 %v1926, %v2087
        %v2090 = vmul.f32 %v1931, %v2087
        %v2091 = vmul.f32 %v1936, %v2087
        %v2092 = vmul.f32 %v1941, %v2087
        %v2093 = vmul.f32 %v1946, %v2087
        %v2094 = vmul.f32 %v1951, %v2087
        %v2095 = vmul.f32 %v1956, %v2087
        %v2096 = vmul.f32 %v1961, %v2087
        %v2097 = vmul.f32 %v1966, %v2087
        %v2098 = vmul.f32 %v1971, %v2087
        %v2099 = vmul.f32 %v1976, %v2087
        %v2100 = vmul.f32 %v1981, %v2087
        %v2101 = vmul.f32 %v1986, %v2087
        %v2102 = vmul.f32 %v1991, %v2087
        %v2103 = vmul.f32 %v1996, %v2087
        %v2104 = vmul.f32 %v2001, %v2087
        %v2105 = vmul.f32 %v2006, %v2087
        %v2106 = vmul.f32 %v2011, %v2087
        %v2107 = vmul.f32 %v2016, %v2087
        %v2108 = vmul.f32 %v2021, %v2087
        %v2109 = vmul.f32 %v2026, %v2087
        %v2110 = vmul.f32 %v2031, %v2087
        %v2111 = vmul.f32 %v2036, %v2087
        %v2112 = vmul.f32 %v2041, %v2087
        %v2113 = vmul.f32 %v2046, %v2087
        %v2114 = vmul.f32 %v2051, %v2087
        %v2115 = vmul.f32 %v2056, %v2087
        %v2116 = vmul.f32 %v2061, %v2087
        %v2117 = vmul.f32 %v2066, %v2087
        %v2118 = vmul.f32 %v2071, %v2087
        %v2119 = vmul.f32 %v2076, %v2087
        %v2120 = vmul.f32 %v2081, %v2087
        %v2121 = vadd.f32 %v1857, %v2089
        %v2122 = vadd.f32 %v1858, %v2090
        %v2123 = vadd.f32 %v1859, %v2091
        %v2124 = vadd.f32 %v1860, %v2092
        %v2125 = vadd.f32 %v1861, %v2093
        %v2126 = vadd.f32 %v1862, %v2094
        %v2127 = vadd.f32 %v1863, %v2095
        %v2128 = vadd.f32 %v1864, %v2096
        %v2129 = vadd.f32 %v1865, %v2097
        %v2130 = vadd.f32 %v1866, %v2098
        %v2131 = vadd.f32 %v1867, %v2099
        %v2132 = vadd.f32 %v1868, %v2100
        %v2133 = vadd.f32 %v1869, %v2101
        %v2134 = vadd.f32 %v1870, %v2102
        %v2135 = vadd.f32 %v1871, %v2103
        %v2136 = vadd.f32 %v1872, %v2104
        %v2137 = vadd.f32 %v1873, %v2105
        %v2138 = vadd.f32 %v1874, %v2106
        %v2139 = vadd.f32 %v1875, %v2107
        %v2140 = vadd.f32 %v1876, %v2108
        %v2141 = vadd.f32 %v1877, %v2109
        %v2142 = vadd.f32 %v1878, %v2110
        %v2143 = vadd.f32 %v1879, %v2111
        %v2144 = vadd.f32 %v1880, %v2112
        %v2145 = vadd.f32 %v1881, %v2113
        %v2146 = vadd.f32 %v1882, %v2114
        %v2147 = vadd.f32 %v1883, %v2115
        %v2148 = vadd.f32 %v1884, %v2116
        %v2149 = vadd.f32 %v1885, %v2117
        %v2150 = vadd.f32 %v1886, %v2118
        %v2151 = vadd.f32 %v1887, %v2119
        %v2152 = vadd.f32 %v1888, %v2120
        %s2153 = scalar_lea.vmem [#allocation2], 48
        %v2154 = vld [vmem:[%s2153] sm:$0xff]
        %v2155 = vld [vmem:[%s2153 + $0x8] sm:$0xff]
        %v2156 = vld [vmem:[%s2153 + $0x18] sm:$0xff]
        %v2157 = vld [vmem:[%s2153 + $0x20] sm:$0xff]
        %v2158 = vld [vmem:[%s2153 + $0x30] sm:$0xff]
        %v2159 = vld [vmem:[%s2153 + $0x38] sm:$0xff]
        %v2160 = vld [vmem:[%s2153 + $0x48] sm:$0xff]
        %v2161 = vld [vmem:[%s2153 + $0x50] sm:$0xff]
        %v2162 = vld [vmem:[%s2153 + $0x60] sm:$0xff]
        %v2163 = vld [vmem:[%s2153 + $0x68] sm:$0xff]
        %v2164 = vld [vmem:[%s2153 + $0x78] sm:$0xff]
        %v2165 = vld [vmem:[%s2153 + $0x80] sm:$0xff]
        %v2166 = vld [vmem:[%s2153 + $0x90] sm:$0xff]
        %v2167 = vld [vmem:[%s2153 + $0x98] sm:$0xff]
        %v2168 = vld [vmem:[%s2153 + $0xa8] sm:$0xff]
        %v2169 = vld [vmem:[%s2153 + $0xb0] sm:$0xff]
        %v2170 = vld [vmem:[%s2153 + $0xc0] sm:$0xff]
        %v2171 = vld [vmem:[%s2153 + $0xc8] sm:$0xff]
        %v2172 = vld [vmem:[%s2153 + $0xd8] sm:$0xff]
        %v2173 = vld [vmem:[%s2153 + $0xe0] sm:$0xff]
        %v2174 = vld [vmem:[%s2153 + $0xf0] sm:$0xff]
        %v2175 = vld [vmem:[%s2153 + $0xf8] sm:$0xff]
        %v2176 = vld [vmem:[%s2153 + $0x108] sm:$0xff]
        %v2177 = vld [vmem:[%s2153 + $0x110] sm:$0xff]
        %v2178 = vld [vmem:[%s2153 + $0x120] sm:$0xff]
        %v2179 = vld [vmem:[%s2153 + $0x128] sm:$0xff]
        %v2180 = vld [vmem:[%s2153 + $0x138] sm:$0xff]
        %v2181 = vld [vmem:[%s2153 + $0x140] sm:$0xff]
        %v2182 = vld [vmem:[%s2153 + $0x150] sm:$0xff]
        %v2183 = vld [vmem:[%s2153 + $0x158] sm:$0xff]
        %v2184 = vld [vmem:[%s2153 + $0x168] sm:$0xff]
        %v2185 = vld [vmem:[%s2153 + $0x170] sm:$0xff]
        %s2186 = scalar_lea.vmem %s1, 6
        %v2187 = vld [vmem:[%s2186] sm:$0x1]
        %2189 = vset.pattern.permute.xlu0 0
        %2190 = vperm.xlu0 %2189, %v2154
        %v2191 = vpop.permute.xlu0 %2190
        %2194 = vset.pattern.permute.xlu0 0
        %2195 = vperm.xlu0 %2194, %v2155
        %v2196 = vpop.permute.xlu0 %2195
        %2199 = vset.pattern.permute.xlu0 0
        %2200 = vperm.xlu0 %2199, %v2156
        %v2201 = vpop.permute.xlu0 %2200
        %2204 = vset.pattern.permute.xlu0 0
        %2205 = vperm.xlu0 %2204, %v2157
        %v2206 = vpop.permute.xlu0 %2205
        %2209 = vset.pattern.permute.xlu0 0
        %2210 = vperm.xlu0 %2209, %v2158
        %v2211 = vpop.permute.xlu0 %2210
        %2214 = vset.pattern.permute.xlu0 0
        %2215 = vperm.xlu0 %2214, %v2159
        %v2216 = vpop.permute.xlu0 %2215
        %2219 = vset.pattern.permute.xlu0 0
        %2220 = vperm.xlu0 %2219, %v2160
        %v2221 = vpop.permute.xlu0 %2220
        %2224 = vset.pattern.permute.xlu0 0
        %2225 = vperm.xlu0 %2224, %v2161
        %v2226 = vpop.permute.xlu0 %2225
        %2229 = vset.pattern.permute.xlu0 0
        %2230 = vperm.xlu0 %2229, %v2162
        %v2231 = vpop.permute.xlu0 %2230
        %2234 = vset.pattern.permute.xlu0 0
        %2235 = vperm.xlu0 %2234, %v2163
        %v2236 = vpop.permute.xlu0 %2235
        %2239 = vset.pattern.permute.xlu0 0
        %2240 = vperm.xlu0 %2239, %v2164
        %v2241 = vpop.permute.xlu0 %2240
        %2244 = vset.pattern.permute.xlu0 0
        %2245 = vperm.xlu0 %2244, %v2165
        %v2246 = vpop.permute.xlu0 %2245
        %2249 = vset.pattern.permute.xlu0 0
        %2250 = vperm.xlu0 %2249, %v2166
        %v2251 = vpop.permute.xlu0 %2250
        %2254 = vset.pattern.permute.xlu0 0
        %2255 = vperm.xlu0 %2254, %v2167
        %v2256 = vpop.permute.xlu0 %2255
        %2259 = vset.pattern.permute.xlu0 0
        %2260 = vperm.xlu0 %2259, %v2168
        %v2261 = vpop.permute.xlu0 %2260
        %2264 = vset.pattern.permute.xlu0 0
        %2265 = vperm.xlu0 %2264, %v2169
        %v2266 = vpop.permute.xlu0 %2265
        %2269 = vset.pattern.permute.xlu0 0
        %2270 = vperm.xlu0 %2269, %v2170
        %v2271 = vpop.permute.xlu0 %2270
        %2274 = vset.pattern.permute.xlu0 0
        %2275 = vperm.xlu0 %2274, %v2171
        %v2276 = vpop.permute.xlu0 %2275
        %2279 = vset.pattern.permute.xlu0 0
        %2280 = vperm.xlu0 %2279, %v2172
        %v2281 = vpop.permute.xlu0 %2280
        %2284 = vset.pattern.permute.xlu0 0
        %2285 = vperm.xlu0 %2284, %v2173
        %v2286 = vpop.permute.xlu0 %2285
        %2289 = vset.pattern.permute.xlu0 0
        %2290 = vperm.xlu0 %2289, %v2174
        %v2291 = vpop.permute.xlu0 %2290
        %2294 = vset.pattern.permute.xlu0 0
        %2295 = vperm.xlu0 %2294, %v2175
        %v2296 = vpop.permute.xlu0 %2295
        %2299 = vset.pattern.permute.xlu0 0
        %2300 = vperm.xlu0 %2299, %v2176
        %v2301 = vpop.permute.xlu0 %2300
        %2304 = vset.pattern.permute.xlu0 0
        %2305 = vperm.xlu0 %2304, %v2177
        %v2306 = vpop.permute.xlu0 %2305
        %2309 = vset.pattern.permute.xlu0 0
        %2310 = vperm.xlu0 %2309, %v2178
        %v2311 = vpop.permute.xlu0 %2310
        %2314 = vset.pattern.permute.xlu0 0
        %2315 = vperm.xlu0 %2314, %v2179
        %v2316 = vpop.permute.xlu0 %2315
        %2319 = vset.pattern.permute.xlu0 0
        %2320 = vperm.xlu0 %2319, %v2180
        %v2321 = vpop.permute.xlu0 %2320
        %2324 = vset.pattern.permute.xlu0 0
        %2325 = vperm.xlu0 %2324, %v2181
        %v2326 = vpop.permute.xlu0 %2325
        %2329 = vset.pattern.permute.xlu0 0
        %2330 = vperm.xlu0 %2329, %v2182
        %v2331 = vpop.permute.xlu0 %2330
        %2334 = vset.pattern.permute.xlu0 0
        %2335 = vperm.xlu0 %2334, %v2183
        %v2336 = vpop.permute.xlu0 %2335
        %2339 = vset.pattern.permute.xlu0 0
        %2340 = vperm.xlu0 %2339, %v2184
        %v2341 = vpop.permute.xlu0 %2340
        %2344 = vset.pattern.permute.xlu0 0
        %2345 = vperm.xlu0 %2344, %v2185
        %v2346 = vpop.permute.xlu0 %2345
        %v2349 = vlaneseq
        %v2350 = vshrl.u32 %v2349, 7
        %v2351 = vsub.s32 0, %v2350
        %v2352 = vrot.slane %v2187, %v2351
        %v2354 = vmul.f32 %v2191, %v2352
        %v2355 = vmul.f32 %v2196, %v2352
        %v2356 = vmul.f32 %v2201, %v2352
        %v2357 = vmul.f32 %v2206, %v2352
        %v2358 = vmul.f32 %v2211, %v2352
        %v2359 = vmul.f32 %v2216, %v2352
        %v2360 = vmul.f32 %v2221, %v2352
        %v2361 = vmul.f32 %v2226, %v2352
        %v2362 = vmul.f32 %v2231, %v2352
        %v2363 = vmul.f32 %v2236, %v2352
        %v2364 = vmul.f32 %v2241, %v2352
        %v2365 = vmul.f32 %v2246, %v2352
        %v2366 = vmul.f32 %v2251, %v2352
        %v2367 = vmul.f32 %v2256, %v2352
        %v2368 = vmul.f32 %v2261, %v2352
        %v2369 = vmul.f32 %v2266, %v2352
        %v2370 = vmul.f32 %v2271, %v2352
        %v2371 = vmul.f32 %v2276, %v2352
        %v2372 = vmul.f32 %v2281, %v2352
        %v2373 = vmul.f32 %v2286, %v2352
        %v2374 = vmul.f32 %v2291, %v2352
        %v2375 = vmul.f32 %v2296, %v2352
        %v2376 = vmul.f32 %v2301, %v2352
        %v2377 = vmul.f32 %v2306, %v2352
        %v2378 = vmul.f32 %v2311, %v2352
        %v2379 = vmul.f32 %v2316, %v2352
        %v2380 = vmul.f32 %v2321, %v2352
        %v2381 = vmul.f32 %v2326, %v2352
        %v2382 = vmul.f32 %v2331, %v2352
        %v2383 = vmul.f32 %v2336, %v2352
        %v2384 = vmul.f32 %v2341, %v2352
        %v2385 = vmul.f32 %v2346, %v2352
        %v2386 = vadd.f32 %v2121, %v2354
        %v2387 = vadd.f32 %v2122, %v2355
        %v2388 = vadd.f32 %v2123, %v2356
        %v2389 = vadd.f32 %v2124, %v2357
        %v2390 = vadd.f32 %v2125, %v2358
        %v2391 = vadd.f32 %v2126, %v2359
        %v2392 = vadd.f32 %v2127, %v2360
        %v2393 = vadd.f32 %v2128, %v2361
        %v2394 = vadd.f32 %v2129, %v2362
        %v2395 = vadd.f32 %v2130, %v2363
        %v2396 = vadd.f32 %v2131, %v2364
        %v2397 = vadd.f32 %v2132, %v2365
        %v2398 = vadd.f32 %v2133, %v2366
        %v2399 = vadd.f32 %v2134, %v2367
        %v2400 = vadd.f32 %v2135, %v2368
        %v2401 = vadd.f32 %v2136, %v2369
        %v2402 = vadd.f32 %v2137, %v2370
        %v2403 = vadd.f32 %v2138, %v2371
        %v2404 = vadd.f32 %v2139, %v2372
        %v2405 = vadd.f32 %v2140, %v2373
        %v2406 = vadd.f32 %v2141, %v2374
        %v2407 = vadd.f32 %v2142, %v2375
        %v2408 = vadd.f32 %v2143, %v2376
        %v2409 = vadd.f32 %v2144, %v2377
        %v2410 = vadd.f32 %v2145, %v2378
        %v2411 = vadd.f32 %v2146, %v2379
        %v2412 = vadd.f32 %v2147, %v2380
        %v2413 = vadd.f32 %v2148, %v2381
        %v2414 = vadd.f32 %v2149, %v2382
        %v2415 = vadd.f32 %v2150, %v2383
        %v2416 = vadd.f32 %v2151, %v2384
        %v2417 = vadd.f32 %v2152, %v2385
        %v2418 = vld [vmem:[%s2153 + $0x1] sm:$0xff]
        %v2419 = vld [vmem:[%s2153 + $0x9] sm:$0xff]
        %v2420 = vld [vmem:[%s2153 + $0x19] sm:$0xff]
        %v2421 = vld [vmem:[%s2153 + $0x21] sm:$0xff]
        %v2422 = vld [vmem:[%s2153 + $0x31] sm:$0xff]
        %v2423 = vld [vmem:[%s2153 + $0x39] sm:$0xff]
        %v2424 = vld [vmem:[%s2153 + $0x49] sm:$0xff]
        %v2425 = vld [vmem:[%s2153 + $0x51] sm:$0xff]
        %v2426 = vld [vmem:[%s2153 + $0x61] sm:$0xff]
        %v2427 = vld [vmem:[%s2153 + $0x69] sm:$0xff]
        %v2428 = vld [vmem:[%s2153 + $0x79] sm:$0xff]
        %v2429 = vld [vmem:[%s2153 + $0x81] sm:$0xff]
        %v2430 = vld [vmem:[%s2153 + $0x91] sm:$0xff]
        %v2431 = vld [vmem:[%s2153 + $0x99] sm:$0xff]
        %v2432 = vld [vmem:[%s2153 + $0xa9] sm:$0xff]
        %v2433 = vld [vmem:[%s2153 + $0xb1] sm:$0xff]
        %v2434 = vld [vmem:[%s2153 + $0xc1] sm:$0xff]
        %v2435 = vld [vmem:[%s2153 + $0xc9] sm:$0xff]
        %v2436 = vld [vmem:[%s2153 + $0xd9] sm:$0xff]
        %v2437 = vld [vmem:[%s2153 + $0xe1] sm:$0xff]
        %v2438 = vld [vmem:[%s2153 + $0xf1] sm:$0xff]
        %v2439 = vld [vmem:[%s2153 + $0xf9] sm:$0xff]
        %v2440 = vld [vmem:[%s2153 + $0x109] sm:$0xff]
        %v2441 = vld [vmem:[%s2153 + $0x111] sm:$0xff]
        %v2442 = vld [vmem:[%s2153 + $0x121] sm:$0xff]
        %v2443 = vld [vmem:[%s2153 + $0x129] sm:$0xff]
        %v2444 = vld [vmem:[%s2153 + $0x139] sm:$0xff]
        %v2445 = vld [vmem:[%s2153 + $0x141] sm:$0xff]
        %v2446 = vld [vmem:[%s2153 + $0x151] sm:$0xff]
        %v2447 = vld [vmem:[%s2153 + $0x159] sm:$0xff]
        %v2448 = vld [vmem:[%s2153 + $0x169] sm:$0xff]
        %v2449 = vld [vmem:[%s2153 + $0x171] sm:$0xff]
        %s2450 = scalar_lea.vmem %s1, 7
        %v2451 = vld [vmem:[%s2450] sm:$0x1]
        %2453 = vset.pattern.permute.xlu0 0
        %2454 = vperm.xlu0 %2453, %v2418
        %v2455 = vpop.permute.xlu0 %2454
        %2458 = vset.pattern.permute.xlu0 0
        %2459 = vperm.xlu0 %2458, %v2419
        %v2460 = vpop.permute.xlu0 %2459
        %2463 = vset.pattern.permute.xlu0 0
        %2464 = vperm.xlu0 %2463, %v2420
        %v2465 = vpop.permute.xlu0 %2464
        %2468 = vset.pattern.permute.xlu0 0
        %2469 = vperm.xlu0 %2468, %v2421
        %v2470 = vpop.permute.xlu0 %2469
        %2473 = vset.pattern.permute.xlu0 0
        %2474 = vperm.xlu0 %2473, %v2422
        %v2475 = vpop.permute.xlu0 %2474
        %2478 = vset.pattern.permute.xlu0 0
        %2479 = vperm.xlu0 %2478, %v2423
        %v2480 = vpop.permute.xlu0 %2479
        %2483 = vset.pattern.permute.xlu0 0
        %2484 = vperm.xlu0 %2483, %v2424
        %v2485 = vpop.permute.xlu0 %2484
        %2488 = vset.pattern.permute.xlu0 0
        %2489 = vperm.xlu0 %2488, %v2425
        %v2490 = vpop.permute.xlu0 %2489
        %2493 = vset.pattern.permute.xlu0 0
        %2494 = vperm.xlu0 %2493, %v2426
        %v2495 = vpop.permute.xlu0 %2494
        %2498 = vset.pattern.permute.xlu0 0
        %2499 = vperm.xlu0 %2498, %v2427
        %v2500 = vpop.permute.xlu0 %2499
        %2503 = vset.pattern.permute.xlu0 0
        %2504 = vperm.xlu0 %2503, %v2428
        %v2505 = vpop.permute.xlu0 %2504
        %2508 = vset.pattern.permute.xlu0 0
        %2509 = vperm.xlu0 %2508, %v2429
        %v2510 = vpop.permute.xlu0 %2509
        %2513 = vset.pattern.permute.xlu0 0
        %2514 = vperm.xlu0 %2513, %v2430
        %v2515 = vpop.permute.xlu0 %2514
        %2518 = vset.pattern.permute.xlu0 0
        %2519 = vperm.xlu0 %2518, %v2431
        %v2520 = vpop.permute.xlu0 %2519
        %2523 = vset.pattern.permute.xlu0 0
        %2524 = vperm.xlu0 %2523, %v2432
        %v2525 = vpop.permute.xlu0 %2524
        %2528 = vset.pattern.permute.xlu0 0
        %2529 = vperm.xlu0 %2528, %v2433
        %v2530 = vpop.permute.xlu0 %2529
        %2533 = vset.pattern.permute.xlu0 0
        %2534 = vperm.xlu0 %2533, %v2434
        %v2535 = vpop.permute.xlu0 %2534
        %2538 = vset.pattern.permute.xlu0 0
        %2539 = vperm.xlu0 %2538, %v2435
        %v2540 = vpop.permute.xlu0 %2539
        %2543 = vset.pattern.permute.xlu0 0
        %2544 = vperm.xlu0 %2543, %v2436
        %v2545 = vpop.permute.xlu0 %2544
        %2548 = vset.pattern.permute.xlu0 0
        %2549 = vperm.xlu0 %2548, %v2437
        %v2550 = vpop.permute.xlu0 %2549
        %2553 = vset.pattern.permute.xlu0 0
        %2554 = vperm.xlu0 %2553, %v2438
        %v2555 = vpop.permute.xlu0 %2554
        %2558 = vset.pattern.permute.xlu0 0
        %2559 = vperm.xlu0 %2558, %v2439
        %v2560 = vpop.permute.xlu0 %2559
        %2563 = vset.pattern.permute.xlu0 0
        %2564 = vperm.xlu0 %2563, %v2440
        %v2565 = vpop.permute.xlu0 %2564
        %2568 = vset.pattern.permute.xlu0 0
        %2569 = vperm.xlu0 %2568, %v2441
        %v2570 = vpop.permute.xlu0 %2569
        %2573 = vset.pattern.permute.xlu0 0
        %2574 = vperm.xlu0 %2573, %v2442
        %v2575 = vpop.permute.xlu0 %2574
        %2578 = vset.pattern.permute.xlu0 0
        %2579 = vperm.xlu0 %2578, %v2443
        %v2580 = vpop.permute.xlu0 %2579
        %2583 = vset.pattern.permute.xlu0 0
        %2584 = vperm.xlu0 %2583, %v2444
        %v2585 = vpop.permute.xlu0 %2584
        %2588 = vset.pattern.permute.xlu0 0
        %2589 = vperm.xlu0 %2588, %v2445
        %v2590 = vpop.permute.xlu0 %2589
        %2593 = vset.pattern.permute.xlu0 0
        %2594 = vperm.xlu0 %2593, %v2446
        %v2595 = vpop.permute.xlu0 %2594
        %2598 = vset.pattern.permute.xlu0 0
        %2599 = vperm.xlu0 %2598, %v2447
        %v2600 = vpop.permute.xlu0 %2599
        %2603 = vset.pattern.permute.xlu0 0
        %2604 = vperm.xlu0 %2603, %v2448
        %v2605 = vpop.permute.xlu0 %2604
        %2608 = vset.pattern.permute.xlu0 0
        %2609 = vperm.xlu0 %2608, %v2449
        %v2610 = vpop.permute.xlu0 %2609
        %v2613 = vlaneseq
        %v2614 = vshrl.u32 %v2613, 7
        %v2615 = vsub.s32 0, %v2614
        %v2616 = vrot.slane %v2451, %v2615
        %v2618 = vmul.f32 %v2455, %v2616
        %v2619 = vmul.f32 %v2460, %v2616
        %v2620 = vmul.f32 %v2465, %v2616
        %v2621 = vmul.f32 %v2470, %v2616
        %v2622 = vmul.f32 %v2475, %v2616
        %v2623 = vmul.f32 %v2480, %v2616
        %v2624 = vmul.f32 %v2485, %v2616
        %v2625 = vmul.f32 %v2490, %v2616
        %v2626 = vmul.f32 %v2495, %v2616
        %v2627 = vmul.f32 %v2500, %v2616
        %v2628 = vmul.f32 %v2505, %v2616
        %v2629 = vmul.f32 %v2510, %v2616
        %v2630 = vmul.f32 %v2515, %v2616
        %v2631 = vmul.f32 %v2520, %v2616
        %v2632 = vmul.f32 %v2525, %v2616
        %v2633 = vmul.f32 %v2530, %v2616
        %v2634 = vmul.f32 %v2535, %v2616
        %v2635 = vmul.f32 %v2540, %v2616
        %v2636 = vmul.f32 %v2545, %v2616
        %v2637 = vmul.f32 %v2550, %v2616
        %v2638 = vmul.f32 %v2555, %v2616
        %v2639 = vmul.f32 %v2560, %v2616
        %v2640 = vmul.f32 %v2565, %v2616
        %v2641 = vmul.f32 %v2570, %v2616
        %v2642 = vmul.f32 %v2575, %v2616
        %v2643 = vmul.f32 %v2580, %v2616
        %v2644 = vmul.f32 %v2585, %v2616
        %v2645 = vmul.f32 %v2590, %v2616
        %v2646 = vmul.f32 %v2595, %v2616
        %v2647 = vmul.f32 %v2600, %v2616
        %v2648 = vmul.f32 %v2605, %v2616
        %v2649 = vmul.f32 %v2610, %v2616
        %v2650 = vadd.f32 %v2386, %v2618
        %v2651 = vadd.f32 %v2387, %v2619
        %v2652 = vadd.f32 %v2388, %v2620
        %v2653 = vadd.f32 %v2389, %v2621
        %v2654 = vadd.f32 %v2390, %v2622
        %v2655 = vadd.f32 %v2391, %v2623
        %v2656 = vadd.f32 %v2392, %v2624
        %v2657 = vadd.f32 %v2393, %v2625
        %v2658 = vadd.f32 %v2394, %v2626
        %v2659 = vadd.f32 %v2395, %v2627
        %v2660 = vadd.f32 %v2396, %v2628
        %v2661 = vadd.f32 %v2397, %v2629
        %v2662 = vadd.f32 %v2398, %v2630
        %v2663 = vadd.f32 %v2399, %v2631
        %v2664 = vadd.f32 %v2400, %v2632
        %v2665 = vadd.f32 %v2401, %v2633
        %v2666 = vadd.f32 %v2402, %v2634
        %v2667 = vadd.f32 %v2403, %v2635
        %v2668 = vadd.f32 %v2404, %v2636
        %v2669 = vadd.f32 %v2405, %v2637
        %v2670 = vadd.f32 %v2406, %v2638
        %v2671 = vadd.f32 %v2407, %v2639
        %v2672 = vadd.f32 %v2408, %v2640
        %v2673 = vadd.f32 %v2409, %v2641
        %v2674 = vadd.f32 %v2410, %v2642
        %v2675 = vadd.f32 %v2411, %v2643
        %v2676 = vadd.f32 %v2412, %v2644
        %v2677 = vadd.f32 %v2413, %v2645
        %v2678 = vadd.f32 %v2414, %v2646
        %v2679 = vadd.f32 %v2415, %v2647
        %v2680 = vadd.f32 %v2416, %v2648
        %v2681 = vadd.f32 %v2417, %v2649
        %v2682 = vld [vmem:[%s2153 + $0x2] sm:$0xff]
        %v2683 = vld [vmem:[%s2153 + $0xa] sm:$0xff]
        %v2684 = vld [vmem:[%s2153 + $0x1a] sm:$0xff]
        %v2685 = vld [vmem:[%s2153 + $0x22] sm:$0xff]
        %v2686 = vld [vmem:[%s2153 + $0x32] sm:$0xff]
        %v2687 = vld [vmem:[%s2153 + $0x3a] sm:$0xff]
        %v2688 = vld [vmem:[%s2153 + $0x4a] sm:$0xff]
        %v2689 = vld [vmem:[%s2153 + $0x52] sm:$0xff]
        %v2690 = vld [vmem:[%s2153 + $0x62] sm:$0xff]
        %v2691 = vld [vmem:[%s2153 + $0x6a] sm:$0xff]
        %v2692 = vld [vmem:[%s2153 + $0x7a] sm:$0xff]
        %v2693 = vld [vmem:[%s2153 + $0x82] sm:$0xff]
        %v2694 = vld [vmem:[%s2153 + $0x92] sm:$0xff]
        %v2695 = vld [vmem:[%s2153 + $0x9a] sm:$0xff]
        %v2696 = vld [vmem:[%s2153 + $0xaa] sm:$0xff]
        %v2697 = vld [vmem:[%s2153 + $0xb2] sm:$0xff]
        %v2698 = vld [vmem:[%s2153 + $0xc2] sm:$0xff]
        %v2699 = vld [vmem:[%s2153 + $0xca] sm:$0xff]
        %v2700 = vld [vmem:[%s2153 + $0xda] sm:$0xff]
        %v2701 = vld [vmem:[%s2153 + $0xe2] sm:$0xff]
        %v2702 = vld [vmem:[%s2153 + $0xf2] sm:$0xff]
        %v2703 = vld [vmem:[%s2153 + $0xfa] sm:$0xff]
        %v2704 = vld [vmem:[%s2153 + $0x10a] sm:$0xff]
        %v2705 = vld [vmem:[%s2153 + $0x112] sm:$0xff]
        %v2706 = vld [vmem:[%s2153 + $0x122] sm:$0xff]
        %v2707 = vld [vmem:[%s2153 + $0x12a] sm:$0xff]
        %v2708 = vld [vmem:[%s2153 + $0x13a] sm:$0xff]
        %v2709 = vld [vmem:[%s2153 + $0x142] sm:$0xff]
        %v2710 = vld [vmem:[%s2153 + $0x152] sm:$0xff]
        %v2711 = vld [vmem:[%s2153 + $0x15a] sm:$0xff]
        %v2712 = vld [vmem:[%s2153 + $0x16a] sm:$0xff]
        %v2713 = vld [vmem:[%s2153 + $0x172] sm:$0xff]
        %s2714 = scalar_lea.vmem %s1, 8
        %v2715 = vld [vmem:[%s2714] sm:$0x1]
        %2717 = vset.pattern.permute.xlu0 0
        %2718 = vperm.xlu0 %2717, %v2682
        %v2719 = vpop.permute.xlu0 %2718
        %2722 = vset.pattern.permute.xlu0 0
        %2723 = vperm.xlu0 %2722, %v2683
        %v2724 = vpop.permute.xlu0 %2723
        %2727 = vset.pattern.permute.xlu0 0
        %2728 = vperm.xlu0 %2727, %v2684
        %v2729 = vpop.permute.xlu0 %2728
        %2732 = vset.pattern.permute.xlu0 0
        %2733 = vperm.xlu0 %2732, %v2685
        %v2734 = vpop.permute.xlu0 %2733
        %2737 = vset.pattern.permute.xlu0 0
        %2738 = vperm.xlu0 %2737, %v2686
        %v2739 = vpop.permute.xlu0 %2738
        %2742 = vset.pattern.permute.xlu0 0
        %2743 = vperm.xlu0 %2742, %v2687
        %v2744 = vpop.permute.xlu0 %2743
        %2747 = vset.pattern.permute.xlu0 0
        %2748 = vperm.xlu0 %2747, %v2688
        %v2749 = vpop.permute.xlu0 %2748
        %2752 = vset.pattern.permute.xlu0 0
        %2753 = vperm.xlu0 %2752, %v2689
        %v2754 = vpop.permute.xlu0 %2753
        %2757 = vset.pattern.permute.xlu0 0
        %2758 = vperm.xlu0 %2757, %v2690
        %v2759 = vpop.permute.xlu0 %2758
        %2762 = vset.pattern.permute.xlu0 0
        %2763 = vperm.xlu0 %2762, %v2691
        %v2764 = vpop.permute.xlu0 %2763
        %2767 = vset.pattern.permute.xlu0 0
        %2768 = vperm.xlu0 %2767, %v2692
        %v2769 = vpop.permute.xlu0 %2768
        %2772 = vset.pattern.permute.xlu0 0
        %2773 = vperm.xlu0 %2772, %v2693
        %v2774 = vpop.permute.xlu0 %2773
        %2777 = vset.pattern.permute.xlu0 0
        %2778 = vperm.xlu0 %2777, %v2694
        %v2779 = vpop.permute.xlu0 %2778
        %2782 = vset.pattern.permute.xlu0 0
        %2783 = vperm.xlu0 %2782, %v2695
        %v2784 = vpop.permute.xlu0 %2783
        %2787 = vset.pattern.permute.xlu0 0
        %2788 = vperm.xlu0 %2787, %v2696
        %v2789 = vpop.permute.xlu0 %2788
        %2792 = vset.pattern.permute.xlu0 0
        %2793 = vperm.xlu0 %2792, %v2697
        %v2794 = vpop.permute.xlu0 %2793
        %2797 = vset.pattern.permute.xlu0 0
        %2798 = vperm.xlu0 %2797, %v2698
        %v2799 = vpop.permute.xlu0 %2798
        %2802 = vset.pattern.permute.xlu0 0
        %2803 = vperm.xlu0 %2802, %v2699
        %v2804 = vpop.permute.xlu0 %2803
        %2807 = vset.pattern.permute.xlu0 0
        %2808 = vperm.xlu0 %2807, %v2700
        %v2809 = vpop.permute.xlu0 %2808
        %2812 = vset.pattern.permute.xlu0 0
        %2813 = vperm.xlu0 %2812, %v2701
        %v2814 = vpop.permute.xlu0 %2813
        %2817 = vset.pattern.permute.xlu0 0
        %2818 = vperm.xlu0 %2817, %v2702
        %v2819 = vpop.permute.xlu0 %2818
        %2822 = vset.pattern.permute.xlu0 0
        %2823 = vperm.xlu0 %2822, %v2703
        %v2824 = vpop.permute.xlu0 %2823
        %2827 = vset.pattern.permute.xlu0 0
        %2828 = vperm.xlu0 %2827, %v2704
        %v2829 = vpop.permute.xlu0 %2828
        %2832 = vset.pattern.permute.xlu0 0
        %2833 = vperm.xlu0 %2832, %v2705
        %v2834 = vpop.permute.xlu0 %2833
        %2837 = vset.pattern.permute.xlu0 0
        %2838 = vperm.xlu0 %2837, %v2706
        %v2839 = vpop.permute.xlu0 %2838
        %2842 = vset.pattern.permute.xlu0 0
        %2843 = vperm.xlu0 %2842, %v2707
        %v2844 = vpop.permute.xlu0 %2843
        %2847 = vset.pattern.permute.xlu0 0
        %2848 = vperm.xlu0 %2847, %v2708
        %v2849 = vpop.permute.xlu0 %2848
        %2852 = vset.pattern.permute.xlu0 0
        %2853 = vperm.xlu0 %2852, %v2709
        %v2854 = vpop.permute.xlu0 %2853
        %2857 = vset.pattern.permute.xlu0 0
        %2858 = vperm.xlu0 %2857, %v2710
        %v2859 = vpop.permute.xlu0 %2858
        %2862 = vset.pattern.permute.xlu0 0
        %2863 = vperm.xlu0 %2862, %v2711
        %v2864 = vpop.permute.xlu0 %2863
        %2867 = vset.pattern.permute.xlu0 0
        %2868 = vperm.xlu0 %2867, %v2712
        %v2869 = vpop.permute.xlu0 %2868
        %2872 = vset.pattern.permute.xlu0 0
        %2873 = vperm.xlu0 %2872, %v2713
        %v2874 = vpop.permute.xlu0 %2873
        %v2877 = vlaneseq
        %v2878 = vshrl.u32 %v2877, 7
        %v2879 = vsub.s32 0, %v2878
        %v2880 = vrot.slane %v2715, %v2879
        %v2882 = vmul.f32 %v2719, %v2880
        %v2883 = vmul.f32 %v2724, %v2880
        %v2884 = vmul.f32 %v2729, %v2880
        %v2885 = vmul.f32 %v2734, %v2880
        %v2886 = vmul.f32 %v2739, %v2880
        %v2887 = vmul.f32 %v2744, %v2880
        %v2888 = vmul.f32 %v2749, %v2880
        %v2889 = vmul.f32 %v2754, %v2880
        %v2890 = vmul.f32 %v2759, %v2880
        %v2891 = vmul.f32 %v2764, %v2880
        %v2892 = vmul.f32 %v2769, %v2880
        %v2893 = vmul.f32 %v2774, %v2880
        %v2894 = vmul.f32 %v2779, %v2880
        %v2895 = vmul.f32 %v2784, %v2880
        %v2896 = vmul.f32 %v2789, %v2880
        %v2897 = vmul.f32 %v2794, %v2880
        %v2898 = vmul.f32 %v2799, %v2880
        %v2899 = vmul.f32 %v2804, %v2880
        %v2900 = vmul.f32 %v2809, %v2880
        %v2901 = vmul.f32 %v2814, %v2880
        %v2902 = vmul.f32 %v2819, %v2880
        %v2903 = vmul.f32 %v2824, %v2880
        %v2904 = vmul.f32 %v2829, %v2880
        %v2905 = vmul.f32 %v2834, %v2880
        %v2906 = vmul.f32 %v2839, %v2880
        %v2907 = vmul.f32 %v2844, %v2880
        %v2908 = vmul.f32 %v2849, %v2880
        %v2909 = vmul.f32 %v2854, %v2880
        %v2910 = vmul.f32 %v2859, %v2880
        %v2911 = vmul.f32 %v2864, %v2880
        %v2912 = vmul.f32 %v2869, %v2880
        %v2913 = vmul.f32 %v2874, %v2880
        %v2914 = vadd.f32 %v2650, %v2882
        %v2915 = vadd.f32 %v2651, %v2883
        %v2916 = vadd.f32 %v2652, %v2884
        %v2917 = vadd.f32 %v2653, %v2885
        %v2918 = vadd.f32 %v2654, %v2886
        %v2919 = vadd.f32 %v2655, %v2887
        %v2920 = vadd.f32 %v2656, %v2888
        %v2921 = vadd.f32 %v2657, %v2889
        %v2922 = vadd.f32 %v2658, %v2890
        %v2923 = vadd.f32 %v2659, %v2891
        %v2924 = vadd.f32 %v2660, %v2892
        %v2925 = vadd.f32 %v2661, %v2893
        %v2926 = vadd.f32 %v2662, %v2894
        %v2927 = vadd.f32 %v2663, %v2895
        %v2928 = vadd.f32 %v2664, %v2896
        %v2929 = vadd.f32 %v2665, %v2897
        %v2930 = vadd.f32 %v2666, %v2898
        %v2931 = vadd.f32 %v2667, %v2899
        %v2932 = vadd.f32 %v2668, %v2900
        %v2933 = vadd.f32 %v2669, %v2901
        %v2934 = vadd.f32 %v2670, %v2902
        %v2935 = vadd.f32 %v2671, %v2903
        %v2936 = vadd.f32 %v2672, %v2904
        %v2937 = vadd.f32 %v2673, %v2905
        %v2938 = vadd.f32 %v2674, %v2906
        %v2939 = vadd.f32 %v2675, %v2907
        %v2940 = vadd.f32 %v2676, %v2908
        %v2941 = vadd.f32 %v2677, %v2909
        %v2942 = vadd.f32 %v2678, %v2910
        %v2943 = vadd.f32 %v2679, %v2911
        %v2944 = vadd.f32 %v2680, %v2912
        %v2945 = vadd.f32 %v2681, %v2913
        %2946 = vst [vmem:[#allocation3] sm:$0xff] %v2914
        %2947 = vst [vmem:[#allocation3 + $0x8] sm:$0xff] %v2915
        %2948 = vst [vmem:[#allocation3 + $0x10] sm:$0xff] %v2916
        %2949 = vst [vmem:[#allocation3 + $0x18] sm:$0xff] %v2917
        %2950 = vst [vmem:[#allocation3 + $0x20] sm:$0xff] %v2918
        %2951 = vst [vmem:[#allocation3 + $0x28] sm:$0xff] %v2919
        %2952 = vst [vmem:[#allocation3 + $0x30] sm:$0xff] %v2920
        %2953 = vst [vmem:[#allocation3 + $0x38] sm:$0xff] %v2921
        %2954 = vst [vmem:[#allocation3 + $0x40] sm:$0xff] %v2922
        %2955 = vst [vmem:[#allocation3 + $0x48] sm:$0xff] %v2923
        %2956 = vst [vmem:[#allocation3 + $0x50] sm:$0xff] %v2924
        %2957 = vst [vmem:[#allocation3 + $0x58] sm:$0xff] %v2925
        %2958 = vst [vmem:[#allocation3 + $0x60] sm:$0xff] %v2926
        %2959 = vst [vmem:[#allocation3 + $0x68] sm:$0xff] %v2927
        %2960 = vst [vmem:[#allocation3 + $0x70] sm:$0xff] %v2928
        %2961 = vst [vmem:[#allocation3 + $0x78] sm:$0xff] %v2929
        %2962 = vst [vmem:[#allocation3 + $0x80] sm:$0xff] %v2930
        %2963 = vst [vmem:[#allocation3 + $0x88] sm:$0xff] %v2931
        %2964 = vst [vmem:[#allocation3 + $0x90] sm:$0xff] %v2932
        %2965 = vst [vmem:[#allocation3 + $0x98] sm:$0xff] %v2933
        %2966 = vst [vmem:[#allocation3 + $0xa0] sm:$0xff] %v2934
        %2967 = vst [vmem:[#allocation3 + $0xa8] sm:$0xff] %v2935
        %2968 = vst [vmem:[#allocation3 + $0xb0] sm:$0xff] %v2936
        %2969 = vst [vmem:[#allocation3 + $0xb8] sm:$0xff] %v2937
        %2970 = vst [vmem:[#allocation3 + $0xc0] sm:$0xff] %v2938
        %2971 = vst [vmem:[#allocation3 + $0xc8] sm:$0xff] %v2939
        %2972 = vst [vmem:[#allocation3 + $0xd0] sm:$0xff] %v2940
        %2973 = vst [vmem:[#allocation3 + $0xd8] sm:$0xff] %v2941
        %2974 = vst [vmem:[#allocation3 + $0xe0] sm:$0xff] %v2942
        %2975 = vst [vmem:[#allocation3 + $0xe8] sm:$0xff] %v2943
        %2976 = vst [vmem:[#allocation3 + $0xf0] sm:$0xff] %v2944
        %2977 = vst [vmem:[#allocation3 + $0xf8] sm:$0xff] %v2945
        %v2978 = vmax.f32 %v2914, 0.0
        %v2979 = vmax.f32 %v2915, 0.0
        %v2980 = vmax.f32 %v2916, 0.0
        %v2981 = vmax.f32 %v2917, 0.0
        %v2982 = vmax.f32 %v2918, 0.0
        %v2983 = vmax.f32 %v2919, 0.0
        %v2984 = vmax.f32 %v2920, 0.0
        %v2985 = vmax.f32 %v2921, 0.0
        %v2986 = vmax.f32 %v2922, 0.0
        %v2987 = vmax.f32 %v2923, 0.0
        %v2988 = vmax.f32 %v2924, 0.0
        %v2989 = vmax.f32 %v2925, 0.0
        %v2990 = vmax.f32 %v2926, 0.0
        %v2991 = vmax.f32 %v2927, 0.0
        %v2992 = vmax.f32 %v2928, 0.0
        %v2993 = vmax.f32 %v2929, 0.0
        %v2994 = vmax.f32 %v2930, 0.0
        %v2995 = vmax.f32 %v2931, 0.0
        %v2996 = vmax.f32 %v2932, 0.0
        %v2997 = vmax.f32 %v2933, 0.0
        %v2998 = vmax.f32 %v2934, 0.0
        %v2999 = vmax.f32 %v2935, 0.0
        %v3000 = vmax.f32 %v2936, 0.0
        %v3001 = vmax.f32 %v2937, 0.0
        %v3002 = vmax.f32 %v2938, 0.0
        %v3003 = vmax.f32 %v2939, 0.0
        %v3004 = vmax.f32 %v2940, 0.0
        %v3005 = vmax.f32 %v2941, 0.0
        %v3006 = vmax.f32 %v2942, 0.0
        %v3007 = vmax.f32 %v2943, 0.0
        %v3008 = vmax.f32 %v2944, 0.0
        %v3009 = vmax.f32 %v2945, 0.0
        %3010 = vst [vmem:[%s316 + $0x1] sm:$0xff] %v2978
        %3011 = vst [vmem:[%s316 + $0x9] sm:$0xff] %v2979
        %3012 = vst [vmem:[%s316 + $0x19] sm:$0xff] %v2980
        %3013 = vst [vmem:[%s316 + $0x21] sm:$0xff] %v2981
        %3014 = vst [vmem:[%s316 + $0x31] sm:$0xff] %v2982
        %3015 = vst [vmem:[%s316 + $0x39] sm:$0xff] %v2983
        %3016 = vst [vmem:[%s316 + $0x49] sm:$0xff] %v2984
        %3017 = vst [vmem:[%s316 + $0x51] sm:$0xff] %v2985
        %3018 = vst [vmem:[%s316 + $0x61] sm:$0xff] %v2986
        %3019 = vst [vmem:[%s316 + $0x69] sm:$0xff] %v2987
        %3020 = vst [vmem:[%s316 + $0x79] sm:$0xff] %v2988
        %3021 = vst [vmem:[%s316 + $0x81] sm:$0xff] %v2989
        %3022 = vst [vmem:[%s316 + $0x91] sm:$0xff] %v2990
        %3023 = vst [vmem:[%s316 + $0x99] sm:$0xff] %v2991
        %3024 = vst [vmem:[%s316 + $0xa9] sm:$0xff] %v2992
        %3025 = vst [vmem:[%s316 + $0xb1] sm:$0xff] %v2993
        %3026 = vst [vmem:[%s316 + $0xc1] sm:$0xff] %v2994
        %3027 = vst [vmem:[%s316 + $0xc9] sm:$0xff] %v2995
        %3028 = vst [vmem:[%s316 + $0xd9] sm:$0xff] %v2996
        %3029 = vst [vmem:[%s316 + $0xe1] sm:$0xff] %v2997
        %3030 = vst [vmem:[%s316 + $0xf1] sm:$0xff] %v2998
        %3031 = vst [vmem:[%s316 + $0xf9] sm:$0xff] %v2999
        %3032 = vst [vmem:[%s316 + $0x109] sm:$0xff] %v3000
        %3033 = vst [vmem:[%s316 + $0x111] sm:$0xff] %v3001
        %3034 = vst [vmem:[%s316 + $0x121] sm:$0xff] %v3002
        %3035 = vst [vmem:[%s316 + $0x129] sm:$0xff] %v3003
        %3036 = vst [vmem:[%s316 + $0x139] sm:$0xff] %v3004
        %3037 = vst [vmem:[%s316 + $0x141] sm:$0xff] %v3005
        %3038 = vst [vmem:[%s316 + $0x151] sm:$0xff] %v3006
        %3039 = vst [vmem:[%s316 + $0x159] sm:$0xff] %v3007
        %3040 = vst [vmem:[%s316 + $0x169] sm:$0xff] %v3008
        %3041 = vst [vmem:[%s316 + $0x171] sm:$0xff] %v3009
        loop: start=0, step=1, limit=25
        $region49: #{drrn_forward.1} parent=39 // loop_pre_header
          _
        $region50: #{drrn_forward.1} parent=39 // loop_header
          %s3043 = sphi 0, %s3047
          %p3044 = scmp.ge.s32.totalorder %s3043, 25
        $region51: #{drrn_forward.1} parent=39 // loop_header_branch
          %3046 = sbr.rel (%p3044) target = $region55
        $region52: #{drrn_forward.1} parent=39 // loop_body
          %v3048 = vld [vmem:[#allocation4] sm:$0xff]
          %v3049 = vld [vmem:[#allocation4 + $0x8] sm:$0xff]
          %v3050 = vld [vmem:[#allocation4 + $0x18] sm:$0xff]
          %v3051 = vld [vmem:[#allocation4 + $0x20] sm:$0xff]
          %v3052 = vld [vmem:[#allocation4 + $0x30] sm:$0xff]
          %v3053 = vld [vmem:[#allocation4 + $0x38] sm:$0xff]
          %v3054 = vld [vmem:[#allocation4 + $0x48] sm:$0xff]
          %v3055 = vld [vmem:[#allocation4 + $0x50] sm:$0xff]
          %v3056 = vld [vmem:[#allocation4 + $0x60] sm:$0xff]
          %v3057 = vld [vmem:[#allocation4 + $0x68] sm:$0xff]
          %v3058 = vld [vmem:[#allocation4 + $0x78] sm:$0xff]
          %v3059 = vld [vmem:[#allocation4 + $0x80] sm:$0xff]
          %v3060 = vld [vmem:[#allocation4 + $0x90] sm:$0xff]
          %v3061 = vld [vmem:[#allocation4 + $0x98] sm:$0xff]
          %v3062 = vld [vmem:[#allocation4 + $0xa8] sm:$0xff]
          %v3063 = vld [vmem:[#allocation4 + $0xb0] sm:$0xff]
          %v3064 = vld [vmem:[#allocation4 + $0xc0] sm:$0xff]
          %v3065 = vld [vmem:[#allocation4 + $0xc8] sm:$0xff]
          %v3066 = vld [vmem:[#allocation4 + $0xd8] sm:$0xff]
          %v3067 = vld [vmem:[#allocation4 + $0xe0] sm:$0xff]
          %v3068 = vld [vmem:[#allocation4 + $0xf0] sm:$0xff]
          %v3069 = vld [vmem:[#allocation4 + $0xf8] sm:$0xff]
          %v3070 = vld [vmem:[#allocation4 + $0x108] sm:$0xff]
          %v3071 = vld [vmem:[#allocation4 + $0x110] sm:$0xff]
          %v3072 = vld [vmem:[#allocation4 + $0x120] sm:$0xff]
          %v3073 = vld [vmem:[#allocation4 + $0x128] sm:$0xff]
          %v3074 = vld [vmem:[#allocation4 + $0x138] sm:$0xff]
          %v3075 = vld [vmem:[#allocation4 + $0x140] sm:$0xff]
          %v3076 = vld [vmem:[#allocation4 + $0x150] sm:$0xff]
          %v3077 = vld [vmem:[#allocation4 + $0x158] sm:$0xff]
          %v3078 = vld [vmem:[#allocation4 + $0x168] sm:$0xff]
          %v3079 = vld [vmem:[#allocation4 + $0x170] sm:$0xff]
          %v3080 = vld [vmem:[#allocation4 + $0x180] sm:$0xff]
          %v3081 = vld [vmem:[#allocation4 + $0x188] sm:$0xff]
          %v3082 = vld [vmem:[#allocation4 + $0x198] sm:$0xff]
          %v3083 = vld [vmem:[#allocation4 + $0x1a0] sm:$0xff]
          %3084 = vst [vmem:[#allocation6] sm:$0xff] %v3048
          %3085 = vst [vmem:[#allocation6 + $0x18] sm:$0xff] %v3049
          %3086 = vst [vmem:[#allocation6 + $0x30] sm:$0xff] %v3050
          %3087 = vst [vmem:[#allocation6 + $0x48] sm:$0xff] %v3051
          %3088 = vst [vmem:[#allocation6 + $0x60] sm:$0xff] %v3052
          %3089 = vst [vmem:[#allocation6 + $0x78] sm:$0xff] %v3053
          %3090 = vst [vmem:[#allocation6 + $0x90] sm:$0xff] %v3054
          %3091 = vst [vmem:[#allocation6 + $0xa8] sm:$0xff] %v3055
          %3092 = vst [vmem:[#allocation6 + $0xc0] sm:$0xff] %v3056
          %3093 = vst [vmem:[#allocation6 + $0xd8] sm:$0xff] %v3057
          %3094 = vst [vmem:[#allocation6 + $0xf0] sm:$0xff] %v3058
          %3095 = vst [vmem:[#allocation6 + $0x108] sm:$0xff] %v3059
          %3096 = vst [vmem:[#allocation6 + $0x120] sm:$0xff] %v3060
          %3097 = vst [vmem:[#allocation6 + $0x138] sm:$0xff] %v3061
          %3098 = vst [vmem:[#allocation6 + $0x150] sm:$0xff] %v3062
          %3099 = vst [vmem:[#allocation6 + $0x168] sm:$0xff] %v3063
          %3100 = vst [vmem:[#allocation6 + $0x180] sm:$0xff] %v3064
          %3101 = vst [vmem:[#allocation6 + $0x198] sm:$0xff] %v3065
          %3102 = vst [vmem:[#allocation6 + $0x1b0] sm:$0xff] %v3066
          %3103 = vst [vmem:[#allocation6 + $0x1c8] sm:$0xff] %v3067
          %3104 = vst [vmem:[#allocation6 + $0x1e0] sm:$0xff] %v3068
          %3105 = vst [vmem:[#allocation6 + $0x1f8] sm:$0xff] %v3069
          %3106 = vst [vmem:[#allocation6 + $0x210] sm:$0xff] %v3070
          %3107 = vst [vmem:[#allocation6 + $0x228] sm:$0xff] %v3071
          %3108 = vst [vmem:[#allocation6 + $0x240] sm:$0xff] %v3072
          %3109 = vst [vmem:[#allocation6 + $0x258] sm:$0xff] %v3073
          %3110 = vst [vmem:[#allocation6 + $0x270] sm:$0xff] %v3074
          %3111 = vst [vmem:[#allocation6 + $0x288] sm:$0xff] %v3075
          %3112 = vst [vmem:[#allocation6 + $0x2a0] sm:$0xff] %v3076
          %3113 = vst [vmem:[#allocation6 + $0x2b8] sm:$0xff] %v3077
          %3114 = vst [vmem:[#allocation6 + $0x2d0] sm:$0xff] %v3078
          %3115 = vst [vmem:[#allocation6 + $0x2e8] sm:$0xff] %v3079
          %3116 = vst [vmem:[#allocation6 + $0x300] sm:$0xff] %v3080
          %3117 = vst [vmem:[#allocation6 + $0x318] sm:$0xff] %v3081
          %3118 = vst [vmem:[#allocation6 + $0x330] sm:$0xff] %v3082
          %3119 = vst [vmem:[#allocation6 + $0x348] sm:$0xff] %v3083
          %v3120 = vld [vmem:[#allocation4 + $0x1] sm:$0xff]
          %v3121 = vld [vmem:[#allocation4 + $0x9] sm:$0xff]
          %v3122 = vld [vmem:[#allocation4 + $0x19] sm:$0xff]
          %v3123 = vld [vmem:[#allocation4 + $0x21] sm:$0xff]
          %v3124 = vld [vmem:[#allocation4 + $0x31] sm:$0xff]
          %v3125 = vld [vmem:[#allocation4 + $0x39] sm:$0xff]
          %v3126 = vld [vmem:[#allocation4 + $0x49] sm:$0xff]
          %v3127 = vld [vmem:[#allocation4 + $0x51] sm:$0xff]
          %v3128 = vld [vmem:[#allocation4 + $0x61] sm:$0xff]
          %v3129 = vld [vmem:[#allocation4 + $0x69] sm:$0xff]
          %v3130 = vld [vmem:[#allocation4 + $0x79] sm:$0xff]
          %v3131 = vld [vmem:[#allocation4 + $0x81] sm:$0xff]
          %v3132 = vld [vmem:[#allocation4 + $0x91] sm:$0xff]
          %v3133 = vld [vmem:[#allocation4 + $0x99] sm:$0xff]
          %v3134 = vld [vmem:[#allocation4 + $0xa9] sm:$0xff]
          %v3135 = vld [vmem:[#allocation4 + $0xb1] sm:$0xff]
          %v3136 = vld [vmem:[#allocation4 + $0xc1] sm:$0xff]
          %v3137 = vld [vmem:[#allocation4 + $0xc9] sm:$0xff]
          %v3138 = vld [vmem:[#allocation4 + $0xd9] sm:$0xff]
          %v3139 = vld [vmem:[#allocation4 + $0xe1] sm:$0xff]
          %v3140 = vld [vmem:[#allocation4 + $0xf1] sm:$0xff]
          %v3141 = vld [vmem:[#allocation4 + $0xf9] sm:$0xff]
          %v3142 = vld [vmem:[#allocation4 + $0x109] sm:$0xff]
          %v3143 = vld [vmem:[#allocation4 + $0x111] sm:$0xff]
          %v3144 = vld [vmem:[#allocation4 + $0x121] sm:$0xff]
          %v3145 = vld [vmem:[#allocation4 + $0x129] sm:$0xff]
          %v3146 = vld [vmem:[#allocation4 + $0x139] sm:$0xff]
          %v3147 = vld [vmem:[#allocation4 + $0x141] sm:$0xff]
          %v3148 = vld [vmem:[#allocation4 + $0x151] sm:$0xff]
          %v3149 = vld [vmem:[#allocation4 + $0x159] sm:$0xff]
          %v3150 = vld [vmem:[#allocation4 + $0x169] sm:$0xff]
          %v3151 = vld [vmem:[#allocation4 + $0x171] sm:$0xff]
          %v3152 = vld [vmem:[#allocation4 + $0x181] sm:$0xff]
          %v3153 = vld [vmem:[#allocation4 + $0x189] sm:$0xff]
          %v3154 = vld [vmem:[#allocation4 + $0x199] sm:$0xff]
          %v3155 = vld [vmem:[#allocation4 + $0x1a1] sm:$0xff]
          %3156 = vst [vmem:[#allocation6 + $0x8] sm:$0xff] %v3120
          %3157 = vst [vmem:[#allocation6 + $0x20] sm:$0xff] %v3121
          %3158 = vst [vmem:[#allocation6 + $0x38] sm:$0xff] %v3122
          %3159 = vst [vmem:[#allocation6 + $0x50] sm:$0xff] %v3123
          %3160 = vst [vmem:[#allocation6 + $0x68] sm:$0xff] %v3124
          %3161 = vst [vmem:[#allocation6 + $0x80] sm:$0xff] %v3125
          %3162 = vst [vmem:[#allocation6 + $0x98] sm:$0xff] %v3126
          %3163 = vst [vmem:[#allocation6 + $0xb0] sm:$0xff] %v3127
          %3164 = vst [vmem:[#allocation6 + $0xc8] sm:$0xff] %v3128
          %3165 = vst [vmem:[#allocation6 + $0xe0] sm:$0xff] %v3129
          %3166 = vst [vmem:[#allocation6 + $0xf8] sm:$0xff] %v3130
          %3167 = vst [vmem:[#allocation6 + $0x110] sm:$0xff] %v3131
          %3168 = vst [vmem:[#allocation6 + $0x128] sm:$0xff] %v3132
          %3169 = vst [vmem:[#allocation6 + $0x140] sm:$0xff] %v3133
          %3170 = vst [vmem:[#allocation6 + $0x158] sm:$0xff] %v3134
          %3171 = vst [vmem:[#allocation6 + $0x170] sm:$0xff] %v3135
          %3172 = vst [vmem:[#allocation6 + $0x188] sm:$0xff] %v3136
          %3173 = vst [vmem:[#allocation6 + $0x1a0] sm:$0xff] %v3137
          %3174 = vst [vmem:[#allocation6 + $0x1b8] sm:$0xff] %v3138
          %3175 = vst [vmem:[#allocation6 + $0x1d0] sm:$0xff] %v3139
          %3176 = vst [vmem:[#allocation6 + $0x1e8] sm:$0xff] %v3140
          %3177 = vst [vmem:[#allocation6 + $0x200] sm:$0xff] %v3141
          %3178 = vst [vmem:[#allocation6 + $0x218] sm:$0xff] %v3142
          %3179 = vst [vmem:[#allocation6 + $0x230] sm:$0xff] %v3143
          %3180 = vst [vmem:[#allocation6 + $0x248] sm:$0xff] %v3144
          %3181 = vst [vmem:[#allocation6 + $0x260] sm:$0xff] %v3145
          %3182 = vst [vmem:[#allocation6 + $0x278] sm:$0xff] %v3146
          %3183 = vst [vmem:[#allocation6 + $0x290] sm:$0xff] %v3147
          %3184 = vst [vmem:[#allocation6 + $0x2a8] sm:$0xff] %v3148
          %3185 = vst [vmem:[#allocation6 + $0x2c0] sm:$0xff] %v3149
          %3186 = vst [vmem:[#allocation6 + $0x2d8] sm:$0xff] %v3150
          %3187 = vst [vmem:[#allocation6 + $0x2f0] sm:$0xff] %v3151
          %3188 = vst [vmem:[#allocation6 + $0x308] sm:$0xff] %v3152
          %3189 = vst [vmem:[#allocation6 + $0x320] sm:$0xff] %v3153
          %3190 = vst [vmem:[#allocation6 + $0x338] sm:$0xff] %v3154
          %3191 = vst [vmem:[#allocation6 + $0x350] sm:$0xff] %v3155
          %v3192 = vld [vmem:[#allocation4 + $0x2] sm:$0xff]
          %v3193 = vld [vmem:[#allocation4 + $0xa] sm:$0xff]
          %v3194 = vld [vmem:[#allocation4 + $0x1a] sm:$0xff]
          %v3195 = vld [vmem:[#allocation4 + $0x22] sm:$0xff]
          %v3196 = vld [vmem:[#allocation4 + $0x32] sm:$0xff]
          %v3197 = vld [vmem:[#allocation4 + $0x3a] sm:$0xff]
          %v3198 = vld [vmem:[#allocation4 + $0x4a] sm:$0xff]
          %v3199 = vld [vmem:[#allocation4 + $0x52] sm:$0xff]
          %v3200 = vld [vmem:[#allocation4 + $0x62] sm:$0xff]
          %v3201 = vld [vmem:[#allocation4 + $0x6a] sm:$0xff]
          %v3202 = vld [vmem:[#allocation4 + $0x7a] sm:$0xff]
          %v3203 = vld [vmem:[#allocation4 + $0x82] sm:$0xff]
          %v3204 = vld [vmem:[#allocation4 + $0x92] sm:$0xff]
          %v3205 = vld [vmem:[#allocation4 + $0x9a] sm:$0xff]
          %v3206 = vld [vmem:[#allocation4 + $0xaa] sm:$0xff]
          %v3207 = vld [vmem:[#allocation4 + $0xb2] sm:$0xff]
          %v3208 = vld [vmem:[#allocation4 + $0xc2] sm:$0xff]
          %v3209 = vld [vmem:[#allocation4 + $0xca] sm:$0xff]
          %v3210 = vld [vmem:[#allocation4 + $0xda] sm:$0xff]
          %v3211 = vld [vmem:[#allocation4 + $0xe2] sm:$0xff]
          %v3212 = vld [vmem:[#allocation4 + $0xf2] sm:$0xff]
          %v3213 = vld [vmem:[#allocation4 + $0xfa] sm:$0xff]
          %v3214 = vld [vmem:[#allocation4 + $0x10a] sm:$0xff]
          %v3215 = vld [vmem:[#allocation4 + $0x112] sm:$0xff]
          %v3216 = vld [vmem:[#allocation4 + $0x122] sm:$0xff]
          %v3217 = vld [vmem:[#allocation4 + $0x12a] sm:$0xff]
          %v3218 = vld [vmem:[#allocation4 + $0x13a] sm:$0xff]
          %v3219 = vld [vmem:[#allocation4 + $0x142] sm:$0xff]
          %v3220 = vld [vmem:[#allocation4 + $0x152] sm:$0xff]
          %v3221 = vld [vmem:[#allocation4 + $0x15a] sm:$0xff]
          %v3222 = vld [vmem:[#allocation4 + $0x16a] sm:$0xff]
          %v3223 = vld [vmem:[#allocation4 + $0x172] sm:$0xff]
          %v3224 = vld [vmem:[#allocation4 + $0x182] sm:$0xff]
          %v3225 = vld [vmem:[#allocation4 + $0x18a] sm:$0xff]
          %v3226 = vld [vmem:[#allocation4 + $0x19a] sm:$0xff]
          %v3227 = vld [vmem:[#allocation4 + $0x1a2] sm:$0xff]
          %3228 = vst [vmem:[#allocation6 + $0x10] sm:$0xff] %v3192
          %3229 = vst [vmem:[#allocation6 + $0x28] sm:$0xff] %v3193
          %3230 = vst [vmem:[#allocation6 + $0x40] sm:$0xff] %v3194
          %3231 = vst [vmem:[#allocation6 + $0x58] sm:$0xff] %v3195
          %3232 = vst [vmem:[#allocation6 + $0x70] sm:$0xff] %v3196
          %3233 = vst [vmem:[#allocation6 + $0x88] sm:$0xff] %v3197
          %3234 = vst [vmem:[#allocation6 + $0xa0] sm:$0xff] %v3198
          %3235 = vst [vmem:[#allocation6 + $0xb8] sm:$0xff] %v3199
          %3236 = vst [vmem:[#allocation6 + $0xd0] sm:$0xff] %v3200
          %3237 = vst [vmem:[#allocation6 + $0xe8] sm:$0xff] %v3201
          %3238 = vst [vmem:[#allocation6 + $0x100] sm:$0xff] %v3202
          %3239 = vst [vmem:[#allocation6 + $0x118] sm:$0xff] %v3203
          %3240 = vst [vmem:[#allocation6 + $0x130] sm:$0xff] %v3204
          %3241 = vst [vmem:[#allocation6 + $0x148] sm:$0xff] %v3205
          %3242 = vst [vmem:[#allocation6 + $0x160] sm:$0xff] %v3206
          %3243 = vst [vmem:[#allocation6 + $0x178] sm:$0xff] %v3207
          %3244 = vst [vmem:[#allocation6 + $0x190] sm:$0xff] %v3208
          %3245 = vst [vmem:[#allocation6 + $0x1a8] sm:$0xff] %v3209
          %3246 = vst [vmem:[#allocation6 + $0x1c0] sm:$0xff] %v3210
          %3247 = vst [vmem:[#allocation6 + $0x1d8] sm:$0xff] %v3211
          %3248 = vst [vmem:[#allocation6 + $0x1f0] sm:$0xff] %v3212
          %3249 = vst [vmem:[#allocation6 + $0x208] sm:$0xff] %v3213
          %3250 = vst [vmem:[#allocation6 + $0x220] sm:$0xff] %v3214
          %3251 = vst [vmem:[#allocation6 + $0x238] sm:$0xff] %v3215
          %3252 = vst [vmem:[#allocation6 + $0x250] sm:$0xff] %v3216
          %3253 = vst [vmem:[#allocation6 + $0x268] sm:$0xff] %v3217
          %3254 = vst [vmem:[#allocation6 + $0x280] sm:$0xff] %v3218
          %3255 = vst [vmem:[#allocation6 + $0x298] sm:$0xff] %v3219
          %3256 = vst [vmem:[#allocation6 + $0x2b0] sm:$0xff] %v3220
          %3257 = vst [vmem:[#allocation6 + $0x2c8] sm:$0xff] %v3221
          %3258 = vst [vmem:[#allocation6 + $0x2e0] sm:$0xff] %v3222
          %3259 = vst [vmem:[#allocation6 + $0x2f8] sm:$0xff] %v3223
          %3260 = vst [vmem:[#allocation6 + $0x310] sm:$0xff] %v3224
          %3261 = vst [vmem:[#allocation6 + $0x328] sm:$0xff] %v3225
          %3262 = vst [vmem:[#allocation6 + $0x340] sm:$0xff] %v3226
          %3263 = vst [vmem:[#allocation6 + $0x358] sm:$0xff] %v3227
          %v3264 = vld [vmem:[#allocation6] sm:$0xff]
          %v3265 = vld [vmem:[#allocation6 + $0x8] sm:$0xff]
          %v3266 = vld [vmem:[#allocation6 + $0x10] sm:$0xff]
          %v3267 = vld [vmem:[#allocation6 + $0x18] sm:$0xff]
          %v3268 = vld [vmem:[#allocation6 + $0x20] sm:$0xff]
          %v3269 = vld [vmem:[#allocation6 + $0x28] sm:$0xff]
          %v3270 = vld [vmem:[#allocation6 + $0x30] sm:$0xff]
          %v3271 = vld [vmem:[#allocation6 + $0x38] sm:$0xff]
          %v3272 = vld [vmem:[#allocation6 + $0x40] sm:$0xff]
          %v3273 = vld [vmem:[#allocation6 + $0x48] sm:$0xff]
          %v3274 = vld [vmem:[#allocation6 + $0x50] sm:$0xff]
          %v3275 = vld [vmem:[#allocation6 + $0x58] sm:$0xff]
          %v3276 = vld [vmem:[#allocation6 + $0x60] sm:$0xff]
          %v3277 = vld [vmem:[#allocation6 + $0x68] sm:$0xff]
          %v3278 = vld [vmem:[#allocation6 + $0x70] sm:$0xff]
          %v3279 = vld [vmem:[#allocation6 + $0x78] sm:$0xff]
          %v3280 = vld [vmem:[#allocation6 + $0x80] sm:$0xff]
          %v3281 = vld [vmem:[#allocation6 + $0x88] sm:$0xff]
          %v3282 = vld [vmem:[#allocation6 + $0x90] sm:$0xff]
          %v3283 = vld [vmem:[#allocation6 + $0x98] sm:$0xff]
          %v3284 = vld [vmem:[#allocation6 + $0xa0] sm:$0xff]
          %v3285 = vld [vmem:[#allocation6 + $0xa8] sm:$0xff]
          %v3286 = vld [vmem:[#allocation6 + $0xb0] sm:$0xff]
          %v3287 = vld [vmem:[#allocation6 + $0xb8] sm:$0xff]
          %v3288 = vld [vmem:[#allocation6 + $0xc0] sm:$0xff]
          %v3289 = vld [vmem:[#allocation6 + $0xc8] sm:$0xff]
          %v3290 = vld [vmem:[#allocation6 + $0xd0] sm:$0xff]
          %v3291 = vld [vmem:[#allocation6 + $0xd8] sm:$0xff]
          %v3292 = vld [vmem:[#allocation6 + $0xe0] sm:$0xff]
          %v3293 = vld [vmem:[#allocation6 + $0xe8] sm:$0xff]
          %v3294 = vld [vmem:[#allocation6 + $0xf0] sm:$0xff]
          %v3295 = vld [vmem:[#allocation6 + $0xf8] sm:$0xff]
          %v3296 = vld [vmem:[#allocation6 + $0x100] sm:$0xff]
          %v3297 = vld [vmem:[#allocation6 + $0x108] sm:$0xff]
          %v3298 = vld [vmem:[#allocation6 + $0x110] sm:$0xff]
          %v3299 = vld [vmem:[#allocation6 + $0x118] sm:$0xff]
          %v3300 = vld [vmem:[#allocation6 + $0x120] sm:$0xff]
          %v3301 = vld [vmem:[#allocation6 + $0x128] sm:$0xff]
          %v3302 = vld [vmem:[#allocation6 + $0x130] sm:$0xff]
          %v3303 = vld [vmem:[#allocation6 + $0x138] sm:$0xff]
          %v3304 = vld [vmem:[#allocation6 + $0x140] sm:$0xff]
          %v3305 = vld [vmem:[#allocation6 + $0x148] sm:$0xff]
          %v3306 = vld [vmem:[#allocation6 + $0x150] sm:$0xff]
          %v3307 = vld [vmem:[#allocation6 + $0x158] sm:$0xff]
          %v3308 = vld [vmem:[#allocation6 + $0x160] sm:$0xff]
          %v3309 = vld [vmem:[#allocation6 + $0x168] sm:$0xff]
          %v3310 = vld [vmem:[#allocation6 + $0x170] sm:$0xff]
          %v3311 = vld [vmem:[#allocation6 + $0x178] sm:$0xff]
          %v3312 = vld [vmem:[#allocation6 + $0x180] sm:$0xff]
          %v3313 = vld [vmem:[#allocation6 + $0x188] sm:$0xff]
          %v3314 = vld [vmem:[#allocation6 + $0x190] sm:$0xff]
          %v3315 = vld [vmem:[#allocation6 + $0x198] sm:$0xff]
          %v3316 = vld [vmem:[#allocation6 + $0x1a0] sm:$0xff]
          %v3317 = vld [vmem:[#allocation6 + $0x1a8] sm:$0xff]
          %v3318 = vld [vmem:[#allocation6 + $0x1b0] sm:$0xff]
          %v3319 = vld [vmem:[#allocation6 + $0x1b8] sm:$0xff]
          %v3320 = vld [vmem:[#allocation6 + $0x1c0] sm:$0xff]
          %v3321 = vld [vmem:[#allocation6 + $0x1c8] sm:$0xff]
          %v3322 = vld [vmem:[#allocation6 + $0x1d0] sm:$0xff]
          %v3323 = vld [vmem:[#allocation6 + $0x1d8] sm:$0xff]
          %v3324 = vld [vmem:[#allocation6 + $0x1e0] sm:$0xff]
          %v3325 = vld [vmem:[#allocation6 + $0x1e8] sm:$0xff]
          %v3326 = vld [vmem:[#allocation6 + $0x1f0] sm:$0xff]
          %v3327 = vld [vmem:[#allocation6 + $0x1f8] sm:$0xff]
          %v3328 = vld [vmem:[#allocation6 + $0x200] sm:$0xff]
          %v3329 = vld [vmem:[#allocation6 + $0x208] sm:$0xff]
          %v3330 = vld [vmem:[#allocation6 + $0x210] sm:$0xff]
          %v3331 = vld [vmem:[#allocation6 + $0x218] sm:$0xff]
          %v3332 = vld [vmem:[#allocation6 + $0x220] sm:$0xff]
          %v3333 = vld [vmem:[#allocation6 + $0x228] sm:$0xff]
          %v3334 = vld [vmem:[#allocation6 + $0x230] sm:$0xff]
          %v3335 = vld [vmem:[#allocation6 + $0x238] sm:$0xff]
          %v3336 = vld [vmem:[#allocation6 + $0x240] sm:$0xff]
          %v3337 = vld [vmem:[#allocation6 + $0x248] sm:$0xff]
          %v3338 = vld [vmem:[#allocation6 + $0x250] sm:$0xff]
          %v3339 = vld [vmem:[#allocation6 + $0x258] sm:$0xff]
          %v3340 = vld [vmem:[#allocation6 + $0x260] sm:$0xff]
          %v3341 = vld [vmem:[#allocation6 + $0x268] sm:$0xff]
          %v3342 = vld [vmem:[#allocation6 + $0x270] sm:$0xff]
          %v3343 = vld [vmem:[#allocation6 + $0x278] sm:$0xff]
          %v3344 = vld [vmem:[#allocation6 + $0x280] sm:$0xff]
          %v3345 = vld [vmem:[#allocation6 + $0x288] sm:$0xff]
          %v3346 = vld [vmem:[#allocation6 + $0x290] sm:$0xff]
          %v3347 = vld [vmem:[#allocation6 + $0x298] sm:$0xff]
          %v3348 = vld [vmem:[#allocation6 + $0x2a0] sm:$0xff]
          %v3349 = vld [vmem:[#allocation6 + $0x2a8] sm:$0xff]
          %v3350 = vld [vmem:[#allocation6 + $0x2b0] sm:$0xff]
          %v3351 = vld [vmem:[#allocation6 + $0x2b8] sm:$0xff]
          %v3352 = vld [vmem:[#allocation6 + $0x2c0] sm:$0xff]
          %v3353 = vld [vmem:[#allocation6 + $0x2c8] sm:$0xff]
          %v3354 = vld [vmem:[#allocation6 + $0x2d0] sm:$0xff]
          %v3355 = vld [vmem:[#allocation6 + $0x2d8] sm:$0xff]
          %v3356 = vld [vmem:[#allocation6 + $0x2e0] sm:$0xff]
          %v3357 = vld [vmem:[#allocation6 + $0x2e8] sm:$0xff]
          %v3358 = vld [vmem:[#allocation6 + $0x2f0] sm:$0xff]
          %v3359 = vld [vmem:[#allocation6 + $0x2f8] sm:$0xff]
          %v3360 = vld [vmem:[#allocation7] sm:$0xff]
          %v3361 = vld [vmem:[#allocation7 + $0x8] sm:$0xff]
          %v3362 = vld [vmem:[#allocation7 + $0x10] sm:$0xff]
          %v3363 = vld [vmem:[#allocation7 + $0x18] sm:$0xff]
          %v3364 = vld [vmem:[#allocation7 + $0x20] sm:$0xff]
          %v3365 = vld [vmem:[#allocation7 + $0x28] sm:$0xff]
          %v3366 = vld [vmem:[#allocation7 + $0x30] sm:$0xff]
          %v3367 = vld [vmem:[#allocation7 + $0x38] sm:$0xff]
          %v3368 = vld [vmem:[#allocation7 + $0x40] sm:$0xff]
          %v3369 = vld [vmem:[#allocation7 + $0x48] sm:$0xff]
          %v3370 = vld [vmem:[#allocation7 + $0x50] sm:$0xff]
          %v3371 = vld [vmem:[#allocation7 + $0x58] sm:$0xff]
          %v3372 = vld [vmem:[#allocation7 + $0x60] sm:$0xff]
          %v3373 = vld [vmem:[#allocation7 + $0x68] sm:$0xff]
          %v3374 = vld [vmem:[#allocation7 + $0x70] sm:$0xff]
          %v3375 = vld [vmem:[#allocation7 + $0x78] sm:$0xff]
          %v3376 = vld [vmem:[#allocation7 + $0x80] sm:$0xff]
          %v3377 = vld [vmem:[#allocation7 + $0x88] sm:$0xff]
          %v3378 = vld [vmem:[#allocation7 + $0x90] sm:$0xff]
          %v3379 = vld [vmem:[#allocation7 + $0x98] sm:$0xff]
          %v3380 = vld [vmem:[#allocation7 + $0xa0] sm:$0xff]
          %v3381 = vld [vmem:[#allocation7 + $0xa8] sm:$0xff]
          %v3382 = vld [vmem:[#allocation7 + $0xb0] sm:$0xff]
          %v3383 = vld [vmem:[#allocation7 + $0xb8] sm:$0xff]
          %v3384 = vld [vmem:[#allocation7 + $0xc0] sm:$0xff]
          %v3385 = vld [vmem:[#allocation7 + $0xc8] sm:$0xff]
          %v3386 = vld [vmem:[#allocation7 + $0xd0] sm:$0xff]
          %v3387 = vld [vmem:[#allocation7 + $0xd8] sm:$0xff]
          %v3388 = vld [vmem:[#allocation7 + $0xe0] sm:$0xff]
          %v3389 = vld [vmem:[#allocation7 + $0xe8] sm:$0xff]
          %v3390 = vld [vmem:[#allocation7 + $0xf0] sm:$0xff]
          %v3391 = vld [vmem:[#allocation7 + $0xf8] sm:$0xff]
          %v3392 = vld [vmem:[#allocation7 + $0x100] sm:$0xff]
          %v3393 = vld [vmem:[#allocation7 + $0x108] sm:$0xff]
          %v3394 = vld [vmem:[#allocation7 + $0x110] sm:$0xff]
          %v3395 = vld [vmem:[#allocation7 + $0x118] sm:$0xff]
          %v3396 = vld [vmem:[#allocation7 + $0x120] sm:$0xff]
          %v3397 = vld [vmem:[#allocation7 + $0x128] sm:$0xff]
          %v3398 = vld [vmem:[#allocation7 + $0x130] sm:$0xff]
          %v3399 = vld [vmem:[#allocation7 + $0x138] sm:$0xff]
          %v3400 = vld [vmem:[#allocation7 + $0x140] sm:$0xff]
          %v3401 = vld [vmem:[#allocation7 + $0x148] sm:$0xff]
          %v3402 = vld [vmem:[#allocation7 + $0x150] sm:$0xff]
          %v3403 = vld [vmem:[#allocation7 + $0x158] sm:$0xff]
          %v3404 = vld [vmem:[#allocation7 + $0x160] sm:$0xff]
          %v3405 = vld [vmem:[#allocation7 + $0x168] sm:$0xff]
          %v3406 = vld [vmem:[#allocation7 + $0x170] sm:$0xff]
          %v3407 = vld [vmem:[#allocation7 + $0x178] sm:$0xff]
          %s3408 = scalar_lea.vmem [#allocation6], 48
          %v3409 = vld [vmem:[%s3408] sm:$0xff]
          %v3410 = vld [vmem:[%s3408 + $0x8] sm:$0xff]
          %v3411 = vld [vmem:[%s3408 + $0x10] sm:$0xff]
          %v3412 = vld [vmem:[%s3408 + $0x18] sm:$0xff]
          %v3413 = vld [vmem:[%s3408 + $0x20] sm:$0xff]
          %v3414 = vld [vmem:[%s3408 + $0x28] sm:$0xff]
          %v3415 = vld [vmem:[%s3408 + $0x30] sm:$0xff]
          %v3416 = vld [vmem:[%s3408 + $0x38] sm:$0xff]
          %v3417 = vld [vmem:[%s3408 + $0x40] sm:$0xff]
          %v3418 = vld [vmem:[%s3408 + $0x48] sm:$0xff]
          %v3419 = vld [vmem:[%s3408 + $0x50] sm:$0xff]
          %v3420 = vld [vmem:[%s3408 + $0x58] sm:$0xff]
          %v3421 = vld [vmem:[%s3408 + $0x60] sm:$0xff]
          %v3422 = vld [vmem:[%s3408 + $0x68] sm:$0xff]
          %v3423 = vld [vmem:[%s3408 + $0x70] sm:$0xff]
          %v3424 = vld [vmem:[%s3408 + $0x78] sm:$0xff]
          %v3425 = vld [vmem:[%s3408 + $0x80] sm:$0xff]
          %v3426 = vld [vmem:[%s3408 + $0x88] sm:$0xff]
          %v3427 = vld [vmem:[%s3408 + $0x90] sm:$0xff]
          %v3428 = vld [vmem:[%s3408 + $0x98] sm:$0xff]
          %v3429 = vld [vmem:[%s3408 + $0xa0] sm:$0xff]
          %v3430 = vld [vmem:[%s3408 + $0xa8] sm:$0xff]
          %v3431 = vld [vmem:[%s3408 + $0xb0] sm:$0xff]
          %v3432 = vld [vmem:[%s3408 + $0xb8] sm:$0xff]
          %v3433 = vld [vmem:[%s3408 + $0xc0] sm:$0xff]
          %v3434 = vld [vmem:[%s3408 + $0xc8] sm:$0xff]
          %v3435 = vld [vmem:[%s3408 + $0xd0] sm:$0xff]
          %v3436 = vld [vmem:[%s3408 + $0xd8] sm:$0xff]
          %v3437 = vld [vmem:[%s3408 + $0xe0] sm:$0xff]
          %v3438 = vld [vmem:[%s3408 + $0xe8] sm:$0xff]
          %v3439 = vld [vmem:[%s3408 + $0xf0] sm:$0xff]
          %v3440 = vld [vmem:[%s3408 + $0xf8] sm:$0xff]
          %v3441 = vld [vmem:[%s3408 + $0x100] sm:$0xff]
          %v3442 = vld [vmem:[%s3408 + $0x108] sm:$0xff]
          %v3443 = vld [vmem:[%s3408 + $0x110] sm:$0xff]
          %v3444 = vld [vmem:[%s3408 + $0x118] sm:$0xff]
          %v3445 = vld [vmem:[%s3408 + $0x120] sm:$0xff]
          %v3446 = vld [vmem:[%s3408 + $0x128] sm:$0xff]
          %v3447 = vld [vmem:[%s3408 + $0x130] sm:$0xff]
          %v3448 = vld [vmem:[%s3408 + $0x138] sm:$0xff]
          %v3449 = vld [vmem:[%s3408 + $0x140] sm:$0xff]
          %v3450 = vld [vmem:[%s3408 + $0x148] sm:$0xff]
          %v3451 = vld [vmem:[%s3408 + $0x150] sm:$0xff]
          %v3452 = vld [vmem:[%s3408 + $0x158] sm:$0xff]
          %v3453 = vld [vmem:[%s3408 + $0x160] sm:$0xff]
          %v3454 = vld [vmem:[%s3408 + $0x168] sm:$0xff]
          %v3455 = vld [vmem:[%s3408 + $0x170] sm:$0xff]
          %v3456 = vld [vmem:[%s3408 + $0x178] sm:$0xff]
          %v3457 = vld [vmem:[%s3408 + $0x180] sm:$0xff]
          %v3458 = vld [vmem:[%s3408 + $0x188] sm:$0xff]
          %v3459 = vld [vmem:[%s3408 + $0x190] sm:$0xff]
          %v3460 = vld [vmem:[%s3408 + $0x198] sm:$0xff]
          %v3461 = vld [vmem:[%s3408 + $0x1a0] sm:$0xff]
          %v3462 = vld [vmem:[%s3408 + $0x1a8] sm:$0xff]
          %v3463 = vld [vmem:[%s3408 + $0x1b0] sm:$0xff]
          %v3464 = vld [vmem:[%s3408 + $0x1b8] sm:$0xff]
          %v3465 = vld [vmem:[%s3408 + $0x1c0] sm:$0xff]
          %v3466 = vld [vmem:[%s3408 + $0x1c8] sm:$0xff]
          %v3467 = vld [vmem:[%s3408 + $0x1d0] sm:$0xff]
          %v3468 = vld [vmem:[%s3408 + $0x1d8] sm:$0xff]
          %v3469 = vld [vmem:[%s3408 + $0x1e0] sm:$0xff]
          %v3470 = vld [vmem:[%s3408 + $0x1e8] sm:$0xff]
          %v3471 = vld [vmem:[%s3408 + $0x1f0] sm:$0xff]
          %v3472 = vld [vmem:[%s3408 + $0x1f8] sm:$0xff]
          %v3473 = vld [vmem:[%s3408 + $0x200] sm:$0xff]
          %v3474 = vld [vmem:[%s3408 + $0x208] sm:$0xff]
          %v3475 = vld [vmem:[%s3408 + $0x210] sm:$0xff]
          %v3476 = vld [vmem:[%s3408 + $0x218] sm:$0xff]
          %v3477 = vld [vmem:[%s3408 + $0x220] sm:$0xff]
          %v3478 = vld [vmem:[%s3408 + $0x228] sm:$0xff]
          %v3479 = vld [vmem:[%s3408 + $0x230] sm:$0xff]
          %v3480 = vld [vmem:[%s3408 + $0x238] sm:$0xff]
          %v3481 = vld [vmem:[%s3408 + $0x240] sm:$0xff]
          %v3482 = vld [vmem:[%s3408 + $0x248] sm:$0xff]
          %v3483 = vld [vmem:[%s3408 + $0x250] sm:$0xff]
          %v3484 = vld [vmem:[%s3408 + $0x258] sm:$0xff]
          %v3485 = vld [vmem:[%s3408 + $0x260] sm:$0xff]
          %v3486 = vld [vmem:[%s3408 + $0x268] sm:$0xff]
          %v3487 = vld [vmem:[%s3408 + $0x270] sm:$0xff]
          %v3488 = vld [vmem:[%s3408 + $0x278] sm:$0xff]
          %v3489 = vld [vmem:[%s3408 + $0x280] sm:$0xff]
          %v3490 = vld [vmem:[%s3408 + $0x288] sm:$0xff]
          %v3491 = vld [vmem:[%s3408 + $0x290] sm:$0xff]
          %v3492 = vld [vmem:[%s3408 + $0x298] sm:$0xff]
          %v3493 = vld [vmem:[%s3408 + $0x2a0] sm:$0xff]
          %v3494 = vld [vmem:[%s3408 + $0x2a8] sm:$0xff]
          %v3495 = vld [vmem:[%s3408 + $0x2b0] sm:$0xff]
          %v3496 = vld [vmem:[%s3408 + $0x2b8] sm:$0xff]
          %v3497 = vld [vmem:[%s3408 + $0x2c0] sm:$0xff]
          %v3498 = vld [vmem:[%s3408 + $0x2c8] sm:$0xff]
          %v3499 = vld [vmem:[%s3408 + $0x2d0] sm:$0xff]
          %v3500 = vld [vmem:[%s3408 + $0x2d8] sm:$0xff]
          %v3501 = vld [vmem:[%s3408 + $0x2e0] sm:$0xff]
          %v3502 = vld [vmem:[%s3408 + $0x2e8] sm:$0xff]
          %v3503 = vld [vmem:[%s3408 + $0x2f0] sm:$0xff]
          %v3504 = vld [vmem:[%s3408 + $0x2f8] sm:$0xff]
          %s3505 = scalar_lea.vmem [#allocation7], 384
          %v3506 = vld [vmem:[%s3505] sm:$0xff]
          %v3507 = vld [vmem:[%s3505 + $0x8] sm:$0xff]
          %v3508 = vld [vmem:[%s3505 + $0x10] sm:$0xff]
          %v3509 = vld [vmem:[%s3505 + $0x18] sm:$0xff]
          %v3510 = vld [vmem:[%s3505 + $0x20] sm:$0xff]
          %v3511 = vld [vmem:[%s3505 + $0x28] sm:$0xff]
          %v3512 = vld [vmem:[%s3505 + $0x30] sm:$0xff]
          %v3513 = vld [vmem:[%s3505 + $0x38] sm:$0xff]
          %v3514 = vld [vmem:[%s3505 + $0x40] sm:$0xff]
          %v3515 = vld [vmem:[%s3505 + $0x48] sm:$0xff]
          %v3516 = vld [vmem:[%s3505 + $0x50] sm:$0xff]
          %v3517 = vld [vmem:[%s3505 + $0x58] sm:$0xff]
          %v3518 = vld [vmem:[%s3505 + $0x60] sm:$0xff]
          %v3519 = vld [vmem:[%s3505 + $0x68] sm:$0xff]
          %v3520 = vld [vmem:[%s3505 + $0x70] sm:$0xff]
          %v3521 = vld [vmem:[%s3505 + $0x78] sm:$0xff]
          %v3522 = vld [vmem:[%s3505 + $0x80] sm:$0xff]
          %v3523 = vld [vmem:[%s3505 + $0x88] sm:$0xff]
          %v3524 = vld [vmem:[%s3505 + $0x90] sm:$0xff]
          %v3525 = vld [vmem:[%s3505 + $0x98] sm:$0xff]
          %v3526 = vld [vmem:[%s3505 + $0xa0] sm:$0xff]
          %v3527 = vld [vmem:[%s3505 + $0xa8] sm:$0xff]
          %v3528 = vld [vmem:[%s3505 + $0xb0] sm:$0xff]
          %v3529 = vld [vmem:[%s3505 + $0xb8] sm:$0xff]
          %v3530 = vld [vmem:[%s3505 + $0xc0] sm:$0xff]
          %v3531 = vld [vmem:[%s3505 + $0xc8] sm:$0xff]
          %v3532 = vld [vmem:[%s3505 + $0xd0] sm:$0xff]
          %v3533 = vld [vmem:[%s3505 + $0xd8] sm:$0xff]
          %v3534 = vld [vmem:[%s3505 + $0xe0] sm:$0xff]
          %v3535 = vld [vmem:[%s3505 + $0xe8] sm:$0xff]
          %v3536 = vld [vmem:[%s3505 + $0xf0] sm:$0xff]
          %v3537 = vld [vmem:[%s3505 + $0xf8] sm:$0xff]
          %v3538 = vld [vmem:[%s3505 + $0x100] sm:$0xff]
          %v3539 = vld [vmem:[%s3505 + $0x108] sm:$0xff]
          %v3540 = vld [vmem:[%s3505 + $0x110] sm:$0xff]
          %v3541 = vld [vmem:[%s3505 + $0x118] sm:$0xff]
          %v3542 = vld [vmem:[%s3505 + $0x120] sm:$0xff]
          %v3543 = vld [vmem:[%s3505 + $0x128] sm:$0xff]
          %v3544 = vld [vmem:[%s3505 + $0x130] sm:$0xff]
          %v3545 = vld [vmem:[%s3505 + $0x138] sm:$0xff]
          %v3546 = vld [vmem:[%s3505 + $0x140] sm:$0xff]
          %v3547 = vld [vmem:[%s3505 + $0x148] sm:$0xff]
          %v3548 = vld [vmem:[%s3505 + $0x150] sm:$0xff]
          %v3549 = vld [vmem:[%s3505 + $0x158] sm:$0xff]
          %v3550 = vld [vmem:[%s3505 + $0x160] sm:$0xff]
          %v3551 = vld [vmem:[%s3505 + $0x168] sm:$0xff]
          %v3552 = vld [vmem:[%s3505 + $0x170] sm:$0xff]
          %v3553 = vld [vmem:[%s3505 + $0x178] sm:$0xff]
          %3554 = vmatprep.subr.mxu0 0.0
          %3555 = vmatpush1.msra.mxu0 %v3521
          %3556 = vmatprep.subr.mxu0 0.0
          %3557 = vmatpush1.msra.mxu0 %v3520
          %3558 = vmatprep.subr.mxu0 0.0
          %3559 = vmatpush1.msra.mxu0 %v3519
          %3560 = vmatprep.subr.mxu0 0.0
          %3561 = vmatpush1.msra.mxu0 %v3518
          %3562 = vmatprep.subr.mxu0 0.0
          %3563 = vmatpush1.msra.mxu0 %v3517
          %3564 = vmatprep.subr.mxu0 0.0
          %3565 = vmatpush1.msra.mxu0 %v3516
          %3566 = vmatprep.subr.mxu0 0.0
          %3567 = vmatpush1.msra.mxu0 %v3515
          %3568 = vmatprep.subr.mxu0 0.0
          %3569 = vmatpush1.msra.mxu0 %v3514
          %3570 = vmatprep.subr.mxu0 0.0
          %3571 = vmatpush1.msra.mxu0 %v3513
          %3572 = vmatprep.subr.mxu0 0.0
          %3573 = vmatpush1.msra.mxu0 %v3512
          %3574 = vmatprep.subr.mxu0 0.0
          %3575 = vmatpush1.msra.mxu0 %v3511
          %3576 = vmatprep.subr.mxu0 0.0
          %3577 = vmatpush1.msra.mxu0 %v3510
          %3578 = vmatprep.subr.mxu0 0.0
          %3579 = vmatpush1.msra.mxu0 %v3509
          %3580 = vmatprep.subr.mxu0 0.0
          %3581 = vmatpush1.msra.mxu0 %v3508
          %3582 = vmatprep.subr.mxu0 0.0
          %3583 = vmatpush1.msra.mxu0 %v3507
          %3584 = vmatprep.subr.mxu0 0.0
          %3585 = vmatpush1.msra.mxu0 %v3506
          %3586 = vmatprep.subr.mxu0 0.0
          %3587 = vmatpush2.msra.mxu0 %v3537
          %3588 = vmatprep.subr.mxu0 0.0
          %3589 = vmatpush2.msra.mxu0 %v3536
          %3590 = vmatprep.subr.mxu0 0.0
          %3591 = vmatpush2.msra.mxu0 %v3535
          %3592 = vmatprep.subr.mxu0 0.0
          %3593 = vmatpush2.msra.mxu0 %v3534
          %3594 = vmatprep.subr.mxu0 0.0
          %3595 = vmatpush2.msra.mxu0 %v3533
          %3596 = vmatprep.subr.mxu0 0.0
          %3597 = vmatpush2.msra.mxu0 %v3532
          %3598 = vmatprep.subr.mxu0 0.0
          %3599 = vmatpush2.msra.mxu0 %v3531
          %3600 = vmatprep.subr.mxu0 0.0
          %3601 = vmatpush2.msra.mxu0 %v3530
          %3602 = vmatprep.subr.mxu0 0.0
          %3603 = vmatpush2.msra.mxu0 %v3529
          %3604 = vmatprep.subr.mxu0 0.0
          %3605 = vmatpush2.msra.mxu0 %v3528
          %3606 = vmatprep.subr.mxu0 0.0
          %3607 = vmatpush2.msra.mxu0 %v3527
          %3608 = vmatprep.subr.mxu0 0.0
          %3609 = vmatpush2.msra.mxu0 %v3526
          %3610 = vmatprep.subr.mxu0 0.0
          %3611 = vmatpush2.msra.mxu0 %v3525
          %3612 = vmatprep.subr.mxu0 0.0
          %3613 = vmatpush2.msra.mxu0 %v3524
          %3614 = vmatprep.subr.mxu0 0.0
          %3615 = vmatpush2.msra.mxu0 %v3523
          %3616 = vmatprep.subr.mxu0 0.0
          %3617 = vmatpush2.msra.mxu0 %v3522
          %3618 = vmatprep.mubr.f32.mxu0 %v3410
          %3619 = vmatmul.mubr.f32.gmra.mxu0 %v3409
          %v3620 = vpop.f32.mrf.mxu0
          %v3621 = vadd.f32 0.0, %v3620
          %v3622 = vpop.f32.mrf.mxu0
          %3623 = vmatprep.mubr.f32.mxu0 %v3413
          %3624 = vmatmul.mubr.f32.gmra.mxu0 %v3412
          %v3625 = vpop.f32.mrf.mxu0
          %v3626 = vadd.f32 0.0, %v3625
          %v3627 = vpop.f32.mrf.mxu0
          %3628 = vmatprep.mubr.f32.mxu0 %v3416
          %3629 = vmatmul.mubr.f32.gmra.mxu0 %v3415
          %v3630 = vpop.f32.mrf.mxu0
          %v3631 = vadd.f32 0.0, %v3630
          %v3632 = vpop.f32.mrf.mxu0
          %3633 = vmatprep.mubr.f32.mxu0 %v3419
          %3634 = vmatmul.mubr.f32.gmra.mxu0 %v3418
          %v3635 = vpop.f32.mrf.mxu0
          %v3636 = vadd.f32 0.0, %v3635
          %v3637 = vpop.f32.mrf.mxu0
          %3638 = vmatprep.mubr.f32.mxu0 %v3422
          %3639 = vmatmul.mubr.f32.gmra.mxu0 %v3421
          %v3640 = vpop.f32.mrf.mxu0
          %v3641 = vadd.f32 0.0, %v3640
          %v3642 = vpop.f32.mrf.mxu0
          %3643 = vmatprep.mubr.f32.mxu0 %v3425
          %3644 = vmatmul.mubr.f32.gmra.mxu0 %v3424
          %v3645 = vpop.f32.mrf.mxu0
          %v3646 = vadd.f32 0.0, %v3645
          %v3647 = vpop.f32.mrf.mxu0
          %3648 = vmatprep.mubr.f32.mxu0 %v3428
          %3649 = vmatmul.mubr.f32.gmra.mxu0 %v3427
          %v3650 = vpop.f32.mrf.mxu0
          %v3651 = vadd.f32 0.0, %v3650
          %v3652 = vpop.f32.mrf.mxu0
          %3653 = vmatprep.mubr.f32.mxu0 %v3431
          %3654 = vmatmul.mubr.f32.gmra.mxu0 %v3430
          %v3655 = vpop.f32.mrf.mxu0
          %v3656 = vadd.f32 0.0, %v3655
          %v3657 = vpop.f32.mrf.mxu0
          %3658 = vmatprep.mubr.f32.mxu0 %v3434
          %3659 = vmatmul.mubr.f32.gmra.mxu0 %v3433
          %v3660 = vpop.f32.mrf.mxu0
          %v3661 = vadd.f32 0.0, %v3660
          %v3662 = vpop.f32.mrf.mxu0
          %3663 = vmatprep.mubr.f32.mxu0 %v3437
          %3664 = vmatmul.mubr.f32.gmra.mxu0 %v3436
          %v3665 = vpop.f32.mrf.mxu0
          %v3666 = vadd.f32 0.0, %v3665
          %v3667 = vpop.f32.mrf.mxu0
          %3668 = vmatprep.mubr.f32.mxu0 %v3440
          %3669 = vmatmul.mubr.f32.gmra.mxu0 %v3439
          %v3670 = vpop.f32.mrf.mxu0
          %v3671 = vadd.f32 0.0, %v3670
          %v3672 = vpop.f32.mrf.mxu0
          %3673 = vmatprep.mubr.f32.mxu0 %v3443
          %3674 = vmatmul.mubr.f32.gmra.mxu0 %v3442
          %v3675 = vpop.f32.mrf.mxu0
          %v3676 = vadd.f32 0.0, %v3675
          %v3677 = vpop.f32.mrf.mxu0
          %3678 = vmatprep.mubr.f32.mxu0 %v3446
          %3679 = vmatmul.mubr.f32.gmra.mxu0 %v3445
          %v3680 = vpop.f32.mrf.mxu0
          %v3681 = vadd.f32 0.0, %v3680
          %v3682 = vpop.f32.mrf.mxu0
          %3683 = vmatprep.mubr.f32.mxu0 %v3449
          %3684 = vmatmul.mubr.f32.gmra.mxu0 %v3448
          %v3685 = vpop.f32.mrf.mxu0
          %v3686 = vadd.f32 0.0, %v3685
          %v3687 = vpop.f32.mrf.mxu0
          %3688 = vmatprep.mubr.f32.mxu0 %v3452
          %3689 = vmatmul.mubr.f32.gmra.mxu0 %v3451
          %v3690 = vpop.f32.mrf.mxu0
          %v3691 = vadd.f32 0.0, %v3690
          %v3692 = vpop.f32.mrf.mxu0
          %3693 = vmatprep.mubr.f32.mxu0 %v3455
          %3694 = vmatmul.mubr.f32.gmra.mxu0 %v3454
          %v3695 = vpop.f32.mrf.mxu0
          %v3696 = vadd.f32 0.0, %v3695
          %v3697 = vpop.f32.mrf.mxu0
          %3698 = vmatprep.mubr.f32.mxu0 %v3458
          %3699 = vmatmul.mubr.f32.gmra.mxu0 %v3457
          %v3700 = vpop.f32.mrf.mxu0
          %v3701 = vadd.f32 0.0, %v3700
          %v3702 = vpop.f32.mrf.mxu0
          %3703 = vmatprep.mubr.f32.mxu0 %v3461
          %3704 = vmatmul.mubr.f32.gmra.mxu0 %v3460
          %v3705 = vpop.f32.mrf.mxu0
          %v3706 = vadd.f32 0.0, %v3705
          %v3707 = vpop.f32.mrf.mxu0
          %3708 = vmatprep.mubr.f32.mxu0 %v3464
          %3709 = vmatmul.mubr.f32.gmra.mxu0 %v3463
          %v3710 = vpop.f32.mrf.mxu0
          %v3711 = vadd.f32 0.0, %v3710
          %v3712 = vpop.f32.mrf.mxu0
          %3713 = vmatprep.mubr.f32.mxu0 %v3467
          %3714 = vmatmul.mubr.f32.gmra.mxu0 %v3466
          %v3715 = vpop.f32.mrf.mxu0
          %v3716 = vadd.f32 0.0, %v3715
          %v3717 = vpop.f32.mrf.mxu0
          %3718 = vmatprep.mubr.f32.mxu0 %v3470
          %3719 = vmatmul.mubr.f32.gmra.mxu0 %v3469
          %v3720 = vpop.f32.mrf.mxu0
          %v3721 = vadd.f32 0.0, %v3720
          %v3722 = vpop.f32.mrf.mxu0
          %3723 = vmatprep.mubr.f32.mxu0 %v3473
          %3724 = vmatmul.mubr.f32.gmra.mxu0 %v3472
          %v3725 = vpop.f32.mrf.mxu0
          %v3726 = vadd.f32 0.0, %v3725
          %v3727 = vpop.f32.mrf.mxu0
          %3728 = vmatprep.mubr.f32.mxu0 %v3476
          %3729 = vmatmul.mubr.f32.gmra.mxu0 %v3475
          %v3730 = vpop.f32.mrf.mxu0
          %v3731 = vadd.f32 0.0, %v3730
          %v3732 = vpop.f32.mrf.mxu0
          %3733 = vmatprep.mubr.f32.mxu0 %v3479
          %3734 = vmatmul.mubr.f32.gmra.mxu0 %v3478
          %v3735 = vpop.f32.mrf.mxu0
          %v3736 = vadd.f32 0.0, %v3735
          %v3737 = vpop.f32.mrf.mxu0
          %3738 = vmatprep.mubr.f32.mxu0 %v3482
          %3739 = vmatmul.mubr.f32.gmra.mxu0 %v3481
          %v3740 = vpop.f32.mrf.mxu0
          %v3741 = vadd.f32 0.0, %v3740
          %v3742 = vpop.f32.mrf.mxu0
          %3743 = vmatprep.mubr.f32.mxu0 %v3485
          %3744 = vmatmul.mubr.f32.gmra.mxu0 %v3484
          %v3745 = vpop.f32.mrf.mxu0
          %v3746 = vadd.f32 0.0, %v3745
          %v3747 = vpop.f32.mrf.mxu0
          %3748 = vmatprep.mubr.f32.mxu0 %v3488
          %3749 = vmatmul.mubr.f32.gmra.mxu0 %v3487
          %v3750 = vpop.f32.mrf.mxu0
          %v3751 = vadd.f32 0.0, %v3750
          %v3752 = vpop.f32.mrf.mxu0
          %3753 = vmatprep.mubr.f32.mxu0 %v3491
          %3754 = vmatmul.mubr.f32.gmra.mxu0 %v3490
          %v3755 = vpop.f32.mrf.mxu0
          %v3756 = vadd.f32 0.0, %v3755
          %v3757 = vpop.f32.mrf.mxu0
          %3758 = vmatprep.mubr.f32.mxu0 %v3494
          %3759 = vmatmul.mubr.f32.gmra.mxu0 %v3493
          %v3760 = vpop.f32.mrf.mxu0
          %v3761 = vadd.f32 0.0, %v3760
          %v3762 = vpop.f32.mrf.mxu0
          %3763 = vmatprep.mubr.f32.mxu0 %v3497
          %3764 = vmatmul.mubr.f32.gmra.mxu0 %v3496
          %v3765 = vpop.f32.mrf.mxu0
          %v3766 = vadd.f32 0.0, %v3765
          %v3767 = vpop.f32.mrf.mxu0
          %3768 = vmatprep.mubr.f32.mxu0 %v3500
          %3769 = vmatmul.mubr.f32.gmra.mxu0 %v3499
          %v3770 = vpop.f32.mrf.mxu0
          %v3771 = vadd.f32 0.0, %v3770
          %v3772 = vpop.f32.mrf.mxu0
          %3773 = vmatprep.mubr.f32.mxu0 %v3503
          %3774 = vmatmul.mubr.f32.gmra.mxu0 %v3502
          %v3775 = vpop.f32.mrf.mxu0
          %v3776 = vadd.f32 0.0, %v3775
          %v3777 = vpop.f32.mrf.mxu0
          %3778 = vdwg.mxu0
          %3779 = vmatprep.subr.mxu0 0.0
          %3780 = vmatpush1.msra.mxu0 %v3553
          %3781 = vmatprep.subr.mxu0 0.0
          %3782 = vmatpush1.msra.mxu0 %v3552
          %3783 = vmatprep.subr.mxu0 0.0
          %3784 = vmatpush1.msra.mxu0 %v3551
          %3785 = vmatprep.subr.mxu0 0.0
          %3786 = vmatpush1.msra.mxu0 %v3550
          %3787 = vmatprep.subr.mxu0 0.0
          %3788 = vmatpush1.msra.mxu0 %v3549
          %3789 = vmatprep.subr.mxu0 0.0
          %3790 = vmatpush1.msra.mxu0 %v3548
          %3791 = vmatprep.subr.mxu0 0.0
          %3792 = vmatpush1.msra.mxu0 %v3547
          %3793 = vmatprep.subr.mxu0 0.0
          %3794 = vmatpush1.msra.mxu0 %v3546
          %3795 = vmatprep.subr.mxu0 0.0
          %3796 = vmatpush1.msra.mxu0 %v3545
          %3797 = vmatprep.subr.mxu0 0.0
          %3798 = vmatpush1.msra.mxu0 %v3544
          %3799 = vmatprep.subr.mxu0 0.0
          %3800 = vmatpush1.msra.mxu0 %v3543
          %3801 = vmatprep.subr.mxu0 0.0
          %3802 = vmatpush1.msra.mxu0 %v3542
          %3803 = vmatprep.subr.mxu0 0.0
          %3804 = vmatpush1.msra.mxu0 %v3541
          %3805 = vmatprep.subr.mxu0 0.0
          %3806 = vmatpush1.msra.mxu0 %v3540
          %3807 = vmatprep.subr.mxu0 0.0
          %3808 = vmatpush1.msra.mxu0 %v3539
          %3809 = vmatprep.subr.mxu0 0.0
          %3810 = vmatpush1.msra.mxu0 %v3538
          %3811 = vmatprep.subr.mxu0 0.0
          %3812 = vmatpush2.msra.mxu0 0.0
          %3813 = vmatprep.subr.mxu0 0.0
          %3814 = vmatpush2.msra.mxu0 0.0
          %3815 = vmatprep.subr.mxu0 0.0
          %3816 = vmatpush2.msra.mxu0 0.0
          %3817 = vmatprep.subr.mxu0 0.0
          %3818 = vmatpush2.msra.mxu0 0.0
          %3819 = vmatprep.subr.mxu0 0.0
          %3820 = vmatpush2.msra.mxu0 0.0
          %3821 = vmatprep.subr.mxu0 0.0
          %3822 = vmatpush2.msra.mxu0 0.0
          %3823 = vmatprep.subr.mxu0 0.0
          %3824 = vmatpush2.msra.mxu0 0.0
          %3825 = vmatprep.subr.mxu0 0.0
          %3826 = vmatpush2.msra.mxu0 0.0
          %3827 = vmatprep.subr.mxu0 0.0
          %3828 = vmatpush2.msra.mxu0 0.0
          %3829 = vmatprep.subr.mxu0 0.0
          %3830 = vmatpush2.msra.mxu0 0.0
          %3831 = vmatprep.subr.mxu0 0.0
          %3832 = vmatpush2.msra.mxu0 0.0
          %3833 = vmatprep.subr.mxu0 0.0
          %3834 = vmatpush2.msra.mxu0 0.0
          %3835 = vmatprep.subr.mxu0 0.0
          %3836 = vmatpush2.msra.mxu0 0.0
          %3837 = vmatprep.subr.mxu0 0.0
          %3838 = vmatpush2.msra.mxu0 0.0
          %3839 = vmatprep.subr.mxu0 0.0
          %3840 = vmatpush2.msra.mxu0 0.0
          %3841 = vmatprep.subr.mxu0 0.0
          %3842 = vmatpush2.msra.mxu0 0.0
          %3843 = vmatprep.mubr.f32.mxu0 0.0
          %3844 = vmatmul.mubr.f32.gmra.mxu0 %v3411
          %v3845 = vpop.f32.mrf.mxu0
          %v3846 = vadd.f32 %v3621, %v3845
          %v3847 = vpop.f32.mrf.mxu0
          %3848 = vmatprep.mubr.f32.mxu0 0.0
          %3849 = vmatmul.mubr.f32.gmra.mxu0 %v3414
          %v3850 = vpop.f32.mrf.mxu0
          %v3851 = vadd.f32 %v3626, %v3850
          %v3852 = vpop.f32.mrf.mxu0
          %3853 = vmatprep.mubr.f32.mxu0 0.0
          %3854 = vmatmul.mubr.f32.gmra.mxu0 %v3417
          %v3855 = vpop.f32.mrf.mxu0
          %v3856 = vadd.f32 %v3631, %v3855
          %v3857 = vpop.f32.mrf.mxu0
          %3858 = vmatprep.mubr.f32.mxu0 0.0
          %3859 = vmatmul.mubr.f32.gmra.mxu0 %v3420
          %v3860 = vpop.f32.mrf.mxu0
          %v3861 = vadd.f32 %v3636, %v3860
          %v3862 = vpop.f32.mrf.mxu0
          %3863 = vmatprep.mubr.f32.mxu0 0.0
          %3864 = vmatmul.mubr.f32.gmra.mxu0 %v3423
          %v3865 = vpop.f32.mrf.mxu0
          %v3866 = vadd.f32 %v3641, %v3865
          %v3867 = vpop.f32.mrf.mxu0
          %3868 = vmatprep.mubr.f32.mxu0 0.0
          %3869 = vmatmul.mubr.f32.gmra.mxu0 %v3426
          %v3870 = vpop.f32.mrf.mxu0
          %v3871 = vadd.f32 %v3646, %v3870
          %v3872 = vpop.f32.mrf.mxu0
          %3873 = vmatprep.mubr.f32.mxu0 0.0
          %3874 = vmatmul.mubr.f32.gmra.mxu0 %v3429
          %v3875 = vpop.f32.mrf.mxu0
          %v3876 = vadd.f32 %v3651, %v3875
          %v3877 = vpop.f32.mrf.mxu0
          %3878 = vmatprep.mubr.f32.mxu0 0.0
          %3879 = vmatmul.mubr.f32.gmra.mxu0 %v3432
          %v3880 = vpop.f32.mrf.mxu0
          %v3881 = vadd.f32 %v3656, %v3880
          %v3882 = vpop.f32.mrf.mxu0
          %3883 = vmatprep.mubr.f32.mxu0 0.0
          %3884 = vmatmul.mubr.f32.gmra.mxu0 %v3435
          %v3885 = vpop.f32.mrf.mxu0
          %v3886 = vadd.f32 %v3661, %v3885
          %v3887 = vpop.f32.mrf.mxu0
          %3888 = vmatprep.mubr.f32.mxu0 0.0
          %3889 = vmatmul.mubr.f32.gmra.mxu0 %v3438
          %v3890 = vpop.f32.mrf.mxu0
          %v3891 = vadd.f32 %v3666, %v3890
          %v3892 = vpop.f32.mrf.mxu0
          %3893 = vmatprep.mubr.f32.mxu0 0.0
          %3894 = vmatmul.mubr.f32.gmra.mxu0 %v3441
          %v3895 = vpop.f32.mrf.mxu0
          %v3896 = vadd.f32 %v3671, %v3895
          %v3897 = vpop.f32.mrf.mxu0
          %3898 = vmatprep.mubr.f32.mxu0 0.0
          %3899 = vmatmul.mubr.f32.gmra.mxu0 %v3444
          %v3900 = vpop.f32.mrf.mxu0
          %v3901 = vadd.f32 %v3676, %v3900
          %v3902 = vpop.f32.mrf.mxu0
          %3903 = vmatprep.mubr.f32.mxu0 0.0
          %3904 = vmatmul.mubr.f32.gmra.mxu0 %v3447
          %v3905 = vpop.f32.mrf.mxu0
          %v3906 = vadd.f32 %v3681, %v3905
          %v3907 = vpop.f32.mrf.mxu0
          %3908 = vmatprep.mubr.f32.mxu0 0.0
          %3909 = vmatmul.mubr.f32.gmra.mxu0 %v3450
          %v3910 = vpop.f32.mrf.mxu0
          %v3911 = vadd.f32 %v3686, %v3910
          %v3912 = vpop.f32.mrf.mxu0
          %3913 = vmatprep.mubr.f32.mxu0 0.0
          %3914 = vmatmul.mubr.f32.gmra.mxu0 %v3453
          %v3915 = vpop.f32.mrf.mxu0
          %v3916 = vadd.f32 %v3691, %v3915
          %v3917 = vpop.f32.mrf.mxu0
          %3918 = vmatprep.mubr.f32.mxu0 0.0
          %3919 = vmatmul.mubr.f32.gmra.mxu0 %v3456
          %v3920 = vpop.f32.mrf.mxu0
          %v3921 = vadd.f32 %v3696, %v3920
          %v3922 = vpop.f32.mrf.mxu0
          %3923 = vmatprep.mubr.f32.mxu0 0.0
          %3924 = vmatmul.mubr.f32.gmra.mxu0 %v3459
          %v3925 = vpop.f32.mrf.mxu0
          %v3926 = vadd.f32 %v3701, %v3925
          %v3927 = vpop.f32.mrf.mxu0
          %3928 = vmatprep.mubr.f32.mxu0 0.0
          %3929 = vmatmul.mubr.f32.gmra.mxu0 %v3462
          %v3930 = vpop.f32.mrf.mxu0
          %v3931 = vadd.f32 %v3706, %v3930
          %v3932 = vpop.f32.mrf.mxu0
          %3933 = vmatprep.mubr.f32.mxu0 0.0
          %3934 = vmatmul.mubr.f32.gmra.mxu0 %v3465
          %v3935 = vpop.f32.mrf.mxu0
          %v3936 = vadd.f32 %v3711, %v3935
          %v3937 = vpop.f32.mrf.mxu0
          %3938 = vmatprep.mubr.f32.mxu0 0.0
          %3939 = vmatmul.mubr.f32.gmra.mxu0 %v3468
          %v3940 = vpop.f32.mrf.mxu0
          %v3941 = vadd.f32 %v3716, %v3940
          %v3942 = vpop.f32.mrf.mxu0
          %3943 = vmatprep.mubr.f32.mxu0 0.0
          %3944 = vmatmul.mubr.f32.gmra.mxu0 %v3471
          %v3945 = vpop.f32.mrf.mxu0
          %v3946 = vadd.f32 %v3721, %v3945
          %v3947 = vpop.f32.mrf.mxu0
          %3948 = vmatprep.mubr.f32.mxu0 0.0
          %3949 = vmatmul.mubr.f32.gmra.mxu0 %v3474
          %v3950 = vpop.f32.mrf.mxu0
          %v3951 = vadd.f32 %v3726, %v3950
          %v3952 = vpop.f32.mrf.mxu0
          %3953 = vmatprep.mubr.f32.mxu0 0.0
          %3954 = vmatmul.mubr.f32.gmra.mxu0 %v3477
          %v3955 = vpop.f32.mrf.mxu0
          %v3956 = vadd.f32 %v3731, %v3955
          %v3957 = vpop.f32.mrf.mxu0
          %3958 = vmatprep.mubr.f32.mxu0 0.0
          %3959 = vmatmul.mubr.f32.gmra.mxu0 %v3480
          %v3960 = vpop.f32.mrf.mxu0
          %v3961 = vadd.f32 %v3736, %v3960
          %v3962 = vpop.f32.mrf.mxu0
          %3963 = vmatprep.mubr.f32.mxu0 0.0
          %3964 = vmatmul.mubr.f32.gmra.mxu0 %v3483
          %v3965 = vpop.f32.mrf.mxu0
          %v3966 = vadd.f32 %v3741, %v3965
          %v3967 = vpop.f32.mrf.mxu0
          %3968 = vmatprep.mubr.f32.mxu0 0.0
          %3969 = vmatmul.mubr.f32.gmra.mxu0 %v3486
          %v3970 = vpop.f32.mrf.mxu0
          %v3971 = vadd.f32 %v3746, %v3970
          %v3972 = vpop.f32.mrf.mxu0
          %3973 = vmatprep.mubr.f32.mxu0 0.0
          %3974 = vmatmul.mubr.f32.gmra.mxu0 %v3489
          %v3975 = vpop.f32.mrf.mxu0
          %v3976 = vadd.f32 %v3751, %v3975
          %v3977 = vpop.f32.mrf.mxu0
          %3978 = vmatprep.mubr.f32.mxu0 0.0
          %3979 = vmatmul.mubr.f32.gmra.mxu0 %v3492
          %v3980 = vpop.f32.mrf.mxu0
          %v3981 = vadd.f32 %v3756, %v3980
          %v3982 = vpop.f32.mrf.mxu0
          %3983 = vmatprep.mubr.f32.mxu0 0.0
          %3984 = vmatmul.mubr.f32.gmra.mxu0 %v3495
          %v3985 = vpop.f32.mrf.mxu0
          %v3986 = vadd.f32 %v3761, %v3985
          %v3987 = vpop.f32.mrf.mxu0
          %3988 = vmatprep.mubr.f32.mxu0 0.0
          %3989 = vmatmul.mubr.f32.gmra.mxu0 %v3498
          %v3990 = vpop.f32.mrf.mxu0
          %v3991 = vadd.f32 %v3766, %v3990
          %v3992 = vpop.f32.mrf.mxu0
          %3993 = vmatprep.mubr.f32.mxu0 0.0
          %3994 = vmatmul.mubr.f32.gmra.mxu0 %v3501
          %v3995 = vpop.f32.mrf.mxu0
          %v3996 = vadd.f32 %v3771, %v3995
          %v3997 = vpop.f32.mrf.mxu0
          %3998 = vmatprep.mubr.f32.mxu0 0.0
          %3999 = vmatmul.mubr.f32.gmra.mxu0 %v3504
          %v4000 = vpop.f32.mrf.mxu0
          %v4001 = vadd.f32 %v3776, %v4000
          %v4002 = vpop.f32.mrf.mxu0
          %4003 = vdwg.mxu0
          %4004 = vmatprep.subr.mxu0 0.0
          %4005 = vmatpush1.msra.mxu0 %v3375
          %4006 = vmatprep.subr.mxu0 0.0
          %4007 = vmatpush1.msra.mxu0 %v3374
          %4008 = vmatprep.subr.mxu0 0.0
          %4009 = vmatpush1.msra.mxu0 %v3373
          %4010 = vmatprep.subr.mxu0 0.0
          %4011 = vmatpush1.msra.mxu0 %v3372
          %4012 = vmatprep.subr.mxu0 0.0
          %4013 = vmatpush1.msra.mxu0 %v3371
          %4014 = vmatprep.subr.mxu0 0.0
          %4015 = vmatpush1.msra.mxu0 %v3370
          %4016 = vmatprep.subr.mxu0 0.0
          %4017 = vmatpush1.msra.mxu0 %v3369
          %4018 = vmatprep.subr.mxu0 0.0
          %4019 = vmatpush1.msra.mxu0 %v3368
          %4020 = vmatprep.subr.mxu0 0.0
          %4021 = vmatpush1.msra.mxu0 %v3367
          %4022 = vmatprep.subr.mxu0 0.0
          %4023 = vmatpush1.msra.mxu0 %v3366
          %4024 = vmatprep.subr.mxu0 0.0
          %4025 = vmatpush1.msra.mxu0 %v3365
          %4026 = vmatprep.subr.mxu0 0.0
          %4027 = vmatpush1.msra.mxu0 %v3364
          %4028 = vmatprep.subr.mxu0 0.0
          %4029 = vmatpush1.msra.mxu0 %v3363
          %4030 = vmatprep.subr.mxu0 0.0
          %4031 = vmatpush1.msra.mxu0 %v3362
          %4032 = vmatprep.subr.mxu0 0.0
          %4033 = vmatpush1.msra.mxu0 %v3361
          %4034 = vmatprep.subr.mxu0 0.0
          %4035 = vmatpush1.msra.mxu0 %v3360
          %4036 = vmatprep.subr.mxu0 0.0
          %4037 = vmatpush2.msra.mxu0 %v3391
          %4038 = vmatprep.subr.mxu0 0.0
          %4039 = vmatpush2.msra.mxu0 %v3390
          %4040 = vmatprep.subr.mxu0 0.0
          %4041 = vmatpush2.msra.mxu0 %v3389
          %4042 = vmatprep.subr.mxu0 0.0
          %4043 = vmatpush2.msra.mxu0 %v3388
          %4044 = vmatprep.subr.mxu0 0.0
          %4045 = vmatpush2.msra.mxu0 %v3387
          %4046 = vmatprep.subr.mxu0 0.0
          %4047 = vmatpush2.msra.mxu0 %v3386
          %4048 = vmatprep.subr.mxu0 0.0
          %4049 = vmatpush2.msra.mxu0 %v3385
          %4050 = vmatprep.subr.mxu0 0.0
          %4051 = vmatpush2.msra.mxu0 %v3384
          %4052 = vmatprep.subr.mxu0 0.0
          %4053 = vmatpush2.msra.mxu0 %v3383
          %4054 = vmatprep.subr.mxu0 0.0
          %4055 = vmatpush2.msra.mxu0 %v3382
          %4056 = vmatprep.subr.mxu0 0.0
          %4057 = vmatpush2.msra.mxu0 %v3381
          %4058 = vmatprep.subr.mxu0 0.0
          %4059 = vmatpush2.msra.mxu0 %v3380
          %4060 = vmatprep.subr.mxu0 0.0
          %4061 = vmatpush2.msra.mxu0 %v3379
          %4062 = vmatprep.subr.mxu0 0.0
          %4063 = vmatpush2.msra.mxu0 %v3378
          %4064 = vmatprep.subr.mxu0 0.0
          %4065 = vmatpush2.msra.mxu0 %v3377
          %4066 = vmatprep.subr.mxu0 0.0
          %4067 = vmatpush2.msra.mxu0 %v3376
          %4068 = vmatprep.mubr.f32.mxu0 %v3265
          %4069 = vmatmul.mubr.f32.gmra.mxu0 %v3264
          %v4070 = vpop.f32.mrf.mxu0
          %v4071 = vadd.f32 %v3846, %v4070
          %v4072 = vpop.f32.mrf.mxu0
          %4073 = vmatprep.mubr.f32.mxu0 %v3268
          %4074 = vmatmul.mubr.f32.gmra.mxu0 %v3267
          %v4075 = vpop.f32.mrf.mxu0
          %v4076 = vadd.f32 %v3851, %v4075
          %v4077 = vpop.f32.mrf.mxu0
          %4078 = vmatprep.mubr.f32.mxu0 %v3271
          %4079 = vmatmul.mubr.f32.gmra.mxu0 %v3270
          %v4080 = vpop.f32.mrf.mxu0
          %v4081 = vadd.f32 %v3856, %v4080
          %v4082 = vpop.f32.mrf.mxu0
          %4083 = vmatprep.mubr.f32.mxu0 %v3274
          %4084 = vmatmul.mubr.f32.gmra.mxu0 %v3273
          %v4085 = vpop.f32.mrf.mxu0
          %v4086 = vadd.f32 %v3861, %v4085
          %v4087 = vpop.f32.mrf.mxu0
          %4088 = vmatprep.mubr.f32.mxu0 %v3277
          %4089 = vmatmul.mubr.f32.gmra.mxu0 %v3276
          %v4090 = vpop.f32.mrf.mxu0
          %v4091 = vadd.f32 %v3866, %v4090
          %v4092 = vpop.f32.mrf.mxu0
          %4093 = vmatprep.mubr.f32.mxu0 %v3280
          %4094 = vmatmul.mubr.f32.gmra.mxu0 %v3279
          %v4095 = vpop.f32.mrf.mxu0
          %v4096 = vadd.f32 %v3871, %v4095
          %v4097 = vpop.f32.mrf.mxu0
          %4098 = vmatprep.mubr.f32.mxu0 %v3283
          %4099 = vmatmul.mubr.f32.gmra.mxu0 %v3282
          %v4100 = vpop.f32.mrf.mxu0
          %v4101 = vadd.f32 %v3876, %v4100
          %v4102 = vpop.f32.mrf.mxu0
          %4103 = vmatprep.mubr.f32.mxu0 %v3286
          %4104 = vmatmul.mubr.f32.gmra.mxu0 %v3285
          %v4105 = vpop.f32.mrf.mxu0
          %v4106 = vadd.f32 %v3881, %v4105
          %v4107 = vpop.f32.mrf.mxu0
          %4108 = vmatprep.mubr.f32.mxu0 %v3289
          %4109 = vmatmul.mubr.f32.gmra.mxu0 %v3288
          %v4110 = vpop.f32.mrf.mxu0
          %v4111 = vadd.f32 %v3886, %v4110
          %v4112 = vpop.f32.mrf.mxu0
          %4113 = vmatprep.mubr.f32.mxu0 %v3292
          %4114 = vmatmul.mubr.f32.gmra.mxu0 %v3291
          %v4115 = vpop.f32.mrf.mxu0
          %v4116 = vadd.f32 %v3891, %v4115
          %v4117 = vpop.f32.mrf.mxu0
          %4118 = vmatprep.mubr.f32.mxu0 %v3295
          %4119 = vmatmul.mubr.f32.gmra.mxu0 %v3294
          %v4120 = vpop.f32.mrf.mxu0
          %v4121 = vadd.f32 %v3896, %v4120
          %v4122 = vpop.f32.mrf.mxu0
          %4123 = vmatprep.mubr.f32.mxu0 %v3298
          %4124 = vmatmul.mubr.f32.gmra.mxu0 %v3297
          %v4125 = vpop.f32.mrf.mxu0
          %v4126 = vadd.f32 %v3901, %v4125
          %v4127 = vpop.f32.mrf.mxu0
          %4128 = vmatprep.mubr.f32.mxu0 %v3301
          %4129 = vmatmul.mubr.f32.gmra.mxu0 %v3300
          %v4130 = vpop.f32.mrf.mxu0
          %v4131 = vadd.f32 %v3906, %v4130
          %v4132 = vpop.f32.mrf.mxu0
          %4133 = vmatprep.mubr.f32.mxu0 %v3304
          %4134 = vmatmul.mubr.f32.gmra.mxu0 %v3303
          %v4135 = vpop.f32.mrf.mxu0
          %v4136 = vadd.f32 %v3911, %v4135
          %v4137 = vpop.f32.mrf.mxu0
          %4138 = vmatprep.mubr.f32.mxu0 %v3307
          %4139 = vmatmul.mubr.f32.gmra.mxu0 %v3306
          %v4140 = vpop.f32.mrf.mxu0
          %v4141 = vadd.f32 %v3916, %v4140
          %v4142 = vpop.f32.mrf.mxu0
          %4143 = vmatprep.mubr.f32.mxu0 %v3310
          %4144 = vmatmul.mubr.f32.gmra.mxu0 %v3309
          %v4145 = vpop.f32.mrf.mxu0
          %v4146 = vadd.f32 %v3921, %v4145
          %v4147 = vpop.f32.mrf.mxu0
          %4148 = vmatprep.mubr.f32.mxu0 %v3313
          %4149 = vmatmul.mubr.f32.gmra.mxu0 %v3312
          %v4150 = vpop.f32.mrf.mxu0
          %v4151 = vadd.f32 %v3926, %v4150
          %v4152 = vpop.f32.mrf.mxu0
          %4153 = vmatprep.mubr.f32.mxu0 %v3316
          %4154 = vmatmul.mubr.f32.gmra.mxu0 %v3315
          %v4155 = vpop.f32.mrf.mxu0
          %v4156 = vadd.f32 %v3931, %v4155
          %v4157 = vpop.f32.mrf.mxu0
          %4158 = vmatprep.mubr.f32.mxu0 %v3319
          %4159 = vmatmul.mubr.f32.gmra.mxu0 %v3318
          %v4160 = vpop.f32.mrf.mxu0
          %v4161 = vadd.f32 %v3936, %v4160
          %v4162 = vpop.f32.mrf.mxu0
          %4163 = vmatprep.mubr.f32.mxu0 %v3322
          %4164 = vmatmul.mubr.f32.gmra.mxu0 %v3321
          %v4165 = vpop.f32.mrf.mxu0
          %v4166 = vadd.f32 %v3941, %v4165
          %v4167 = vpop.f32.mrf.mxu0
          %4168 = vmatprep.mubr.f32.mxu0 %v3325
          %4169 = vmatmul.mubr.f32.gmra.mxu0 %v3324
          %v4170 = vpop.f32.mrf.mxu0
          %v4171 = vadd.f32 %v3946, %v4170
          %v4172 = vpop.f32.mrf.mxu0
          %4173 = vmatprep.mubr.f32.mxu0 %v3328
          %4174 = vmatmul.mubr.f32.gmra.mxu0 %v3327
          %v4175 = vpop.f32.mrf.mxu0
          %v4176 = vadd.f32 %v3951, %v4175
          %v4177 = vpop.f32.mrf.mxu0
          %4178 = vmatprep.mubr.f32.mxu0 %v3331
          %4179 = vmatmul.mubr.f32.gmra.mxu0 %v3330
          %v4180 = vpop.f32.mrf.mxu0
          %v4181 = vadd.f32 %v3956, %v4180
          %v4182 = vpop.f32.mrf.mxu0
          %4183 = vmatprep.mubr.f32.mxu0 %v3334
          %4184 = vmatmul.mubr.f32.gmra.mxu0 %v3333
          %v4185 = vpop.f32.mrf.mxu0
          %v4186 = vadd.f32 %v3961, %v4185
          %v4187 = vpop.f32.mrf.mxu0
          %4188 = vmatprep.mubr.f32.mxu0 %v3337
          %4189 = vmatmul.mubr.f32.gmra.mxu0 %v3336
          %v4190 = vpop.f32.mrf.mxu0
          %v4191 = vadd.f32 %v3966, %v4190
          %v4192 = vpop.f32.mrf.mxu0
          %4193 = vmatprep.mubr.f32.mxu0 %v3340
          %4194 = vmatmul.mubr.f32.gmra.mxu0 %v3339
          %v4195 = vpop.f32.mrf.mxu0
          %v4196 = vadd.f32 %v3971, %v4195
          %v4197 = vpop.f32.mrf.mxu0
          %4198 = vmatprep.mubr.f32.mxu0 %v3343
          %4199 = vmatmul.mubr.f32.gmra.mxu0 %v3342
          %v4200 = vpop.f32.mrf.mxu0
          %v4201 = vadd.f32 %v3976, %v4200
          %v4202 = vpop.f32.mrf.mxu0
          %4203 = vmatprep.mubr.f32.mxu0 %v3346
          %4204 = vmatmul.mubr.f32.gmra.mxu0 %v3345
          %v4205 = vpop.f32.mrf.mxu0
          %v4206 = vadd.f32 %v3981, %v4205
          %v4207 = vpop.f32.mrf.mxu0
          %4208 = vmatprep.mubr.f32.mxu0 %v3349
          %4209 = vmatmul.mubr.f32.gmra.mxu0 %v3348
          %v4210 = vpop.f32.mrf.mxu0
          %v4211 = vadd.f32 %v3986, %v4210
          %v4212 = vpop.f32.mrf.mxu0
          %4213 = vmatprep.mubr.f32.mxu0 %v3352
          %4214 = vmatmul.mubr.f32.gmra.mxu0 %v3351
          %v4215 = vpop.f32.mrf.mxu0
          %v4216 = vadd.f32 %v3991, %v4215
          %v4217 = vpop.f32.mrf.mxu0
          %4218 = vmatprep.mubr.f32.mxu0 %v3355
          %4219 = vmatmul.mubr.f32.gmra.mxu0 %v3354
          %v4220 = vpop.f32.mrf.mxu0
          %v4221 = vadd.f32 %v3996, %v4220
          %v4222 = vpop.f32.mrf.mxu0
          %4223 = vmatprep.mubr.f32.mxu0 %v3358
          %4224 = vmatmul.mubr.f32.gmra.mxu0 %v3357
          %v4225 = vpop.f32.mrf.mxu0
          %v4226 = vadd.f32 %v4001, %v4225
          %v4227 = vpop.f32.mrf.mxu0
          %4228 = vdwg.mxu0
          %4229 = vmatprep.subr.mxu0 0.0
          %4230 = vmatpush1.msra.mxu0 %v3407
          %4231 = vmatprep.subr.mxu0 0.0
          %4232 = vmatpush1.msra.mxu0 %v3406
          %4233 = vmatprep.subr.mxu0 0.0
          %4234 = vmatpush1.msra.mxu0 %v3405
          %4235 = vmatprep.subr.mxu0 0.0
          %4236 = vmatpush1.msra.mxu0 %v3404
          %4237 = vmatprep.subr.mxu0 0.0
          %4238 = vmatpush1.msra.mxu0 %v3403
          %4239 = vmatprep.subr.mxu0 0.0
          %4240 = vmatpush1.msra.mxu0 %v3402
          %4241 = vmatprep.subr.mxu0 0.0
          %4242 = vmatpush1.msra.mxu0 %v3401
          %4243 = vmatprep.subr.mxu0 0.0
          %4244 = vmatpush1.msra.mxu0 %v3400
          %4245 = vmatprep.subr.mxu0 0.0
          %4246 = vmatpush1.msra.mxu0 %v3399
          %4247 = vmatprep.subr.mxu0 0.0
          %4248 = vmatpush1.msra.mxu0 %v3398
          %4249 = vmatprep.subr.mxu0 0.0
          %4250 = vmatpush1.msra.mxu0 %v3397
          %4251 = vmatprep.subr.mxu0 0.0
          %4252 = vmatpush1.msra.mxu0 %v3396
          %4253 = vmatprep.subr.mxu0 0.0
          %4254 = vmatpush1.msra.mxu0 %v3395
          %4255 = vmatprep.subr.mxu0 0.0
          %4256 = vmatpush1.msra.mxu0 %v3394
          %4257 = vmatprep.subr.mxu0 0.0
          %4258 = vmatpush1.msra.mxu0 %v3393
          %4259 = vmatprep.subr.mxu0 0.0
          %4260 = vmatpush1.msra.mxu0 %v3392
          %4261 = vmatprep.subr.mxu0 0.0
          %4262 = vmatpush2.msra.mxu0 0.0
          %4263 = vmatprep.subr.mxu0 0.0
          %4264 = vmatpush2.msra.mxu0 0.0
          %4265 = vmatprep.subr.mxu0 0.0
          %4266 = vmatpush2.msra.mxu0 0.0
          %4267 = vmatprep.subr.mxu0 0.0
          %4268 = vmatpush2.msra.mxu0 0.0
          %4269 = vmatprep.subr.mxu0 0.0
          %4270 = vmatpush2.msra.mxu0 0.0
          %4271 = vmatprep.subr.mxu0 0.0
          %4272 = vmatpush2.msra.mxu0 0.0
          %4273 = vmatprep.subr.mxu0 0.0
          %4274 = vmatpush2.msra.mxu0 0.0
          %4275 = vmatprep.subr.mxu0 0.0
          %4276 = vmatpush2.msra.mxu0 0.0
          %4277 = vmatprep.subr.mxu0 0.0
          %4278 = vmatpush2.msra.mxu0 0.0
          %4279 = vmatprep.subr.mxu0 0.0
          %4280 = vmatpush2.msra.mxu0 0.0
          %4281 = vmatprep.subr.mxu0 0.0
          %4282 = vmatpush2.msra.mxu0 0.0
          %4283 = vmatprep.subr.mxu0 0.0
          %4284 = vmatpush2.msra.mxu0 0.0
          %4285 = vmatprep.subr.mxu0 0.0
          %4286 = vmatpush2.msra.mxu0 0.0
          %4287 = vmatprep.subr.mxu0 0.0
          %4288 = vmatpush2.msra.mxu0 0.0
          %4289 = vmatprep.subr.mxu0 0.0
          %4290 = vmatpush2.msra.mxu0 0.0
          %4291 = vmatprep.subr.mxu0 0.0
          %4292 = vmatpush2.msra.mxu0 0.0
          %4293 = vmatprep.mubr.f32.mxu0 0.0
          %4294 = vmatmul.mubr.f32.gmra.mxu0 %v3266
          %v4295 = vpop.f32.mrf.mxu0
          %v4296 = vadd.f32 %v4071, %v4295
          %v4297 = vpop.f32.mrf.mxu0
          %4298 = vmatprep.mubr.f32.mxu0 0.0
          %4299 = vmatmul.mubr.f32.gmra.mxu0 %v3269
          %v4300 = vpop.f32.mrf.mxu0
          %v4301 = vadd.f32 %v4076, %v4300
          %v4302 = vpop.f32.mrf.mxu0
          %4303 = vmatprep.mubr.f32.mxu0 0.0
          %4304 = vmatmul.mubr.f32.gmra.mxu0 %v3272
          %v4305 = vpop.f32.mrf.mxu0
          %v4306 = vadd.f32 %v4081, %v4305
          %v4307 = vpop.f32.mrf.mxu0
          %4308 = vmatprep.mubr.f32.mxu0 0.0
          %4309 = vmatmul.mubr.f32.gmra.mxu0 %v3275
          %v4310 = vpop.f32.mrf.mxu0
          %v4311 = vadd.f32 %v4086, %v4310
          %v4312 = vpop.f32.mrf.mxu0
          %4313 = vmatprep.mubr.f32.mxu0 0.0
          %4314 = vmatmul.mubr.f32.gmra.mxu0 %v3278
          %v4315 = vpop.f32.mrf.mxu0
          %v4316 = vadd.f32 %v4091, %v4315
          %v4317 = vpop.f32.mrf.mxu0
          %4318 = vmatprep.mubr.f32.mxu0 0.0
          %4319 = vmatmul.mubr.f32.gmra.mxu0 %v3281
          %v4320 = vpop.f32.mrf.mxu0
          %v4321 = vadd.f32 %v4096, %v4320
          %v4322 = vpop.f32.mrf.mxu0
          %4323 = vmatprep.mubr.f32.mxu0 0.0
          %4324 = vmatmul.mubr.f32.gmra.mxu0 %v3284
          %v4325 = vpop.f32.mrf.mxu0
          %v4326 = vadd.f32 %v4101, %v4325
          %v4327 = vpop.f32.mrf.mxu0
          %4328 = vmatprep.mubr.f32.mxu0 0.0
          %4329 = vmatmul.mubr.f32.gmra.mxu0 %v3287
          %v4330 = vpop.f32.mrf.mxu0
          %v4331 = vadd.f32 %v4106, %v4330
          %v4332 = vpop.f32.mrf.mxu0
          %4333 = vmatprep.mubr.f32.mxu0 0.0
          %4334 = vmatmul.mubr.f32.gmra.mxu0 %v3290
          %v4335 = vpop.f32.mrf.mxu0
          %v4336 = vadd.f32 %v4111, %v4335
          %v4337 = vpop.f32.mrf.mxu0
          %4338 = vmatprep.mubr.f32.mxu0 0.0
          %4339 = vmatmul.mubr.f32.gmra.mxu0 %v3293
          %v4340 = vpop.f32.mrf.mxu0
          %v4341 = vadd.f32 %v4116, %v4340
          %v4342 = vpop.f32.mrf.mxu0
          %4343 = vmatprep.mubr.f32.mxu0 0.0
          %4344 = vmatmul.mubr.f32.gmra.mxu0 %v3296
          %v4345 = vpop.f32.mrf.mxu0
          %v4346 = vadd.f32 %v4121, %v4345
          %v4347 = vpop.f32.mrf.mxu0
          %4348 = vmatprep.mubr.f32.mxu0 0.0
          %4349 = vmatmul.mubr.f32.gmra.mxu0 %v3299
          %v4350 = vpop.f32.mrf.mxu0
          %v4351 = vadd.f32 %v4126, %v4350
          %v4352 = vpop.f32.mrf.mxu0
          %4353 = vmatprep.mubr.f32.mxu0 0.0
          %4354 = vmatmul.mubr.f32.gmra.mxu0 %v3302
          %v4355 = vpop.f32.mrf.mxu0
          %v4356 = vadd.f32 %v4131, %v4355
          %v4357 = vpop.f32.mrf.mxu0
          %4358 = vmatprep.mubr.f32.mxu0 0.0
          %4359 = vmatmul.mubr.f32.gmra.mxu0 %v3305
          %v4360 = vpop.f32.mrf.mxu0
          %v4361 = vadd.f32 %v4136, %v4360
          %v4362 = vpop.f32.mrf.mxu0
          %4363 = vmatprep.mubr.f32.mxu0 0.0
          %4364 = vmatmul.mubr.f32.gmra.mxu0 %v3308
          %v4365 = vpop.f32.mrf.mxu0
          %v4366 = vadd.f32 %v4141, %v4365
          %v4367 = vpop.f32.mrf.mxu0
          %4368 = vmatprep.mubr.f32.mxu0 0.0
          %4369 = vmatmul.mubr.f32.gmra.mxu0 %v3311
          %v4370 = vpop.f32.mrf.mxu0
          %v4371 = vadd.f32 %v4146, %v4370
          %v4372 = vpop.f32.mrf.mxu0
          %4373 = vmatprep.mubr.f32.mxu0 0.0
          %4374 = vmatmul.mubr.f32.gmra.mxu0 %v3314
          %v4375 = vpop.f32.mrf.mxu0
          %v4376 = vadd.f32 %v4151, %v4375
          %v4377 = vpop.f32.mrf.mxu0
          %4378 = vmatprep.mubr.f32.mxu0 0.0
          %4379 = vmatmul.mubr.f32.gmra.mxu0 %v3317
          %v4380 = vpop.f32.mrf.mxu0
          %v4381 = vadd.f32 %v4156, %v4380
          %v4382 = vpop.f32.mrf.mxu0
          %4383 = vmatprep.mubr.f32.mxu0 0.0
          %4384 = vmatmul.mubr.f32.gmra.mxu0 %v3320
          %v4385 = vpop.f32.mrf.mxu0
          %v4386 = vadd.f32 %v4161, %v4385
          %v4387 = vpop.f32.mrf.mxu0
          %4388 = vmatprep.mubr.f32.mxu0 0.0
          %4389 = vmatmul.mubr.f32.gmra.mxu0 %v3323
          %v4390 = vpop.f32.mrf.mxu0
          %v4391 = vadd.f32 %v4166, %v4390
          %v4392 = vpop.f32.mrf.mxu0
          %4393 = vmatprep.mubr.f32.mxu0 0.0
          %4394 = vmatmul.mubr.f32.gmra.mxu0 %v3326
          %v4395 = vpop.f32.mrf.mxu0
          %v4396 = vadd.f32 %v4171, %v4395
          %v4397 = vpop.f32.mrf.mxu0
          %4398 = vmatprep.mubr.f32.mxu0 0.0
          %4399 = vmatmul.mubr.f32.gmra.mxu0 %v3329
          %v4400 = vpop.f32.mrf.mxu0
          %v4401 = vadd.f32 %v4176, %v4400
          %v4402 = vpop.f32.mrf.mxu0
          %4403 = vmatprep.mubr.f32.mxu0 0.0
          %4404 = vmatmul.mubr.f32.gmra.mxu0 %v3332
          %v4405 = vpop.f32.mrf.mxu0
          %v4406 = vadd.f32 %v4181, %v4405
          %v4407 = vpop.f32.mrf.mxu0
          %4408 = vmatprep.mubr.f32.mxu0 0.0
          %4409 = vmatmul.mubr.f32.gmra.mxu0 %v3335
          %v4410 = vpop.f32.mrf.mxu0
          %v4411 = vadd.f32 %v4186, %v4410
          %v4412 = vpop.f32.mrf.mxu0
          %4413 = vmatprep.mubr.f32.mxu0 0.0
          %4414 = vmatmul.mubr.f32.gmra.mxu0 %v3338
          %v4415 = vpop.f32.mrf.mxu0
          %v4416 = vadd.f32 %v4191, %v4415
          %v4417 = vpop.f32.mrf.mxu0
          %4418 = vmatprep.mubr.f32.mxu0 0.0
          %4419 = vmatmul.mubr.f32.gmra.mxu0 %v3341
          %v4420 = vpop.f32.mrf.mxu0
          %v4421 = vadd.f32 %v4196, %v4420
          %v4422 = vpop.f32.mrf.mxu0
          %4423 = vmatprep.mubr.f32.mxu0 0.0
          %4424 = vmatmul.mubr.f32.gmra.mxu0 %v3344
          %v4425 = vpop.f32.mrf.mxu0
          %v4426 = vadd.f32 %v4201, %v4425
          %v4427 = vpop.f32.mrf.mxu0
          %4428 = vmatprep.mubr.f32.mxu0 0.0
          %4429 = vmatmul.mubr.f32.gmra.mxu0 %v3347
          %v4430 = vpop.f32.mrf.mxu0
          %v4431 = vadd.f32 %v4206, %v4430
          %v4432 = vpop.f32.mrf.mxu0
          %4433 = vmatprep.mubr.f32.mxu0 0.0
          %4434 = vmatmul.mubr.f32.gmra.mxu0 %v3350
          %v4435 = vpop.f32.mrf.mxu0
          %v4436 = vadd.f32 %v4211, %v4435
          %v4437 = vpop.f32.mrf.mxu0
          %4438 = vmatprep.mubr.f32.mxu0 0.0
          %4439 = vmatmul.mubr.f32.gmra.mxu0 %v3353
          %v4440 = vpop.f32.mrf.mxu0
          %v4441 = vadd.f32 %v4216, %v4440
          %v4442 = vpop.f32.mrf.mxu0
          %4443 = vmatprep.mubr.f32.mxu0 0.0
          %4444 = vmatmul.mubr.f32.gmra.mxu0 %v3356
          %v4445 = vpop.f32.mrf.mxu0
          %v4446 = vadd.f32 %v4221, %v4445
          %v4447 = vpop.f32.mrf.mxu0
          %4448 = vmatprep.mubr.f32.mxu0 0.0
          %4449 = vmatmul.mubr.f32.gmra.mxu0 %v3359
          %v4450 = vpop.f32.mrf.mxu0
          %v4451 = vadd.f32 %v4226, %v4450
          %v4452 = vpop.f32.mrf.mxu0
          %4453 = vdwg.mxu0
          %s4454 = scalar_lea.vmem [#allocation6], 96
          %v4455 = vld [vmem:[%s4454] sm:$0xff]
          %v4456 = vld [vmem:[%s4454 + $0x8] sm:$0xff]
          %v4457 = vld [vmem:[%s4454 + $0x10] sm:$0xff]
          %v4458 = vld [vmem:[%s4454 + $0x18] sm:$0xff]
          %v4459 = vld [vmem:[%s4454 + $0x20] sm:$0xff]
          %v4460 = vld [vmem:[%s4454 + $0x28] sm:$0xff]
          %v4461 = vld [vmem:[%s4454 + $0x30] sm:$0xff]
          %v4462 = vld [vmem:[%s4454 + $0x38] sm:$0xff]
          %v4463 = vld [vmem:[%s4454 + $0x40] sm:$0xff]
          %v4464 = vld [vmem:[%s4454 + $0x48] sm:$0xff]
          %v4465 = vld [vmem:[%s4454 + $0x50] sm:$0xff]
          %v4466 = vld [vmem:[%s4454 + $0x58] sm:$0xff]
          %v4467 = vld [vmem:[%s4454 + $0x60] sm:$0xff]
          %v4468 = vld [vmem:[%s4454 + $0x68] sm:$0xff]
          %v4469 = vld [vmem:[%s4454 + $0x70] sm:$0xff]
          %v4470 = vld [vmem:[%s4454 + $0x78] sm:$0xff]
          %v4471 = vld [vmem:[%s4454 + $0x80] sm:$0xff]
          %v4472 = vld [vmem:[%s4454 + $0x88] sm:$0xff]
          %v4473 = vld [vmem:[%s4454 + $0x90] sm:$0xff]
          %v4474 = vld [vmem:[%s4454 + $0x98] sm:$0xff]
          %v4475 = vld [vmem:[%s4454 + $0xa0] sm:$0xff]
          %v4476 = vld [vmem:[%s4454 + $0xa8] sm:$0xff]
          %v4477 = vld [vmem:[%s4454 + $0xb0] sm:$0xff]
          %v4478 = vld [vmem:[%s4454 + $0xb8] sm:$0xff]
          %v4479 = vld [vmem:[%s4454 + $0xc0] sm:$0xff]
          %v4480 = vld [vmem:[%s4454 + $0xc8] sm:$0xff]
          %v4481 = vld [vmem:[%s4454 + $0xd0] sm:$0xff]
          %v4482 = vld [vmem:[%s4454 + $0xd8] sm:$0xff]
          %v4483 = vld [vmem:[%s4454 + $0xe0] sm:$0xff]
          %v4484 = vld [vmem:[%s4454 + $0xe8] sm:$0xff]
          %v4485 = vld [vmem:[%s4454 + $0xf0] sm:$0xff]
          %v4486 = vld [vmem:[%s4454 + $0xf8] sm:$0xff]
          %v4487 = vld [vmem:[%s4454 + $0x100] sm:$0xff]
          %v4488 = vld [vmem:[%s4454 + $0x108] sm:$0xff]
          %v4489 = vld [vmem:[%s4454 + $0x110] sm:$0xff]
          %v4490 = vld [vmem:[%s4454 + $0x118] sm:$0xff]
          %v4491 = vld [vmem:[%s4454 + $0x120] sm:$0xff]
          %v4492 = vld [vmem:[%s4454 + $0x128] sm:$0xff]
          %v4493 = vld [vmem:[%s4454 + $0x130] sm:$0xff]
          %v4494 = vld [vmem:[%s4454 + $0x138] sm:$0xff]
          %v4495 = vld [vmem:[%s4454 + $0x140] sm:$0xff]
          %v4496 = vld [vmem:[%s4454 + $0x148] sm:$0xff]
          %v4497 = vld [vmem:[%s4454 + $0x150] sm:$0xff]
          %v4498 = vld [vmem:[%s4454 + $0x158] sm:$0xff]
          %v4499 = vld [vmem:[%s4454 + $0x160] sm:$0xff]
          %v4500 = vld [vmem:[%s4454 + $0x168] sm:$0xff]
          %v4501 = vld [vmem:[%s4454 + $0x170] sm:$0xff]
          %v4502 = vld [vmem:[%s4454 + $0x178] sm:$0xff]
          %v4503 = vld [vmem:[%s4454 + $0x180] sm:$0xff]
          %v4504 = vld [vmem:[%s4454 + $0x188] sm:$0xff]
          %v4505 = vld [vmem:[%s4454 + $0x190] sm:$0xff]
          %v4506 = vld [vmem:[%s4454 + $0x198] sm:$0xff]
          %v4507 = vld [vmem:[%s4454 + $0x1a0] sm:$0xff]
          %v4508 = vld [vmem:[%s4454 + $0x1a8] sm:$0xff]
          %v4509 = vld [vmem:[%s4454 + $0x1b0] sm:$0xff]
          %v4510 = vld [vmem:[%s4454 + $0x1b8] sm:$0xff]
          %v4511 = vld [vmem:[%s4454 + $0x1c0] sm:$0xff]
          %v4512 = vld [vmem:[%s4454 + $0x1c8] sm:$0xff]
          %v4513 = vld [vmem:[%s4454 + $0x1d0] sm:$0xff]
          %v4514 = vld [vmem:[%s4454 + $0x1d8] sm:$0xff]
          %v4515 = vld [vmem:[%s4454 + $0x1e0] sm:$0xff]
          %v4516 = vld [vmem:[%s4454 + $0x1e8] sm:$0xff]
          %v4517 = vld [vmem:[%s4454 + $0x1f0] sm:$0xff]
          %v4518 = vld [vmem:[%s4454 + $0x1f8] sm:$0xff]
          %v4519 = vld [vmem:[%s4454 + $0x200] sm:$0xff]
          %v4520 = vld [vmem:[%s4454 + $0x208] sm:$0xff]
          %v4521 = vld [vmem:[%s4454 + $0x210] sm:$0xff]
          %v4522 = vld [vmem:[%s4454 + $0x218] sm:$0xff]
          %v4523 = vld [vmem:[%s4454 + $0x220] sm:$0xff]
          %v4524 = vld [vmem:[%s4454 + $0x228] sm:$0xff]
          %v4525 = vld [vmem:[%s4454 + $0x230] sm:$0xff]
          %v4526 = vld [vmem:[%s4454 + $0x238] sm:$0xff]
          %v4527 = vld [vmem:[%s4454 + $0x240] sm:$0xff]
          %v4528 = vld [vmem:[%s4454 + $0x248] sm:$0xff]
          %v4529 = vld [vmem:[%s4454 + $0x250] sm:$0xff]
          %v4530 = vld [vmem:[%s4454 + $0x258] sm:$0xff]
          %v4531 = vld [vmem:[%s4454 + $0x260] sm:$0xff]
          %v4532 = vld [vmem:[%s4454 + $0x268] sm:$0xff]
          %v4533 = vld [vmem:[%s4454 + $0x270] sm:$0xff]
          %v4534 = vld [vmem:[%s4454 + $0x278] sm:$0xff]
          %v4535 = vld [vmem:[%s4454 + $0x280] sm:$0xff]
          %v4536 = vld [vmem:[%s4454 + $0x288] sm:$0xff]
          %v4537 = vld [vmem:[%s4454 + $0x290] sm:$0xff]
          %v4538 = vld [vmem:[%s4454 + $0x298] sm:$0xff]
          %v4539 = vld [vmem:[%s4454 + $0x2a0] sm:$0xff]
          %v4540 = vld [vmem:[%s4454 + $0x2a8] sm:$0xff]
          %v4541 = vld [vmem:[%s4454 + $0x2b0] sm:$0xff]
          %v4542 = vld [vmem:[%s4454 + $0x2b8] sm:$0xff]
          %v4543 = vld [vmem:[%s4454 + $0x2c0] sm:$0xff]
          %v4544 = vld [vmem:[%s4454 + $0x2c8] sm:$0xff]
          %v4545 = vld [vmem:[%s4454 + $0x2d0] sm:$0xff]
          %v4546 = vld [vmem:[%s4454 + $0x2d8] sm:$0xff]
          %v4547 = vld [vmem:[%s4454 + $0x2e0] sm:$0xff]
          %v4548 = vld [vmem:[%s4454 + $0x2e8] sm:$0xff]
          %v4549 = vld [vmem:[%s4454 + $0x2f0] sm:$0xff]
          %v4550 = vld [vmem:[%s4454 + $0x2f8] sm:$0xff]
          %s4551 = scalar_lea.vmem [#allocation7], 768
          %v4552 = vld [vmem:[%s4551] sm:$0xff]
          %v4553 = vld [vmem:[%s4551 + $0x8] sm:$0xff]
          %v4554 = vld [vmem:[%s4551 + $0x10] sm:$0xff]
          %v4555 = vld [vmem:[%s4551 + $0x18] sm:$0xff]
          %v4556 = vld [vmem:[%s4551 + $0x20] sm:$0xff]
          %v4557 = vld [vmem:[%s4551 + $0x28] sm:$0xff]
          %v4558 = vld [vmem:[%s4551 + $0x30] sm:$0xff]
          %v4559 = vld [vmem:[%s4551 + $0x38] sm:$0xff]
          %v4560 = vld [vmem:[%s4551 + $0x40] sm:$0xff]
          %v4561 = vld [vmem:[%s4551 + $0x48] sm:$0xff]
          %v4562 = vld [vmem:[%s4551 + $0x50] sm:$0xff]
          %v4563 = vld [vmem:[%s4551 + $0x58] sm:$0xff]
          %v4564 = vld [vmem:[%s4551 + $0x60] sm:$0xff]
          %v4565 = vld [vmem:[%s4551 + $0x68] sm:$0xff]
          %v4566 = vld [vmem:[%s4551 + $0x70] sm:$0xff]
          %v4567 = vld [vmem:[%s4551 + $0x78] sm:$0xff]
          %v4568 = vld [vmem:[%s4551 + $0x80] sm:$0xff]
          %v4569 = vld [vmem:[%s4551 + $0x88] sm:$0xff]
          %v4570 = vld [vmem:[%s4551 + $0x90] sm:$0xff]
          %v4571 = vld [vmem:[%s4551 + $0x98] sm:$0xff]
          %v4572 = vld [vmem:[%s4551 + $0xa0] sm:$0xff]
          %v4573 = vld [vmem:[%s4551 + $0xa8] sm:$0xff]
          %v4574 = vld [vmem:[%s4551 + $0xb0] sm:$0xff]
          %v4575 = vld [vmem:[%s4551 + $0xb8] sm:$0xff]
          %v4576 = vld [vmem:[%s4551 + $0xc0] sm:$0xff]
          %v4577 = vld [vmem:[%s4551 + $0xc8] sm:$0xff]
          %v4578 = vld [vmem:[%s4551 + $0xd0] sm:$0xff]
          %v4579 = vld [vmem:[%s4551 + $0xd8] sm:$0xff]
          %v4580 = vld [vmem:[%s4551 + $0xe0] sm:$0xff]
          %v4581 = vld [vmem:[%s4551 + $0xe8] sm:$0xff]
          %v4582 = vld [vmem:[%s4551 + $0xf0] sm:$0xff]
          %v4583 = vld [vmem:[%s4551 + $0xf8] sm:$0xff]
          %v4584 = vld [vmem:[%s4551 + $0x100] sm:$0xff]
          %v4585 = vld [vmem:[%s4551 + $0x108] sm:$0xff]
          %v4586 = vld [vmem:[%s4551 + $0x110] sm:$0xff]
          %v4587 = vld [vmem:[%s4551 + $0x118] sm:$0xff]
          %v4588 = vld [vmem:[%s4551 + $0x120] sm:$0xff]
          %v4589 = vld [vmem:[%s4551 + $0x128] sm:$0xff]
          %v4590 = vld [vmem:[%s4551 + $0x130] sm:$0xff]
          %v4591 = vld [vmem:[%s4551 + $0x138] sm:$0xff]
          %v4592 = vld [vmem:[%s4551 + $0x140] sm:$0xff]
          %v4593 = vld [vmem:[%s4551 + $0x148] sm:$0xff]
          %v4594 = vld [vmem:[%s4551 + $0x150] sm:$0xff]
          %v4595 = vld [vmem:[%s4551 + $0x158] sm:$0xff]
          %v4596 = vld [vmem:[%s4551 + $0x160] sm:$0xff]
          %v4597 = vld [vmem:[%s4551 + $0x168] sm:$0xff]
          %v4598 = vld [vmem:[%s4551 + $0x170] sm:$0xff]
          %v4599 = vld [vmem:[%s4551 + $0x178] sm:$0xff]
          %4600 = vmatprep.subr.mxu0 0.0
          %4601 = vmatpush1.msra.mxu0 %v4567
          %4602 = vmatprep.subr.mxu0 0.0
          %4603 = vmatpush1.msra.mxu0 %v4566
          %4604 = vmatprep.subr.mxu0 0.0
          %4605 = vmatpush1.msra.mxu0 %v4565
          %4606 = vmatprep.subr.mxu0 0.0
          %4607 = vmatpush1.msra.mxu0 %v4564
          %4608 = vmatprep.subr.mxu0 0.0
          %4609 = vmatpush1.msra.mxu0 %v4563
          %4610 = vmatprep.subr.mxu0 0.0
          %4611 = vmatpush1.msra.mxu0 %v4562
          %4612 = vmatprep.subr.mxu0 0.0
          %4613 = vmatpush1.msra.mxu0 %v4561
          %4614 = vmatprep.subr.mxu0 0.0
          %4615 = vmatpush1.msra.mxu0 %v4560
          %4616 = vmatprep.subr.mxu0 0.0
          %4617 = vmatpush1.msra.mxu0 %v4559
          %4618 = vmatprep.subr.mxu0 0.0
          %4619 = vmatpush1.msra.mxu0 %v4558
          %4620 = vmatprep.subr.mxu0 0.0
          %4621 = vmatpush1.msra.mxu0 %v4557
          %4622 = vmatprep.subr.mxu0 0.0
          %4623 = vmatpush1.msra.mxu0 %v4556
          %4624 = vmatprep.subr.mxu0 0.0
          %4625 = vmatpush1.msra.mxu0 %v4555
          %4626 = vmatprep.subr.mxu0 0.0
          %4627 = vmatpush1.msra.mxu0 %v4554
          %4628 = vmatprep.subr.mxu0 0.0
          %4629 = vmatpush1.msra.mxu0 %v4553
          %4630 = vmatprep.subr.mxu0 0.0
          %4631 = vmatpush1.msra.mxu0 %v4552
          %4632 = vmatprep.subr.mxu0 0.0
          %4633 = vmatpush2.msra.mxu0 %v4583
          %4634 = vmatprep.subr.mxu0 0.0
          %4635 = vmatpush2.msra.mxu0 %v4582
          %4636 = vmatprep.subr.mxu0 0.0
          %4637 = vmatpush2.msra.mxu0 %v4581
          %4638 = vmatprep.subr.mxu0 0.0
          %4639 = vmatpush2.msra.mxu0 %v4580
          %4640 = vmatprep.subr.mxu0 0.0
          %4641 = vmatpush2.msra.mxu0 %v4579
          %4642 = vmatprep.subr.mxu0 0.0
          %4643 = vmatpush2.msra.mxu0 %v4578
          %4644 = vmatprep.subr.mxu0 0.0
          %4645 = vmatpush2.msra.mxu0 %v4577
          %4646 = vmatprep.subr.mxu0 0.0
          %4647 = vmatpush2.msra.mxu0 %v4576
          %4648 = vmatprep.subr.mxu0 0.0
          %4649 = vmatpush2.msra.mxu0 %v4575
          %4650 = vmatprep.subr.mxu0 0.0
          %4651 = vmatpush2.msra.mxu0 %v4574
          %4652 = vmatprep.subr.mxu0 0.0
          %4653 = vmatpush2.msra.mxu0 %v4573
          %4654 = vmatprep.subr.mxu0 0.0
          %4655 = vmatpush2.msra.mxu0 %v4572
          %4656 = vmatprep.subr.mxu0 0.0
          %4657 = vmatpush2.msra.mxu0 %v4571
          %4658 = vmatprep.subr.mxu0 0.0
          %4659 = vmatpush2.msra.mxu0 %v4570
          %4660 = vmatprep.subr.mxu0 0.0
          %4661 = vmatpush2.msra.mxu0 %v4569
          %4662 = vmatprep.subr.mxu0 0.0
          %4663 = vmatpush2.msra.mxu0 %v4568
          %4664 = vmatprep.mubr.f32.mxu0 %v4456
          %4665 = vmatmul.mubr.f32.gmra.mxu0 %v4455
          %v4666 = vpop.f32.mrf.mxu0
          %v4667 = vadd.f32 0.0, %v4666
          %v4668 = vpop.f32.mrf.mxu0
          %4669 = vmatprep.mubr.f32.mxu0 %v4459
          %4670 = vmatmul.mubr.f32.gmra.mxu0 %v4458
          %v4671 = vpop.f32.mrf.mxu0
          %v4672 = vadd.f32 0.0, %v4671
          %v4673 = vpop.f32.mrf.mxu0
          %4674 = vmatprep.mubr.f32.mxu0 %v4462
          %4675 = vmatmul.mubr.f32.gmra.mxu0 %v4461
          %v4676 = vpop.f32.mrf.mxu0
          %v4677 = vadd.f32 0.0, %v4676
          %v4678 = vpop.f32.mrf.mxu0
          %4679 = vmatprep.mubr.f32.mxu0 %v4465
          %4680 = vmatmul.mubr.f32.gmra.mxu0 %v4464
          %v4681 = vpop.f32.mrf.mxu0
          %v4682 = vadd.f32 0.0, %v4681
          %v4683 = vpop.f32.mrf.mxu0
          %4684 = vmatprep.mubr.f32.mxu0 %v4468
          %4685 = vmatmul.mubr.f32.gmra.mxu0 %v4467
          %v4686 = vpop.f32.mrf.mxu0
          %v4687 = vadd.f32 0.0, %v4686
          %v4688 = vpop.f32.mrf.mxu0
          %4689 = vmatprep.mubr.f32.mxu0 %v4471
          %4690 = vmatmul.mubr.f32.gmra.mxu0 %v4470
          %v4691 = vpop.f32.mrf.mxu0
          %v4692 = vadd.f32 0.0, %v4691
          %v4693 = vpop.f32.mrf.mxu0
          %4694 = vmatprep.mubr.f32.mxu0 %v4474
          %4695 = vmatmul.mubr.f32.gmra.mxu0 %v4473
          %v4696 = vpop.f32.mrf.mxu0
          %v4697 = vadd.f32 0.0, %v4696
          %v4698 = vpop.f32.mrf.mxu0
          %4699 = vmatprep.mubr.f32.mxu0 %v4477
          %4700 = vmatmul.mubr.f32.gmra.mxu0 %v4476
          %v4701 = vpop.f32.mrf.mxu0
          %v4702 = vadd.f32 0.0, %v4701
          %v4703 = vpop.f32.mrf.mxu0
          %4704 = vmatprep.mubr.f32.mxu0 %v4480
          %4705 = vmatmul.mubr.f32.gmra.mxu0 %v4479
          %v4706 = vpop.f32.mrf.mxu0
          %v4707 = vadd.f32 0.0, %v4706
          %v4708 = vpop.f32.mrf.mxu0
          %4709 = vmatprep.mubr.f32.mxu0 %v4483
          %4710 = vmatmul.mubr.f32.gmra.mxu0 %v4482
          %v4711 = vpop.f32.mrf.mxu0
          %v4712 = vadd.f32 0.0, %v4711
          %v4713 = vpop.f32.mrf.mxu0
          %4714 = vmatprep.mubr.f32.mxu0 %v4486
          %4715 = vmatmul.mubr.f32.gmra.mxu0 %v4485
          %v4716 = vpop.f32.mrf.mxu0
          %v4717 = vadd.f32 0.0, %v4716
          %v4718 = vpop.f32.mrf.mxu0
          %4719 = vmatprep.mubr.f32.mxu0 %v4489
          %4720 = vmatmul.mubr.f32.gmra.mxu0 %v4488
          %v4721 = vpop.f32.mrf.mxu0
          %v4722 = vadd.f32 0.0, %v4721
          %v4723 = vpop.f32.mrf.mxu0
          %4724 = vmatprep.mubr.f32.mxu0 %v4492
          %4725 = vmatmul.mubr.f32.gmra.mxu0 %v4491
          %v4726 = vpop.f32.mrf.mxu0
          %v4727 = vadd.f32 0.0, %v4726
          %v4728 = vpop.f32.mrf.mxu0
          %4729 = vmatprep.mubr.f32.mxu0 %v4495
          %4730 = vmatmul.mubr.f32.gmra.mxu0 %v4494
          %v4731 = vpop.f32.mrf.mxu0
          %v4732 = vadd.f32 0.0, %v4731
          %v4733 = vpop.f32.mrf.mxu0
          %4734 = vmatprep.mubr.f32.mxu0 %v4498
          %4735 = vmatmul.mubr.f32.gmra.mxu0 %v4497
          %v4736 = vpop.f32.mrf.mxu0
          %v4737 = vadd.f32 0.0, %v4736
          %v4738 = vpop.f32.mrf.mxu0
          %4739 = vmatprep.mubr.f32.mxu0 %v4501
          %4740 = vmatmul.mubr.f32.gmra.mxu0 %v4500
          %v4741 = vpop.f32.mrf.mxu0
          %v4742 = vadd.f32 0.0, %v4741
          %v4743 = vpop.f32.mrf.mxu0
          %4744 = vmatprep.mubr.f32.mxu0 %v4504
          %4745 = vmatmul.mubr.f32.gmra.mxu0 %v4503
          %v4746 = vpop.f32.mrf.mxu0
          %v4747 = vadd.f32 0.0, %v4746
          %v4748 = vpop.f32.mrf.mxu0
          %4749 = vmatprep.mubr.f32.mxu0 %v4507
          %4750 = vmatmul.mubr.f32.gmra.mxu0 %v4506
          %v4751 = vpop.f32.mrf.mxu0
          %v4752 = vadd.f32 0.0, %v4751
          %v4753 = vpop.f32.mrf.mxu0
          %4754 = vmatprep.mubr.f32.mxu0 %v4510
          %4755 = vmatmul.mubr.f32.gmra.mxu0 %v4509
          %v4756 = vpop.f32.mrf.mxu0
          %v4757 = vadd.f32 0.0, %v4756
          %v4758 = vpop.f32.mrf.mxu0
          %4759 = vmatprep.mubr.f32.mxu0 %v4513
          %4760 = vmatmul.mubr.f32.gmra.mxu0 %v4512
          %v4761 = vpop.f32.mrf.mxu0
          %v4762 = vadd.f32 0.0, %v4761
          %v4763 = vpop.f32.mrf.mxu0
          %4764 = vmatprep.mubr.f32.mxu0 %v4516
          %4765 = vmatmul.mubr.f32.gmra.mxu0 %v4515
          %v4766 = vpop.f32.mrf.mxu0
          %v4767 = vadd.f32 0.0, %v4766
          %v4768 = vpop.f32.mrf.mxu0
          %4769 = vmatprep.mubr.f32.mxu0 %v4519
          %4770 = vmatmul.mubr.f32.gmra.mxu0 %v4518
          %v4771 = vpop.f32.mrf.mxu0
          %v4772 = vadd.f32 0.0, %v4771
          %v4773 = vpop.f32.mrf.mxu0
          %4774 = vmatprep.mubr.f32.mxu0 %v4522
          %4775 = vmatmul.mubr.f32.gmra.mxu0 %v4521
          %v4776 = vpop.f32.mrf.mxu0
          %v4777 = vadd.f32 0.0, %v4776
          %v4778 = vpop.f32.mrf.mxu0
          %4779 = vmatprep.mubr.f32.mxu0 %v4525
          %4780 = vmatmul.mubr.f32.gmra.mxu0 %v4524
          %v4781 = vpop.f32.mrf.mxu0
          %v4782 = vadd.f32 0.0, %v4781
          %v4783 = vpop.f32.mrf.mxu0
          %4784 = vmatprep.mubr.f32.mxu0 %v4528
          %4785 = vmatmul.mubr.f32.gmra.mxu0 %v4527
          %v4786 = vpop.f32.mrf.mxu0
          %v4787 = vadd.f32 0.0, %v4786
          %v4788 = vpop.f32.mrf.mxu0
          %4789 = vmatprep.mubr.f32.mxu0 %v4531
          %4790 = vmatmul.mubr.f32.gmra.mxu0 %v4530
          %v4791 = vpop.f32.mrf.mxu0
          %v4792 = vadd.f32 0.0, %v4791
          %v4793 = vpop.f32.mrf.mxu0
          %4794 = vmatprep.mubr.f32.mxu0 %v4534
          %4795 = vmatmul.mubr.f32.gmra.mxu0 %v4533
          %v4796 = vpop.f32.mrf.mxu0
          %v4797 = vadd.f32 0.0, %v4796
          %v4798 = vpop.f32.mrf.mxu0
          %4799 = vmatprep.mubr.f32.mxu0 %v4537
          %4800 = vmatmul.mubr.f32.gmra.mxu0 %v4536
          %v4801 = vpop.f32.mrf.mxu0
          %v4802 = vadd.f32 0.0, %v4801
          %v4803 = vpop.f32.mrf.mxu0
          %4804 = vmatprep.mubr.f32.mxu0 %v4540
          %4805 = vmatmul.mubr.f32.gmra.mxu0 %v4539
          %v4806 = vpop.f32.mrf.mxu0
          %v4807 = vadd.f32 0.0, %v4806
          %v4808 = vpop.f32.mrf.mxu0
          %4809 = vmatprep.mubr.f32.mxu0 %v4543
          %4810 = vmatmul.mubr.f32.gmra.mxu0 %v4542
          %v4811 = vpop.f32.mrf.mxu0
          %v4812 = vadd.f32 0.0, %v4811
          %v4813 = vpop.f32.mrf.mxu0
          %4814 = vmatprep.mubr.f32.mxu0 %v4546
          %4815 = vmatmul.mubr.f32.gmra.mxu0 %v4545
          %v4816 = vpop.f32.mrf.mxu0
          %v4817 = vadd.f32 0.0, %v4816
          %v4818 = vpop.f32.mrf.mxu0
          %4819 = vmatprep.mubr.f32.mxu0 %v4549
          %4820 = vmatmul.mubr.f32.gmra.mxu0 %v4548
          %v4821 = vpop.f32.mrf.mxu0
          %v4822 = vadd.f32 0.0, %v4821
          %v4823 = vpop.f32.mrf.mxu0
          %4824 = vdwg.mxu0
          %4825 = vmatprep.subr.mxu0 0.0
          %4826 = vmatpush1.msra.mxu0 %v4599
          %4827 = vmatprep.subr.mxu0 0.0
          %4828 = vmatpush1.msra.mxu0 %v4598
          %4829 = vmatprep.subr.mxu0 0.0
          %4830 = vmatpush1.msra.mxu0 %v4597
          %4831 = vmatprep.subr.mxu0 0.0
          %4832 = vmatpush1.msra.mxu0 %v4596
          %4833 = vmatprep.subr.mxu0 0.0
          %4834 = vmatpush1.msra.mxu0 %v4595
          %4835 = vmatprep.subr.mxu0 0.0
          %4836 = vmatpush1.msra.mxu0 %v4594
          %4837 = vmatprep.subr.mxu0 0.0
          %4838 = vmatpush1.msra.mxu0 %v4593
          %4839 = vmatprep.subr.mxu0 0.0
          %4840 = vmatpush1.msra.mxu0 %v4592
          %4841 = vmatprep.subr.mxu0 0.0
          %4842 = vmatpush1.msra.mxu0 %v4591
          %4843 = vmatprep.subr.mxu0 0.0
          %4844 = vmatpush1.msra.mxu0 %v4590
          %4845 = vmatprep.subr.mxu0 0.0
          %4846 = vmatpush1.msra.mxu0 %v4589
          %4847 = vmatprep.subr.mxu0 0.0
          %4848 = vmatpush1.msra.mxu0 %v4588
          %4849 = vmatprep.subr.mxu0 0.0
          %4850 = vmatpush1.msra.mxu0 %v4587
          %4851 = vmatprep.subr.mxu0 0.0
          %4852 = vmatpush1.msra.mxu0 %v4586
          %4853 = vmatprep.subr.mxu0 0.0
          %4854 = vmatpush1.msra.mxu0 %v4585
          %4855 = vmatprep.subr.mxu0 0.0
          %4856 = vmatpush1.msra.mxu0 %v4584
          %4857 = vmatprep.subr.mxu0 0.0
          %4858 = vmatpush2.msra.mxu0 0.0
          %4859 = vmatprep.subr.mxu0 0.0
          %4860 = vmatpush2.msra.mxu0 0.0
          %4861 = vmatprep.subr.mxu0 0.0
          %4862 = vmatpush2.msra.mxu0 0.0
          %4863 = vmatprep.subr.mxu0 0.0
          %4864 = vmatpush2.msra.mxu0 0.0
          %4865 = vmatprep.subr.mxu0 0.0
          %4866 = vmatpush2.msra.mxu0 0.0
          %4867 = vmatprep.subr.mxu0 0.0
          %4868 = vmatpush2.msra.mxu0 0.0
          %4869 = vmatprep.subr.mxu0 0.0
          %4870 = vmatpush2.msra.mxu0 0.0
          %4871 = vmatprep.subr.mxu0 0.0
          %4872 = vmatpush2.msra.mxu0 0.0
          %4873 = vmatprep.subr.mxu0 0.0
          %4874 = vmatpush2.msra.mxu0 0.0
          %4875 = vmatprep.subr.mxu0 0.0
          %4876 = vmatpush2.msra.mxu0 0.0
          %4877 = vmatprep.subr.mxu0 0.0
          %4878 = vmatpush2.msra.mxu0 0.0
          %4879 = vmatprep.subr.mxu0 0.0
          %4880 = vmatpush2.msra.mxu0 0.0
          %4881 = vmatprep.subr.mxu0 0.0
          %4882 = vmatpush2.msra.mxu0 0.0
          %4883 = vmatprep.subr.mxu0 0.0
          %4884 = vmatpush2.msra.mxu0 0.0
          %4885 = vmatprep.subr.mxu0 0.0
          %4886 = vmatpush2.msra.mxu0 0.0
          %4887 = vmatprep.subr.mxu0 0.0
          %4888 = vmatpush2.msra.mxu0 0.0
          %4889 = vmatprep.mubr.f32.mxu0 0.0
          %4890 = vmatmul.mubr.f32.gmra.mxu0 %v4457
          %v4891 = vpop.f32.mrf.mxu0
          %v4892 = vadd.f32 %v4667, %v4891
          %v4893 = vpop.f32.mrf.mxu0
          %4894 = vmatprep.mubr.f32.mxu0 0.0
          %4895 = vmatmul.mubr.f32.gmra.mxu0 %v4460
          %v4896 = vpop.f32.mrf.mxu0
          %v4897 = vadd.f32 %v4672, %v4896
          %v4898 = vpop.f32.mrf.mxu0
          %4899 = vmatprep.mubr.f32.mxu0 0.0
          %4900 = vmatmul.mubr.f32.gmra.mxu0 %v4463
          %v4901 = vpop.f32.mrf.mxu0
          %v4902 = vadd.f32 %v4677, %v4901
          %v4903 = vpop.f32.mrf.mxu0
          %4904 = vmatprep.mubr.f32.mxu0 0.0
          %4905 = vmatmul.mubr.f32.gmra.mxu0 %v4466
          %v4906 = vpop.f32.mrf.mxu0
          %v4907 = vadd.f32 %v4682, %v4906
          %v4908 = vpop.f32.mrf.mxu0
          %4909 = vmatprep.mubr.f32.mxu0 0.0
          %4910 = vmatmul.mubr.f32.gmra.mxu0 %v4469
          %v4911 = vpop.f32.mrf.mxu0
          %v4912 = vadd.f32 %v4687, %v4911
          %v4913 = vpop.f32.mrf.mxu0
          %4914 = vmatprep.mubr.f32.mxu0 0.0
          %4915 = vmatmul.mubr.f32.gmra.mxu0 %v4472
          %v4916 = vpop.f32.mrf.mxu0
          %v4917 = vadd.f32 %v4692, %v4916
          %v4918 = vpop.f32.mrf.mxu0
          %4919 = vmatprep.mubr.f32.mxu0 0.0
          %4920 = vmatmul.mubr.f32.gmra.mxu0 %v4475
          %v4921 = vpop.f32.mrf.mxu0
          %v4922 = vadd.f32 %v4697, %v4921
          %v4923 = vpop.f32.mrf.mxu0
          %4924 = vmatprep.mubr.f32.mxu0 0.0
          %4925 = vmatmul.mubr.f32.gmra.mxu0 %v4478
          %v4926 = vpop.f32.mrf.mxu0
          %v4927 = vadd.f32 %v4702, %v4926
          %v4928 = vpop.f32.mrf.mxu0
          %4929 = vmatprep.mubr.f32.mxu0 0.0
          %4930 = vmatmul.mubr.f32.gmra.mxu0 %v4481
          %v4931 = vpop.f32.mrf.mxu0
          %v4932 = vadd.f32 %v4707, %v4931
          %v4933 = vpop.f32.mrf.mxu0
          %4934 = vmatprep.mubr.f32.mxu0 0.0
          %4935 = vmatmul.mubr.f32.gmra.mxu0 %v4484
          %v4936 = vpop.f32.mrf.mxu0
          %v4937 = vadd.f32 %v4712, %v4936
          %v4938 = vpop.f32.mrf.mxu0
          %4939 = vmatprep.mubr.f32.mxu0 0.0
          %4940 = vmatmul.mubr.f32.gmra.mxu0 %v4487
          %v4941 = vpop.f32.mrf.mxu0
          %v4942 = vadd.f32 %v4717, %v4941
          %v4943 = vpop.f32.mrf.mxu0
          %4944 = vmatprep.mubr.f32.mxu0 0.0
          %4945 = vmatmul.mubr.f32.gmra.mxu0 %v4490
          %v4946 = vpop.f32.mrf.mxu0
          %v4947 = vadd.f32 %v4722, %v4946
          %v4948 = vpop.f32.mrf.mxu0
          %4949 = vmatprep.mubr.f32.mxu0 0.0
          %4950 = vmatmul.mubr.f32.gmra.mxu0 %v4493
          %v4951 = vpop.f32.mrf.mxu0
          %v4952 = vadd.f32 %v4727, %v4951
          %v4953 = vpop.f32.mrf.mxu0
          %4954 = vmatprep.mubr.f32.mxu0 0.0
          %4955 = vmatmul.mubr.f32.gmra.mxu0 %v4496
          %v4956 = vpop.f32.mrf.mxu0
          %v4957 = vadd.f32 %v4732, %v4956
          %v4958 = vpop.f32.mrf.mxu0
          %4959 = vmatprep.mubr.f32.mxu0 0.0
          %4960 = vmatmul.mubr.f32.gmra.mxu0 %v4499
          %v4961 = vpop.f32.mrf.mxu0
          %v4962 = vadd.f32 %v4737, %v4961
          %v4963 = vpop.f32.mrf.mxu0
          %4964 = vmatprep.mubr.f32.mxu0 0.0
          %4965 = vmatmul.mubr.f32.gmra.mxu0 %v4502
          %v4966 = vpop.f32.mrf.mxu0
          %v4967 = vadd.f32 %v4742, %v4966
          %v4968 = vpop.f32.mrf.mxu0
          %4969 = vmatprep.mubr.f32.mxu0 0.0
          %4970 = vmatmul.mubr.f32.gmra.mxu0 %v4505
          %v4971 = vpop.f32.mrf.mxu0
          %v4972 = vadd.f32 %v4747, %v4971
          %v4973 = vpop.f32.mrf.mxu0
          %4974 = vmatprep.mubr.f32.mxu0 0.0
          %4975 = vmatmul.mubr.f32.gmra.mxu0 %v4508
          %v4976 = vpop.f32.mrf.mxu0
          %v4977 = vadd.f32 %v4752, %v4976
          %v4978 = vpop.f32.mrf.mxu0
          %4979 = vmatprep.mubr.f32.mxu0 0.0
          %4980 = vmatmul.mubr.f32.gmra.mxu0 %v4511
          %v4981 = vpop.f32.mrf.mxu0
          %v4982 = vadd.f32 %v4757, %v4981
          %v4983 = vpop.f32.mrf.mxu0
          %4984 = vmatprep.mubr.f32.mxu0 0.0
          %4985 = vmatmul.mubr.f32.gmra.mxu0 %v4514
          %v4986 = vpop.f32.mrf.mxu0
          %v4987 = vadd.f32 %v4762, %v4986
          %v4988 = vpop.f32.mrf.mxu0
          %4989 = vmatprep.mubr.f32.mxu0 0.0
          %4990 = vmatmul.mubr.f32.gmra.mxu0 %v4517
          %v4991 = vpop.f32.mrf.mxu0
          %v4992 = vadd.f32 %v4767, %v4991
          %v4993 = vpop.f32.mrf.mxu0
          %4994 = vmatprep.mubr.f32.mxu0 0.0
          %4995 = vmatmul.mubr.f32.gmra.mxu0 %v4520
          %v4996 = vpop.f32.mrf.mxu0
          %v4997 = vadd.f32 %v4772, %v4996
          %v4998 = vpop.f32.mrf.mxu0
          %4999 = vmatprep.mubr.f32.mxu0 0.0
          %5000 = vmatmul.mubr.f32.gmra.mxu0 %v4523
          %v5001 = vpop.f32.mrf.mxu0
          %v5002 = vadd.f32 %v4777, %v5001
          %v5003 = vpop.f32.mrf.mxu0
          %5004 = vmatprep.mubr.f32.mxu0 0.0
          %5005 = vmatmul.mubr.f32.gmra.mxu0 %v4526
          %v5006 = vpop.f32.mrf.mxu0
          %v5007 = vadd.f32 %v4782, %v5006
          %v5008 = vpop.f32.mrf.mxu0
          %5009 = vmatprep.mubr.f32.mxu0 0.0
          %5010 = vmatmul.mubr.f32.gmra.mxu0 %v4529
          %v5011 = vpop.f32.mrf.mxu0
          %v5012 = vadd.f32 %v4787, %v5011
          %v5013 = vpop.f32.mrf.mxu0
          %5014 = vmatprep.mubr.f32.mxu0 0.0
          %5015 = vmatmul.mubr.f32.gmra.mxu0 %v4532
          %v5016 = vpop.f32.mrf.mxu0
          %v5017 = vadd.f32 %v4792, %v5016
          %v5018 = vpop.f32.mrf.mxu0
          %5019 = vmatprep.mubr.f32.mxu0 0.0
          %5020 = vmatmul.mubr.f32.gmra.mxu0 %v4535
          %v5021 = vpop.f32.mrf.mxu0
          %v5022 = vadd.f32 %v4797, %v5021
          %v5023 = vpop.f32.mrf.mxu0
          %5024 = vmatprep.mubr.f32.mxu0 0.0
          %5025 = vmatmul.mubr.f32.gmra.mxu0 %v4538
          %v5026 = vpop.f32.mrf.mxu0
          %v5027 = vadd.f32 %v4802, %v5026
          %v5028 = vpop.f32.mrf.mxu0
          %5029 = vmatprep.mubr.f32.mxu0 0.0
          %5030 = vmatmul.mubr.f32.gmra.mxu0 %v4541
          %v5031 = vpop.f32.mrf.mxu0
          %v5032 = vadd.f32 %v4807, %v5031
          %v5033 = vpop.f32.mrf.mxu0
          %5034 = vmatprep.mubr.f32.mxu0 0.0
          %5035 = vmatmul.mubr.f32.gmra.mxu0 %v4544
          %v5036 = vpop.f32.mrf.mxu0
          %v5037 = vadd.f32 %v4812, %v5036
          %v5038 = vpop.f32.mrf.mxu0
          %5039 = vmatprep.mubr.f32.mxu0 0.0
          %5040 = vmatmul.mubr.f32.gmra.mxu0 %v4547
          %v5041 = vpop.f32.mrf.mxu0
          %v5042 = vadd.f32 %v4817, %v5041
          %v5043 = vpop.f32.mrf.mxu0
          %5044 = vmatprep.mubr.f32.mxu0 0.0
          %5045 = vmatmul.mubr.f32.gmra.mxu0 %v4550
          %v5046 = vpop.f32.mrf.mxu0
          %v5047 = vadd.f32 %v4822, %v5046
          %v5048 = vpop.f32.mrf.mxu0
          %5049 = vdwg.mxu0
          %v5050 = vadd.f32 %v4296, %v4892
          %v5051 = vadd.f32 %v4301, %v4897
          %v5052 = vadd.f32 %v4306, %v4902
          %v5053 = vadd.f32 %v4311, %v4907
          %v5054 = vadd.f32 %v4316, %v4912
          %v5055 = vadd.f32 %v4321, %v4917
          %v5056 = vadd.f32 %v4326, %v4922
          %v5057 = vadd.f32 %v4331, %v4927
          %v5058 = vadd.f32 %v4336, %v4932
          %v5059 = vadd.f32 %v4341, %v4937
          %v5060 = vadd.f32 %v4346, %v4942
          %v5061 = vadd.f32 %v4351, %v4947
          %v5062 = vadd.f32 %v4356, %v4952
          %v5063 = vadd.f32 %v4361, %v4957
          %v5064 = vadd.f32 %v4366, %v4962
          %v5065 = vadd.f32 %v4371, %v4967
          %v5066 = vadd.f32 %v4376, %v4972
          %v5067 = vadd.f32 %v4381, %v4977
          %v5068 = vadd.f32 %v4386, %v4982
          %v5069 = vadd.f32 %v4391, %v4987
          %v5070 = vadd.f32 %v4396, %v4992
          %v5071 = vadd.f32 %v4401, %v4997
          %v5072 = vadd.f32 %v4406, %v5002
          %v5073 = vadd.f32 %v4411, %v5007
          %v5074 = vadd.f32 %v4416, %v5012
          %v5075 = vadd.f32 %v4421, %v5017
          %v5076 = vadd.f32 %v4426, %v5022
          %v5077 = vadd.f32 %v4431, %v5027
          %v5078 = vadd.f32 %v4436, %v5032
          %v5079 = vadd.f32 %v4441, %v5037
          %v5080 = vadd.f32 %v4446, %v5042
          %v5081 = vadd.f32 %v4451, %v5047
          %v5082 = vmax.f32 %v5050, 0.0
          %v5083 = vmax.f32 %v5051, 0.0
          %v5084 = vmax.f32 %v5052, 0.0
          %v5085 = vmax.f32 %v5053, 0.0
          %v5086 = vmax.f32 %v5054, 0.0
          %v5087 = vmax.f32 %v5055, 0.0
          %v5088 = vmax.f32 %v5056, 0.0
          %v5089 = vmax.f32 %v5057, 0.0
          %v5090 = vmax.f32 %v5058, 0.0
          %v5091 = vmax.f32 %v5059, 0.0
          %v5092 = vmax.f32 %v5060, 0.0
          %v5093 = vmax.f32 %v5061, 0.0
          %v5094 = vmax.f32 %v5062, 0.0
          %v5095 = vmax.f32 %v5063, 0.0
          %v5096 = vmax.f32 %v5064, 0.0
          %v5097 = vmax.f32 %v5065, 0.0
          %v5098 = vmax.f32 %v5066, 0.0
          %v5099 = vmax.f32 %v5067, 0.0
          %v5100 = vmax.f32 %v5068, 0.0
          %v5101 = vmax.f32 %v5069, 0.0
          %v5102 = vmax.f32 %v5070, 0.0
          %v5103 = vmax.f32 %v5071, 0.0
          %v5104 = vmax.f32 %v5072, 0.0
          %v5105 = vmax.f32 %v5073, 0.0
          %v5106 = vmax.f32 %v5074, 0.0
          %v5107 = vmax.f32 %v5075, 0.0
          %v5108 = vmax.f32 %v5076, 0.0
          %v5109 = vmax.f32 %v5077, 0.0
          %v5110 = vmax.f32 %v5078, 0.0
          %v5111 = vmax.f32 %v5079, 0.0
          %v5112 = vmax.f32 %v5080, 0.0
          %v5113 = vmax.f32 %v5081, 0.0
          %5114 = vst [vmem:[%s356 + $0x1] sm:$0xff] %v5082
          %5115 = vst [vmem:[%s356 + $0x9] sm:$0xff] %v5083
          %5116 = vst [vmem:[%s356 + $0x19] sm:$0xff] %v5084
          %5117 = vst [vmem:[%s356 + $0x21] sm:$0xff] %v5085
          %5118 = vst [vmem:[%s356 + $0x31] sm:$0xff] %v5086
          %5119 = vst [vmem:[%s356 + $0x39] sm:$0xff] %v5087
          %5120 = vst [vmem:[%s356 + $0x49] sm:$0xff] %v5088
          %5121 = vst [vmem:[%s356 + $0x51] sm:$0xff] %v5089
          %5122 = vst [vmem:[%s356 + $0x61] sm:$0xff] %v5090
          %5123 = vst [vmem:[%s356 + $0x69] sm:$0xff] %v5091
          %5124 = vst [vmem:[%s356 + $0x79] sm:$0xff] %v5092
          %5125 = vst [vmem:[%s356 + $0x81] sm:$0xff] %v5093
          %5126 = vst [vmem:[%s356 + $0x91] sm:$0xff] %v5094
          %5127 = vst [vmem:[%s356 + $0x99] sm:$0xff] %v5095
          %5128 = vst [vmem:[%s356 + $0xa9] sm:$0xff] %v5096
          %5129 = vst [vmem:[%s356 + $0xb1] sm:$0xff] %v5097
          %5130 = vst [vmem:[%s356 + $0xc1] sm:$0xff] %v5098
          %5131 = vst [vmem:[%s356 + $0xc9] sm:$0xff] %v5099
          %5132 = vst [vmem:[%s356 + $0xd9] sm:$0xff] %v5100
          %5133 = vst [vmem:[%s356 + $0xe1] sm:$0xff] %v5101
          %5134 = vst [vmem:[%s356 + $0xf1] sm:$0xff] %v5102
          %5135 = vst [vmem:[%s356 + $0xf9] sm:$0xff] %v5103
          %5136 = vst [vmem:[%s356 + $0x109] sm:$0xff] %v5104
          %5137 = vst [vmem:[%s356 + $0x111] sm:$0xff] %v5105
          %5138 = vst [vmem:[%s356 + $0x121] sm:$0xff] %v5106
          %5139 = vst [vmem:[%s356 + $0x129] sm:$0xff] %v5107
          %5140 = vst [vmem:[%s356 + $0x139] sm:$0xff] %v5108
          %5141 = vst [vmem:[%s356 + $0x141] sm:$0xff] %v5109
          %5142 = vst [vmem:[%s356 + $0x151] sm:$0xff] %v5110
          %5143 = vst [vmem:[%s356 + $0x159] sm:$0xff] %v5111
          %5144 = vst [vmem:[%s356 + $0x169] sm:$0xff] %v5112
          %5145 = vst [vmem:[%s356 + $0x171] sm:$0xff] %v5113
          %v5146 = vld [vmem:[#allocation3] sm:$0xff]
          %v5147 = vld [vmem:[#allocation3 + $0x8] sm:$0xff]
          %v5148 = vld [vmem:[#allocation3 + $0x10] sm:$0xff]
          %v5149 = vld [vmem:[#allocation3 + $0x18] sm:$0xff]
          %v5150 = vld [vmem:[#allocation3 + $0x20] sm:$0xff]
          %v5151 = vld [vmem:[#allocation3 + $0x28] sm:$0xff]
          %v5152 = vld [vmem:[#allocation3 + $0x30] sm:$0xff]
          %v5153 = vld [vmem:[#allocation3 + $0x38] sm:$0xff]
          %v5154 = vld [vmem:[#allocation3 + $0x40] sm:$0xff]
          %v5155 = vld [vmem:[#allocation3 + $0x48] sm:$0xff]
          %v5156 = vld [vmem:[#allocation3 + $0x50] sm:$0xff]
          %v5157 = vld [vmem:[#allocation3 + $0x58] sm:$0xff]
          %v5158 = vld [vmem:[#allocation3 + $0x60] sm:$0xff]
          %v5159 = vld [vmem:[#allocation3 + $0x68] sm:$0xff]
          %v5160 = vld [vmem:[#allocation3 + $0x70] sm:$0xff]
          %v5161 = vld [vmem:[#allocation3 + $0x78] sm:$0xff]
          %v5162 = vld [vmem:[#allocation3 + $0x80] sm:$0xff]
          %v5163 = vld [vmem:[#allocation3 + $0x88] sm:$0xff]
          %v5164 = vld [vmem:[#allocation3 + $0x90] sm:$0xff]
          %v5165 = vld [vmem:[#allocation3 + $0x98] sm:$0xff]
          %v5166 = vld [vmem:[#allocation3 + $0xa0] sm:$0xff]
          %v5167 = vld [vmem:[#allocation3 + $0xa8] sm:$0xff]
          %v5168 = vld [vmem:[#allocation3 + $0xb0] sm:$0xff]
          %v5169 = vld [vmem:[#allocation3 + $0xb8] sm:$0xff]
          %v5170 = vld [vmem:[#allocation3 + $0xc0] sm:$0xff]
          %v5171 = vld [vmem:[#allocation3 + $0xc8] sm:$0xff]
          %v5172 = vld [vmem:[#allocation3 + $0xd0] sm:$0xff]
          %v5173 = vld [vmem:[#allocation3 + $0xd8] sm:$0xff]
          %v5174 = vld [vmem:[#allocation3 + $0xe0] sm:$0xff]
          %v5175 = vld [vmem:[#allocation3 + $0xe8] sm:$0xff]
          %v5176 = vld [vmem:[#allocation3 + $0xf0] sm:$0xff]
          %v5177 = vld [vmem:[#allocation3 + $0xf8] sm:$0xff]
          %v5178 = vld [vmem:[#allocation5] sm:$0xff]
          %v5179 = vld [vmem:[#allocation5 + $0x8] sm:$0xff]
          %v5180 = vld [vmem:[#allocation5 + $0x18] sm:$0xff]
          %v5181 = vld [vmem:[#allocation5 + $0x20] sm:$0xff]
          %v5182 = vld [vmem:[#allocation5 + $0x30] sm:$0xff]
          %v5183 = vld [vmem:[#allocation5 + $0x38] sm:$0xff]
          %v5184 = vld [vmem:[#allocation5 + $0x48] sm:$0xff]
          %v5185 = vld [vmem:[#allocation5 + $0x50] sm:$0xff]
          %v5186 = vld [vmem:[#allocation5 + $0x60] sm:$0xff]
          %v5187 = vld [vmem:[#allocation5 + $0x68] sm:$0xff]
          %v5188 = vld [vmem:[#allocation5 + $0x78] sm:$0xff]
          %v5189 = vld [vmem:[#allocation5 + $0x80] sm:$0xff]
          %v5190 = vld [vmem:[#allocation5 + $0x90] sm:$0xff]
          %v5191 = vld [vmem:[#allocation5 + $0x98] sm:$0xff]
          %v5192 = vld [vmem:[#allocation5 + $0xa8] sm:$0xff]
          %v5193 = vld [vmem:[#allocation5 + $0xb0] sm:$0xff]
          %v5194 = vld [vmem:[#allocation5 + $0xc0] sm:$0xff]
          %v5195 = vld [vmem:[#allocation5 + $0xc8] sm:$0xff]
          %v5196 = vld [vmem:[#allocation5 + $0xd8] sm:$0xff]
          %v5197 = vld [vmem:[#allocation5 + $0xe0] sm:$0xff]
          %v5198 = vld [vmem:[#allocation5 + $0xf0] sm:$0xff]
          %v5199 = vld [vmem:[#allocation5 + $0xf8] sm:$0xff]
          %v5200 = vld [vmem:[#allocation5 + $0x108] sm:$0xff]
          %v5201 = vld [vmem:[#allocation5 + $0x110] sm:$0xff]
          %v5202 = vld [vmem:[#allocation5 + $0x120] sm:$0xff]
          %v5203 = vld [vmem:[#allocation5 + $0x128] sm:$0xff]
          %v5204 = vld [vmem:[#allocation5 + $0x138] sm:$0xff]
          %v5205 = vld [vmem:[#allocation5 + $0x140] sm:$0xff]
          %v5206 = vld [vmem:[#allocation5 + $0x150] sm:$0xff]
          %v5207 = vld [vmem:[#allocation5 + $0x158] sm:$0xff]
          %v5208 = vld [vmem:[#allocation5 + $0x168] sm:$0xff]
          %v5209 = vld [vmem:[#allocation5 + $0x170] sm:$0xff]
          %v5210 = vld [vmem:[#allocation5 + $0x180] sm:$0xff]
          %v5211 = vld [vmem:[#allocation5 + $0x188] sm:$0xff]
          %v5212 = vld [vmem:[#allocation5 + $0x198] sm:$0xff]
          %v5213 = vld [vmem:[#allocation5 + $0x1a0] sm:$0xff]
          %5214 = vst [vmem:[#allocation6] sm:$0xff] %v5178
          %5215 = vst [vmem:[#allocation6 + $0x18] sm:$0xff] %v5179
          %5216 = vst [vmem:[#allocation6 + $0x30] sm:$0xff] %v5180
          %5217 = vst [vmem:[#allocation6 + $0x48] sm:$0xff] %v5181
          %5218 = vst [vmem:[#allocation6 + $0x60] sm:$0xff] %v5182
          %5219 = vst [vmem:[#allocation6 + $0x78] sm:$0xff] %v5183
          %5220 = vst [vmem:[#allocation6 + $0x90] sm:$0xff] %v5184
          %5221 = vst [vmem:[#allocation6 + $0xa8] sm:$0xff] %v5185
          %5222 = vst [vmem:[#allocation6 + $0xc0] sm:$0xff] %v5186
          %5223 = vst [vmem:[#allocation6 + $0xd8] sm:$0xff] %v5187
          %5224 = vst [vmem:[#allocation6 + $0xf0] sm:$0xff] %v5188
          %5225 = vst [vmem:[#allocation6 + $0x108] sm:$0xff] %v5189
          %5226 = vst [vmem:[#allocation6 + $0x120] sm:$0xff] %v5190
          %5227 = vst [vmem:[#allocation6 + $0x138] sm:$0xff] %v5191
          %5228 = vst [vmem:[#allocation6 + $0x150] sm:$0xff] %v5192
          %5229 = vst [vmem:[#allocation6 + $0x168] sm:$0xff] %v5193
          %5230 = vst [vmem:[#allocation6 + $0x180] sm:$0xff] %v5194
          %5231 = vst [vmem:[#allocation6 + $0x198] sm:$0xff] %v5195
          %5232 = vst [vmem:[#allocation6 + $0x1b0] sm:$0xff] %v5196
          %5233 = vst [vmem:[#allocation6 + $0x1c8] sm:$0xff] %v5197
          %5234 = vst [vmem:[#allocation6 + $0x1e0] sm:$0xff] %v5198
          %5235 = vst [vmem:[#allocation6 + $0x1f8] sm:$0xff] %v5199
          %5236 = vst [vmem:[#allocation6 + $0x210] sm:$0xff] %v5200
          %5237 = vst [vmem:[#allocation6 + $0x228] sm:$0xff] %v5201
          %5238 = vst [vmem:[#allocation6 + $0x240] sm:$0xff] %v5202
          %5239 = vst [vmem:[#allocation6 + $0x258] sm:$0xff] %v5203
          %5240 = vst [vmem:[#allocation6 + $0x270] sm:$0xff] %v5204
          %5241 = vst [vmem:[#allocation6 + $0x288] sm:$0xff] %v5205
          %5242 = vst [vmem:[#allocation6 + $0x2a0] sm:$0xff] %v5206
          %5243 = vst [vmem:[#allocation6 + $0x2b8] sm:$0xff] %v5207
          %5244 = vst [vmem:[#allocation6 + $0x2d0] sm:$0xff] %v5208
          %5245 = vst [vmem:[#allocation6 + $0x2e8] sm:$0xff] %v5209
          %5246 = vst [vmem:[#allocation6 + $0x300] sm:$0xff] %v5210
          %5247 = vst [vmem:[#allocation6 + $0x318] sm:$0xff] %v5211
          %5248 = vst [vmem:[#allocation6 + $0x330] sm:$0xff] %v5212
          %5249 = vst [vmem:[#allocation6 + $0x348] sm:$0xff] %v5213
          %v5250 = vld [vmem:[#allocation5 + $0x1] sm:$0xff]
          %v5251 = vld [vmem:[#allocation5 + $0x9] sm:$0xff]
          %v5252 = vld [vmem:[#allocation5 + $0x19] sm:$0xff]
          %v5253 = vld [vmem:[#allocation5 + $0x21] sm:$0xff]
          %v5254 = vld [vmem:[#allocation5 + $0x31] sm:$0xff]
          %v5255 = vld [vmem:[#allocation5 + $0x39] sm:$0xff]
          %v5256 = vld [vmem:[#allocation5 + $0x49] sm:$0xff]
          %v5257 = vld [vmem:[#allocation5 + $0x51] sm:$0xff]
          %v5258 = vld [vmem:[#allocation5 + $0x61] sm:$0xff]
          %v5259 = vld [vmem:[#allocation5 + $0x69] sm:$0xff]
          %v5260 = vld [vmem:[#allocation5 + $0x79] sm:$0xff]
          %v5261 = vld [vmem:[#allocation5 + $0x81] sm:$0xff]
          %v5262 = vld [vmem:[#allocation5 + $0x91] sm:$0xff]
          %v5263 = vld [vmem:[#allocation5 + $0x99] sm:$0xff]
          %v5264 = vld [vmem:[#allocation5 + $0xa9] sm:$0xff]
          %v5265 = vld [vmem:[#allocation5 + $0xb1] sm:$0xff]
          %v5266 = vld [vmem:[#allocation5 + $0xc1] sm:$0xff]
          %v5267 = vld [vmem:[#allocation5 + $0xc9] sm:$0xff]
          %v5268 = vld [vmem:[#allocation5 + $0xd9] sm:$0xff]
          %v5269 = vld [vmem:[#allocation5 + $0xe1] sm:$0xff]
          %v5270 = vld [vmem:[#allocation5 + $0xf1] sm:$0xff]
          %v5271 = vld [vmem:[#allocation5 + $0xf9] sm:$0xff]
          %v5272 = vld [vmem:[#allocation5 + $0x109] sm:$0xff]
          %v5273 = vld [vmem:[#allocation5 + $0x111] sm:$0xff]
          %v5274 = vld [vmem:[#allocation5 + $0x121] sm:$0xff]
          %v5275 = vld [vmem:[#allocation5 + $0x129] sm:$0xff]
          %v5276 = vld [vmem:[#allocation5 + $0x139] sm:$0xff]
          %v5277 = vld [vmem:[#allocation5 + $0x141] sm:$0xff]
          %v5278 = vld [vmem:[#allocation5 + $0x151] sm:$0xff]
          %v5279 = vld [vmem:[#allocation5 + $0x159] sm:$0xff]
          %v5280 = vld [vmem:[#allocation5 + $0x169] sm:$0xff]
          %v5281 = vld [vmem:[#allocation5 + $0x171] sm:$0xff]
          %v5282 = vld [vmem:[#allocation5 + $0x181] sm:$0xff]
          %v5283 = vld [vmem:[#allocation5 + $0x189] sm:$0xff]
          %v5284 = vld [vmem:[#allocation5 + $0x199] sm:$0xff]
          %v5285 = vld [vmem:[#allocation5 + $0x1a1] sm:$0xff]
          %5286 = vst [vmem:[#allocation6 + $0x8] sm:$0xff] %v5250
          %5287 = vst [vmem:[#allocation6 + $0x20] sm:$0xff] %v5251
          %5288 = vst [vmem:[#allocation6 + $0x38] sm:$0xff] %v5252
          %5289 = vst [vmem:[#allocation6 + $0x50] sm:$0xff] %v5253
          %5290 = vst [vmem:[#allocation6 + $0x68] sm:$0xff] %v5254
          %5291 = vst [vmem:[#allocation6 + $0x80] sm:$0xff] %v5255
          %5292 = vst [vmem:[#allocation6 + $0x98] sm:$0xff] %v5256
          %5293 = vst [vmem:[#allocation6 + $0xb0] sm:$0xff] %v5257
          %5294 = vst [vmem:[#allocation6 + $0xc8] sm:$0xff] %v5258
          %5295 = vst [vmem:[#allocation6 + $0xe0] sm:$0xff] %v5259
          %5296 = vst [vmem:[#allocation6 + $0xf8] sm:$0xff] %v5260
          %5297 = vst [vmem:[#allocation6 + $0x110] sm:$0xff] %v5261
          %5298 = vst [vmem:[#allocation6 + $0x128] sm:$0xff] %v5262
          %5299 = vst [vmem:[#allocation6 + $0x140] sm:$0xff] %v5263
          %5300 = vst [vmem:[#allocation6 + $0x158] sm:$0xff] %v5264
          %5301 = vst [vmem:[#allocation6 + $0x170] sm:$0xff] %v5265
          %5302 = vst [vmem:[#allocation6 + $0x188] sm:$0xff] %v5266
          %5303 = vst [vmem:[#allocation6 + $0x1a0] sm:$0xff] %v5267
          %5304 = vst [vmem:[#allocation6 + $0x1b8] sm:$0xff] %v5268
          %5305 = vst [vmem:[#allocation6 + $0x1d0] sm:$0xff] %v5269
          %5306 = vst [vmem:[#allocation6 + $0x1e8] sm:$0xff] %v5270
          %5307 = vst [vmem:[#allocation6 + $0x200] sm:$0xff] %v5271
          %5308 = vst [vmem:[#allocation6 + $0x218] sm:$0xff] %v5272
          %5309 = vst [vmem:[#allocation6 + $0x230] sm:$0xff] %v5273
          %5310 = vst [vmem:[#allocation6 + $0x248] sm:$0xff] %v5274
          %5311 = vst [vmem:[#allocation6 + $0x260] sm:$0xff] %v5275
          %5312 = vst [vmem:[#allocation6 + $0x278] sm:$0xff] %v5276
          %5313 = vst [vmem:[#allocation6 + $0x290] sm:$0xff] %v5277
          %5314 = vst [vmem:[#allocation6 + $0x2a8] sm:$0xff] %v5278
          %5315 = vst [vmem:[#allocation6 + $0x2c0] sm:$0xff] %v5279
          %5316 = vst [vmem:[#allocation6 + $0x2d8] sm:$0xff] %v5280
          %5317 = vst [vmem:[#allocation6 + $0x2f0] sm:$0xff] %v5281
          %5318 = vst [vmem:[#allocation6 + $0x308] sm:$0xff] %v5282
          %5319 = vst [vmem:[#allocation6 + $0x320] sm:$0xff] %v5283
          %5320 = vst [vmem:[#allocation6 + $0x338] sm:$0xff] %v5284
          %5321 = vst [vmem:[#allocation6 + $0x350] sm:$0xff] %v5285
          %v5322 = vld [vmem:[#allocation5 + $0x2] sm:$0xff]
          %v5323 = vld [vmem:[#allocation5 + $0xa] sm:$0xff]
          %v5324 = vld [vmem:[#allocation5 + $0x1a] sm:$0xff]
          %v5325 = vld [vmem:[#allocation5 + $0x22] sm:$0xff]
          %v5326 = vld [vmem:[#allocation5 + $0x32] sm:$0xff]
          %v5327 = vld [vmem:[#allocation5 + $0x3a] sm:$0xff]
          %v5328 = vld [vmem:[#allocation5 + $0x4a] sm:$0xff]
          %v5329 = vld [vmem:[#allocation5 + $0x52] sm:$0xff]
          %v5330 = vld [vmem:[#allocation5 + $0x62] sm:$0xff]
          %v5331 = vld [vmem:[#allocation5 + $0x6a] sm:$0xff]
          %v5332 = vld [vmem:[#allocation5 + $0x7a] sm:$0xff]
          %v5333 = vld [vmem:[#allocation5 + $0x82] sm:$0xff]
          %v5334 = vld [vmem:[#allocation5 + $0x92] sm:$0xff]
          %v5335 = vld [vmem:[#allocation5 + $0x9a] sm:$0xff]
          %v5336 = vld [vmem:[#allocation5 + $0xaa] sm:$0xff]
          %v5337 = vld [vmem:[#allocation5 + $0xb2] sm:$0xff]
          %v5338 = vld [vmem:[#allocation5 + $0xc2] sm:$0xff]
          %v5339 = vld [vmem:[#allocation5 + $0xca] sm:$0xff]
          %v5340 = vld [vmem:[#allocation5 + $0xda] sm:$0xff]
          %v5341 = vld [vmem:[#allocation5 + $0xe2] sm:$0xff]
          %v5342 = vld [vmem:[#allocation5 + $0xf2] sm:$0xff]
          %v5343 = vld [vmem:[#allocation5 + $0xfa] sm:$0xff]
          %v5344 = vld [vmem:[#allocation5 + $0x10a] sm:$0xff]
          %v5345 = vld [vmem:[#allocation5 + $0x112] sm:$0xff]
          %v5346 = vld [vmem:[#allocation5 + $0x122] sm:$0xff]
          %v5347 = vld [vmem:[#allocation5 + $0x12a] sm:$0xff]
          %v5348 = vld [vmem:[#allocation5 + $0x13a] sm:$0xff]
          %v5349 = vld [vmem:[#allocation5 + $0x142] sm:$0xff]
          %v5350 = vld [vmem:[#allocation5 + $0x152] sm:$0xff]
          %v5351 = vld [vmem:[#allocation5 + $0x15a] sm:$0xff]
          %v5352 = vld [vmem:[#allocation5 + $0x16a] sm:$0xff]
          %v5353 = vld [vmem:[#allocation5 + $0x172] sm:$0xff]
          %v5354 = vld [vmem:[#allocation5 + $0x182] sm:$0xff]
          %v5355 = vld [vmem:[#allocation5 + $0x18a] sm:$0xff]
          %v5356 = vld [vmem:[#allocation5 + $0x19a] sm:$0xff]
          %v5357 = vld [vmem:[#allocation5 + $0x1a2] sm:$0xff]
          %5358 = vst [vmem:[#allocation6 + $0x10] sm:$0xff] %v5322
          %5359 = vst [vmem:[#allocation6 + $0x28] sm:$0xff] %v5323
          %5360 = vst [vmem:[#allocation6 + $0x40] sm:$0xff] %v5324
          %5361 = vst [vmem:[#allocation6 + $0x58] sm:$0xff] %v5325
          %5362 = vst [vmem:[#allocation6 + $0x70] sm:$0xff] %v5326
          %5363 = vst [vmem:[#allocation6 + $0x88] sm:$0xff] %v5327
          %5364 = vst [vmem:[#allocation6 + $0xa0] sm:$0xff] %v5328
          %5365 = vst [vmem:[#allocation6 + $0xb8] sm:$0xff] %v5329
          %5366 = vst [vmem:[#allocation6 + $0xd0] sm:$0xff] %v5330
          %5367 = vst [vmem:[#allocation6 + $0xe8] sm:$0xff] %v5331
          %5368 = vst [vmem:[#allocation6 + $0x100] sm:$0xff] %v5332
          %5369 = vst [vmem:[#allocation6 + $0x118] sm:$0xff] %v5333
          %5370 = vst [vmem:[#allocation6 + $0x130] sm:$0xff] %v5334
          %5371 = vst [vmem:[#allocation6 + $0x148] sm:$0xff] %v5335
          %5372 = vst [vmem:[#allocation6 + $0x160] sm:$0xff] %v5336
          %5373 = vst [vmem:[#allocation6 + $0x178] sm:$0xff] %v5337
          %5374 = vst [vmem:[#allocation6 + $0x190] sm:$0xff] %v5338
          %5375 = vst [vmem:[#allocation6 + $0x1a8] sm:$0xff] %v5339
          %5376 = vst [vmem:[#allocation6 + $0x1c0] sm:$0xff] %v5340
          %5377 = vst [vmem:[#allocation6 + $0x1d8] sm:$0xff] %v5341
          %5378 = vst [vmem:[#allocation6 + $0x1f0] sm:$0xff] %v5342
          %5379 = vst [vmem:[#allocation6 + $0x208] sm:$0xff] %v5343
          %5380 = vst [vmem:[#allocation6 + $0x220] sm:$0xff] %v5344
          %5381 = vst [vmem:[#allocation6 + $0x238] sm:$0xff] %v5345
          %5382 = vst [vmem:[#allocation6 + $0x250] sm:$0xff] %v5346
          %5383 = vst [vmem:[#allocation6 + $0x268] sm:$0xff] %v5347
          %5384 = vst [vmem:[#allocation6 + $0x280] sm:$0xff] %v5348
          %5385 = vst [vmem:[#allocation6 + $0x298] sm:$0xff] %v5349
          %5386 = vst [vmem:[#allocation6 + $0x2b0] sm:$0xff] %v5350
          %5387 = vst [vmem:[#allocation6 + $0x2c8] sm:$0xff] %v5351
          %5388 = vst [vmem:[#allocation6 + $0x2e0] sm:$0xff] %v5352
          %5389 = vst [vmem:[#allocation6 + $0x2f8] sm:$0xff] %v5353
          %5390 = vst [vmem:[#allocation6 + $0x310] sm:$0xff] %v5354
          %5391 = vst [vmem:[#allocation6 + $0x328] sm:$0xff] %v5355
          %5392 = vst [vmem:[#allocation6 + $0x340] sm:$0xff] %v5356
          %5393 = vst [vmem:[#allocation6 + $0x358] sm:$0xff] %v5357
          %v5394 = vld [vmem:[#allocation6] sm:$0xff]
          %v5395 = vld [vmem:[#allocation6 + $0x8] sm:$0xff]
          %v5396 = vld [vmem:[#allocation6 + $0x10] sm:$0xff]
          %v5397 = vld [vmem:[#allocation6 + $0x18] sm:$0xff]
          %v5398 = vld [vmem:[#allocation6 + $0x20] sm:$0xff]
          %v5399 = vld [vmem:[#allocation6 + $0x28] sm:$0xff]
          %v5400 = vld [vmem:[#allocation6 + $0x30] sm:$0xff]
          %v5401 = vld [vmem:[#allocation6 + $0x38] sm:$0xff]
          %v5402 = vld [vmem:[#allocation6 + $0x40] sm:$0xff]
          %v5403 = vld [vmem:[#allocation6 + $0x48] sm:$0xff]
          %v5404 = vld [vmem:[#allocation6 + $0x50] sm:$0xff]
          %v5405 = vld [vmem:[#allocation6 + $0x58] sm:$0xff]
          %v5406 = vld [vmem:[#allocation6 + $0x60] sm:$0xff]
          %v5407 = vld [vmem:[#allocation6 + $0x68] sm:$0xff]
          %v5408 = vld [vmem:[#allocation6 + $0x70] sm:$0xff]
          %v5409 = vld [vmem:[#allocation6 + $0x78] sm:$0xff]
          %v5410 = vld [vmem:[#allocation6 + $0x80] sm:$0xff]
          %v5411 = vld [vmem:[#allocation6 + $0x88] sm:$0xff]
          %v5412 = vld [vmem:[#allocation6 + $0x90] sm:$0xff]
          %v5413 = vld [vmem:[#allocation6 + $0x98] sm:$0xff]
          %v5414 = vld [vmem:[#allocation6 + $0xa0] sm:$0xff]
          %v5415 = vld [vmem:[#allocation6 + $0xa8] sm:$0xff]
          %v5416 = vld [vmem:[#allocation6 + $0xb0] sm:$0xff]
          %v5417 = vld [vmem:[#allocation6 + $0xb8] sm:$0xff]
          %v5418 = vld [vmem:[#allocation6 + $0xc0] sm:$0xff]
          %v5419 = vld [vmem:[#allocation6 + $0xc8] sm:$0xff]
          %v5420 = vld [vmem:[#allocation6 + $0xd0] sm:$0xff]
          %v5421 = vld [vmem:[#allocation6 + $0xd8] sm:$0xff]
          %v5422 = vld [vmem:[#allocation6 + $0xe0] sm:$0xff]
          %v5423 = vld [vmem:[#allocation6 + $0xe8] sm:$0xff]
          %v5424 = vld [vmem:[#allocation6 + $0xf0] sm:$0xff]
          %v5425 = vld [vmem:[#allocation6 + $0xf8] sm:$0xff]
          %v5426 = vld [vmem:[#allocation6 + $0x100] sm:$0xff]
          %v5427 = vld [vmem:[#allocation6 + $0x108] sm:$0xff]
          %v5428 = vld [vmem:[#allocation6 + $0x110] sm:$0xff]
          %v5429 = vld [vmem:[#allocation6 + $0x118] sm:$0xff]
          %v5430 = vld [vmem:[#allocation6 + $0x120] sm:$0xff]
          %v5431 = vld [vmem:[#allocation6 + $0x128] sm:$0xff]
          %v5432 = vld [vmem:[#allocation6 + $0x130] sm:$0xff]
          %v5433 = vld [vmem:[#allocation6 + $0x138] sm:$0xff]
          %v5434 = vld [vmem:[#allocation6 + $0x140] sm:$0xff]
          %v5435 = vld [vmem:[#allocation6 + $0x148] sm:$0xff]
          %v5436 = vld [vmem:[#allocation6 + $0x150] sm:$0xff]
          %v5437 = vld [vmem:[#allocation6 + $0x158] sm:$0xff]
          %v5438 = vld [vmem:[#allocation6 + $0x160] sm:$0xff]
          %v5439 = vld [vmem:[#allocation6 + $0x168] sm:$0xff]
          %v5440 = vld [vmem:[#allocation6 + $0x170] sm:$0xff]
          %v5441 = vld [vmem:[#allocation6 + $0x178] sm:$0xff]
          %v5442 = vld [vmem:[#allocation6 + $0x180] sm:$0xff]
          %v5443 = vld [vmem:[#allocation6 + $0x188] sm:$0xff]
          %v5444 = vld [vmem:[#allocation6 + $0x190] sm:$0xff]
          %v5445 = vld [vmem:[#allocation6 + $0x198] sm:$0xff]
          %v5446 = vld [vmem:[#allocation6 + $0x1a0] sm:$0xff]
          %v5447 = vld [vmem:[#allocation6 + $0x1a8] sm:$0xff]
          %v5448 = vld [vmem:[#allocation6 + $0x1b0] sm:$0xff]
          %v5449 = vld [vmem:[#allocation6 + $0x1b8] sm:$0xff]
          %v5450 = vld [vmem:[#allocation6 + $0x1c0] sm:$0xff]
          %v5451 = vld [vmem:[#allocation6 + $0x1c8] sm:$0xff]
          %v5452 = vld [vmem:[#allocation6 + $0x1d0] sm:$0xff]
          %v5453 = vld [vmem:[#allocation6 + $0x1d8] sm:$0xff]
          %v5454 = vld [vmem:[#allocation6 + $0x1e0] sm:$0xff]
          %v5455 = vld [vmem:[#allocation6 + $0x1e8] sm:$0xff]
          %v5456 = vld [vmem:[#allocation6 + $0x1f0] sm:$0xff]
          %v5457 = vld [vmem:[#allocation6 + $0x1f8] sm:$0xff]
          %v5458 = vld [vmem:[#allocation6 + $0x200] sm:$0xff]
          %v5459 = vld [vmem:[#allocation6 + $0x208] sm:$0xff]
          %v5460 = vld [vmem:[#allocation6 + $0x210] sm:$0xff]
          %v5461 = vld [vmem:[#allocation6 + $0x218] sm:$0xff]
          %v5462 = vld [vmem:[#allocation6 + $0x220] sm:$0xff]
          %v5463 = vld [vmem:[#allocation6 + $0x228] sm:$0xff]
          %v5464 = vld [vmem:[#allocation6 + $0x230] sm:$0xff]
          %v5465 = vld [vmem:[#allocation6 + $0x238] sm:$0xff]
          %v5466 = vld [vmem:[#allocation6 + $0x240] sm:$0xff]
          %v5467 = vld [vmem:[#allocation6 + $0x248] sm:$0xff]
          %v5468 = vld [vmem:[#allocation6 + $0x250] sm:$0xff]
          %v5469 = vld [vmem:[#allocation6 + $0x258] sm:$0xff]
          %v5470 = vld [vmem:[#allocation6 + $0x260] sm:$0xff]
          %v5471 = vld [vmem:[#allocation6 + $0x268] sm:$0xff]
          %v5472 = vld [vmem:[#allocation6 + $0x270] sm:$0xff]
          %v5473 = vld [vmem:[#allocation6 + $0x278] sm:$0xff]
          %v5474 = vld [vmem:[#allocation6 + $0x280] sm:$0xff]
          %v5475 = vld [vmem:[#allocation6 + $0x288] sm:$0xff]
          %v5476 = vld [vmem:[#allocation6 + $0x290] sm:$0xff]
          %v5477 = vld [vmem:[#allocation6 + $0x298] sm:$0xff]
          %v5478 = vld [vmem:[#allocation6 + $0x2a0] sm:$0xff]
          %v5479 = vld [vmem:[#allocation6 + $0x2a8] sm:$0xff]
          %v5480 = vld [vmem:[#allocation6 + $0x2b0] sm:$0xff]
          %v5481 = vld [vmem:[#allocation6 + $0x2b8] sm:$0xff]
          %v5482 = vld [vmem:[#allocation6 + $0x2c0] sm:$0xff]
          %v5483 = vld [vmem:[#allocation6 + $0x2c8] sm:$0xff]
          %v5484 = vld [vmem:[#allocation6 + $0x2d0] sm:$0xff]
          %v5485 = vld [vmem:[#allocation6 + $0x2d8] sm:$0xff]
          %v5486 = vld [vmem:[#allocation6 + $0x2e0] sm:$0xff]
          %v5487 = vld [vmem:[#allocation6 + $0x2e8] sm:$0xff]
          %v5488 = vld [vmem:[#allocation6 + $0x2f0] sm:$0xff]
          %v5489 = vld [vmem:[#allocation6 + $0x2f8] sm:$0xff]
          %v5490 = vld [vmem:[#allocation10] sm:$0xff]
          %v5491 = vld [vmem:[#allocation10 + $0x8] sm:$0xff]
          %v5492 = vld [vmem:[#allocation10 + $0x10] sm:$0xff]
          %v5493 = vld [vmem:[#allocation10 + $0x18] sm:$0xff]
          %v5494 = vld [vmem:[#allocation10 + $0x20] sm:$0xff]
          %v5495 = vld [vmem:[#allocation10 + $0x28] sm:$0xff]
          %v5496 = vld [vmem:[#allocation10 + $0x30] sm:$0xff]
          %v5497 = vld [vmem:[#allocation10 + $0x38] sm:$0xff]
          %v5498 = vld [vmem:[#allocation10 + $0x40] sm:$0xff]
          %v5499 = vld [vmem:[#allocation10 + $0x48] sm:$0xff]
          %v5500 = vld [vmem:[#allocation10 + $0x50] sm:$0xff]
          %v5501 = vld [vmem:[#allocation10 + $0x58] sm:$0xff]
          %v5502 = vld [vmem:[#allocation10 + $0x60] sm:$0xff]
          %v5503 = vld [vmem:[#allocation10 + $0x68] sm:$0xff]
          %v5504 = vld [vmem:[#allocation10 + $0x70] sm:$0xff]
          %v5505 = vld [vmem:[#allocation10 + $0x78] sm:$0xff]
          %v5506 = vld [vmem:[#allocation10 + $0x80] sm:$0xff]
          %v5507 = vld [vmem:[#allocation10 + $0x88] sm:$0xff]
          %v5508 = vld [vmem:[#allocation10 + $0x90] sm:$0xff]
          %v5509 = vld [vmem:[#allocation10 + $0x98] sm:$0xff]
          %v5510 = vld [vmem:[#allocation10 + $0xa0] sm:$0xff]
          %v5511 = vld [vmem:[#allocation10 + $0xa8] sm:$0xff]
          %v5512 = vld [vmem:[#allocation10 + $0xb0] sm:$0xff]
          %v5513 = vld [vmem:[#allocation10 + $0xb8] sm:$0xff]
          %v5514 = vld [vmem:[#allocation10 + $0xc0] sm:$0xff]
          %v5515 = vld [vmem:[#allocation10 + $0xc8] sm:$0xff]
          %v5516 = vld [vmem:[#allocation10 + $0xd0] sm:$0xff]
          %v5517 = vld [vmem:[#allocation10 + $0xd8] sm:$0xff]
          %v5518 = vld [vmem:[#allocation10 + $0xe0] sm:$0xff]
          %v5519 = vld [vmem:[#allocation10 + $0xe8] sm:$0xff]
          %v5520 = vld [vmem:[#allocation10 + $0xf0] sm:$0xff]
          %v5521 = vld [vmem:[#allocation10 + $0xf8] sm:$0xff]
          %v5522 = vld [vmem:[#allocation10 + $0x100] sm:$0xff]
          %v5523 = vld [vmem:[#allocation10 + $0x108] sm:$0xff]
          %v5524 = vld [vmem:[#allocation10 + $0x110] sm:$0xff]
          %v5525 = vld [vmem:[#allocation10 + $0x118] sm:$0xff]
          %v5526 = vld [vmem:[#allocation10 + $0x120] sm:$0xff]
          %v5527 = vld [vmem:[#allocation10 + $0x128] sm:$0xff]
          %v5528 = vld [vmem:[#allocation10 + $0x130] sm:$0xff]
          %v5529 = vld [vmem:[#allocation10 + $0x138] sm:$0xff]
          %v5530 = vld [vmem:[#allocation10 + $0x140] sm:$0xff]
          %v5531 = vld [vmem:[#allocation10 + $0x148] sm:$0xff]
          %v5532 = vld [vmem:[#allocation10 + $0x150] sm:$0xff]
          %v5533 = vld [vmem:[#allocation10 + $0x158] sm:$0xff]
          %v5534 = vld [vmem:[#allocation10 + $0x160] sm:$0xff]
          %v5535 = vld [vmem:[#allocation10 + $0x168] sm:$0xff]
          %v5536 = vld [vmem:[#allocation10 + $0x170] sm:$0xff]
          %v5537 = vld [vmem:[#allocation10 + $0x178] sm:$0xff]
          %5538 = vmatprep.subr.mxu0 0.0
          %5539 = vmatpush1.msra.mxu0 %v5505
          %5540 = vmatprep.subr.mxu0 0.0
          %5541 = vmatpush1.msra.mxu0 %v5504
          %5542 = vmatprep.subr.mxu0 0.0
          %5543 = vmatpush1.msra.mxu0 %v5503
          %5544 = vmatprep.subr.mxu0 0.0
          %5545 = vmatpush1.msra.mxu0 %v5502
          %5546 = vmatprep.subr.mxu0 0.0
          %5547 = vmatpush1.msra.mxu0 %v5501
          %5548 = vmatprep.subr.mxu0 0.0
          %5549 = vmatpush1.msra.mxu0 %v5500
          %5550 = vmatprep.subr.mxu0 0.0
          %5551 = vmatpush1.msra.mxu0 %v5499
          %5552 = vmatprep.subr.mxu0 0.0
          %5553 = vmatpush1.msra.mxu0 %v5498
          %5554 = vmatprep.subr.mxu0 0.0
          %5555 = vmatpush1.msra.mxu0 %v5497
          %5556 = vmatprep.subr.mxu0 0.0
          %5557 = vmatpush1.msra.mxu0 %v5496
          %5558 = vmatprep.subr.mxu0 0.0
          %5559 = vmatpush1.msra.mxu0 %v5495
          %5560 = vmatprep.subr.mxu0 0.0
          %5561 = vmatpush1.msra.mxu0 %v5494
          %5562 = vmatprep.subr.mxu0 0.0
          %5563 = vmatpush1.msra.mxu0 %v5493
          %5564 = vmatprep.subr.mxu0 0.0
          %5565 = vmatpush1.msra.mxu0 %v5492
          %5566 = vmatprep.subr.mxu0 0.0
          %5567 = vmatpush1.msra.mxu0 %v5491
          %5568 = vmatprep.subr.mxu0 0.0
          %5569 = vmatpush1.msra.mxu0 %v5490
          %5570 = vmatprep.subr.mxu0 0.0
          %5571 = vmatpush2.msra.mxu0 %v5521
          %5572 = vmatprep.subr.mxu0 0.0
          %5573 = vmatpush2.msra.mxu0 %v5520
          %5574 = vmatprep.subr.mxu0 0.0
          %5575 = vmatpush2.msra.mxu0 %v5519
          %5576 = vmatprep.subr.mxu0 0.0
          %5577 = vmatpush2.msra.mxu0 %v5518
          %5578 = vmatprep.subr.mxu0 0.0
          %5579 = vmatpush2.msra.mxu0 %v5517
          %5580 = vmatprep.subr.mxu0 0.0
          %5581 = vmatpush2.msra.mxu0 %v5516
          %5582 = vmatprep.subr.mxu0 0.0
          %5583 = vmatpush2.msra.mxu0 %v5515
          %5584 = vmatprep.subr.mxu0 0.0
          %5585 = vmatpush2.msra.mxu0 %v5514
          %5586 = vmatprep.subr.mxu0 0.0
          %5587 = vmatpush2.msra.mxu0 %v5513
          %5588 = vmatprep.subr.mxu0 0.0
          %5589 = vmatpush2.msra.mxu0 %v5512
          %5590 = vmatprep.subr.mxu0 0.0
          %5591 = vmatpush2.msra.mxu0 %v5511
          %5592 = vmatprep.subr.mxu0 0.0
          %5593 = vmatpush2.msra.mxu0 %v5510
          %5594 = vmatprep.subr.mxu0 0.0
          %5595 = vmatpush2.msra.mxu0 %v5509
          %5596 = vmatprep.subr.mxu0 0.0
          %5597 = vmatpush2.msra.mxu0 %v5508
          %5598 = vmatprep.subr.mxu0 0.0
          %5599 = vmatpush2.msra.mxu0 %v5507
          %5600 = vmatprep.subr.mxu0 0.0
          %5601 = vmatpush2.msra.mxu0 %v5506
          %5602 = vmatprep.mubr.f32.mxu0 %v5395
          %5603 = vmatmul.mubr.f32.gmra.mxu0 %v5394
          %v5604 = vpop.f32.mrf.mxu0
          %v5605 = vadd.f32 0.0, %v5604
          %v5606 = vpop.f32.mrf.mxu0
          %5607 = vmatprep.mubr.f32.mxu0 %v5398
          %5608 = vmatmul.mubr.f32.gmra.mxu0 %v5397
          %v5609 = vpop.f32.mrf.mxu0
          %v5610 = vadd.f32 0.0, %v5609
          %v5611 = vpop.f32.mrf.mxu0
          %5612 = vmatprep.mubr.f32.mxu0 %v5401
          %5613 = vmatmul.mubr.f32.gmra.mxu0 %v5400
          %v5614 = vpop.f32.mrf.mxu0
          %v5615 = vadd.f32 0.0, %v5614
          %v5616 = vpop.f32.mrf.mxu0
          %5617 = vmatprep.mubr.f32.mxu0 %v5404
          %5618 = vmatmul.mubr.f32.gmra.mxu0 %v5403
          %v5619 = vpop.f32.mrf.mxu0
          %v5620 = vadd.f32 0.0, %v5619
          %v5621 = vpop.f32.mrf.mxu0
          %5622 = vmatprep.mubr.f32.mxu0 %v5407
          %5623 = vmatmul.mubr.f32.gmra.mxu0 %v5406
          %v5624 = vpop.f32.mrf.mxu0
          %v5625 = vadd.f32 0.0, %v5624
          %v5626 = vpop.f32.mrf.mxu0
          %5627 = vmatprep.mubr.f32.mxu0 %v5410
          %5628 = vmatmul.mubr.f32.gmra.mxu0 %v5409
          %v5629 = vpop.f32.mrf.mxu0
          %v5630 = vadd.f32 0.0, %v5629
          %v5631 = vpop.f32.mrf.mxu0
          %5632 = vmatprep.mubr.f32.mxu0 %v5413
          %5633 = vmatmul.mubr.f32.gmra.mxu0 %v5412
          %v5634 = vpop.f32.mrf.mxu0
          %v5635 = vadd.f32 0.0, %v5634
          %v5636 = vpop.f32.mrf.mxu0
          %5637 = vmatprep.mubr.f32.mxu0 %v5416
          %5638 = vmatmul.mubr.f32.gmra.mxu0 %v5415
          %v5639 = vpop.f32.mrf.mxu0
          %v5640 = vadd.f32 0.0, %v5639
          %v5641 = vpop.f32.mrf.mxu0
          %5642 = vmatprep.mubr.f32.mxu0 %v5419
          %5643 = vmatmul.mubr.f32.gmra.mxu0 %v5418
          %v5644 = vpop.f32.mrf.mxu0
          %v5645 = vadd.f32 0.0, %v5644
          %v5646 = vpop.f32.mrf.mxu0
          %5647 = vmatprep.mubr.f32.mxu0 %v5422
          %5648 = vmatmul.mubr.f32.gmra.mxu0 %v5421
          %v5649 = vpop.f32.mrf.mxu0
          %v5650 = vadd.f32 0.0, %v5649
          %v5651 = vpop.f32.mrf.mxu0
          %5652 = vmatprep.mubr.f32.mxu0 %v5425
          %5653 = vmatmul.mubr.f32.gmra.mxu0 %v5424
          %v5654 = vpop.f32.mrf.mxu0
          %v5655 = vadd.f32 0.0, %v5654
          %v5656 = vpop.f32.mrf.mxu0
          %5657 = vmatprep.mubr.f32.mxu0 %v5428
          %5658 = vmatmul.mubr.f32.gmra.mxu0 %v5427
          %v5659 = vpop.f32.mrf.mxu0
          %v5660 = vadd.f32 0.0, %v5659
          %v5661 = vpop.f32.mrf.mxu0
          %5662 = vmatprep.mubr.f32.mxu0 %v5431
          %5663 = vmatmul.mubr.f32.gmra.mxu0 %v5430
          %v5664 = vpop.f32.mrf.mxu0
          %v5665 = vadd.f32 0.0, %v5664
          %v5666 = vpop.f32.mrf.mxu0
          %5667 = vmatprep.mubr.f32.mxu0 %v5434
          %5668 = vmatmul.mubr.f32.gmra.mxu0 %v5433
          %v5669 = vpop.f32.mrf.mxu0
          %v5670 = vadd.f32 0.0, %v5669
          %v5671 = vpop.f32.mrf.mxu0
          %5672 = vmatprep.mubr.f32.mxu0 %v5437
          %5673 = vmatmul.mubr.f32.gmra.mxu0 %v5436
          %v5674 = vpop.f32.mrf.mxu0
          %v5675 = vadd.f32 0.0, %v5674
          %v5676 = vpop.f32.mrf.mxu0
          %5677 = vmatprep.mubr.f32.mxu0 %v5440
          %5678 = vmatmul.mubr.f32.gmra.mxu0 %v5439
          %v5679 = vpop.f32.mrf.mxu0
          %v5680 = vadd.f32 0.0, %v5679
          %v5681 = vpop.f32.mrf.mxu0
          %5682 = vmatprep.mubr.f32.mxu0 %v5443
          %5683 = vmatmul.mubr.f32.gmra.mxu0 %v5442
          %v5684 = vpop.f32.mrf.mxu0
          %v5685 = vadd.f32 0.0, %v5684
          %v5686 = vpop.f32.mrf.mxu0
          %5687 = vmatprep.mubr.f32.mxu0 %v5446
          %5688 = vmatmul.mubr.f32.gmra.mxu0 %v5445
          %v5689 = vpop.f32.mrf.mxu0
          %v5690 = vadd.f32 0.0, %v5689
          %v5691 = vpop.f32.mrf.mxu0
          %5692 = vmatprep.mubr.f32.mxu0 %v5449
          %5693 = vmatmul.mubr.f32.gmra.mxu0 %v5448
          %v5694 = vpop.f32.mrf.mxu0
          %v5695 = vadd.f32 0.0, %v5694
          %v5696 = vpop.f32.mrf.mxu0
          %5697 = vmatprep.mubr.f32.mxu0 %v5452
          %5698 = vmatmul.mubr.f32.gmra.mxu0 %v5451
          %v5699 = vpop.f32.mrf.mxu0
          %v5700 = vadd.f32 0.0, %v5699
          %v5701 = vpop.f32.mrf.mxu0
          %5702 = vmatprep.mubr.f32.mxu0 %v5455
          %5703 = vmatmul.mubr.f32.gmra.mxu0 %v5454
          %v5704 = vpop.f32.mrf.mxu0
          %v5705 = vadd.f32 0.0, %v5704
          %v5706 = vpop.f32.mrf.mxu0
          %5707 = vmatprep.mubr.f32.mxu0 %v5458
          %5708 = vmatmul.mubr.f32.gmra.mxu0 %v5457
          %v5709 = vpop.f32.mrf.mxu0
          %v5710 = vadd.f32 0.0, %v5709
          %v5711 = vpop.f32.mrf.mxu0
          %5712 = vmatprep.mubr.f32.mxu0 %v5461
          %5713 = vmatmul.mubr.f32.gmra.mxu0 %v5460
          %v5714 = vpop.f32.mrf.mxu0
          %v5715 = vadd.f32 0.0, %v5714
          %v5716 = vpop.f32.mrf.mxu0
          %5717 = vmatprep.mubr.f32.mxu0 %v5464
          %5718 = vmatmul.mubr.f32.gmra.mxu0 %v5463
          %v5719 = vpop.f32.mrf.mxu0
          %v5720 = vadd.f32 0.0, %v5719
          %v5721 = vpop.f32.mrf.mxu0
          %5722 = vmatprep.mubr.f32.mxu0 %v5467
          %5723 = vmatmul.mubr.f32.gmra.mxu0 %v5466
          %v5724 = vpop.f32.mrf.mxu0
          %v5725 = vadd.f32 0.0, %v5724
          %v5726 = vpop.f32.mrf.mxu0
          %5727 = vmatprep.mubr.f32.mxu0 %v5470
          %5728 = vmatmul.mubr.f32.gmra.mxu0 %v5469
          %v5729 = vpop.f32.mrf.mxu0
          %v5730 = vadd.f32 0.0, %v5729
          %v5731 = vpop.f32.mrf.mxu0
          %5732 = vmatprep.mubr.f32.mxu0 %v5473
          %5733 = vmatmul.mubr.f32.gmra.mxu0 %v5472
          %v5734 = vpop.f32.mrf.mxu0
          %v5735 = vadd.f32 0.0, %v5734
          %v5736 = vpop.f32.mrf.mxu0
          %5737 = vmatprep.mubr.f32.mxu0 %v5476
          %5738 = vmatmul.mubr.f32.gmra.mxu0 %v5475
          %v5739 = vpop.f32.mrf.mxu0
          %v5740 = vadd.f32 0.0, %v5739
          %v5741 = vpop.f32.mrf.mxu0
          %5742 = vmatprep.mubr.f32.mxu0 %v5479
          %5743 = vmatmul.mubr.f32.gmra.mxu0 %v5478
          %v5744 = vpop.f32.mrf.mxu0
          %v5745 = vadd.f32 0.0, %v5744
          %v5746 = vpop.f32.mrf.mxu0
          %5747 = vmatprep.mubr.f32.mxu0 %v5482
          %5748 = vmatmul.mubr.f32.gmra.mxu0 %v5481
          %v5749 = vpop.f32.mrf.mxu0
          %v5750 = vadd.f32 0.0, %v5749
          %v5751 = vpop.f32.mrf.mxu0
          %5752 = vmatprep.mubr.f32.mxu0 %v5485
          %5753 = vmatmul.mubr.f32.gmra.mxu0 %v5484
          %v5754 = vpop.f32.mrf.mxu0
          %v5755 = vadd.f32 0.0, %v5754
          %v5756 = vpop.f32.mrf.mxu0
          %5757 = vmatprep.mubr.f32.mxu0 %v5488
          %5758 = vmatmul.mubr.f32.gmra.mxu0 %v5487
          %v5759 = vpop.f32.mrf.mxu0
          %v5760 = vadd.f32 0.0, %v5759
          %v5761 = vpop.f32.mrf.mxu0
          %5762 = vdwg.mxu0
          %5763 = vmatprep.subr.mxu0 0.0
          %5764 = vmatpush1.msra.mxu0 %v5537
          %5765 = vmatprep.subr.mxu0 0.0
          %5766 = vmatpush1.msra.mxu0 %v5536
          %5767 = vmatprep.subr.mxu0 0.0
          %5768 = vmatpush1.msra.mxu0 %v5535
          %5769 = vmatprep.subr.mxu0 0.0
          %5770 = vmatpush1.msra.mxu0 %v5534
          %5771 = vmatprep.subr.mxu0 0.0
          %5772 = vmatpush1.msra.mxu0 %v5533
          %5773 = vmatprep.subr.mxu0 0.0
          %5774 = vmatpush1.msra.mxu0 %v5532
          %5775 = vmatprep.subr.mxu0 0.0
          %5776 = vmatpush1.msra.mxu0 %v5531
          %5777 = vmatprep.subr.mxu0 0.0
          %5778 = vmatpush1.msra.mxu0 %v5530
          %5779 = vmatprep.subr.mxu0 0.0
          %5780 = vmatpush1.msra.mxu0 %v5529
          %5781 = vmatprep.subr.mxu0 0.0
          %5782 = vmatpush1.msra.mxu0 %v5528
          %5783 = vmatprep.subr.mxu0 0.0
          %5784 = vmatpush1.msra.mxu0 %v5527
          %5785 = vmatprep.subr.mxu0 0.0
          %5786 = vmatpush1.msra.mxu0 %v5526
          %5787 = vmatprep.subr.mxu0 0.0
          %5788 = vmatpush1.msra.mxu0 %v5525
          %5789 = vmatprep.subr.mxu0 0.0
          %5790 = vmatpush1.msra.mxu0 %v5524
          %5791 = vmatprep.subr.mxu0 0.0
          %5792 = vmatpush1.msra.mxu0 %v5523
          %5793 = vmatprep.subr.mxu0 0.0
          %5794 = vmatpush1.msra.mxu0 %v5522
          %5795 = vmatprep.subr.mxu0 0.0
          %5796 = vmatpush2.msra.mxu0 0.0
          %5797 = vmatprep.subr.mxu0 0.0
          %5798 = vmatpush2.msra.mxu0 0.0
          %5799 = vmatprep.subr.mxu0 0.0
          %5800 = vmatpush2.msra.mxu0 0.0
          %5801 = vmatprep.subr.mxu0 0.0
          %5802 = vmatpush2.msra.mxu0 0.0
          %5803 = vmatprep.subr.mxu0 0.0
          %5804 = vmatpush2.msra.mxu0 0.0
          %5805 = vmatprep.subr.mxu0 0.0
          %5806 = vmatpush2.msra.mxu0 0.0
          %5807 = vmatprep.subr.mxu0 0.0
          %5808 = vmatpush2.msra.mxu0 0.0
          %5809 = vmatprep.subr.mxu0 0.0
          %5810 = vmatpush2.msra.mxu0 0.0
          %5811 = vmatprep.subr.mxu0 0.0
          %5812 = vmatpush2.msra.mxu0 0.0
          %5813 = vmatprep.subr.mxu0 0.0
          %5814 = vmatpush2.msra.mxu0 0.0
          %5815 = vmatprep.subr.mxu0 0.0
          %5816 = vmatpush2.msra.mxu0 0.0
          %5817 = vmatprep.subr.mxu0 0.0
          %5818 = vmatpush2.msra.mxu0 0.0
          %5819 = vmatprep.subr.mxu0 0.0
          %5820 = vmatpush2.msra.mxu0 0.0
          %5821 = vmatprep.subr.mxu0 0.0
          %5822 = vmatpush2.msra.mxu0 0.0
          %5823 = vmatprep.subr.mxu0 0.0
          %5824 = vmatpush2.msra.mxu0 0.0
          %5825 = vmatprep.subr.mxu0 0.0
          %5826 = vmatpush2.msra.mxu0 0.0
          %5827 = vmatprep.mubr.f32.mxu0 0.0
          %5828 = vmatmul.mubr.f32.gmra.mxu0 %v5396
          %v5829 = vpop.f32.mrf.mxu0
          %v5830 = vadd.f32 %v5605, %v5829
          %v5831 = vpop.f32.mrf.mxu0
          %5832 = vmatprep.mubr.f32.mxu0 0.0
          %5833 = vmatmul.mubr.f32.gmra.mxu0 %v5399
          %v5834 = vpop.f32.mrf.mxu0
          %v5835 = vadd.f32 %v5610, %v5834
          %v5836 = vpop.f32.mrf.mxu0
          %5837 = vmatprep.mubr.f32.mxu0 0.0
          %5838 = vmatmul.mubr.f32.gmra.mxu0 %v5402
          %v5839 = vpop.f32.mrf.mxu0
          %v5840 = vadd.f32 %v5615, %v5839
          %v5841 = vpop.f32.mrf.mxu0
          %5842 = vmatprep.mubr.f32.mxu0 0.0
          %5843 = vmatmul.mubr.f32.gmra.mxu0 %v5405
          %v5844 = vpop.f32.mrf.mxu0
          %v5845 = vadd.f32 %v5620, %v5844
          %v5846 = vpop.f32.mrf.mxu0
          %5847 = vmatprep.mubr.f32.mxu0 0.0
          %5848 = vmatmul.mubr.f32.gmra.mxu0 %v5408
          %v5849 = vpop.f32.mrf.mxu0
          %v5850 = vadd.f32 %v5625, %v5849
          %v5851 = vpop.f32.mrf.mxu0
          %5852 = vmatprep.mubr.f32.mxu0 0.0
          %5853 = vmatmul.mubr.f32.gmra.mxu0 %v5411
          %v5854 = vpop.f32.mrf.mxu0
          %v5855 = vadd.f32 %v5630, %v5854
          %v5856 = vpop.f32.mrf.mxu0
          %5857 = vmatprep.mubr.f32.mxu0 0.0
          %5858 = vmatmul.mubr.f32.gmra.mxu0 %v5414
          %v5859 = vpop.f32.mrf.mxu0
          %v5860 = vadd.f32 %v5635, %v5859
          %v5861 = vpop.f32.mrf.mxu0
          %5862 = vmatprep.mubr.f32.mxu0 0.0
          %5863 = vmatmul.mubr.f32.gmra.mxu0 %v5417
          %v5864 = vpop.f32.mrf.mxu0
          %v5865 = vadd.f32 %v5640, %v5864
          %v5866 = vpop.f32.mrf.mxu0
          %5867 = vmatprep.mubr.f32.mxu0 0.0
          %5868 = vmatmul.mubr.f32.gmra.mxu0 %v5420
          %v5869 = vpop.f32.mrf.mxu0
          %v5870 = vadd.f32 %v5645, %v5869
          %v5871 = vpop.f32.mrf.mxu0
          %5872 = vmatprep.mubr.f32.mxu0 0.0
          %5873 = vmatmul.mubr.f32.gmra.mxu0 %v5423
          %v5874 = vpop.f32.mrf.mxu0
          %v5875 = vadd.f32 %v5650, %v5874
          %v5876 = vpop.f32.mrf.mxu0
          %5877 = vmatprep.mubr.f32.mxu0 0.0
          %5878 = vmatmul.mubr.f32.gmra.mxu0 %v5426
          %v5879 = vpop.f32.mrf.mxu0
          %v5880 = vadd.f32 %v5655, %v5879
          %v5881 = vpop.f32.mrf.mxu0
          %5882 = vmatprep.mubr.f32.mxu0 0.0
          %5883 = vmatmul.mubr.f32.gmra.mxu0 %v5429
          %v5884 = vpop.f32.mrf.mxu0
          %v5885 = vadd.f32 %v5660, %v5884
          %v5886 = vpop.f32.mrf.mxu0
          %5887 = vmatprep.mubr.f32.mxu0 0.0
          %5888 = vmatmul.mubr.f32.gmra.mxu0 %v5432
          %v5889 = vpop.f32.mrf.mxu0
          %v5890 = vadd.f32 %v5665, %v5889
          %v5891 = vpop.f32.mrf.mxu0
          %5892 = vmatprep.mubr.f32.mxu0 0.0
          %5893 = vmatmul.mubr.f32.gmra.mxu0 %v5435
          %v5894 = vpop.f32.mrf.mxu0
          %v5895 = vadd.f32 %v5670, %v5894
          %v5896 = vpop.f32.mrf.mxu0
          %5897 = vmatprep.mubr.f32.mxu0 0.0
          %5898 = vmatmul.mubr.f32.gmra.mxu0 %v5438
          %v5899 = vpop.f32.mrf.mxu0
          %v5900 = vadd.f32 %v5675, %v5899
          %v5901 = vpop.f32.mrf.mxu0
          %5902 = vmatprep.mubr.f32.mxu0 0.0
          %5903 = vmatmul.mubr.f32.gmra.mxu0 %v5441
          %v5904 = vpop.f32.mrf.mxu0
          %v5905 = vadd.f32 %v5680, %v5904
          %v5906 = vpop.f32.mrf.mxu0
          %5907 = vmatprep.mubr.f32.mxu0 0.0
          %5908 = vmatmul.mubr.f32.gmra.mxu0 %v5444
          %v5909 = vpop.f32.mrf.mxu0
          %v5910 = vadd.f32 %v5685, %v5909
          %v5911 = vpop.f32.mrf.mxu0
          %5912 = vmatprep.mubr.f32.mxu0 0.0
          %5913 = vmatmul.mubr.f32.gmra.mxu0 %v5447
          %v5914 = vpop.f32.mrf.mxu0
          %v5915 = vadd.f32 %v5690, %v5914
          %v5916 = vpop.f32.mrf.mxu0
          %5917 = vmatprep.mubr.f32.mxu0 0.0
          %5918 = vmatmul.mubr.f32.gmra.mxu0 %v5450
          %v5919 = vpop.f32.mrf.mxu0
          %v5920 = vadd.f32 %v5695, %v5919
          %v5921 = vpop.f32.mrf.mxu0
          %5922 = vmatprep.mubr.f32.mxu0 0.0
          %5923 = vmatmul.mubr.f32.gmra.mxu0 %v5453
          %v5924 = vpop.f32.mrf.mxu0
          %v5925 = vadd.f32 %v5700, %v5924
          %v5926 = vpop.f32.mrf.mxu0
          %5927 = vmatprep.mubr.f32.mxu0 0.0
          %5928 = vmatmul.mubr.f32.gmra.mxu0 %v5456
          %v5929 = vpop.f32.mrf.mxu0
          %v5930 = vadd.f32 %v5705, %v5929
          %v5931 = vpop.f32.mrf.mxu0
          %5932 = vmatprep.mubr.f32.mxu0 0.0
          %5933 = vmatmul.mubr.f32.gmra.mxu0 %v5459
          %v5934 = vpop.f32.mrf.mxu0
          %v5935 = vadd.f32 %v5710, %v5934
          %v5936 = vpop.f32.mrf.mxu0
          %5937 = vmatprep.mubr.f32.mxu0 0.0
          %5938 = vmatmul.mubr.f32.gmra.mxu0 %v5462
          %v5939 = vpop.f32.mrf.mxu0
          %v5940 = vadd.f32 %v5715, %v5939
          %v5941 = vpop.f32.mrf.mxu0
          %5942 = vmatprep.mubr.f32.mxu0 0.0
          %5943 = vmatmul.mubr.f32.gmra.mxu0 %v5465
          %v5944 = vpop.f32.mrf.mxu0
          %v5945 = vadd.f32 %v5720, %v5944
          %v5946 = vpop.f32.mrf.mxu0
          %5947 = vmatprep.mubr.f32.mxu0 0.0
          %5948 = vmatmul.mubr.f32.gmra.mxu0 %v5468
          %v5949 = vpop.f32.mrf.mxu0
          %v5950 = vadd.f32 %v5725, %v5949
          %v5951 = vpop.f32.mrf.mxu0
          %5952 = vmatprep.mubr.f32.mxu0 0.0
          %5953 = vmatmul.mubr.f32.gmra.mxu0 %v5471
          %v5954 = vpop.f32.mrf.mxu0
          %v5955 = vadd.f32 %v5730, %v5954
          %v5956 = vpop.f32.mrf.mxu0
          %5957 = vmatprep.mubr.f32.mxu0 0.0
          %5958 = vmatmul.mubr.f32.gmra.mxu0 %v5474
          %v5959 = vpop.f32.mrf.mxu0
          %v5960 = vadd.f32 %v5735, %v5959
          %v5961 = vpop.f32.mrf.mxu0
          %5962 = vmatprep.mubr.f32.mxu0 0.0
          %5963 = vmatmul.mubr.f32.gmra.mxu0 %v5477
          %v5964 = vpop.f32.mrf.mxu0
          %v5965 = vadd.f32 %v5740, %v5964
          %v5966 = vpop.f32.mrf.mxu0
          %5967 = vmatprep.mubr.f32.mxu0 0.0
          %5968 = vmatmul.mubr.f32.gmra.mxu0 %v5480
          %v5969 = vpop.f32.mrf.mxu0
          %v5970 = vadd.f32 %v5745, %v5969
          %v5971 = vpop.f32.mrf.mxu0
          %5972 = vmatprep.mubr.f32.mxu0 0.0
          %5973 = vmatmul.mubr.f32.gmra.mxu0 %v5483
          %v5974 = vpop.f32.mrf.mxu0
          %v5975 = vadd.f32 %v5750, %v5974
          %v5976 = vpop.f32.mrf.mxu0
          %5977 = vmatprep.mubr.f32.mxu0 0.0
          %5978 = vmatmul.mubr.f32.gmra.mxu0 %v5486
          %v5979 = vpop.f32.mrf.mxu0
          %v5980 = vadd.f32 %v5755, %v5979
          %v5981 = vpop.f32.mrf.mxu0
          %5982 = vmatprep.mubr.f32.mxu0 0.0
          %5983 = vmatmul.mubr.f32.gmra.mxu0 %v5489
          %v5984 = vpop.f32.mrf.mxu0
          %v5985 = vadd.f32 %v5760, %v5984
          %v5986 = vpop.f32.mrf.mxu0
          %5987 = vdwg.mxu0
          %v5988 = vadd.f32 %v5146, %v5830
          %v5989 = vadd.f32 %v5147, %v5835
          %v5990 = vadd.f32 %v5148, %v5840
          %v5991 = vadd.f32 %v5149, %v5845
          %v5992 = vadd.f32 %v5150, %v5850
          %v5993 = vadd.f32 %v5151, %v5855
          %v5994 = vadd.f32 %v5152, %v5860
          %v5995 = vadd.f32 %v5153, %v5865
          %v5996 = vadd.f32 %v5154, %v5870
          %v5997 = vadd.f32 %v5155, %v5875
          %v5998 = vadd.f32 %v5156, %v5880
          %v5999 = vadd.f32 %v5157, %v5885
          %v6000 = vadd.f32 %v5158, %v5890
          %v6001 = vadd.f32 %v5159, %v5895
          %v6002 = vadd.f32 %v5160, %v5900
          %v6003 = vadd.f32 %v5161, %v5905
          %v6004 = vadd.f32 %v5162, %v5910
          %v6005 = vadd.f32 %v5163, %v5915
          %v6006 = vadd.f32 %v5164, %v5920
          %v6007 = vadd.f32 %v5165, %v5925
          %v6008 = vadd.f32 %v5166, %v5930
          %v6009 = vadd.f32 %v5167, %v5935
          %v6010 = vadd.f32 %v5168, %v5940
          %v6011 = vadd.f32 %v5169, %v5945
          %v6012 = vadd.f32 %v5170, %v5950
          %v6013 = vadd.f32 %v5171, %v5955
          %v6014 = vadd.f32 %v5172, %v5960
          %v6015 = vadd.f32 %v5173, %v5965
          %v6016 = vadd.f32 %v5174, %v5970
          %v6017 = vadd.f32 %v5175, %v5975
          %v6018 = vadd.f32 %v5176, %v5980
          %v6019 = vadd.f32 %v5177, %v5985
          %v6020 = vld [vmem:[%s3408] sm:$0xff]
          %v6021 = vld [vmem:[%s3408 + $0x8] sm:$0xff]
          %v6022 = vld [vmem:[%s3408 + $0x10] sm:$0xff]
          %v6023 = vld [vmem:[%s3408 + $0x18] sm:$0xff]
          %v6024 = vld [vmem:[%s3408 + $0x20] sm:$0xff]
          %v6025 = vld [vmem:[%s3408 + $0x28] sm:$0xff]
          %v6026 = vld [vmem:[%s3408 + $0x30] sm:$0xff]
          %v6027 = vld [vmem:[%s3408 + $0x38] sm:$0xff]
          %v6028 = vld [vmem:[%s3408 + $0x40] sm:$0xff]
          %v6029 = vld [vmem:[%s3408 + $0x48] sm:$0xff]
          %v6030 = vld [vmem:[%s3408 + $0x50] sm:$0xff]
          %v6031 = vld [vmem:[%s3408 + $0x58] sm:$0xff]
          %v6032 = vld [vmem:[%s3408 + $0x60] sm:$0xff]
          %v6033 = vld [vmem:[%s3408 + $0x68] sm:$0xff]
          %v6034 = vld [vmem:[%s3408 + $0x70] sm:$0xff]
          %v6035 = vld [vmem:[%s3408 + $0x78] sm:$0xff]
          %v6036 = vld [vmem:[%s3408 + $0x80] sm:$0xff]
          %v6037 = vld [vmem:[%s3408 + $0x88] sm:$0xff]
          %v6038 = vld [vmem:[%s3408 + $0x90] sm:$0xff]
          %v6039 = vld [vmem:[%s3408 + $0x98] sm:$0xff]
          %v6040 = vld [vmem:[%s3408 + $0xa0] sm:$0xff]
          %v6041 = vld [vmem:[%s3408 + $0xa8] sm:$0xff]
          %v6042 = vld [vmem:[%s3408 + $0xb0] sm:$0xff]
          %v6043 = vld [vmem:[%s3408 + $0xb8] sm:$0xff]
          %v6044 = vld [vmem:[%s3408 + $0xc0] sm:$0xff]
          %v6045 = vld [vmem:[%s3408 + $0xc8] sm:$0xff]
          %v6046 = vld [vmem:[%s3408 + $0xd0] sm:$0xff]
          %v6047 = vld [vmem:[%s3408 + $0xd8] sm:$0xff]
          %v6048 = vld [vmem:[%s3408 + $0xe0] sm:$0xff]
          %v6049 = vld [vmem:[%s3408 + $0xe8] sm:$0xff]
          %v6050 = vld [vmem:[%s3408 + $0xf0] sm:$0xff]
          %v6051 = vld [vmem:[%s3408 + $0xf8] sm:$0xff]
          %v6052 = vld [vmem:[%s3408 + $0x100] sm:$0xff]
          %v6053 = vld [vmem:[%s3408 + $0x108] sm:$0xff]
          %v6054 = vld [vmem:[%s3408 + $0x110] sm:$0xff]
          %v6055 = vld [vmem:[%s3408 + $0x118] sm:$0xff]
          %v6056 = vld [vmem:[%s3408 + $0x120] sm:$0xff]
          %v6057 = vld [vmem:[%s3408 + $0x128] sm:$0xff]
          %v6058 = vld [vmem:[%s3408 + $0x130] sm:$0xff]
          %v6059 = vld [vmem:[%s3408 + $0x138] sm:$0xff]
          %v6060 = vld [vmem:[%s3408 + $0x140] sm:$0xff]
          %v6061 = vld [vmem:[%s3408 + $0x148] sm:$0xff]
          %v6062 = vld [vmem:[%s3408 + $0x150] sm:$0xff]
          %v6063 = vld [vmem:[%s3408 + $0x158] sm:$0xff]
          %v6064 = vld [vmem:[%s3408 + $0x160] sm:$0xff]
          %v6065 = vld [vmem:[%s3408 + $0x168] sm:$0xff]
          %v6066 = vld [vmem:[%s3408 + $0x170] sm:$0xff]
          %v6067 = vld [vmem:[%s3408 + $0x178] sm:$0xff]
          %v6068 = vld [vmem:[%s3408 + $0x180] sm:$0xff]
          %v6069 = vld [vmem:[%s3408 + $0x188] sm:$0xff]
          %v6070 = vld [vmem:[%s3408 + $0x190] sm:$0xff]
          %v6071 = vld [vmem:[%s3408 + $0x198] sm:$0xff]
          %v6072 = vld [vmem:[%s3408 + $0x1a0] sm:$0xff]
          %v6073 = vld [vmem:[%s3408 + $0x1a8] sm:$0xff]
          %v6074 = vld [vmem:[%s3408 + $0x1b0] sm:$0xff]
          %v6075 = vld [vmem:[%s3408 + $0x1b8] sm:$0xff]
          %v6076 = vld [vmem:[%s3408 + $0x1c0] sm:$0xff]
          %v6077 = vld [vmem:[%s3408 + $0x1c8] sm:$0xff]
          %v6078 = vld [vmem:[%s3408 + $0x1d0] sm:$0xff]
          %v6079 = vld [vmem:[%s3408 + $0x1d8] sm:$0xff]
          %v6080 = vld [vmem:[%s3408 + $0x1e0] sm:$0xff]
          %v6081 = vld [vmem:[%s3408 + $0x1e8] sm:$0xff]
          %v6082 = vld [vmem:[%s3408 + $0x1f0] sm:$0xff]
          %v6083 = vld [vmem:[%s3408 + $0x1f8] sm:$0xff]
          %v6084 = vld [vmem:[%s3408 + $0x200] sm:$0xff]
          %v6085 = vld [vmem:[%s3408 + $0x208] sm:$0xff]
          %v6086 = vld [vmem:[%s3408 + $0x210] sm:$0xff]
          %v6087 = vld [vmem:[%s3408 + $0x218] sm:$0xff]
          %v6088 = vld [vmem:[%s3408 + $0x220] sm:$0xff]
          %v6089 = vld [vmem:[%s3408 + $0x228] sm:$0xff]
          %v6090 = vld [vmem:[%s3408 + $0x230] sm:$0xff]
          %v6091 = vld [vmem:[%s3408 + $0x238] sm:$0xff]
          %v6092 = vld [vmem:[%s3408 + $0x240] sm:$0xff]
          %v6093 = vld [vmem:[%s3408 + $0x248] sm:$0xff]
          %v6094 = vld [vmem:[%s3408 + $0x250] sm:$0xff]
          %v6095 = vld [vmem:[%s3408 + $0x258] sm:$0xff]
          %v6096 = vld [vmem:[%s3408 + $0x260] sm:$0xff]
          %v6097 = vld [vmem:[%s3408 + $0x268] sm:$0xff]
          %v6098 = vld [vmem:[%s3408 + $0x270] sm:$0xff]
          %v6099 = vld [vmem:[%s3408 + $0x278] sm:$0xff]
          %v6100 = vld [vmem:[%s3408 + $0x280] sm:$0xff]
          %v6101 = vld [vmem:[%s3408 + $0x288] sm:$0xff]
          %v6102 = vld [vmem:[%s3408 + $0x290] sm:$0xff]
          %v6103 = vld [vmem:[%s3408 + $0x298] sm:$0xff]
          %v6104 = vld [vmem:[%s3408 + $0x2a0] sm:$0xff]
          %v6105 = vld [vmem:[%s3408 + $0x2a8] sm:$0xff]
          %v6106 = vld [vmem:[%s3408 + $0x2b0] sm:$0xff]
          %v6107 = vld [vmem:[%s3408 + $0x2b8] sm:$0xff]
          %v6108 = vld [vmem:[%s3408 + $0x2c0] sm:$0xff]
          %v6109 = vld [vmem:[%s3408 + $0x2c8] sm:$0xff]
          %v6110 = vld [vmem:[%s3408 + $0x2d0] sm:$0xff]
          %v6111 = vld [vmem:[%s3408 + $0x2d8] sm:$0xff]
          %v6112 = vld [vmem:[%s3408 + $0x2e0] sm:$0xff]
          %v6113 = vld [vmem:[%s3408 + $0x2e8] sm:$0xff]
          %v6114 = vld [vmem:[%s3408 + $0x2f0] sm:$0xff]
          %v6115 = vld [vmem:[%s3408 + $0x2f8] sm:$0xff]
          %s6116 = scalar_lea.vmem [#allocation10], 384
          %v6117 = vld [vmem:[%s6116] sm:$0xff]
          %v6118 = vld [vmem:[%s6116 + $0x8] sm:$0xff]
          %v6119 = vld [vmem:[%s6116 + $0x10] sm:$0xff]
          %v6120 = vld [vmem:[%s6116 + $0x18] sm:$0xff]
          %v6121 = vld [vmem:[%s6116 + $0x20] sm:$0xff]
          %v6122 = vld [vmem:[%s6116 + $0x28] sm:$0xff]
          %v6123 = vld [vmem:[%s6116 + $0x30] sm:$0xff]
          %v6124 = vld [vmem:[%s6116 + $0x38] sm:$0xff]
          %v6125 = vld [vmem:[%s6116 + $0x40] sm:$0xff]
          %v6126 = vld [vmem:[%s6116 + $0x48] sm:$0xff]
          %v6127 = vld [vmem:[%s6116 + $0x50] sm:$0xff]
          %v6128 = vld [vmem:[%s6116 + $0x58] sm:$0xff]
          %v6129 = vld [vmem:[%s6116 + $0x60] sm:$0xff]
          %v6130 = vld [vmem:[%s6116 + $0x68] sm:$0xff]
          %v6131 = vld [vmem:[%s6116 + $0x70] sm:$0xff]
          %v6132 = vld [vmem:[%s6116 + $0x78] sm:$0xff]
          %v6133 = vld [vmem:[%s6116 + $0x80] sm:$0xff]
          %v6134 = vld [vmem:[%s6116 + $0x88] sm:$0xff]
          %v6135 = vld [vmem:[%s6116 + $0x90] sm:$0xff]
          %v6136 = vld [vmem:[%s6116 + $0x98] sm:$0xff]
          %v6137 = vld [vmem:[%s6116 + $0xa0] sm:$0xff]
          %v6138 = vld [vmem:[%s6116 + $0xa8] sm:$0xff]
          %v6139 = vld [vmem:[%s6116 + $0xb0] sm:$0xff]
          %v6140 = vld [vmem:[%s6116 + $0xb8] sm:$0xff]
          %v6141 = vld [vmem:[%s6116 + $0xc0] sm:$0xff]
          %v6142 = vld [vmem:[%s6116 + $0xc8] sm:$0xff]
          %v6143 = vld [vmem:[%s6116 + $0xd0] sm:$0xff]
          %v6144 = vld [vmem:[%s6116 + $0xd8] sm:$0xff]
          %v6145 = vld [vmem:[%s6116 + $0xe0] sm:$0xff]
          %v6146 = vld [vmem:[%s6116 + $0xe8] sm:$0xff]
          %v6147 = vld [vmem:[%s6116 + $0xf0] sm:$0xff]
          %v6148 = vld [vmem:[%s6116 + $0xf8] sm:$0xff]
          %v6149 = vld [vmem:[%s6116 + $0x100] sm:$0xff]
          %v6150 = vld [vmem:[%s6116 + $0x108] sm:$0xff]
          %v6151 = vld [vmem:[%s6116 + $0x110] sm:$0xff]
          %v6152 = vld [vmem:[%s6116 + $0x118] sm:$0xff]
          %v6153 = vld [vmem:[%s6116 + $0x120] sm:$0xff]
          %v6154 = vld [vmem:[%s6116 + $0x128] sm:$0xff]
          %v6155 = vld [vmem:[%s6116 + $0x130] sm:$0xff]
          %v6156 = vld [vmem:[%s6116 + $0x138] sm:$0xff]
          %v6157 = vld [vmem:[%s6116 + $0x140] sm:$0xff]
          %v6158 = vld [vmem:[%s6116 + $0x148] sm:$0xff]
          %v6159 = vld [vmem:[%s6116 + $0x150] sm:$0xff]
          %v6160 = vld [vmem:[%s6116 + $0x158] sm:$0xff]
          %v6161 = vld [vmem:[%s6116 + $0x160] sm:$0xff]
          %v6162 = vld [vmem:[%s6116 + $0x168] sm:$0xff]
          %v6163 = vld [vmem:[%s6116 + $0x170] sm:$0xff]
          %v6164 = vld [vmem:[%s6116 + $0x178] sm:$0xff]
          %6165 = vmatprep.subr.mxu0 0.0
          %6166 = vmatpush1.msra.mxu0 %v6132
          %6167 = vmatprep.subr.mxu0 0.0
          %6168 = vmatpush1.msra.mxu0 %v6131
          %6169 = vmatprep.subr.mxu0 0.0
          %6170 = vmatpush1.msra.mxu0 %v6130
          %6171 = vmatprep.subr.mxu0 0.0
          %6172 = vmatpush1.msra.mxu0 %v6129
          %6173 = vmatprep.subr.mxu0 0.0
          %6174 = vmatpush1.msra.mxu0 %v6128
          %6175 = vmatprep.subr.mxu0 0.0
          %6176 = vmatpush1.msra.mxu0 %v6127
          %6177 = vmatprep.subr.mxu0 0.0
          %6178 = vmatpush1.msra.mxu0 %v6126
          %6179 = vmatprep.subr.mxu0 0.0
          %6180 = vmatpush1.msra.mxu0 %v6125
          %6181 = vmatprep.subr.mxu0 0.0
          %6182 = vmatpush1.msra.mxu0 %v6124
          %6183 = vmatprep.subr.mxu0 0.0
          %6184 = vmatpush1.msra.mxu0 %v6123
          %6185 = vmatprep.subr.mxu0 0.0
          %6186 = vmatpush1.msra.mxu0 %v6122
          %6187 = vmatprep.subr.mxu0 0.0
          %6188 = vmatpush1.msra.mxu0 %v6121
          %6189 = vmatprep.subr.mxu0 0.0
          %6190 = vmatpush1.msra.mxu0 %v6120
          %6191 = vmatprep.subr.mxu0 0.0
          %6192 = vmatpush1.msra.mxu0 %v6119
          %6193 = vmatprep.subr.mxu0 0.0
          %6194 = vmatpush1.msra.mxu0 %v6118
          %6195 = vmatprep.subr.mxu0 0.0
          %6196 = vmatpush1.msra.mxu0 %v6117
          %6197 = vmatprep.subr.mxu0 0.0
          %6198 = vmatpush2.msra.mxu0 %v6148
          %6199 = vmatprep.subr.mxu0 0.0
          %6200 = vmatpush2.msra.mxu0 %v6147
          %6201 = vmatprep.subr.mxu0 0.0
          %6202 = vmatpush2.msra.mxu0 %v6146
          %6203 = vmatprep.subr.mxu0 0.0
          %6204 = vmatpush2.msra.mxu0 %v6145
          %6205 = vmatprep.subr.mxu0 0.0
          %6206 = vmatpush2.msra.mxu0 %v6144
          %6207 = vmatprep.subr.mxu0 0.0
          %6208 = vmatpush2.msra.mxu0 %v6143
          %6209 = vmatprep.subr.mxu0 0.0
          %6210 = vmatpush2.msra.mxu0 %v6142
          %6211 = vmatprep.subr.mxu0 0.0
          %6212 = vmatpush2.msra.mxu0 %v6141
          %6213 = vmatprep.subr.mxu0 0.0
          %6214 = vmatpush2.msra.mxu0 %v6140
          %6215 = vmatprep.subr.mxu0 0.0
          %6216 = vmatpush2.msra.mxu0 %v6139
          %6217 = vmatprep.subr.mxu0 0.0
          %6218 = vmatpush2.msra.mxu0 %v6138
          %6219 = vmatprep.subr.mxu0 0.0
          %6220 = vmatpush2.msra.mxu0 %v6137
          %6221 = vmatprep.subr.mxu0 0.0
          %6222 = vmatpush2.msra.mxu0 %v6136
          %6223 = vmatprep.subr.mxu0 0.0
          %6224 = vmatpush2.msra.mxu0 %v6135
          %6225 = vmatprep.subr.mxu0 0.0
          %6226 = vmatpush2.msra.mxu0 %v6134
          %6227 = vmatprep.subr.mxu0 0.0
          %6228 = vmatpush2.msra.mxu0 %v6133
          %6229 = vmatprep.mubr.f32.mxu0 %v6021
          %6230 = vmatmul.mubr.f32.gmra.mxu0 %v6020
          %v6231 = vpop.f32.mrf.mxu0
          %v6232 = vadd.f32 0.0, %v6231
          %v6233 = vpop.f32.mrf.mxu0
          %6234 = vmatprep.mubr.f32.mxu0 %v6024
          %6235 = vmatmul.mubr.f32.gmra.mxu0 %v6023
          %v6236 = vpop.f32.mrf.mxu0
          %v6237 = vadd.f32 0.0, %v6236
          %v6238 = vpop.f32.mrf.mxu0
          %6239 = vmatprep.mubr.f32.mxu0 %v6027
          %6240 = vmatmul.mubr.f32.gmra.mxu0 %v6026
          %v6241 = vpop.f32.mrf.mxu0
          %v6242 = vadd.f32 0.0, %v6241
          %v6243 = vpop.f32.mrf.mxu0
          %6244 = vmatprep.mubr.f32.mxu0 %v6030
          %6245 = vmatmul.mubr.f32.gmra.mxu0 %v6029
          %v6246 = vpop.f32.mrf.mxu0
          %v6247 = vadd.f32 0.0, %v6246
          %v6248 = vpop.f32.mrf.mxu0
          %6249 = vmatprep.mubr.f32.mxu0 %v6033
          %6250 = vmatmul.mubr.f32.gmra.mxu0 %v6032
          %v6251 = vpop.f32.mrf.mxu0
          %v6252 = vadd.f32 0.0, %v6251
          %v6253 = vpop.f32.mrf.mxu0
          %6254 = vmatprep.mubr.f32.mxu0 %v6036
          %6255 = vmatmul.mubr.f32.gmra.mxu0 %v6035
          %v6256 = vpop.f32.mrf.mxu0
          %v6257 = vadd.f32 0.0, %v6256
          %v6258 = vpop.f32.mrf.mxu0
          %6259 = vmatprep.mubr.f32.mxu0 %v6039
          %6260 = vmatmul.mubr.f32.gmra.mxu0 %v6038
          %v6261 = vpop.f32.mrf.mxu0
          %v6262 = vadd.f32 0.0, %v6261
          %v6263 = vpop.f32.mrf.mxu0
          %6264 = vmatprep.mubr.f32.mxu0 %v6042
          %6265 = vmatmul.mubr.f32.gmra.mxu0 %v6041
          %v6266 = vpop.f32.mrf.mxu0
          %v6267 = vadd.f32 0.0, %v6266
          %v6268 = vpop.f32.mrf.mxu0
          %6269 = vmatprep.mubr.f32.mxu0 %v6045
          %6270 = vmatmul.mubr.f32.gmra.mxu0 %v6044
          %v6271 = vpop.f32.mrf.mxu0
          %v6272 = vadd.f32 0.0, %v6271
          %v6273 = vpop.f32.mrf.mxu0
          %6274 = vmatprep.mubr.f32.mxu0 %v6048
          %6275 = vmatmul.mubr.f32.gmra.mxu0 %v6047
          %v6276 = vpop.f32.mrf.mxu0
          %v6277 = vadd.f32 0.0, %v6276
          %v6278 = vpop.f32.mrf.mxu0
          %6279 = vmatprep.mubr.f32.mxu0 %v6051
          %6280 = vmatmul.mubr.f32.gmra.mxu0 %v6050
          %v6281 = vpop.f32.mrf.mxu0
          %v6282 = vadd.f32 0.0, %v6281
          %v6283 = vpop.f32.mrf.mxu0
          %6284 = vmatprep.mubr.f32.mxu0 %v6054
          %6285 = vmatmul.mubr.f32.gmra.mxu0 %v6053
          %v6286 = vpop.f32.mrf.mxu0
          %v6287 = vadd.f32 0.0, %v6286
          %v6288 = vpop.f32.mrf.mxu0
          %6289 = vmatprep.mubr.f32.mxu0 %v6057
          %6290 = vmatmul.mubr.f32.gmra.mxu0 %v6056
          %v6291 = vpop.f32.mrf.mxu0
          %v6292 = vadd.f32 0.0, %v6291
          %v6293 = vpop.f32.mrf.mxu0
          %6294 = vmatprep.mubr.f32.mxu0 %v6060
          %6295 = vmatmul.mubr.f32.gmra.mxu0 %v6059
          %v6296 = vpop.f32.mrf.mxu0
          %v6297 = vadd.f32 0.0, %v6296
          %v6298 = vpop.f32.mrf.mxu0
          %6299 = vmatprep.mubr.f32.mxu0 %v6063
          %6300 = vmatmul.mubr.f32.gmra.mxu0 %v6062
          %v6301 = vpop.f32.mrf.mxu0
          %v6302 = vadd.f32 0.0, %v6301
          %v6303 = vpop.f32.mrf.mxu0
          %6304 = vmatprep.mubr.f32.mxu0 %v6066
          %6305 = vmatmul.mubr.f32.gmra.mxu0 %v6065
          %v6306 = vpop.f32.mrf.mxu0
          %v6307 = vadd.f32 0.0, %v6306
          %v6308 = vpop.f32.mrf.mxu0
          %6309 = vmatprep.mubr.f32.mxu0 %v6069
          %6310 = vmatmul.mubr.f32.gmra.mxu0 %v6068
          %v6311 = vpop.f32.mrf.mxu0
          %v6312 = vadd.f32 0.0, %v6311
          %v6313 = vpop.f32.mrf.mxu0
          %6314 = vmatprep.mubr.f32.mxu0 %v6072
          %6315 = vmatmul.mubr.f32.gmra.mxu0 %v6071
          %v6316 = vpop.f32.mrf.mxu0
          %v6317 = vadd.f32 0.0, %v6316
          %v6318 = vpop.f32.mrf.mxu0
          %6319 = vmatprep.mubr.f32.mxu0 %v6075
          %6320 = vmatmul.mubr.f32.gmra.mxu0 %v6074
          %v6321 = vpop.f32.mrf.mxu0
          %v6322 = vadd.f32 0.0, %v6321
          %v6323 = vpop.f32.mrf.mxu0
          %6324 = vmatprep.mubr.f32.mxu0 %v6078
          %6325 = vmatmul.mubr.f32.gmra.mxu0 %v6077
          %v6326 = vpop.f32.mrf.mxu0
          %v6327 = vadd.f32 0.0, %v6326
          %v6328 = vpop.f32.mrf.mxu0
          %6329 = vmatprep.mubr.f32.mxu0 %v6081
          %6330 = vmatmul.mubr.f32.gmra.mxu0 %v6080
          %v6331 = vpop.f32.mrf.mxu0
          %v6332 = vadd.f32 0.0, %v6331
          %v6333 = vpop.f32.mrf.mxu0
          %6334 = vmatprep.mubr.f32.mxu0 %v6084
          %6335 = vmatmul.mubr.f32.gmra.mxu0 %v6083
          %v6336 = vpop.f32.mrf.mxu0
          %v6337 = vadd.f32 0.0, %v6336
          %v6338 = vpop.f32.mrf.mxu0
          %6339 = vmatprep.mubr.f32.mxu0 %v6087
          %6340 = vmatmul.mubr.f32.gmra.mxu0 %v6086
          %v6341 = vpop.f32.mrf.mxu0
          %v6342 = vadd.f32 0.0, %v6341
          %v6343 = vpop.f32.mrf.mxu0
          %6344 = vmatprep.mubr.f32.mxu0 %v6090
          %6345 = vmatmul.mubr.f32.gmra.mxu0 %v6089
          %v6346 = vpop.f32.mrf.mxu0
          %v6347 = vadd.f32 0.0, %v6346
          %v6348 = vpop.f32.mrf.mxu0
          %6349 = vmatprep.mubr.f32.mxu0 %v6093
          %6350 = vmatmul.mubr.f32.gmra.mxu0 %v6092
          %v6351 = vpop.f32.mrf.mxu0
          %v6352 = vadd.f32 0.0, %v6351
          %v6353 = vpop.f32.mrf.mxu0
          %6354 = vmatprep.mubr.f32.mxu0 %v6096
          %6355 = vmatmul.mubr.f32.gmra.mxu0 %v6095
          %v6356 = vpop.f32.mrf.mxu0
          %v6357 = vadd.f32 0.0, %v6356
          %v6358 = vpop.f32.mrf.mxu0
          %6359 = vmatprep.mubr.f32.mxu0 %v6099
          %6360 = vmatmul.mubr.f32.gmra.mxu0 %v6098
          %v6361 = vpop.f32.mrf.mxu0
          %v6362 = vadd.f32 0.0, %v6361
          %v6363 = vpop.f32.mrf.mxu0
          %6364 = vmatprep.mubr.f32.mxu0 %v6102
          %6365 = vmatmul.mubr.f32.gmra.mxu0 %v6101
          %v6366 = vpop.f32.mrf.mxu0
          %v6367 = vadd.f32 0.0, %v6366
          %v6368 = vpop.f32.mrf.mxu0
          %6369 = vmatprep.mubr.f32.mxu0 %v6105
          %6370 = vmatmul.mubr.f32.gmra.mxu0 %v6104
          %v6371 = vpop.f32.mrf.mxu0
          %v6372 = vadd.f32 0.0, %v6371
          %v6373 = vpop.f32.mrf.mxu0
          %6374 = vmatprep.mubr.f32.mxu0 %v6108
          %6375 = vmatmul.mubr.f32.gmra.mxu0 %v6107
          %v6376 = vpop.f32.mrf.mxu0
          %v6377 = vadd.f32 0.0, %v6376
          %v6378 = vpop.f32.mrf.mxu0
          %6379 = vmatprep.mubr.f32.mxu0 %v6111
          %6380 = vmatmul.mubr.f32.gmra.mxu0 %v6110
          %v6381 = vpop.f32.mrf.mxu0
          %v6382 = vadd.f32 0.0, %v6381
          %v6383 = vpop.f32.mrf.mxu0
          %6384 = vmatprep.mubr.f32.mxu0 %v6114
          %6385 = vmatmul.mubr.f32.gmra.mxu0 %v6113
          %v6386 = vpop.f32.mrf.mxu0
          %v6387 = vadd.f32 0.0, %v6386
          %v6388 = vpop.f32.mrf.mxu0
          %6389 = vdwg.mxu0
          %6390 = vmatprep.subr.mxu0 0.0
          %6391 = vmatpush1.msra.mxu0 %v6164
          %6392 = vmatprep.subr.mxu0 0.0
          %6393 = vmatpush1.msra.mxu0 %v6163
          %6394 = vmatprep.subr.mxu0 0.0
          %6395 = vmatpush1.msra.mxu0 %v6162
          %6396 = vmatprep.subr.mxu0 0.0
          %6397 = vmatpush1.msra.mxu0 %v6161
          %6398 = vmatprep.subr.mxu0 0.0
          %6399 = vmatpush1.msra.mxu0 %v6160
          %6400 = vmatprep.subr.mxu0 0.0
          %6401 = vmatpush1.msra.mxu0 %v6159
          %6402 = vmatprep.subr.mxu0 0.0
          %6403 = vmatpush1.msra.mxu0 %v6158
          %6404 = vmatprep.subr.mxu0 0.0
          %6405 = vmatpush1.msra.mxu0 %v6157
          %6406 = vmatprep.subr.mxu0 0.0
          %6407 = vmatpush1.msra.mxu0 %v6156
          %6408 = vmatprep.subr.mxu0 0.0
          %6409 = vmatpush1.msra.mxu0 %v6155
          %6410 = vmatprep.subr.mxu0 0.0
          %6411 = vmatpush1.msra.mxu0 %v6154
          %6412 = vmatprep.subr.mxu0 0.0
          %6413 = vmatpush1.msra.mxu0 %v6153
          %6414 = vmatprep.subr.mxu0 0.0
          %6415 = vmatpush1.msra.mxu0 %v6152
          %6416 = vmatprep.subr.mxu0 0.0
          %6417 = vmatpush1.msra.mxu0 %v6151
          %6418 = vmatprep.subr.mxu0 0.0
          %6419 = vmatpush1.msra.mxu0 %v6150
          %6420 = vmatprep.subr.mxu0 0.0
          %6421 = vmatpush1.msra.mxu0 %v6149
          %6422 = vmatprep.subr.mxu0 0.0
          %6423 = vmatpush2.msra.mxu0 0.0
          %6424 = vmatprep.subr.mxu0 0.0
          %6425 = vmatpush2.msra.mxu0 0.0
          %6426 = vmatprep.subr.mxu0 0.0
          %6427 = vmatpush2.msra.mxu0 0.0
          %6428 = vmatprep.subr.mxu0 0.0
          %6429 = vmatpush2.msra.mxu0 0.0
          %6430 = vmatprep.subr.mxu0 0.0
          %6431 = vmatpush2.msra.mxu0 0.0
          %6432 = vmatprep.subr.mxu0 0.0
          %6433 = vmatpush2.msra.mxu0 0.0
          %6434 = vmatprep.subr.mxu0 0.0
          %6435 = vmatpush2.msra.mxu0 0.0
          %6436 = vmatprep.subr.mxu0 0.0
          %6437 = vmatpush2.msra.mxu0 0.0
          %6438 = vmatprep.subr.mxu0 0.0
          %6439 = vmatpush2.msra.mxu0 0.0
          %6440 = vmatprep.subr.mxu0 0.0
          %6441 = vmatpush2.msra.mxu0 0.0
          %6442 = vmatprep.subr.mxu0 0.0
          %6443 = vmatpush2.msra.mxu0 0.0
          %6444 = vmatprep.subr.mxu0 0.0
          %6445 = vmatpush2.msra.mxu0 0.0
          %6446 = vmatprep.subr.mxu0 0.0
          %6447 = vmatpush2.msra.mxu0 0.0
          %6448 = vmatprep.subr.mxu0 0.0
          %6449 = vmatpush2.msra.mxu0 0.0
          %6450 = vmatprep.subr.mxu0 0.0
          %6451 = vmatpush2.msra.mxu0 0.0
          %6452 = vmatprep.subr.mxu0 0.0
          %6453 = vmatpush2.msra.mxu0 0.0
          %6454 = vmatprep.mubr.f32.mxu0 0.0
          %6455 = vmatmul.mubr.f32.gmra.mxu0 %v6022
          %v6456 = vpop.f32.mrf.mxu0
          %v6457 = vadd.f32 %v6232, %v6456
          %v6458 = vpop.f32.mrf.mxu0
          %6459 = vmatprep.mubr.f32.mxu0 0.0
          %6460 = vmatmul.mubr.f32.gmra.mxu0 %v6025
          %v6461 = vpop.f32.mrf.mxu0
          %v6462 = vadd.f32 %v6237, %v6461
          %v6463 = vpop.f32.mrf.mxu0
          %6464 = vmatprep.mubr.f32.mxu0 0.0
          %6465 = vmatmul.mubr.f32.gmra.mxu0 %v6028
          %v6466 = vpop.f32.mrf.mxu0
          %v6467 = vadd.f32 %v6242, %v6466
          %v6468 = vpop.f32.mrf.mxu0
          %6469 = vmatprep.mubr.f32.mxu0 0.0
          %6470 = vmatmul.mubr.f32.gmra.mxu0 %v6031
          %v6471 = vpop.f32.mrf.mxu0
          %v6472 = vadd.f32 %v6247, %v6471
          %v6473 = vpop.f32.mrf.mxu0
          %6474 = vmatprep.mubr.f32.mxu0 0.0
          %6475 = vmatmul.mubr.f32.gmra.mxu0 %v6034
          %v6476 = vpop.f32.mrf.mxu0
          %v6477 = vadd.f32 %v6252, %v6476
          %v6478 = vpop.f32.mrf.mxu0
          %6479 = vmatprep.mubr.f32.mxu0 0.0
          %6480 = vmatmul.mubr.f32.gmra.mxu0 %v6037
          %v6481 = vpop.f32.mrf.mxu0
          %v6482 = vadd.f32 %v6257, %v6481
          %v6483 = vpop.f32.mrf.mxu0
          %6484 = vmatprep.mubr.f32.mxu0 0.0
          %6485 = vmatmul.mubr.f32.gmra.mxu0 %v6040
          %v6486 = vpop.f32.mrf.mxu0
          %v6487 = vadd.f32 %v6262, %v6486
          %v6488 = vpop.f32.mrf.mxu0
          %6489 = vmatprep.mubr.f32.mxu0 0.0
          %6490 = vmatmul.mubr.f32.gmra.mxu0 %v6043
          %v6491 = vpop.f32.mrf.mxu0
          %v6492 = vadd.f32 %v6267, %v6491
          %v6493 = vpop.f32.mrf.mxu0
          %6494 = vmatprep.mubr.f32.mxu0 0.0
          %6495 = vmatmul.mubr.f32.gmra.mxu0 %v6046
          %v6496 = vpop.f32.mrf.mxu0
          %v6497 = vadd.f32 %v6272, %v6496
          %v6498 = vpop.f32.mrf.mxu0
          %6499 = vmatprep.mubr.f32.mxu0 0.0
          %6500 = vmatmul.mubr.f32.gmra.mxu0 %v6049
          %v6501 = vpop.f32.mrf.mxu0
          %v6502 = vadd.f32 %v6277, %v6501
          %v6503 = vpop.f32.mrf.mxu0
          %6504 = vmatprep.mubr.f32.mxu0 0.0
          %6505 = vmatmul.mubr.f32.gmra.mxu0 %v6052
          %v6506 = vpop.f32.mrf.mxu0
          %v6507 = vadd.f32 %v6282, %v6506
          %v6508 = vpop.f32.mrf.mxu0
          %6509 = vmatprep.mubr.f32.mxu0 0.0
          %6510 = vmatmul.mubr.f32.gmra.mxu0 %v6055
          %v6511 = vpop.f32.mrf.mxu0
          %v6512 = vadd.f32 %v6287, %v6511
          %v6513 = vpop.f32.mrf.mxu0
          %6514 = vmatprep.mubr.f32.mxu0 0.0
          %6515 = vmatmul.mubr.f32.gmra.mxu0 %v6058
          %v6516 = vpop.f32.mrf.mxu0
          %v6517 = vadd.f32 %v6292, %v6516
          %v6518 = vpop.f32.mrf.mxu0
          %6519 = vmatprep.mubr.f32.mxu0 0.0
          %6520 = vmatmul.mubr.f32.gmra.mxu0 %v6061
          %v6521 = vpop.f32.mrf.mxu0
          %v6522 = vadd.f32 %v6297, %v6521
          %v6523 = vpop.f32.mrf.mxu0
          %6524 = vmatprep.mubr.f32.mxu0 0.0
          %6525 = vmatmul.mubr.f32.gmra.mxu0 %v6064
          %v6526 = vpop.f32.mrf.mxu0
          %v6527 = vadd.f32 %v6302, %v6526
          %v6528 = vpop.f32.mrf.mxu0
          %6529 = vmatprep.mubr.f32.mxu0 0.0
          %6530 = vmatmul.mubr.f32.gmra.mxu0 %v6067
          %v6531 = vpop.f32.mrf.mxu0
          %v6532 = vadd.f32 %v6307, %v6531
          %v6533 = vpop.f32.mrf.mxu0
          %6534 = vmatprep.mubr.f32.mxu0 0.0
          %6535 = vmatmul.mubr.f32.gmra.mxu0 %v6070
          %v6536 = vpop.f32.mrf.mxu0
          %v6537 = vadd.f32 %v6312, %v6536
          %v6538 = vpop.f32.mrf.mxu0
          %6539 = vmatprep.mubr.f32.mxu0 0.0
          %6540 = vmatmul.mubr.f32.gmra.mxu0 %v6073
          %v6541 = vpop.f32.mrf.mxu0
          %v6542 = vadd.f32 %v6317, %v6541
          %v6543 = vpop.f32.mrf.mxu0
          %6544 = vmatprep.mubr.f32.mxu0 0.0
          %6545 = vmatmul.mubr.f32.gmra.mxu0 %v6076
          %v6546 = vpop.f32.mrf.mxu0
          %v6547 = vadd.f32 %v6322, %v6546
          %v6548 = vpop.f32.mrf.mxu0
          %6549 = vmatprep.mubr.f32.mxu0 0.0
          %6550 = vmatmul.mubr.f32.gmra.mxu0 %v6079
          %v6551 = vpop.f32.mrf.mxu0
          %v6552 = vadd.f32 %v6327, %v6551
          %v6553 = vpop.f32.mrf.mxu0
          %6554 = vmatprep.mubr.f32.mxu0 0.0
          %6555 = vmatmul.mubr.f32.gmra.mxu0 %v6082
          %v6556 = vpop.f32.mrf.mxu0
          %v6557 = vadd.f32 %v6332, %v6556
          %v6558 = vpop.f32.mrf.mxu0
          %6559 = vmatprep.mubr.f32.mxu0 0.0
          %6560 = vmatmul.mubr.f32.gmra.mxu0 %v6085
          %v6561 = vpop.f32.mrf.mxu0
          %v6562 = vadd.f32 %v6337, %v6561
          %v6563 = vpop.f32.mrf.mxu0
          %6564 = vmatprep.mubr.f32.mxu0 0.0
          %6565 = vmatmul.mubr.f32.gmra.mxu0 %v6088
          %v6566 = vpop.f32.mrf.mxu0
          %v6567 = vadd.f32 %v6342, %v6566
          %v6568 = vpop.f32.mrf.mxu0
          %6569 = vmatprep.mubr.f32.mxu0 0.0
          %6570 = vmatmul.mubr.f32.gmra.mxu0 %v6091
          %v6571 = vpop.f32.mrf.mxu0
          %v6572 = vadd.f32 %v6347, %v6571
          %v6573 = vpop.f32.mrf.mxu0
          %6574 = vmatprep.mubr.f32.mxu0 0.0
          %6575 = vmatmul.mubr.f32.gmra.mxu0 %v6094
          %v6576 = vpop.f32.mrf.mxu0
          %v6577 = vadd.f32 %v6352, %v6576
          %v6578 = vpop.f32.mrf.mxu0
          %6579 = vmatprep.mubr.f32.mxu0 0.0
          %6580 = vmatmul.mubr.f32.gmra.mxu0 %v6097
          %v6581 = vpop.f32.mrf.mxu0
          %v6582 = vadd.f32 %v6357, %v6581
          %v6583 = vpop.f32.mrf.mxu0
          %6584 = vmatprep.mubr.f32.mxu0 0.0
          %6585 = vmatmul.mubr.f32.gmra.mxu0 %v6100
          %v6586 = vpop.f32.mrf.mxu0
          %v6587 = vadd.f32 %v6362, %v6586
          %v6588 = vpop.f32.mrf.mxu0
          %6589 = vmatprep.mubr.f32.mxu0 0.0
          %6590 = vmatmul.mubr.f32.gmra.mxu0 %v6103
          %v6591 = vpop.f32.mrf.mxu0
          %v6592 = vadd.f32 %v6367, %v6591
          %v6593 = vpop.f32.mrf.mxu0
          %6594 = vmatprep.mubr.f32.mxu0 0.0
          %6595 = vmatmul.mubr.f32.gmra.mxu0 %v6106
          %v6596 = vpop.f32.mrf.mxu0
          %v6597 = vadd.f32 %v6372, %v6596
          %v6598 = vpop.f32.mrf.mxu0
          %6599 = vmatprep.mubr.f32.mxu0 0.0
          %6600 = vmatmul.mubr.f32.gmra.mxu0 %v6109
          %v6601 = vpop.f32.mrf.mxu0
          %v6602 = vadd.f32 %v6377, %v6601
          %v6603 = vpop.f32.mrf.mxu0
          %6604 = vmatprep.mubr.f32.mxu0 0.0
          %6605 = vmatmul.mubr.f32.gmra.mxu0 %v6112
          %v6606 = vpop.f32.mrf.mxu0
          %v6607 = vadd.f32 %v6382, %v6606
          %v6608 = vpop.f32.mrf.mxu0
          %6609 = vmatprep.mubr.f32.mxu0 0.0
          %6610 = vmatmul.mubr.f32.gmra.mxu0 %v6115
          %v6611 = vpop.f32.mrf.mxu0
          %v6612 = vadd.f32 %v6387, %v6611
          %v6613 = vpop.f32.mrf.mxu0
          %6614 = vdwg.mxu0
          %v6615 = vadd.f32 %v5988, %v6457
          %v6616 = vadd.f32 %v5989, %v6462
          %v6617 = vadd.f32 %v5990, %v6467
          %v6618 = vadd.f32 %v5991, %v6472
          %v6619 = vadd.f32 %v5992, %v6477
          %v6620 = vadd.f32 %v5993, %v6482
          %v6621 = vadd.f32 %v5994, %v6487
          %v6622 = vadd.f32 %v5995, %v6492
          %v6623 = vadd.f32 %v5996, %v6497
          %v6624 = vadd.f32 %v5997, %v6502
          %v6625 = vadd.f32 %v5998, %v6507
          %v6626 = vadd.f32 %v5999, %v6512
          %v6627 = vadd.f32 %v6000, %v6517
          %v6628 = vadd.f32 %v6001, %v6522
          %v6629 = vadd.f32 %v6002, %v6527
          %v6630 = vadd.f32 %v6003, %v6532
          %v6631 = vadd.f32 %v6004, %v6537
          %v6632 = vadd.f32 %v6005, %v6542
          %v6633 = vadd.f32 %v6006, %v6547
          %v6634 = vadd.f32 %v6007, %v6552
          %v6635 = vadd.f32 %v6008, %v6557
          %v6636 = vadd.f32 %v6009, %v6562
          %v6637 = vadd.f32 %v6010, %v6567
          %v6638 = vadd.f32 %v6011, %v6572
          %v6639 = vadd.f32 %v6012, %v6577
          %v6640 = vadd.f32 %v6013, %v6582
          %v6641 = vadd.f32 %v6014, %v6587
          %v6642 = vadd.f32 %v6015, %v6592
          %v6643 = vadd.f32 %v6016, %v6597
          %v6644 = vadd.f32 %v6017, %v6602
          %v6645 = vadd.f32 %v6018, %v6607
          %v6646 = vadd.f32 %v6019, %v6612
          %v6647 = vld [vmem:[%s4454] sm:$0xff]
          %v6648 = vld [vmem:[%s4454 + $0x8] sm:$0xff]
          %v6649 = vld [vmem:[%s4454 + $0x10] sm:$0xff]
          %v6650 = vld [vmem:[%s4454 + $0x18] sm:$0xff]
          %v6651 = vld [vmem:[%s4454 + $0x20] sm:$0xff]
          %v6652 = vld [vmem:[%s4454 + $0x28] sm:$0xff]
          %v6653 = vld [vmem:[%s4454 + $0x30] sm:$0xff]
          %v6654 = vld [vmem:[%s4454 + $0x38] sm:$0xff]
          %v6655 = vld [vmem:[%s4454 + $0x40] sm:$0xff]
          %v6656 = vld [vmem:[%s4454 + $0x48] sm:$0xff]
          %v6657 = vld [vmem:[%s4454 + $0x50] sm:$0xff]
          %v6658 = vld [vmem:[%s4454 + $0x58] sm:$0xff]
          %v6659 = vld [vmem:[%s4454 + $0x60] sm:$0xff]
          %v6660 = vld [vmem:[%s4454 + $0x68] sm:$0xff]
          %v6661 = vld [vmem:[%s4454 + $0x70] sm:$0xff]
          %v6662 = vld [vmem:[%s4454 + $0x78] sm:$0xff]
          %v6663 = vld [vmem:[%s4454 + $0x80] sm:$0xff]
          %v6664 = vld [vmem:[%s4454 + $0x88] sm:$0xff]
          %v6665 = vld [vmem:[%s4454 + $0x90] sm:$0xff]
          %v6666 = vld [vmem:[%s4454 + $0x98] sm:$0xff]
          %v6667 = vld [vmem:[%s4454 + $0xa0] sm:$0xff]
          %v6668 = vld [vmem:[%s4454 + $0xa8] sm:$0xff]
          %v6669 = vld [vmem:[%s4454 + $0xb0] sm:$0xff]
          %v6670 = vld [vmem:[%s4454 + $0xb8] sm:$0xff]
          %v6671 = vld [vmem:[%s4454 + $0xc0] sm:$0xff]
          %v6672 = vld [vmem:[%s4454 + $0xc8] sm:$0xff]
          %v6673 = vld [vmem:[%s4454 + $0xd0] sm:$0xff]
          %v6674 = vld [vmem:[%s4454 + $0xd8] sm:$0xff]
          %v6675 = vld [vmem:[%s4454 + $0xe0] sm:$0xff]
          %v6676 = vld [vmem:[%s4454 + $0xe8] sm:$0xff]
          %v6677 = vld [vmem:[%s4454 + $0xf0] sm:$0xff]
          %v6678 = vld [vmem:[%s4454 + $0xf8] sm:$0xff]
          %v6679 = vld [vmem:[%s4454 + $0x100] sm:$0xff]
          %v6680 = vld [vmem:[%s4454 + $0x108] sm:$0xff]
          %v6681 = vld [vmem:[%s4454 + $0x110] sm:$0xff]
          %v6682 = vld [vmem:[%s4454 + $0x118] sm:$0xff]
          %v6683 = vld [vmem:[%s4454 + $0x120] sm:$0xff]
          %v6684 = vld [vmem:[%s4454 + $0x128] sm:$0xff]
          %v6685 = vld [vmem:[%s4454 + $0x130] sm:$0xff]
          %v6686 = vld [vmem:[%s4454 + $0x138] sm:$0xff]
          %v6687 = vld [vmem:[%s4454 + $0x140] sm:$0xff]
          %v6688 = vld [vmem:[%s4454 + $0x148] sm:$0xff]
          %v6689 = vld [vmem:[%s4454 + $0x150] sm:$0xff]
          %v6690 = vld [vmem:[%s4454 + $0x158] sm:$0xff]
          %v6691 = vld [vmem:[%s4454 + $0x160] sm:$0xff]
          %v6692 = vld [vmem:[%s4454 + $0x168] sm:$0xff]
          %v6693 = vld [vmem:[%s4454 + $0x170] sm:$0xff]
          %v6694 = vld [vmem:[%s4454 + $0x178] sm:$0xff]
          %v6695 = vld [vmem:[%s4454 + $0x180] sm:$0xff]
          %v6696 = vld [vmem:[%s4454 + $0x188] sm:$0xff]
          %v6697 = vld [vmem:[%s4454 + $0x190] sm:$0xff]
          %v6698 = vld [vmem:[%s4454 + $0x198] sm:$0xff]
          %v6699 = vld [vmem:[%s4454 + $0x1a0] sm:$0xff]
          %v6700 = vld [vmem:[%s4454 + $0x1a8] sm:$0xff]
          %v6701 = vld [vmem:[%s4454 + $0x1b0] sm:$0xff]
          %v6702 = vld [vmem:[%s4454 + $0x1b8] sm:$0xff]
          %v6703 = vld [vmem:[%s4454 + $0x1c0] sm:$0xff]
          %v6704 = vld [vmem:[%s4454 + $0x1c8] sm:$0xff]
          %v6705 = vld [vmem:[%s4454 + $0x1d0] sm:$0xff]
          %v6706 = vld [vmem:[%s4454 + $0x1d8] sm:$0xff]
          %v6707 = vld [vmem:[%s4454 + $0x1e0] sm:$0xff]
          %v6708 = vld [vmem:[%s4454 + $0x1e8] sm:$0xff]
          %v6709 = vld [vmem:[%s4454 + $0x1f0] sm:$0xff]
          %v6710 = vld [vmem:[%s4454 + $0x1f8] sm:$0xff]
          %v6711 = vld [vmem:[%s4454 + $0x200] sm:$0xff]
          %v6712 = vld [vmem:[%s4454 + $0x208] sm:$0xff]
          %v6713 = vld [vmem:[%s4454 + $0x210] sm:$0xff]
          %v6714 = vld [vmem:[%s4454 + $0x218] sm:$0xff]
          %v6715 = vld [vmem:[%s4454 + $0x220] sm:$0xff]
          %v6716 = vld [vmem:[%s4454 + $0x228] sm:$0xff]
          %v6717 = vld [vmem:[%s4454 + $0x230] sm:$0xff]
          %v6718 = vld [vmem:[%s4454 + $0x238] sm:$0xff]
          %v6719 = vld [vmem:[%s4454 + $0x240] sm:$0xff]
          %v6720 = vld [vmem:[%s4454 + $0x248] sm:$0xff]
          %v6721 = vld [vmem:[%s4454 + $0x250] sm:$0xff]
          %v6722 = vld [vmem:[%s4454 + $0x258] sm:$0xff]
          %v6723 = vld [vmem:[%s4454 + $0x260] sm:$0xff]
          %v6724 = vld [vmem:[%s4454 + $0x268] sm:$0xff]
          %v6725 = vld [vmem:[%s4454 + $0x270] sm:$0xff]
          %v6726 = vld [vmem:[%s4454 + $0x278] sm:$0xff]
          %v6727 = vld [vmem:[%s4454 + $0x280] sm:$0xff]
          %v6728 = vld [vmem:[%s4454 + $0x288] sm:$0xff]
          %v6729 = vld [vmem:[%s4454 + $0x290] sm:$0xff]
          %v6730 = vld [vmem:[%s4454 + $0x298] sm:$0xff]
          %v6731 = vld [vmem:[%s4454 + $0x2a0] sm:$0xff]
          %v6732 = vld [vmem:[%s4454 + $0x2a8] sm:$0xff]
          %v6733 = vld [vmem:[%s4454 + $0x2b0] sm:$0xff]
          %v6734 = vld [vmem:[%s4454 + $0x2b8] sm:$0xff]
          %v6735 = vld [vmem:[%s4454 + $0x2c0] sm:$0xff]
          %v6736 = vld [vmem:[%s4454 + $0x2c8] sm:$0xff]
          %v6737 = vld [vmem:[%s4454 + $0x2d0] sm:$0xff]
          %v6738 = vld [vmem:[%s4454 + $0x2d8] sm:$0xff]
          %v6739 = vld [vmem:[%s4454 + $0x2e0] sm:$0xff]
          %v6740 = vld [vmem:[%s4454 + $0x2e8] sm:$0xff]
          %v6741 = vld [vmem:[%s4454 + $0x2f0] sm:$0xff]
          %v6742 = vld [vmem:[%s4454 + $0x2f8] sm:$0xff]
          %s6743 = scalar_lea.vmem [#allocation10], 768
          %v6744 = vld [vmem:[%s6743] sm:$0xff]
          %v6745 = vld [vmem:[%s6743 + $0x8] sm:$0xff]
          %v6746 = vld [vmem:[%s6743 + $0x10] sm:$0xff]
          %v6747 = vld [vmem:[%s6743 + $0x18] sm:$0xff]
          %v6748 = vld [vmem:[%s6743 + $0x20] sm:$0xff]
          %v6749 = vld [vmem:[%s6743 + $0x28] sm:$0xff]
          %v6750 = vld [vmem:[%s6743 + $0x30] sm:$0xff]
          %v6751 = vld [vmem:[%s6743 + $0x38] sm:$0xff]
          %v6752 = vld [vmem:[%s6743 + $0x40] sm:$0xff]
          %v6753 = vld [vmem:[%s6743 + $0x48] sm:$0xff]
          %v6754 = vld [vmem:[%s6743 + $0x50] sm:$0xff]
          %v6755 = vld [vmem:[%s6743 + $0x58] sm:$0xff]
          %v6756 = vld [vmem:[%s6743 + $0x60] sm:$0xff]
          %v6757 = vld [vmem:[%s6743 + $0x68] sm:$0xff]
          %v6758 = vld [vmem:[%s6743 + $0x70] sm:$0xff]
          %v6759 = vld [vmem:[%s6743 + $0x78] sm:$0xff]
          %v6760 = vld [vmem:[%s6743 + $0x80] sm:$0xff]
          %v6761 = vld [vmem:[%s6743 + $0x88] sm:$0xff]
          %v6762 = vld [vmem:[%s6743 + $0x90] sm:$0xff]
          %v6763 = vld [vmem:[%s6743 + $0x98] sm:$0xff]
          %v6764 = vld [vmem:[%s6743 + $0xa0] sm:$0xff]
          %v6765 = vld [vmem:[%s6743 + $0xa8] sm:$0xff]
          %v6766 = vld [vmem:[%s6743 + $0xb0] sm:$0xff]
          %v6767 = vld [vmem:[%s6743 + $0xb8] sm:$0xff]
          %v6768 = vld [vmem:[%s6743 + $0xc0] sm:$0xff]
          %v6769 = vld [vmem:[%s6743 + $0xc8] sm:$0xff]
          %v6770 = vld [vmem:[%s6743 + $0xd0] sm:$0xff]
          %v6771 = vld [vmem:[%s6743 + $0xd8] sm:$0xff]
          %v6772 = vld [vmem:[%s6743 + $0xe0] sm:$0xff]
          %v6773 = vld [vmem:[%s6743 + $0xe8] sm:$0xff]
          %v6774 = vld [vmem:[%s6743 + $0xf0] sm:$0xff]
          %v6775 = vld [vmem:[%s6743 + $0xf8] sm:$0xff]
          %v6776 = vld [vmem:[%s6743 + $0x100] sm:$0xff]
          %v6777 = vld [vmem:[%s6743 + $0x108] sm:$0xff]
          %v6778 = vld [vmem:[%s6743 + $0x110] sm:$0xff]
          %v6779 = vld [vmem:[%s6743 + $0x118] sm:$0xff]
          %v6780 = vld [vmem:[%s6743 + $0x120] sm:$0xff]
          %v6781 = vld [vmem:[%s6743 + $0x128] sm:$0xff]
          %v6782 = vld [vmem:[%s6743 + $0x130] sm:$0xff]
          %v6783 = vld [vmem:[%s6743 + $0x138] sm:$0xff]
          %v6784 = vld [vmem:[%s6743 + $0x140] sm:$0xff]
          %v6785 = vld [vmem:[%s6743 + $0x148] sm:$0xff]
          %v6786 = vld [vmem:[%s6743 + $0x150] sm:$0xff]
          %v6787 = vld [vmem:[%s6743 + $0x158] sm:$0xff]
          %v6788 = vld [vmem:[%s6743 + $0x160] sm:$0xff]
          %v6789 = vld [vmem:[%s6743 + $0x168] sm:$0xff]
          %v6790 = vld [vmem:[%s6743 + $0x170] sm:$0xff]
          %v6791 = vld [vmem:[%s6743 + $0x178] sm:$0xff]
          %6792 = vmatprep.subr.mxu0 0.0
          %6793 = vmatpush1.msra.mxu0 %v6759
          %6794 = vmatprep.subr.mxu0 0.0
          %6795 = vmatpush1.msra.mxu0 %v6758
          %6796 = vmatprep.subr.mxu0 0.0
          %6797 = vmatpush1.msra.mxu0 %v6757
          %6798 = vmatprep.subr.mxu0 0.0
          %6799 = vmatpush1.msra.mxu0 %v6756
          %6800 = vmatprep.subr.mxu0 0.0
          %6801 = vmatpush1.msra.mxu0 %v6755
          %6802 = vmatprep.subr.mxu0 0.0
          %6803 = vmatpush1.msra.mxu0 %v6754
          %6804 = vmatprep.subr.mxu0 0.0
          %6805 = vmatpush1.msra.mxu0 %v6753
          %6806 = vmatprep.subr.mxu0 0.0
          %6807 = vmatpush1.msra.mxu0 %v6752
          %6808 = vmatprep.subr.mxu0 0.0
          %6809 = vmatpush1.msra.mxu0 %v6751
          %6810 = vmatprep.subr.mxu0 0.0
          %6811 = vmatpush1.msra.mxu0 %v6750
          %6812 = vmatprep.subr.mxu0 0.0
          %6813 = vmatpush1.msra.mxu0 %v6749
          %6814 = vmatprep.subr.mxu0 0.0
          %6815 = vmatpush1.msra.mxu0 %v6748
          %6816 = vmatprep.subr.mxu0 0.0
          %6817 = vmatpush1.msra.mxu0 %v6747
          %6818 = vmatprep.subr.mxu0 0.0
          %6819 = vmatpush1.msra.mxu0 %v6746
          %6820 = vmatprep.subr.mxu0 0.0
          %6821 = vmatpush1.msra.mxu0 %v6745
          %6822 = vmatprep.subr.mxu0 0.0
          %6823 = vmatpush1.msra.mxu0 %v6744
          %6824 = vmatprep.subr.mxu0 0.0
          %6825 = vmatpush2.msra.mxu0 %v6775
          %6826 = vmatprep.subr.mxu0 0.0
          %6827 = vmatpush2.msra.mxu0 %v6774
          %6828 = vmatprep.subr.mxu0 0.0
          %6829 = vmatpush2.msra.mxu0 %v6773
          %6830 = vmatprep.subr.mxu0 0.0
          %6831 = vmatpush2.msra.mxu0 %v6772
          %6832 = vmatprep.subr.mxu0 0.0
          %6833 = vmatpush2.msra.mxu0 %v6771
          %6834 = vmatprep.subr.mxu0 0.0
          %6835 = vmatpush2.msra.mxu0 %v6770
          %6836 = vmatprep.subr.mxu0 0.0
          %6837 = vmatpush2.msra.mxu0 %v6769
          %6838 = vmatprep.subr.mxu0 0.0
          %6839 = vmatpush2.msra.mxu0 %v6768
          %6840 = vmatprep.subr.mxu0 0.0
          %6841 = vmatpush2.msra.mxu0 %v6767
          %6842 = vmatprep.subr.mxu0 0.0
          %6843 = vmatpush2.msra.mxu0 %v6766
          %6844 = vmatprep.subr.mxu0 0.0
          %6845 = vmatpush2.msra.mxu0 %v6765
          %6846 = vmatprep.subr.mxu0 0.0
          %6847 = vmatpush2.msra.mxu0 %v6764
          %6848 = vmatprep.subr.mxu0 0.0
          %6849 = vmatpush2.msra.mxu0 %v6763
          %6850 = vmatprep.subr.mxu0 0.0
          %6851 = vmatpush2.msra.mxu0 %v6762
          %6852 = vmatprep.subr.mxu0 0.0
          %6853 = vmatpush2.msra.mxu0 %v6761
          %6854 = vmatprep.subr.mxu0 0.0
          %6855 = vmatpush2.msra.mxu0 %v6760
          %6856 = vmatprep.mubr.f32.mxu0 %v6648
          %6857 = vmatmul.mubr.f32.gmra.mxu0 %v6647
          %v6858 = vpop.f32.mrf.mxu0
          %v6859 = vadd.f32 0.0, %v6858
          %v6860 = vpop.f32.mrf.mxu0
          %6861 = vmatprep.mubr.f32.mxu0 %v6651
          %6862 = vmatmul.mubr.f32.gmra.mxu0 %v6650
          %v6863 = vpop.f32.mrf.mxu0
          %v6864 = vadd.f32 0.0, %v6863
          %v6865 = vpop.f32.mrf.mxu0
          %6866 = vmatprep.mubr.f32.mxu0 %v6654
          %6867 = vmatmul.mubr.f32.gmra.mxu0 %v6653
          %v6868 = vpop.f32.mrf.mxu0
          %v6869 = vadd.f32 0.0, %v6868
          %v6870 = vpop.f32.mrf.mxu0
          %6871 = vmatprep.mubr.f32.mxu0 %v6657
          %6872 = vmatmul.mubr.f32.gmra.mxu0 %v6656
          %v6873 = vpop.f32.mrf.mxu0
          %v6874 = vadd.f32 0.0, %v6873
          %v6875 = vpop.f32.mrf.mxu0
          %6876 = vmatprep.mubr.f32.mxu0 %v6660
          %6877 = vmatmul.mubr.f32.gmra.mxu0 %v6659
          %v6878 = vpop.f32.mrf.mxu0
          %v6879 = vadd.f32 0.0, %v6878
          %v6880 = vpop.f32.mrf.mxu0
          %6881 = vmatprep.mubr.f32.mxu0 %v6663
          %6882 = vmatmul.mubr.f32.gmra.mxu0 %v6662
          %v6883 = vpop.f32.mrf.mxu0
          %v6884 = vadd.f32 0.0, %v6883
          %v6885 = vpop.f32.mrf.mxu0
          %6886 = vmatprep.mubr.f32.mxu0 %v6666
          %6887 = vmatmul.mubr.f32.gmra.mxu0 %v6665
          %v6888 = vpop.f32.mrf.mxu0
          %v6889 = vadd.f32 0.0, %v6888
          %v6890 = vpop.f32.mrf.mxu0
          %6891 = vmatprep.mubr.f32.mxu0 %v6669
          %6892 = vmatmul.mubr.f32.gmra.mxu0 %v6668
          %v6893 = vpop.f32.mrf.mxu0
          %v6894 = vadd.f32 0.0, %v6893
          %v6895 = vpop.f32.mrf.mxu0
          %6896 = vmatprep.mubr.f32.mxu0 %v6672
          %6897 = vmatmul.mubr.f32.gmra.mxu0 %v6671
          %v6898 = vpop.f32.mrf.mxu0
          %v6899 = vadd.f32 0.0, %v6898
          %v6900 = vpop.f32.mrf.mxu0
          %6901 = vmatprep.mubr.f32.mxu0 %v6675
          %6902 = vmatmul.mubr.f32.gmra.mxu0 %v6674
          %v6903 = vpop.f32.mrf.mxu0
          %v6904 = vadd.f32 0.0, %v6903
          %v6905 = vpop.f32.mrf.mxu0
          %6906 = vmatprep.mubr.f32.mxu0 %v6678
          %6907 = vmatmul.mubr.f32.gmra.mxu0 %v6677
          %v6908 = vpop.f32.mrf.mxu0
          %v6909 = vadd.f32 0.0, %v6908
          %v6910 = vpop.f32.mrf.mxu0
          %6911 = vmatprep.mubr.f32.mxu0 %v6681
          %6912 = vmatmul.mubr.f32.gmra.mxu0 %v6680
          %v6913 = vpop.f32.mrf.mxu0
          %v6914 = vadd.f32 0.0, %v6913
          %v6915 = vpop.f32.mrf.mxu0
          %6916 = vmatprep.mubr.f32.mxu0 %v6684
          %6917 = vmatmul.mubr.f32.gmra.mxu0 %v6683
          %v6918 = vpop.f32.mrf.mxu0
          %v6919 = vadd.f32 0.0, %v6918
          %v6920 = vpop.f32.mrf.mxu0
          %6921 = vmatprep.mubr.f32.mxu0 %v6687
          %6922 = vmatmul.mubr.f32.gmra.mxu0 %v6686
          %v6923 = vpop.f32.mrf.mxu0
          %v6924 = vadd.f32 0.0, %v6923
          %v6925 = vpop.f32.mrf.mxu0
          %6926 = vmatprep.mubr.f32.mxu0 %v6690
          %6927 = vmatmul.mubr.f32.gmra.mxu0 %v6689
          %v6928 = vpop.f32.mrf.mxu0
          %v6929 = vadd.f32 0.0, %v6928
          %v6930 = vpop.f32.mrf.mxu0
          %6931 = vmatprep.mubr.f32.mxu0 %v6693
          %6932 = vmatmul.mubr.f32.gmra.mxu0 %v6692
          %v6933 = vpop.f32.mrf.mxu0
          %v6934 = vadd.f32 0.0, %v6933
          %v6935 = vpop.f32.mrf.mxu0
          %6936 = vmatprep.mubr.f32.mxu0 %v6696
          %6937 = vmatmul.mubr.f32.gmra.mxu0 %v6695
          %v6938 = vpop.f32.mrf.mxu0
          %v6939 = vadd.f32 0.0, %v6938
          %v6940 = vpop.f32.mrf.mxu0
          %6941 = vmatprep.mubr.f32.mxu0 %v6699
          %6942 = vmatmul.mubr.f32.gmra.mxu0 %v6698
          %v6943 = vpop.f32.mrf.mxu0
          %v6944 = vadd.f32 0.0, %v6943
          %v6945 = vpop.f32.mrf.mxu0
          %6946 = vmatprep.mubr.f32.mxu0 %v6702
          %6947 = vmatmul.mubr.f32.gmra.mxu0 %v6701
          %v6948 = vpop.f32.mrf.mxu0
          %v6949 = vadd.f32 0.0, %v6948
          %v6950 = vpop.f32.mrf.mxu0
          %6951 = vmatprep.mubr.f32.mxu0 %v6705
          %6952 = vmatmul.mubr.f32.gmra.mxu0 %v6704
          %v6953 = vpop.f32.mrf.mxu0
          %v6954 = vadd.f32 0.0, %v6953
          %v6955 = vpop.f32.mrf.mxu0
          %6956 = vmatprep.mubr.f32.mxu0 %v6708
          %6957 = vmatmul.mubr.f32.gmra.mxu0 %v6707
          %v6958 = vpop.f32.mrf.mxu0
          %v6959 = vadd.f32 0.0, %v6958
          %v6960 = vpop.f32.mrf.mxu0
          %6961 = vmatprep.mubr.f32.mxu0 %v6711
          %6962 = vmatmul.mubr.f32.gmra.mxu0 %v6710
          %v6963 = vpop.f32.mrf.mxu0
          %v6964 = vadd.f32 0.0, %v6963
          %v6965 = vpop.f32.mrf.mxu0
          %6966 = vmatprep.mubr.f32.mxu0 %v6714
          %6967 = vmatmul.mubr.f32.gmra.mxu0 %v6713
          %v6968 = vpop.f32.mrf.mxu0
          %v6969 = vadd.f32 0.0, %v6968
          %v6970 = vpop.f32.mrf.mxu0
          %6971 = vmatprep.mubr.f32.mxu0 %v6717
          %6972 = vmatmul.mubr.f32.gmra.mxu0 %v6716
          %v6973 = vpop.f32.mrf.mxu0
          %v6974 = vadd.f32 0.0, %v6973
          %v6975 = vpop.f32.mrf.mxu0
          %6976 = vmatprep.mubr.f32.mxu0 %v6720
          %6977 = vmatmul.mubr.f32.gmra.mxu0 %v6719
          %v6978 = vpop.f32.mrf.mxu0
          %v6979 = vadd.f32 0.0, %v6978
          %v6980 = vpop.f32.mrf.mxu0
          %6981 = vmatprep.mubr.f32.mxu0 %v6723
          %6982 = vmatmul.mubr.f32.gmra.mxu0 %v6722
          %v6983 = vpop.f32.mrf.mxu0
          %v6984 = vadd.f32 0.0, %v6983
          %v6985 = vpop.f32.mrf.mxu0
          %6986 = vmatprep.mubr.f32.mxu0 %v6726
          %6987 = vmatmul.mubr.f32.gmra.mxu0 %v6725
          %v6988 = vpop.f32.mrf.mxu0
          %v6989 = vadd.f32 0.0, %v6988
          %v6990 = vpop.f32.mrf.mxu0
          %6991 = vmatprep.mubr.f32.mxu0 %v6729
          %6992 = vmatmul.mubr.f32.gmra.mxu0 %v6728
          %v6993 = vpop.f32.mrf.mxu0
          %v6994 = vadd.f32 0.0, %v6993
          %v6995 = vpop.f32.mrf.mxu0
          %6996 = vmatprep.mubr.f32.mxu0 %v6732
          %6997 = vmatmul.mubr.f32.gmra.mxu0 %v6731
          %v6998 = vpop.f32.mrf.mxu0
          %v6999 = vadd.f32 0.0, %v6998
          %v7000 = vpop.f32.mrf.mxu0
          %7001 = vmatprep.mubr.f32.mxu0 %v6735
          %7002 = vmatmul.mubr.f32.gmra.mxu0 %v6734
          %v7003 = vpop.f32.mrf.mxu0
          %v7004 = vadd.f32 0.0, %v7003
          %v7005 = vpop.f32.mrf.mxu0
          %7006 = vmatprep.mubr.f32.mxu0 %v6738
          %7007 = vmatmul.mubr.f32.gmra.mxu0 %v6737
          %v7008 = vpop.f32.mrf.mxu0
          %v7009 = vadd.f32 0.0, %v7008
          %v7010 = vpop.f32.mrf.mxu0
          %7011 = vmatprep.mubr.f32.mxu0 %v6741
          %7012 = vmatmul.mubr.f32.gmra.mxu0 %v6740
          %v7013 = vpop.f32.mrf.mxu0
          %v7014 = vadd.f32 0.0, %v7013
          %v7015 = vpop.f32.mrf.mxu0
          %7016 = vdwg.mxu0
          %7017 = vmatprep.subr.mxu0 0.0
          %7018 = vmatpush1.msra.mxu0 %v6791
          %7019 = vmatprep.subr.mxu0 0.0
          %7020 = vmatpush1.msra.mxu0 %v6790
          %7021 = vmatprep.subr.mxu0 0.0
          %7022 = vmatpush1.msra.mxu0 %v6789
          %7023 = vmatprep.subr.mxu0 0.0
          %7024 = vmatpush1.msra.mxu0 %v6788
          %7025 = vmatprep.subr.mxu0 0.0
          %7026 = vmatpush1.msra.mxu0 %v6787
          %7027 = vmatprep.subr.mxu0 0.0
          %7028 = vmatpush1.msra.mxu0 %v6786
          %7029 = vmatprep.subr.mxu0 0.0
          %7030 = vmatpush1.msra.mxu0 %v6785
          %7031 = vmatprep.subr.mxu0 0.0
          %7032 = vmatpush1.msra.mxu0 %v6784
          %7033 = vmatprep.subr.mxu0 0.0
          %7034 = vmatpush1.msra.mxu0 %v6783
          %7035 = vmatprep.subr.mxu0 0.0
          %7036 = vmatpush1.msra.mxu0 %v6782
          %7037 = vmatprep.subr.mxu0 0.0
          %7038 = vmatpush1.msra.mxu0 %v6781
          %7039 = vmatprep.subr.mxu0 0.0
          %7040 = vmatpush1.msra.mxu0 %v6780
          %7041 = vmatprep.subr.mxu0 0.0
          %7042 = vmatpush1.msra.mxu0 %v6779
          %7043 = vmatprep.subr.mxu0 0.0
          %7044 = vmatpush1.msra.mxu0 %v6778
          %7045 = vmatprep.subr.mxu0 0.0
          %7046 = vmatpush1.msra.mxu0 %v6777
          %7047 = vmatprep.subr.mxu0 0.0
          %7048 = vmatpush1.msra.mxu0 %v6776
          %7049 = vmatprep.subr.mxu0 0.0
          %7050 = vmatpush2.msra.mxu0 0.0
          %7051 = vmatprep.subr.mxu0 0.0
          %7052 = vmatpush2.msra.mxu0 0.0
          %7053 = vmatprep.subr.mxu0 0.0
          %7054 = vmatpush2.msra.mxu0 0.0
          %7055 = vmatprep.subr.mxu0 0.0
          %7056 = vmatpush2.msra.mxu0 0.0
          %7057 = vmatprep.subr.mxu0 0.0
          %7058 = vmatpush2.msra.mxu0 0.0
          %7059 = vmatprep.subr.mxu0 0.0
          %7060 = vmatpush2.msra.mxu0 0.0
          %7061 = vmatprep.subr.mxu0 0.0
          %7062 = vmatpush2.msra.mxu0 0.0
          %7063 = vmatprep.subr.mxu0 0.0
          %7064 = vmatpush2.msra.mxu0 0.0
          %7065 = vmatprep.subr.mxu0 0.0
          %7066 = vmatpush2.msra.mxu0 0.0
          %7067 = vmatprep.subr.mxu0 0.0
          %7068 = vmatpush2.msra.mxu0 0.0
          %7069 = vmatprep.subr.mxu0 0.0
          %7070 = vmatpush2.msra.mxu0 0.0
          %7071 = vmatprep.subr.mxu0 0.0
          %7072 = vmatpush2.msra.mxu0 0.0
          %7073 = vmatprep.subr.mxu0 0.0
          %7074 = vmatpush2.msra.mxu0 0.0
          %7075 = vmatprep.subr.mxu0 0.0
          %7076 = vmatpush2.msra.mxu0 0.0
          %7077 = vmatprep.subr.mxu0 0.0
          %7078 = vmatpush2.msra.mxu0 0.0
          %7079 = vmatprep.subr.mxu0 0.0
          %7080 = vmatpush2.msra.mxu0 0.0
          %7081 = vmatprep.mubr.f32.mxu0 0.0
          %7082 = vmatmul.mubr.f32.gmra.mxu0 %v6649
          %v7083 = vpop.f32.mrf.mxu0
          %v7084 = vadd.f32 %v6859, %v7083
          %v7085 = vpop.f32.mrf.mxu0
          %7086 = vmatprep.mubr.f32.mxu0 0.0
          %7087 = vmatmul.mubr.f32.gmra.mxu0 %v6652
          %v7088 = vpop.f32.mrf.mxu0
          %v7089 = vadd.f32 %v6864, %v7088
          %v7090 = vpop.f32.mrf.mxu0
          %7091 = vmatprep.mubr.f32.mxu0 0.0
          %7092 = vmatmul.mubr.f32.gmra.mxu0 %v6655
          %v7093 = vpop.f32.mrf.mxu0
          %v7094 = vadd.f32 %v6869, %v7093
          %v7095 = vpop.f32.mrf.mxu0
          %7096 = vmatprep.mubr.f32.mxu0 0.0
          %7097 = vmatmul.mubr.f32.gmra.mxu0 %v6658
          %v7098 = vpop.f32.mrf.mxu0
          %v7099 = vadd.f32 %v6874, %v7098
          %v7100 = vpop.f32.mrf.mxu0
          %7101 = vmatprep.mubr.f32.mxu0 0.0
          %7102 = vmatmul.mubr.f32.gmra.mxu0 %v6661
          %v7103 = vpop.f32.mrf.mxu0
          %v7104 = vadd.f32 %v6879, %v7103
          %v7105 = vpop.f32.mrf.mxu0
          %7106 = vmatprep.mubr.f32.mxu0 0.0
          %7107 = vmatmul.mubr.f32.gmra.mxu0 %v6664
          %v7108 = vpop.f32.mrf.mxu0
          %v7109 = vadd.f32 %v6884, %v7108
          %v7110 = vpop.f32.mrf.mxu0
          %7111 = vmatprep.mubr.f32.mxu0 0.0
          %7112 = vmatmul.mubr.f32.gmra.mxu0 %v6667
          %v7113 = vpop.f32.mrf.mxu0
          %v7114 = vadd.f32 %v6889, %v7113
          %v7115 = vpop.f32.mrf.mxu0
          %7116 = vmatprep.mubr.f32.mxu0 0.0
          %7117 = vmatmul.mubr.f32.gmra.mxu0 %v6670
          %v7118 = vpop.f32.mrf.mxu0
          %v7119 = vadd.f32 %v6894, %v7118
          %v7120 = vpop.f32.mrf.mxu0
          %7121 = vmatprep.mubr.f32.mxu0 0.0
          %7122 = vmatmul.mubr.f32.gmra.mxu0 %v6673
          %v7123 = vpop.f32.mrf.mxu0
          %v7124 = vadd.f32 %v6899, %v7123
          %v7125 = vpop.f32.mrf.mxu0
          %7126 = vmatprep.mubr.f32.mxu0 0.0
          %7127 = vmatmul.mubr.f32.gmra.mxu0 %v6676
          %v7128 = vpop.f32.mrf.mxu0
          %v7129 = vadd.f32 %v6904, %v7128
          %v7130 = vpop.f32.mrf.mxu0
          %7131 = vmatprep.mubr.f32.mxu0 0.0
          %7132 = vmatmul.mubr.f32.gmra.mxu0 %v6679
          %v7133 = vpop.f32.mrf.mxu0
          %v7134 = vadd.f32 %v6909, %v7133
          %v7135 = vpop.f32.mrf.mxu0
          %7136 = vmatprep.mubr.f32.mxu0 0.0
          %7137 = vmatmul.mubr.f32.gmra.mxu0 %v6682
          %v7138 = vpop.f32.mrf.mxu0
          %v7139 = vadd.f32 %v6914, %v7138
          %v7140 = vpop.f32.mrf.mxu0
          %7141 = vmatprep.mubr.f32.mxu0 0.0
          %7142 = vmatmul.mubr.f32.gmra.mxu0 %v6685
          %v7143 = vpop.f32.mrf.mxu0
          %v7144 = vadd.f32 %v6919, %v7143
          %v7145 = vpop.f32.mrf.mxu0
          %7146 = vmatprep.mubr.f32.mxu0 0.0
          %7147 = vmatmul.mubr.f32.gmra.mxu0 %v6688
          %v7148 = vpop.f32.mrf.mxu0
          %v7149 = vadd.f32 %v6924, %v7148
          %v7150 = vpop.f32.mrf.mxu0
          %7151 = vmatprep.mubr.f32.mxu0 0.0
          %7152 = vmatmul.mubr.f32.gmra.mxu0 %v6691
          %v7153 = vpop.f32.mrf.mxu0
          %v7154 = vadd.f32 %v6929, %v7153
          %v7155 = vpop.f32.mrf.mxu0
          %7156 = vmatprep.mubr.f32.mxu0 0.0
          %7157 = vmatmul.mubr.f32.gmra.mxu0 %v6694
          %v7158 = vpop.f32.mrf.mxu0
          %v7159 = vadd.f32 %v6934, %v7158
          %v7160 = vpop.f32.mrf.mxu0
          %7161 = vmatprep.mubr.f32.mxu0 0.0
          %7162 = vmatmul.mubr.f32.gmra.mxu0 %v6697
          %v7163 = vpop.f32.mrf.mxu0
          %v7164 = vadd.f32 %v6939, %v7163
          %v7165 = vpop.f32.mrf.mxu0
          %7166 = vmatprep.mubr.f32.mxu0 0.0
          %7167 = vmatmul.mubr.f32.gmra.mxu0 %v6700
          %v7168 = vpop.f32.mrf.mxu0
          %v7169 = vadd.f32 %v6944, %v7168
          %v7170 = vpop.f32.mrf.mxu0
          %7171 = vmatprep.mubr.f32.mxu0 0.0
          %7172 = vmatmul.mubr.f32.gmra.mxu0 %v6703
          %v7173 = vpop.f32.mrf.mxu0
          %v7174 = vadd.f32 %v6949, %v7173
          %v7175 = vpop.f32.mrf.mxu0
          %7176 = vmatprep.mubr.f32.mxu0 0.0
          %7177 = vmatmul.mubr.f32.gmra.mxu0 %v6706
          %v7178 = vpop.f32.mrf.mxu0
          %v7179 = vadd.f32 %v6954, %v7178
          %v7180 = vpop.f32.mrf.mxu0
          %7181 = vmatprep.mubr.f32.mxu0 0.0
          %7182 = vmatmul.mubr.f32.gmra.mxu0 %v6709
          %v7183 = vpop.f32.mrf.mxu0
          %v7184 = vadd.f32 %v6959, %v7183
          %v7185 = vpop.f32.mrf.mxu0
          %7186 = vmatprep.mubr.f32.mxu0 0.0
          %7187 = vmatmul.mubr.f32.gmra.mxu0 %v6712
          %v7188 = vpop.f32.mrf.mxu0
          %v7189 = vadd.f32 %v6964, %v7188
          %v7190 = vpop.f32.mrf.mxu0
          %7191 = vmatprep.mubr.f32.mxu0 0.0
          %7192 = vmatmul.mubr.f32.gmra.mxu0 %v6715
          %v7193 = vpop.f32.mrf.mxu0
          %v7194 = vadd.f32 %v6969, %v7193
          %v7195 = vpop.f32.mrf.mxu0
          %7196 = vmatprep.mubr.f32.mxu0 0.0
          %7197 = vmatmul.mubr.f32.gmra.mxu0 %v6718
          %v7198 = vpop.f32.mrf.mxu0
          %v7199 = vadd.f32 %v6974, %v7198
          %v7200 = vpop.f32.mrf.mxu0
          %7201 = vmatprep.mubr.f32.mxu0 0.0
          %7202 = vmatmul.mubr.f32.gmra.mxu0 %v6721
          %v7203 = vpop.f32.mrf.mxu0
          %v7204 = vadd.f32 %v6979, %v7203
          %v7205 = vpop.f32.mrf.mxu0
          %7206 = vmatprep.mubr.f32.mxu0 0.0
          %7207 = vmatmul.mubr.f32.gmra.mxu0 %v6724
          %v7208 = vpop.f32.mrf.mxu0
          %v7209 = vadd.f32 %v6984, %v7208
          %v7210 = vpop.f32.mrf.mxu0
          %7211 = vmatprep.mubr.f32.mxu0 0.0
          %7212 = vmatmul.mubr.f32.gmra.mxu0 %v6727
          %v7213 = vpop.f32.mrf.mxu0
          %v7214 = vadd.f32 %v6989, %v7213
          %v7215 = vpop.f32.mrf.mxu0
          %7216 = vmatprep.mubr.f32.mxu0 0.0
          %7217 = vmatmul.mubr.f32.gmra.mxu0 %v6730
          %v7218 = vpop.f32.mrf.mxu0
          %v7219 = vadd.f32 %v6994, %v7218
          %v7220 = vpop.f32.mrf.mxu0
          %7221 = vmatprep.mubr.f32.mxu0 0.0
          %7222 = vmatmul.mubr.f32.gmra.mxu0 %v6733
          %v7223 = vpop.f32.mrf.mxu0
          %v7224 = vadd.f32 %v6999, %v7223
          %v7225 = vpop.f32.mrf.mxu0
          %7226 = vmatprep.mubr.f32.mxu0 0.0
          %7227 = vmatmul.mubr.f32.gmra.mxu0 %v6736
          %v7228 = vpop.f32.mrf.mxu0
          %v7229 = vadd.f32 %v7004, %v7228
          %v7230 = vpop.f32.mrf.mxu0
          %7231 = vmatprep.mubr.f32.mxu0 0.0
          %7232 = vmatmul.mubr.f32.gmra.mxu0 %v6739
          %v7233 = vpop.f32.mrf.mxu0
          %v7234 = vadd.f32 %v7009, %v7233
          %v7235 = vpop.f32.mrf.mxu0
          %7236 = vmatprep.mubr.f32.mxu0 0.0
          %7237 = vmatmul.mubr.f32.gmra.mxu0 %v6742
          %v7238 = vpop.f32.mrf.mxu0
          %v7239 = vadd.f32 %v7014, %v7238
          %v7240 = vpop.f32.mrf.mxu0
          %7241 = vdwg.mxu0
          %v7242 = vadd.f32 %v6615, %v7084
          %v7243 = vadd.f32 %v6616, %v7089
          %v7244 = vadd.f32 %v6617, %v7094
          %v7245 = vadd.f32 %v6618, %v7099
          %v7246 = vadd.f32 %v6619, %v7104
          %v7247 = vadd.f32 %v6620, %v7109
          %v7248 = vadd.f32 %v6621, %v7114
          %v7249 = vadd.f32 %v6622, %v7119
          %v7250 = vadd.f32 %v6623, %v7124
          %v7251 = vadd.f32 %v6624, %v7129
          %v7252 = vadd.f32 %v6625, %v7134
          %v7253 = vadd.f32 %v6626, %v7139
          %v7254 = vadd.f32 %v6627, %v7144
          %v7255 = vadd.f32 %v6628, %v7149
          %v7256 = vadd.f32 %v6629, %v7154
          %v7257 = vadd.f32 %v6630, %v7159
          %v7258 = vadd.f32 %v6631, %v7164
          %v7259 = vadd.f32 %v6632, %v7169
          %v7260 = vadd.f32 %v6633, %v7174
          %v7261 = vadd.f32 %v6634, %v7179
          %v7262 = vadd.f32 %v6635, %v7184
          %v7263 = vadd.f32 %v6636, %v7189
          %v7264 = vadd.f32 %v6637, %v7194
          %v7265 = vadd.f32 %v6638, %v7199
          %v7266 = vadd.f32 %v6639, %v7204
          %v7267 = vadd.f32 %v6640, %v7209
          %v7268 = vadd.f32 %v6641, %v7214
          %v7269 = vadd.f32 %v6642, %v7219
          %v7270 = vadd.f32 %v6643, %v7224
          %v7271 = vadd.f32 %v6644, %v7229
          %v7272 = vadd.f32 %v6645, %v7234
          %v7273 = vadd.f32 %v6646, %v7239
          %v7274 = vmax.f32 %v7242, 0.0
          %v7275 = vmax.f32 %v7243, 0.0
          %v7276 = vmax.f32 %v7244, 0.0
          %v7277 = vmax.f32 %v7245, 0.0
          %v7278 = vmax.f32 %v7246, 0.0
          %v7279 = vmax.f32 %v7247, 0.0
          %v7280 = vmax.f32 %v7248, 0.0
          %v7281 = vmax.f32 %v7249, 0.0
          %v7282 = vmax.f32 %v7250, 0.0
          %v7283 = vmax.f32 %v7251, 0.0
          %v7284 = vmax.f32 %v7252, 0.0
          %v7285 = vmax.f32 %v7253, 0.0
          %v7286 = vmax.f32 %v7254, 0.0
          %v7287 = vmax.f32 %v7255, 0.0
          %v7288 = vmax.f32 %v7256, 0.0
          %v7289 = vmax.f32 %v7257, 0.0
          %v7290 = vmax.f32 %v7258, 0.0
          %v7291 = vmax.f32 %v7259, 0.0
          %v7292 = vmax.f32 %v7260, 0.0
          %v7293 = vmax.f32 %v7261, 0.0
          %v7294 = vmax.f32 %v7262, 0.0
          %v7295 = vmax.f32 %v7263, 0.0
          %v7296 = vmax.f32 %v7264, 0.0
          %v7297 = vmax.f32 %v7265, 0.0
          %v7298 = vmax.f32 %v7266, 0.0
          %v7299 = vmax.f32 %v7267, 0.0
          %v7300 = vmax.f32 %v7268, 0.0
          %v7301 = vmax.f32 %v7269, 0.0
          %v7302 = vmax.f32 %v7270, 0.0
          %v7303 = vmax.f32 %v7271, 0.0
          %v7304 = vmax.f32 %v7272, 0.0
          %v7305 = vmax.f32 %v7273, 0.0
          %7306 = vst [vmem:[%s316 + $0x1] sm:$0xff] %v7274
          %7307 = vst [vmem:[%s316 + $0x9] sm:$0xff] %v7275
          %7308 = vst [vmem:[%s316 + $0x19] sm:$0xff] %v7276
          %7309 = vst [vmem:[%s316 + $0x21] sm:$0xff] %v7277
          %7310 = vst [vmem:[%s316 + $0x31] sm:$0xff] %v7278
          %7311 = vst [vmem:[%s316 + $0x39] sm:$0xff] %v7279
          %7312 = vst [vmem:[%s316 + $0x49] sm:$0xff] %v7280
          %7313 = vst [vmem:[%s316 + $0x51] sm:$0xff] %v7281
          %7314 = vst [vmem:[%s316 + $0x61] sm:$0xff] %v7282
          %7315 = vst [vmem:[%s316 + $0x69] sm:$0xff] %v7283
          %7316 = vst [vmem:[%s316 + $0x79] sm:$0xff] %v7284
          %7317 = vst [vmem:[%s316 + $0x81] sm:$0xff] %v7285
          %7318 = vst [vmem:[%s316 + $0x91] sm:$0xff] %v7286
          %7319 = vst [vmem:[%s316 + $0x99] sm:$0xff] %v7287
          %7320 = vst [vmem:[%s316 + $0xa9] sm:$0xff] %v7288
          %7321 = vst [vmem:[%s316 + $0xb1] sm:$0xff] %v7289
          %7322 = vst [vmem:[%s316 + $0xc1] sm:$0xff] %v7290
          %7323 = vst [vmem:[%s316 + $0xc9] sm:$0xff] %v7291
          %7324 = vst [vmem:[%s316 + $0xd9] sm:$0xff] %v7292
          %7325 = vst [vmem:[%s316 + $0xe1] sm:$0xff] %v7293
          %7326 = vst [vmem:[%s316 + $0xf1] sm:$0xff] %v7294
          %7327 = vst [vmem:[%s316 + $0xf9] sm:$0xff] %v7295
          %7328 = vst [vmem:[%s316 + $0x109] sm:$0xff] %v7296
          %7329 = vst [vmem:[%s316 + $0x111] sm:$0xff] %v7297
          %7330 = vst [vmem:[%s316 + $0x121] sm:$0xff] %v7298
          %7331 = vst [vmem:[%s316 + $0x129] sm:$0xff] %v7299
          %7332 = vst [vmem:[%s316 + $0x139] sm:$0xff] %v7300
          %7333 = vst [vmem:[%s316 + $0x141] sm:$0xff] %v7301
          %7334 = vst [vmem:[%s316 + $0x151] sm:$0xff] %v7302
          %7335 = vst [vmem:[%s316 + $0x159] sm:$0xff] %v7303
          %7336 = vst [vmem:[%s316 + $0x169] sm:$0xff] %v7304
          %7337 = vst [vmem:[%s316 + $0x171] sm:$0xff] %v7305
        $region53: #{drrn_forward.1} parent=39 // loop_footer
          %s3047 = sadd.s32 1, %s3043
        $region54: #{drrn_forward.1} parent=39 // loop_footer_branch
          %3042 = sbr.rel target = $region50
        $region55: #{drrn_forward.1} parent=39 // loop_exit
          _
        %v7338 = vld [vmem:[#allocation4] sm:$0xff]
        %v7339 = vld [vmem:[#allocation4 + $0x8] sm:$0xff]
        %v7340 = vld [vmem:[#allocation4 + $0x18] sm:$0xff]
        %v7341 = vld [vmem:[#allocation4 + $0x20] sm:$0xff]
        %v7342 = vld [vmem:[#allocation4 + $0x30] sm:$0xff]
        %v7343 = vld [vmem:[#allocation4 + $0x38] sm:$0xff]
        %v7344 = vld [vmem:[#allocation4 + $0x48] sm:$0xff]
        %v7345 = vld [vmem:[#allocation4 + $0x50] sm:$0xff]
        %v7346 = vld [vmem:[#allocation4 + $0x60] sm:$0xff]
        %v7347 = vld [vmem:[#allocation4 + $0x68] sm:$0xff]
        %v7348 = vld [vmem:[#allocation4 + $0x78] sm:$0xff]
        %v7349 = vld [vmem:[#allocation4 + $0x80] sm:$0xff]
        %v7350 = vld [vmem:[#allocation4 + $0x90] sm:$0xff]
        %v7351 = vld [vmem:[#allocation4 + $0x98] sm:$0xff]
        %v7352 = vld [vmem:[#allocation4 + $0xa8] sm:$0xff]
        %v7353 = vld [vmem:[#allocation4 + $0xb0] sm:$0xff]
        %v7354 = vld [vmem:[#allocation4 + $0xc0] sm:$0xff]
        %v7355 = vld [vmem:[#allocation4 + $0xc8] sm:$0xff]
        %v7356 = vld [vmem:[#allocation4 + $0xd8] sm:$0xff]
        %v7357 = vld [vmem:[#allocation4 + $0xe0] sm:$0xff]
        %v7358 = vld [vmem:[#allocation4 + $0xf0] sm:$0xff]
        %v7359 = vld [vmem:[#allocation4 + $0xf8] sm:$0xff]
        %v7360 = vld [vmem:[#allocation4 + $0x108] sm:$0xff]
        %v7361 = vld [vmem:[#allocation4 + $0x110] sm:$0xff]
        %v7362 = vld [vmem:[#allocation4 + $0x120] sm:$0xff]
        %v7363 = vld [vmem:[#allocation4 + $0x128] sm:$0xff]
        %v7364 = vld [vmem:[#allocation4 + $0x138] sm:$0xff]
        %v7365 = vld [vmem:[#allocation4 + $0x140] sm:$0xff]
        %v7366 = vld [vmem:[#allocation4 + $0x150] sm:$0xff]
        %v7367 = vld [vmem:[#allocation4 + $0x158] sm:$0xff]
        %v7368 = vld [vmem:[#allocation4 + $0x168] sm:$0xff]
        %v7369 = vld [vmem:[#allocation4 + $0x170] sm:$0xff]
        %v7370 = vld [vmem:[#allocation4 + $0x180] sm:$0xff]
        %v7371 = vld [vmem:[#allocation4 + $0x188] sm:$0xff]
        %v7372 = vld [vmem:[#allocation4 + $0x198] sm:$0xff]
        %v7373 = vld [vmem:[#allocation4 + $0x1a0] sm:$0xff]
        %7374 = vst [vmem:[#allocation6] sm:$0xff] %v7338
        %7375 = vst [vmem:[#allocation6 + $0x18] sm:$0xff] %v7339
        %7376 = vst [vmem:[#allocation6 + $0x30] sm:$0xff] %v7340
        %7377 = vst [vmem:[#allocation6 + $0x48] sm:$0xff] %v7341
        %7378 = vst [vmem:[#allocation6 + $0x60] sm:$0xff] %v7342
        %7379 = vst [vmem:[#allocation6 + $0x78] sm:$0xff] %v7343
        %7380 = vst [vmem:[#allocation6 + $0x90] sm:$0xff] %v7344
        %7381 = vst [vmem:[#allocation6 + $0xa8] sm:$0xff] %v7345
        %7382 = vst [vmem:[#allocation6 + $0xc0] sm:$0xff] %v7346
        %7383 = vst [vmem:[#allocation6 + $0xd8] sm:$0xff] %v7347
        %7384 = vst [vmem:[#allocation6 + $0xf0] sm:$0xff] %v7348
        %7385 = vst [vmem:[#allocation6 + $0x108] sm:$0xff] %v7349
        %7386 = vst [vmem:[#allocation6 + $0x120] sm:$0xff] %v7350
        %7387 = vst [vmem:[#allocation6 + $0x138] sm:$0xff] %v7351
        %7388 = vst [vmem:[#allocation6 + $0x150] sm:$0xff] %v7352
        %7389 = vst [vmem:[#allocation6 + $0x168] sm:$0xff] %v7353
        %7390 = vst [vmem:[#allocation6 + $0x180] sm:$0xff] %v7354
        %7391 = vst [vmem:[#allocation6 + $0x198] sm:$0xff] %v7355
        %7392 = vst [vmem:[#allocation6 + $0x1b0] sm:$0xff] %v7356
        %7393 = vst [vmem:[#allocation6 + $0x1c8] sm:$0xff] %v7357
        %7394 = vst [vmem:[#allocation6 + $0x1e0] sm:$0xff] %v7358
        %7395 = vst [vmem:[#allocation6 + $0x1f8] sm:$0xff] %v7359
        %7396 = vst [vmem:[#allocation6 + $0x210] sm:$0xff] %v7360
        %7397 = vst [vmem:[#allocation6 + $0x228] sm:$0xff] %v7361
        %7398 = vst [vmem:[#allocation6 + $0x240] sm:$0xff] %v7362
        %7399 = vst [vmem:[#allocation6 + $0x258] sm:$0xff] %v7363
        %7400 = vst [vmem:[#allocation6 + $0x270] sm:$0xff] %v7364
        %7401 = vst [vmem:[#allocation6 + $0x288] sm:$0xff] %v7365
        %7402 = vst [vmem:[#allocation6 + $0x2a0] sm:$0xff] %v7366
        %7403 = vst [vmem:[#allocation6 + $0x2b8] sm:$0xff] %v7367
        %7404 = vst [vmem:[#allocation6 + $0x2d0] sm:$0xff] %v7368
        %7405 = vst [vmem:[#allocation6 + $0x2e8] sm:$0xff] %v7369
        %7406 = vst [vmem:[#allocation6 + $0x300] sm:$0xff] %v7370
        %7407 = vst [vmem:[#allocation6 + $0x318] sm:$0xff] %v7371
        %7408 = vst [vmem:[#allocation6 + $0x330] sm:$0xff] %v7372
        %7409 = vst [vmem:[#allocation6 + $0x348] sm:$0xff] %v7373
        %v7410 = vld [vmem:[#allocation4 + $0x1] sm:$0xff]
        %v7411 = vld [vmem:[#allocation4 + $0x9] sm:$0xff]
        %v7412 = vld [vmem:[#allocation4 + $0x19] sm:$0xff]
        %v7413 = vld [vmem:[#allocation4 + $0x21] sm:$0xff]
        %v7414 = vld [vmem:[#allocation4 + $0x31] sm:$0xff]
        %v7415 = vld [vmem:[#allocation4 + $0x39] sm:$0xff]
        %v7416 = vld [vmem:[#allocation4 + $0x49] sm:$0xff]
        %v7417 = vld [vmem:[#allocation4 + $0x51] sm:$0xff]
        %v7418 = vld [vmem:[#allocation4 + $0x61] sm:$0xff]
        %v7419 = vld [vmem:[#allocation4 + $0x69] sm:$0xff]
        %v7420 = vld [vmem:[#allocation4 + $0x79] sm:$0xff]
        %v7421 = vld [vmem:[#allocation4 + $0x81] sm:$0xff]
        %v7422 = vld [vmem:[#allocation4 + $0x91] sm:$0xff]
        %v7423 = vld [vmem:[#allocation4 + $0x99] sm:$0xff]
        %v7424 = vld [vmem:[#allocation4 + $0xa9] sm:$0xff]
        %v7425 = vld [vmem:[#allocation4 + $0xb1] sm:$0xff]
        %v7426 = vld [vmem:[#allocation4 + $0xc1] sm:$0xff]
        %v7427 = vld [vmem:[#allocation4 + $0xc9] sm:$0xff]
        %v7428 = vld [vmem:[#allocation4 + $0xd9] sm:$0xff]
        %v7429 = vld [vmem:[#allocation4 + $0xe1] sm:$0xff]
        %v7430 = vld [vmem:[#allocation4 + $0xf1] sm:$0xff]
        %v7431 = vld [vmem:[#allocation4 + $0xf9] sm:$0xff]
        %v7432 = vld [vmem:[#allocation4 + $0x109] sm:$0xff]
        %v7433 = vld [vmem:[#allocation4 + $0x111] sm:$0xff]
        %v7434 = vld [vmem:[#allocation4 + $0x121] sm:$0xff]
        %v7435 = vld [vmem:[#allocation4 + $0x129] sm:$0xff]
        %v7436 = vld [vmem:[#allocation4 + $0x139] sm:$0xff]
        %v7437 = vld [vmem:[#allocation4 + $0x141] sm:$0xff]
        %v7438 = vld [vmem:[#allocation4 + $0x151] sm:$0xff]
        %v7439 = vld [vmem:[#allocation4 + $0x159] sm:$0xff]
        %v7440 = vld [vmem:[#allocation4 + $0x169] sm:$0xff]
        %v7441 = vld [vmem:[#allocation4 + $0x171] sm:$0xff]
        %v7442 = vld [vmem:[#allocation4 + $0x181] sm:$0xff]
        %v7443 = vld [vmem:[#allocation4 + $0x189] sm:$0xff]
        %v7444 = vld [vmem:[#allocation4 + $0x199] sm:$0xff]
        %v7445 = vld [vmem:[#allocation4 + $0x1a1] sm:$0xff]
        %7446 = vst [vmem:[#allocation6 + $0x8] sm:$0xff] %v7410
        %7447 = vst [vmem:[#allocation6 + $0x20] sm:$0xff] %v7411
        %7448 = vst [vmem:[#allocation6 + $0x38] sm:$0xff] %v7412
        %7449 = vst [vmem:[#allocation6 + $0x50] sm:$0xff] %v7413
        %7450 = vst [vmem:[#allocation6 + $0x68] sm:$0xff] %v7414
        %7451 = vst [vmem:[#allocation6 + $0x80] sm:$0xff] %v7415
        %7452 = vst [vmem:[#allocation6 + $0x98] sm:$0xff] %v7416
        %7453 = vst [vmem:[#allocation6 + $0xb0] sm:$0xff] %v7417
        %7454 = vst [vmem:[#allocation6 + $0xc8] sm:$0xff] %v7418
        %7455 = vst [vmem:[#allocation6 + $0xe0] sm:$0xff] %v7419
        %7456 = vst [vmem:[#allocation6 + $0xf8] sm:$0xff] %v7420
        %7457 = vst [vmem:[#allocation6 + $0x110] sm:$0xff] %v7421
        %7458 = vst [vmem:[#allocation6 + $0x128] sm:$0xff] %v7422
        %7459 = vst [vmem:[#allocation6 + $0x140] sm:$0xff] %v7423
        %7460 = vst [vmem:[#allocation6 + $0x158] sm:$0xff] %v7424
        %7461 = vst [vmem:[#allocation6 + $0x170] sm:$0xff] %v7425
        %7462 = vst [vmem:[#allocation6 + $0x188] sm:$0xff] %v7426
        %7463 = vst [vmem:[#allocation6 + $0x1a0] sm:$0xff] %v7427
        %7464 = vst [vmem:[#allocation6 + $0x1b8] sm:$0xff] %v7428
        %7465 = vst [vmem:[#allocation6 + $0x1d0] sm:$0xff] %v7429
        %7466 = vst [vmem:[#allocation6 + $0x1e8] sm:$0xff] %v7430
        %7467 = vst [vmem:[#allocation6 + $0x200] sm:$0xff] %v7431
        %7468 = vst [vmem:[#allocation6 + $0x218] sm:$0xff] %v7432
        %7469 = vst [vmem:[#allocation6 + $0x230] sm:$0xff] %v7433
        %7470 = vst [vmem:[#allocation6 + $0x248] sm:$0xff] %v7434
        %7471 = vst [vmem:[#allocation6 + $0x260] sm:$0xff] %v7435
        %7472 = vst [vmem:[#allocation6 + $0x278] sm:$0xff] %v7436
        %7473 = vst [vmem:[#allocation6 + $0x290] sm:$0xff] %v7437
        %7474 = vst [vmem:[#allocation6 + $0x2a8] sm:$0xff] %v7438
        %7475 = vst [vmem:[#allocation6 + $0x2c0] sm:$0xff] %v7439
        %7476 = vst [vmem:[#allocation6 + $0x2d8] sm:$0xff] %v7440
        %7477 = vst [vmem:[#allocation6 + $0x2f0] sm:$0xff] %v7441
        %7478 = vst [vmem:[#allocation6 + $0x308] sm:$0xff] %v7442
        %7479 = vst [vmem:[#allocation6 + $0x320] sm:$0xff] %v7443
        %7480 = vst [vmem:[#allocation6 + $0x338] sm:$0xff] %v7444
        %7481 = vst [vmem:[#allocation6 + $0x350] sm:$0xff] %v7445
        %v7482 = vld [vmem:[#allocation4 + $0x2] sm:$0xff]
        %v7483 = vld [vmem:[#allocation4 + $0xa] sm:$0xff]
        %v7484 = vld [vmem:[#allocation4 + $0x1a] sm:$0xff]
        %v7485 = vld [vmem:[#allocation4 + $0x22] sm:$0xff]
        %v7486 = vld [vmem:[#allocation4 + $0x32] sm:$0xff]
        %v7487 = vld [vmem:[#allocation4 + $0x3a] sm:$0xff]
        %v7488 = vld [vmem:[#allocation4 + $0x4a] sm:$0xff]
        %v7489 = vld [vmem:[#allocation4 + $0x52] sm:$0xff]
        %v7490 = vld [vmem:[#allocation4 + $0x62] sm:$0xff]
        %v7491 = vld [vmem:[#allocation4 + $0x6a] sm:$0xff]
        %v7492 = vld [vmem:[#allocation4 + $0x7a] sm:$0xff]
        %v7493 = vld [vmem:[#allocation4 + $0x82] sm:$0xff]
        %v7494 = vld [vmem:[#allocation4 + $0x92] sm:$0xff]
        %v7495 = vld [vmem:[#allocation4 + $0x9a] sm:$0xff]
        %v7496 = vld [vmem:[#allocation4 + $0xaa] sm:$0xff]
        %v7497 = vld [vmem:[#allocation4 + $0xb2] sm:$0xff]
        %v7498 = vld [vmem:[#allocation4 + $0xc2] sm:$0xff]
        %v7499 = vld [vmem:[#allocation4 + $0xca] sm:$0xff]
        %v7500 = vld [vmem:[#allocation4 + $0xda] sm:$0xff]
        %v7501 = vld [vmem:[#allocation4 + $0xe2] sm:$0xff]
        %v7502 = vld [vmem:[#allocation4 + $0xf2] sm:$0xff]
        %v7503 = vld [vmem:[#allocation4 + $0xfa] sm:$0xff]
        %v7504 = vld [vmem:[#allocation4 + $0x10a] sm:$0xff]
        %v7505 = vld [vmem:[#allocation4 + $0x112] sm:$0xff]
        %v7506 = vld [vmem:[#allocation4 + $0x122] sm:$0xff]
        %v7507 = vld [vmem:[#allocation4 + $0x12a] sm:$0xff]
        %v7508 = vld [vmem:[#allocation4 + $0x13a] sm:$0xff]
        %v7509 = vld [vmem:[#allocation4 + $0x142] sm:$0xff]
        %v7510 = vld [vmem:[#allocation4 + $0x152] sm:$0xff]
        %v7511 = vld [vmem:[#allocation4 + $0x15a] sm:$0xff]
        %v7512 = vld [vmem:[#allocation4 + $0x16a] sm:$0xff]
        %v7513 = vld [vmem:[#allocation4 + $0x172] sm:$0xff]
        %v7514 = vld [vmem:[#allocation4 + $0x182] sm:$0xff]
        %v7515 = vld [vmem:[#allocation4 + $0x18a] sm:$0xff]
        %v7516 = vld [vmem:[#allocation4 + $0x19a] sm:$0xff]
        %v7517 = vld [vmem:[#allocation4 + $0x1a2] sm:$0xff]
        %7518 = vst [vmem:[#allocation6 + $0x10] sm:$0xff] %v7482
        %7519 = vst [vmem:[#allocation6 + $0x28] sm:$0xff] %v7483
        %7520 = vst [vmem:[#allocation6 + $0x40] sm:$0xff] %v7484
        %7521 = vst [vmem:[#allocation6 + $0x58] sm:$0xff] %v7485
        %7522 = vst [vmem:[#allocation6 + $0x70] sm:$0xff] %v7486
        %7523 = vst [vmem:[#allocation6 + $0x88] sm:$0xff] %v7487
        %7524 = vst [vmem:[#allocation6 + $0xa0] sm:$0xff] %v7488
        %7525 = vst [vmem:[#allocation6 + $0xb8] sm:$0xff] %v7489
        %7526 = vst [vmem:[#allocation6 + $0xd0] sm:$0xff] %v7490
        %7527 = vst [vmem:[#allocation6 + $0xe8] sm:$0xff] %v7491
        %7528 = vst [vmem:[#allocation6 + $0x100] sm:$0xff] %v7492
        %7529 = vst [vmem:[#allocation6 + $0x118] sm:$0xff] %v7493
        %7530 = vst [vmem:[#allocation6 + $0x130] sm:$0xff] %v7494
        %7531 = vst [vmem:[#allocation6 + $0x148] sm:$0xff] %v7495
        %7532 = vst [vmem:[#allocation6 + $0x160] sm:$0xff] %v7496
        %7533 = vst [vmem:[#allocation6 + $0x178] sm:$0xff] %v7497
        %7534 = vst [vmem:[#allocation6 + $0x190] sm:$0xff] %v7498
        %7535 = vst [vmem:[#allocation6 + $0x1a8] sm:$0xff] %v7499
        %7536 = vst [vmem:[#allocation6 + $0x1c0] sm:$0xff] %v7500
        %7537 = vst [vmem:[#allocation6 + $0x1d8] sm:$0xff] %v7501
        %7538 = vst [vmem:[#allocation6 + $0x1f0] sm:$0xff] %v7502
        %7539 = vst [vmem:[#allocation6 + $0x208] sm:$0xff] %v7503
        %7540 = vst [vmem:[#allocation6 + $0x220] sm:$0xff] %v7504
        %7541 = vst [vmem:[#allocation6 + $0x238] sm:$0xff] %v7505
        %7542 = vst [vmem:[#allocation6 + $0x250] sm:$0xff] %v7506
        %7543 = vst [vmem:[#allocation6 + $0x268] sm:$0xff] %v7507
        %7544 = vst [vmem:[#allocation6 + $0x280] sm:$0xff] %v7508
        %7545 = vst [vmem:[#allocation6 + $0x298] sm:$0xff] %v7509
        %7546 = vst [vmem:[#allocation6 + $0x2b0] sm:$0xff] %v7510
        %7547 = vst [vmem:[#allocation6 + $0x2c8] sm:$0xff] %v7511
        %7548 = vst [vmem:[#allocation6 + $0x2e0] sm:$0xff] %v7512
        %7549 = vst [vmem:[#allocation6 + $0x2f8] sm:$0xff] %v7513
        %7550 = vst [vmem:[#allocation6 + $0x310] sm:$0xff] %v7514
        %7551 = vst [vmem:[#allocation6 + $0x328] sm:$0xff] %v7515
        %7552 = vst [vmem:[#allocation6 + $0x340] sm:$0xff] %v7516
        %7553 = vst [vmem:[#allocation6 + $0x358] sm:$0xff] %v7517
        %v7554 = vld [vmem:[#allocation6] sm:$0xff]
        %v7555 = vld [vmem:[#allocation6 + $0x8] sm:$0xff]
        %v7556 = vld [vmem:[#allocation6 + $0x10] sm:$0xff]
        %v7557 = vld [vmem:[#allocation6 + $0x18] sm:$0xff]
        %v7558 = vld [vmem:[#allocation6 + $0x20] sm:$0xff]
        %v7559 = vld [vmem:[#allocation6 + $0x28] sm:$0xff]
        %v7560 = vld [vmem:[#allocation6 + $0x30] sm:$0xff]
        %v7561 = vld [vmem:[#allocation6 + $0x38] sm:$0xff]
        %v7562 = vld [vmem:[#allocation6 + $0x40] sm:$0xff]
        %v7563 = vld [vmem:[#allocation6 + $0x48] sm:$0xff]
        %v7564 = vld [vmem:[#allocation6 + $0x50] sm:$0xff]
        %v7565 = vld [vmem:[#allocation6 + $0x58] sm:$0xff]
        %v7566 = vld [vmem:[#allocation6 + $0x60] sm:$0xff]
        %v7567 = vld [vmem:[#allocation6 + $0x68] sm:$0xff]
        %v7568 = vld [vmem:[#allocation6 + $0x70] sm:$0xff]
        %v7569 = vld [vmem:[#allocation6 + $0x78] sm:$0xff]
        %v7570 = vld [vmem:[#allocation6 + $0x80] sm:$0xff]
        %v7571 = vld [vmem:[#allocation6 + $0x88] sm:$0xff]
        %v7572 = vld [vmem:[#allocation6 + $0x90] sm:$0xff]
        %v7573 = vld [vmem:[#allocation6 + $0x98] sm:$0xff]
        %v7574 = vld [vmem:[#allocation6 + $0xa0] sm:$0xff]
        %v7575 = vld [vmem:[#allocation6 + $0xa8] sm:$0xff]
        %v7576 = vld [vmem:[#allocation6 + $0xb0] sm:$0xff]
        %v7577 = vld [vmem:[#allocation6 + $0xb8] sm:$0xff]
        %v7578 = vld [vmem:[#allocation6 + $0xc0] sm:$0xff]
        %v7579 = vld [vmem:[#allocation6 + $0xc8] sm:$0xff]
        %v7580 = vld [vmem:[#allocation6 + $0xd0] sm:$0xff]
        %v7581 = vld [vmem:[#allocation6 + $0xd8] sm:$0xff]
        %v7582 = vld [vmem:[#allocation6 + $0xe0] sm:$0xff]
        %v7583 = vld [vmem:[#allocation6 + $0xe8] sm:$0xff]
        %v7584 = vld [vmem:[#allocation6 + $0xf0] sm:$0xff]
        %v7585 = vld [vmem:[#allocation6 + $0xf8] sm:$0xff]
        %v7586 = vld [vmem:[#allocation6 + $0x100] sm:$0xff]
        %v7587 = vld [vmem:[#allocation6 + $0x108] sm:$0xff]
        %v7588 = vld [vmem:[#allocation6 + $0x110] sm:$0xff]
        %v7589 = vld [vmem:[#allocation6 + $0x118] sm:$0xff]
        %v7590 = vld [vmem:[#allocation6 + $0x120] sm:$0xff]
        %v7591 = vld [vmem:[#allocation6 + $0x128] sm:$0xff]
        %v7592 = vld [vmem:[#allocation6 + $0x130] sm:$0xff]
        %v7593 = vld [vmem:[#allocation6 + $0x138] sm:$0xff]
        %v7594 = vld [vmem:[#allocation6 + $0x140] sm:$0xff]
        %v7595 = vld [vmem:[#allocation6 + $0x148] sm:$0xff]
        %v7596 = vld [vmem:[#allocation6 + $0x150] sm:$0xff]
        %v7597 = vld [vmem:[#allocation6 + $0x158] sm:$0xff]
        %v7598 = vld [vmem:[#allocation6 + $0x160] sm:$0xff]
        %v7599 = vld [vmem:[#allocation6 + $0x168] sm:$0xff]
        %v7600 = vld [vmem:[#allocation6 + $0x170] sm:$0xff]
        %v7601 = vld [vmem:[#allocation6 + $0x178] sm:$0xff]
        %v7602 = vld [vmem:[#allocation6 + $0x180] sm:$0xff]
        %v7603 = vld [vmem:[#allocation6 + $0x188] sm:$0xff]
        %v7604 = vld [vmem:[#allocation6 + $0x190] sm:$0xff]
        %v7605 = vld [vmem:[#allocation6 + $0x198] sm:$0xff]
        %v7606 = vld [vmem:[#allocation6 + $0x1a0] sm:$0xff]
        %v7607 = vld [vmem:[#allocation6 + $0x1a8] sm:$0xff]
        %v7608 = vld [vmem:[#allocation6 + $0x1b0] sm:$0xff]
        %v7609 = vld [vmem:[#allocation6 + $0x1b8] sm:$0xff]
        %v7610 = vld [vmem:[#allocation6 + $0x1c0] sm:$0xff]
        %v7611 = vld [vmem:[#allocation6 + $0x1c8] sm:$0xff]
        %v7612 = vld [vmem:[#allocation6 + $0x1d0] sm:$0xff]
        %v7613 = vld [vmem:[#allocation6 + $0x1d8] sm:$0xff]
        %v7614 = vld [vmem:[#allocation6 + $0x1e0] sm:$0xff]
        %v7615 = vld [vmem:[#allocation6 + $0x1e8] sm:$0xff]
        %v7616 = vld [vmem:[#allocation6 + $0x1f0] sm:$0xff]
        %v7617 = vld [vmem:[#allocation6 + $0x1f8] sm:$0xff]
        %v7618 = vld [vmem:[#allocation6 + $0x200] sm:$0xff]
        %v7619 = vld [vmem:[#allocation6 + $0x208] sm:$0xff]
        %v7620 = vld [vmem:[#allocation6 + $0x210] sm:$0xff]
        %v7621 = vld [vmem:[#allocation6 + $0x218] sm:$0xff]
        %v7622 = vld [vmem:[#allocation6 + $0x220] sm:$0xff]
        %v7623 = vld [vmem:[#allocation6 + $0x228] sm:$0xff]
        %v7624 = vld [vmem:[#allocation6 + $0x230] sm:$0xff]
        %v7625 = vld [vmem:[#allocation6 + $0x238] sm:$0xff]
        %v7626 = vld [vmem:[#allocation6 + $0x240] sm:$0xff]
        %v7627 = vld [vmem:[#allocation6 + $0x248] sm:$0xff]
        %v7628 = vld [vmem:[#allocation6 + $0x250] sm:$0xff]
        %v7629 = vld [vmem:[#allocation6 + $0x258] sm:$0xff]
        %v7630 = vld [vmem:[#allocation6 + $0x260] sm:$0xff]
        %v7631 = vld [vmem:[#allocation6 + $0x268] sm:$0xff]
        %v7632 = vld [vmem:[#allocation6 + $0x270] sm:$0xff]
        %v7633 = vld [vmem:[#allocation6 + $0x278] sm:$0xff]
        %v7634 = vld [vmem:[#allocation6 + $0x280] sm:$0xff]
        %v7635 = vld [vmem:[#allocation6 + $0x288] sm:$0xff]
        %v7636 = vld [vmem:[#allocation6 + $0x290] sm:$0xff]
        %v7637 = vld [vmem:[#allocation6 + $0x298] sm:$0xff]
        %v7638 = vld [vmem:[#allocation6 + $0x2a0] sm:$0xff]
        %v7639 = vld [vmem:[#allocation6 + $0x2a8] sm:$0xff]
        %v7640 = vld [vmem:[#allocation6 + $0x2b0] sm:$0xff]
        %v7641 = vld [vmem:[#allocation6 + $0x2b8] sm:$0xff]
        %v7642 = vld [vmem:[#allocation6 + $0x2c0] sm:$0xff]
        %v7643 = vld [vmem:[#allocation6 + $0x2c8] sm:$0xff]
        %v7644 = vld [vmem:[#allocation6 + $0x2d0] sm:$0xff]
        %v7645 = vld [vmem:[#allocation6 + $0x2d8] sm:$0xff]
        %v7646 = vld [vmem:[#allocation6 + $0x2e0] sm:$0xff]
        %v7647 = vld [vmem:[#allocation6 + $0x2e8] sm:$0xff]
        %v7648 = vld [vmem:[#allocation6 + $0x2f0] sm:$0xff]
        %v7649 = vld [vmem:[#allocation6 + $0x2f8] sm:$0xff]
        %v7650 = vld [vmem:[%s4] ss:$4 sm:$0x7]
        %v7652 = vlaneseq
        %v7653 = vshrl.u32 %v7652, 7
        %v7654 = vsub.s32 0, %v7653
        %v7655 = vrot.slane %v7650, %v7654
        %v7656 = vlaneseq
        %v7657 = vshrl.u32 %v7656, 7
        %v7658 = vsub.s32 1, %v7657
        %v7659 = vrot.slane %v7650, %v7658
        %v7660 = vlaneseq
        %v7661 = vshrl.u32 %v7660, 7
        %v7662 = vsub.s32 2, %v7661
        %v7663 = vrot.slane %v7650, %v7662
        %v7667 = vmul.f32 %v7554, %v7655
        %v7668 = vmul.f32 %v7555, %v7659
        %v7669 = vmul.f32 %v7556, %v7663
        %v7670 = vmul.f32 %v7557, %v7655
        %v7671 = vmul.f32 %v7558, %v7659
        %v7672 = vmul.f32 %v7559, %v7663
        %v7673 = vmul.f32 %v7560, %v7655
        %v7674 = vmul.f32 %v7561, %v7659
        %v7675 = vmul.f32 %v7562, %v7663
        %v7676 = vmul.f32 %v7563, %v7655
        %v7677 = vmul.f32 %v7564, %v7659
        %v7678 = vmul.f32 %v7565, %v7663
        %v7679 = vmul.f32 %v7566, %v7655
        %v7680 = vmul.f32 %v7567, %v7659
        %v7681 = vmul.f32 %v7568, %v7663
        %v7682 = vmul.f32 %v7569, %v7655
        %v7683 = vmul.f32 %v7570, %v7659
        %v7684 = vmul.f32 %v7571, %v7663
        %v7685 = vmul.f32 %v7572, %v7655
        %v7686 = vmul.f32 %v7573, %v7659
        %v7687 = vmul.f32 %v7574, %v7663
        %v7688 = vmul.f32 %v7575, %v7655
        %v7689 = vmul.f32 %v7576, %v7659
        %v7690 = vmul.f32 %v7577, %v7663
        %v7691 = vmul.f32 %v7578, %v7655
        %v7692 = vmul.f32 %v7579, %v7659
        %v7693 = vmul.f32 %v7580, %v7663
        %v7694 = vmul.f32 %v7581, %v7655
        %v7695 = vmul.f32 %v7582, %v7659
        %v7696 = vmul.f32 %v7583, %v7663
        %v7697 = vmul.f32 %v7584, %v7655
        %v7698 = vmul.f32 %v7585, %v7659
        %v7699 = vmul.f32 %v7586, %v7663
        %v7700 = vmul.f32 %v7587, %v7655
        %v7701 = vmul.f32 %v7588, %v7659
        %v7702 = vmul.f32 %v7589, %v7663
        %v7703 = vmul.f32 %v7590, %v7655
        %v7704 = vmul.f32 %v7591, %v7659
        %v7705 = vmul.f32 %v7592, %v7663
        %v7706 = vmul.f32 %v7593, %v7655
        %v7707 = vmul.f32 %v7594, %v7659
        %v7708 = vmul.f32 %v7595, %v7663
        %v7709 = vmul.f32 %v7596, %v7655
        %v7710 = vmul.f32 %v7597, %v7659
        %v7711 = vmul.f32 %v7598, %v7663
        %v7712 = vmul.f32 %v7599, %v7655
        %v7713 = vmul.f32 %v7600, %v7659
        %v7714 = vmul.f32 %v7601, %v7663
        %v7715 = vmul.f32 %v7602, %v7655
        %v7716 = vmul.f32 %v7603, %v7659
        %v7717 = vmul.f32 %v7604, %v7663
        %v7718 = vmul.f32 %v7605, %v7655
        %v7719 = vmul.f32 %v7606, %v7659
        %v7720 = vmul.f32 %v7607, %v7663
        %v7721 = vmul.f32 %v7608, %v7655
        %v7722 = vmul.f32 %v7609, %v7659
        %v7723 = vmul.f32 %v7610, %v7663
        %v7724 = vmul.f32 %v7611, %v7655
        %v7725 = vmul.f32 %v7612, %v7659
        %v7726 = vmul.f32 %v7613, %v7663
        %v7727 = vmul.f32 %v7614, %v7655
        %v7728 = vmul.f32 %v7615, %v7659
        %v7729 = vmul.f32 %v7616, %v7663
        %v7730 = vmul.f32 %v7617, %v7655
        %v7731 = vmul.f32 %v7618, %v7659
        %v7732 = vmul.f32 %v7619, %v7663
        %v7733 = vmul.f32 %v7620, %v7655
        %v7734 = vmul.f32 %v7621, %v7659
        %v7735 = vmul.f32 %v7622, %v7663
        %v7736 = vmul.f32 %v7623, %v7655
        %v7737 = vmul.f32 %v7624, %v7659
        %v7738 = vmul.f32 %v7625, %v7663
        %v7739 = vmul.f32 %v7626, %v7655
        %v7740 = vmul.f32 %v7627, %v7659
        %v7741 = vmul.f32 %v7628, %v7663
        %v7742 = vmul.f32 %v7629, %v7655
        %v7743 = vmul.f32 %v7630, %v7659
        %v7744 = vmul.f32 %v7631, %v7663
        %v7745 = vmul.f32 %v7632, %v7655
        %v7746 = vmul.f32 %v7633, %v7659
        %v7747 = vmul.f32 %v7634, %v7663
        %v7748 = vmul.f32 %v7635, %v7655
        %v7749 = vmul.f32 %v7636, %v7659
        %v7750 = vmul.f32 %v7637, %v7663
        %v7751 = vmul.f32 %v7638, %v7655
        %v7752 = vmul.f32 %v7639, %v7659
        %v7753 = vmul.f32 %v7640, %v7663
        %v7754 = vmul.f32 %v7641, %v7655
        %v7755 = vmul.f32 %v7642, %v7659
        %v7756 = vmul.f32 %v7643, %v7663
        %v7757 = vmul.f32 %v7644, %v7655
        %v7758 = vmul.f32 %v7645, %v7659
        %v7759 = vmul.f32 %v7646, %v7663
        %v7760 = vmul.f32 %v7647, %v7655
        %v7761 = vmul.f32 %v7648, %v7659
        %v7762 = vmul.f32 %v7649, %v7663
        %v7763 = vadd.f32 %v7667, %v7668
        %v7764 = vadd.f32 %v7763, %v7669
        %7765 = vadd.xlane.f32.xlu0 %v7764
        %v7766 = vpop.xlane.xlu0 %7765
        %v7767 = vadd.f32 %v7670, %v7671
        %v7768 = vadd.f32 %v7767, %v7672
        %7769 = vadd.xlane.f32.xlu0 %v7768
        %v7770 = vpop.xlane.xlu0 %7769
        %v7771 = vadd.f32 %v7673, %v7674
        %v7772 = vadd.f32 %v7771, %v7675
        %7773 = vadd.xlane.f32.xlu0 %v7772
        %v7774 = vpop.xlane.xlu0 %7773
        %v7775 = vadd.f32 %v7676, %v7677
        %v7776 = vadd.f32 %v7775, %v7678
        %7777 = vadd.xlane.f32.xlu0 %v7776
        %v7778 = vpop.xlane.xlu0 %7777
        %v7779 = vadd.f32 %v7679, %v7680
        %v7780 = vadd.f32 %v7779, %v7681
        %7781 = vadd.xlane.f32.xlu0 %v7780
        %v7782 = vpop.xlane.xlu0 %7781
        %v7783 = vadd.f32 %v7682, %v7683
        %v7784 = vadd.f32 %v7783, %v7684
        %7785 = vadd.xlane.f32.xlu0 %v7784
        %v7786 = vpop.xlane.xlu0 %7785
        %v7787 = vadd.f32 %v7685, %v7686
        %v7788 = vadd.f32 %v7787, %v7687
        %7789 = vadd.xlane.f32.xlu0 %v7788
        %v7790 = vpop.xlane.xlu0 %7789
        %v7791 = vadd.f32 %v7688, %v7689
        %v7792 = vadd.f32 %v7791, %v7690
        %7793 = vadd.xlane.f32.xlu0 %v7792
        %v7794 = vpop.xlane.xlu0 %7793
        %v7795 = vadd.f32 %v7691, %v7692
        %v7796 = vadd.f32 %v7795, %v7693
        %7797 = vadd.xlane.f32.xlu0 %v7796
        %v7798 = vpop.xlane.xlu0 %7797
        %v7799 = vadd.f32 %v7694, %v7695
        %v7800 = vadd.f32 %v7799, %v7696
        %7801 = vadd.xlane.f32.xlu0 %v7800
        %v7802 = vpop.xlane.xlu0 %7801
        %v7803 = vadd.f32 %v7697, %v7698
        %v7804 = vadd.f32 %v7803, %v7699
        %7805 = vadd.xlane.f32.xlu0 %v7804
        %v7806 = vpop.xlane.xlu0 %7805
        %v7807 = vadd.f32 %v7700, %v7701
        %v7808 = vadd.f32 %v7807, %v7702
        %7809 = vadd.xlane.f32.xlu0 %v7808
        %v7810 = vpop.xlane.xlu0 %7809
        %v7811 = vadd.f32 %v7703, %v7704
        %v7812 = vadd.f32 %v7811, %v7705
        %7813 = vadd.xlane.f32.xlu0 %v7812
        %v7814 = vpop.xlane.xlu0 %7813
        %v7815 = vadd.f32 %v7706, %v7707
        %v7816 = vadd.f32 %v7815, %v7708
        %7817 = vadd.xlane.f32.xlu0 %v7816
        %v7818 = vpop.xlane.xlu0 %7817
        %v7819 = vadd.f32 %v7709, %v7710
        %v7820 = vadd.f32 %v7819, %v7711
        %7821 = vadd.xlane.f32.xlu0 %v7820
        %v7822 = vpop.xlane.xlu0 %7821
        %v7823 = vadd.f32 %v7712, %v7713
        %v7824 = vadd.f32 %v7823, %v7714
        %7825 = vadd.xlane.f32.xlu0 %v7824
        %v7826 = vpop.xlane.xlu0 %7825
        %v7827 = vadd.f32 %v7715, %v7716
        %v7828 = vadd.f32 %v7827, %v7717
        %7829 = vadd.xlane.f32.xlu0 %v7828
        %v7830 = vpop.xlane.xlu0 %7829
        %v7831 = vadd.f32 %v7718, %v7719
        %v7832 = vadd.f32 %v7831, %v7720
        %7833 = vadd.xlane.f32.xlu0 %v7832
        %v7834 = vpop.xlane.xlu0 %7833
        %v7835 = vadd.f32 %v7721, %v7722
        %v7836 = vadd.f32 %v7835, %v7723
        %7837 = vadd.xlane.f32.xlu0 %v7836
        %v7838 = vpop.xlane.xlu0 %7837
        %v7839 = vadd.f32 %v7724, %v7725
        %v7840 = vadd.f32 %v7839, %v7726
        %7841 = vadd.xlane.f32.xlu0 %v7840
        %v7842 = vpop.xlane.xlu0 %7841
        %v7843 = vadd.f32 %v7727, %v7728
        %v7844 = vadd.f32 %v7843, %v7729
        %7845 = vadd.xlane.f32.xlu0 %v7844
        %v7846 = vpop.xlane.xlu0 %7845
        %v7847 = vadd.f32 %v7730, %v7731
        %v7848 = vadd.f32 %v7847, %v7732
        %7849 = vadd.xlane.f32.xlu0 %v7848
        %v7850 = vpop.xlane.xlu0 %7849
        %v7851 = vadd.f32 %v7733, %v7734
        %v7852 = vadd.f32 %v7851, %v7735
        %7853 = vadd.xlane.f32.xlu0 %v7852
        %v7854 = vpop.xlane.xlu0 %7853
        %v7855 = vadd.f32 %v7736, %v7737
        %v7856 = vadd.f32 %v7855, %v7738
        %7857 = vadd.xlane.f32.xlu0 %v7856
        %v7858 = vpop.xlane.xlu0 %7857
        %v7859 = vadd.f32 %v7739, %v7740
        %v7860 = vadd.f32 %v7859, %v7741
        %7861 = vadd.xlane.f32.xlu0 %v7860
        %v7862 = vpop.xlane.xlu0 %7861
        %v7863 = vadd.f32 %v7742, %v7743
        %v7864 = vadd.f32 %v7863, %v7744
        %7865 = vadd.xlane.f32.xlu0 %v7864
        %v7866 = vpop.xlane.xlu0 %7865
        %v7867 = vadd.f32 %v7745, %v7746
        %v7868 = vadd.f32 %v7867, %v7747
        %7869 = vadd.xlane.f32.xlu0 %v7868
        %v7870 = vpop.xlane.xlu0 %7869
        %v7871 = vadd.f32 %v7748, %v7749
        %v7872 = vadd.f32 %v7871, %v7750
        %7873 = vadd.xlane.f32.xlu0 %v7872
        %v7874 = vpop.xlane.xlu0 %7873
        %v7875 = vadd.f32 %v7751, %v7752
        %v7876 = vadd.f32 %v7875, %v7753
        %7877 = vadd.xlane.f32.xlu0 %v7876
        %v7878 = vpop.xlane.xlu0 %7877
        %v7879 = vadd.f32 %v7754, %v7755
        %v7880 = vadd.f32 %v7879, %v7756
        %7881 = vadd.xlane.f32.xlu0 %v7880
        %v7882 = vpop.xlane.xlu0 %7881
        %v7883 = vadd.f32 %v7757, %v7758
        %v7884 = vadd.f32 %v7883, %v7759
        %7885 = vadd.xlane.f32.xlu0 %v7884
        %v7886 = vpop.xlane.xlu0 %7885
        %v7887 = vadd.f32 %v7760, %v7761
        %v7888 = vadd.f32 %v7887, %v7762
        %7889 = vadd.xlane.f32.xlu0 %v7888
        %v7890 = vpop.xlane.xlu0 %7889
        %s7891 = scalar_lea.vmem [#allocation6], 48
        %v7892 = vld [vmem:[%s7891] sm:$0xff]
        %v7893 = vld [vmem:[%s7891 + $0x8] sm:$0xff]
        %v7894 = vld [vmem:[%s7891 + $0x10] sm:$0xff]
        %v7895 = vld [vmem:[%s7891 + $0x18] sm:$0xff]
        %v7896 = vld [vmem:[%s7891 + $0x20] sm:$0xff]
        %v7897 = vld [vmem:[%s7891 + $0x28] sm:$0xff]
        %v7898 = vld [vmem:[%s7891 + $0x30] sm:$0xff]
        %v7899 = vld [vmem:[%s7891 + $0x38] sm:$0xff]
        %v7900 = vld [vmem:[%s7891 + $0x40] sm:$0xff]
        %v7901 = vld [vmem:[%s7891 + $0x48] sm:$0xff]
        %v7902 = vld [vmem:[%s7891 + $0x50] sm:$0xff]
        %v7903 = vld [vmem:[%s7891 + $0x58] sm:$0xff]
        %v7904 = vld [vmem:[%s7891 + $0x60] sm:$0xff]
        %v7905 = vld [vmem:[%s7891 + $0x68] sm:$0xff]
        %v7906 = vld [vmem:[%s7891 + $0x70] sm:$0xff]
        %v7907 = vld [vmem:[%s7891 + $0x78] sm:$0xff]
        %v7908 = vld [vmem:[%s7891 + $0x80] sm:$0xff]
        %v7909 = vld [vmem:[%s7891 + $0x88] sm:$0xff]
        %v7910 = vld [vmem:[%s7891 + $0x90] sm:$0xff]
        %v7911 = vld [vmem:[%s7891 + $0x98] sm:$0xff]
        %v7912 = vld [vmem:[%s7891 + $0xa0] sm:$0xff]
        %v7913 = vld [vmem:[%s7891 + $0xa8] sm:$0xff]
        %v7914 = vld [vmem:[%s7891 + $0xb0] sm:$0xff]
        %v7915 = vld [vmem:[%s7891 + $0xb8] sm:$0xff]
        %v7916 = vld [vmem:[%s7891 + $0xc0] sm:$0xff]
        %v7917 = vld [vmem:[%s7891 + $0xc8] sm:$0xff]
        %v7918 = vld [vmem:[%s7891 + $0xd0] sm:$0xff]
        %v7919 = vld [vmem:[%s7891 + $0xd8] sm:$0xff]
        %v7920 = vld [vmem:[%s7891 + $0xe0] sm:$0xff]
        %v7921 = vld [vmem:[%s7891 + $0xe8] sm:$0xff]
        %v7922 = vld [vmem:[%s7891 + $0xf0] sm:$0xff]
        %v7923 = vld [vmem:[%s7891 + $0xf8] sm:$0xff]
        %v7924 = vld [vmem:[%s7891 + $0x100] sm:$0xff]
        %v7925 = vld [vmem:[%s7891 + $0x108] sm:$0xff]
        %v7926 = vld [vmem:[%s7891 + $0x110] sm:$0xff]
        %v7927 = vld [vmem:[%s7891 + $0x118] sm:$0xff]
        %v7928 = vld [vmem:[%s7891 + $0x120] sm:$0xff]
        %v7929 = vld [vmem:[%s7891 + $0x128] sm:$0xff]
        %v7930 = vld [vmem:[%s7891 + $0x130] sm:$0xff]
        %v7931 = vld [vmem:[%s7891 + $0x138] sm:$0xff]
        %v7932 = vld [vmem:[%s7891 + $0x140] sm:$0xff]
        %v7933 = vld [vmem:[%s7891 + $0x148] sm:$0xff]
        %v7934 = vld [vmem:[%s7891 + $0x150] sm:$0xff]
        %v7935 = vld [vmem:[%s7891 + $0x158] sm:$0xff]
        %v7936 = vld [vmem:[%s7891 + $0x160] sm:$0xff]
        %v7937 = vld [vmem:[%s7891 + $0x168] sm:$0xff]
        %v7938 = vld [vmem:[%s7891 + $0x170] sm:$0xff]
        %v7939 = vld [vmem:[%s7891 + $0x178] sm:$0xff]
        %v7940 = vld [vmem:[%s7891 + $0x180] sm:$0xff]
        %v7941 = vld [vmem:[%s7891 + $0x188] sm:$0xff]
        %v7942 = vld [vmem:[%s7891 + $0x190] sm:$0xff]
        %v7943 = vld [vmem:[%s7891 + $0x198] sm:$0xff]
        %v7944 = vld [vmem:[%s7891 + $0x1a0] sm:$0xff]
        %v7945 = vld [vmem:[%s7891 + $0x1a8] sm:$0xff]
        %v7946 = vld [vmem:[%s7891 + $0x1b0] sm:$0xff]
        %v7947 = vld [vmem:[%s7891 + $0x1b8] sm:$0xff]
        %v7948 = vld [vmem:[%s7891 + $0x1c0] sm:$0xff]
        %v7949 = vld [vmem:[%s7891 + $0x1c8] sm:$0xff]
        %v7950 = vld [vmem:[%s7891 + $0x1d0] sm:$0xff]
        %v7951 = vld [vmem:[%s7891 + $0x1d8] sm:$0xff]
        %v7952 = vld [vmem:[%s7891 + $0x1e0] sm:$0xff]
        %v7953 = vld [vmem:[%s7891 + $0x1e8] sm:$0xff]
        %v7954 = vld [vmem:[%s7891 + $0x1f0] sm:$0xff]
        %v7955 = vld [vmem:[%s7891 + $0x1f8] sm:$0xff]
        %v7956 = vld [vmem:[%s7891 + $0x200] sm:$0xff]
        %v7957 = vld [vmem:[%s7891 + $0x208] sm:$0xff]
        %v7958 = vld [vmem:[%s7891 + $0x210] sm:$0xff]
        %v7959 = vld [vmem:[%s7891 + $0x218] sm:$0xff]
        %v7960 = vld [vmem:[%s7891 + $0x220] sm:$0xff]
        %v7961 = vld [vmem:[%s7891 + $0x228] sm:$0xff]
        %v7962 = vld [vmem:[%s7891 + $0x230] sm:$0xff]
        %v7963 = vld [vmem:[%s7891 + $0x238] sm:$0xff]
        %v7964 = vld [vmem:[%s7891 + $0x240] sm:$0xff]
        %v7965 = vld [vmem:[%s7891 + $0x248] sm:$0xff]
        %v7966 = vld [vmem:[%s7891 + $0x250] sm:$0xff]
        %v7967 = vld [vmem:[%s7891 + $0x258] sm:$0xff]
        %v7968 = vld [vmem:[%s7891 + $0x260] sm:$0xff]
        %v7969 = vld [vmem:[%s7891 + $0x268] sm:$0xff]
        %v7970 = vld [vmem:[%s7891 + $0x270] sm:$0xff]
        %v7971 = vld [vmem:[%s7891 + $0x278] sm:$0xff]
        %v7972 = vld [vmem:[%s7891 + $0x280] sm:$0xff]
        %v7973 = vld [vmem:[%s7891 + $0x288] sm:$0xff]
        %v7974 = vld [vmem:[%s7891 + $0x290] sm:$0xff]
        %v7975 = vld [vmem:[%s7891 + $0x298] sm:$0xff]
        %v7976 = vld [vmem:[%s7891 + $0x2a0] sm:$0xff]
        %v7977 = vld [vmem:[%s7891 + $0x2a8] sm:$0xff]
        %v7978 = vld [vmem:[%s7891 + $0x2b0] sm:$0xff]
        %v7979 = vld [vmem:[%s7891 + $0x2b8] sm:$0xff]
        %v7980 = vld [vmem:[%s7891 + $0x2c0] sm:$0xff]
        %v7981 = vld [vmem:[%s7891 + $0x2c8] sm:$0xff]
        %v7982 = vld [vmem:[%s7891 + $0x2d0] sm:$0xff]
        %v7983 = vld [vmem:[%s7891 + $0x2d8] sm:$0xff]
        %v7984 = vld [vmem:[%s7891 + $0x2e0] sm:$0xff]
        %v7985 = vld [vmem:[%s7891 + $0x2e8] sm:$0xff]
        %v7986 = vld [vmem:[%s7891 + $0x2f0] sm:$0xff]
        %v7987 = vld [vmem:[%s7891 + $0x2f8] sm:$0xff]
        %s7988 = scalar_lea.vmem %s4, 1
        %v7989 = vld [vmem:[%s7988] ss:$4 sm:$0x7]
        %v7991 = vlaneseq
        %v7992 = vshrl.u32 %v7991, 7
        %v7993 = vsub.s32 0, %v7992
        %v7994 = vrot.slane %v7989, %v7993
        %v7995 = vlaneseq
        %v7996 = vshrl.u32 %v7995, 7
        %v7997 = vsub.s32 1, %v7996
        %v7998 = vrot.slane %v7989, %v7997
        %v7999 = vlaneseq
        %v8000 = vshrl.u32 %v7999, 7
        %v8001 = vsub.s32 2, %v8000
        %v8002 = vrot.slane %v7989, %v8001
        %v8006 = vmul.f32 %v7892, %v7994
        %v8007 = vmul.f32 %v7893, %v7998
        %v8008 = vmul.f32 %v7894, %v8002
        %v8009 = vmul.f32 %v7895, %v7994
        %v8010 = vmul.f32 %v7896, %v7998
        %v8011 = vmul.f32 %v7897, %v8002
        %v8012 = vmul.f32 %v7898, %v7994
        %v8013 = vmul.f32 %v7899, %v7998
        %v8014 = vmul.f32 %v7900, %v8002
        %v8015 = vmul.f32 %v7901, %v7994
        %v8016 = vmul.f32 %v7902, %v7998
        %v8017 = vmul.f32 %v7903, %v8002
        %v8018 = vmul.f32 %v7904, %v7994
        %v8019 = vmul.f32 %v7905, %v7998
        %v8020 = vmul.f32 %v7906, %v8002
        %v8021 = vmul.f32 %v7907, %v7994
        %v8022 = vmul.f32 %v7908, %v7998
        %v8023 = vmul.f32 %v7909, %v8002
        %v8024 = vmul.f32 %v7910, %v7994
        %v8025 = vmul.f32 %v7911, %v7998
        %v8026 = vmul.f32 %v7912, %v8002
        %v8027 = vmul.f32 %v7913, %v7994
        %v8028 = vmul.f32 %v7914, %v7998
        %v8029 = vmul.f32 %v7915, %v8002
        %v8030 = vmul.f32 %v7916, %v7994
        %v8031 = vmul.f32 %v7917, %v7998
        %v8032 = vmul.f32 %v7918, %v8002
        %v8033 = vmul.f32 %v7919, %v7994
        %v8034 = vmul.f32 %v7920, %v7998
        %v8035 = vmul.f32 %v7921, %v8002
        %v8036 = vmul.f32 %v7922, %v7994
        %v8037 = vmul.f32 %v7923, %v7998
        %v8038 = vmul.f32 %v7924, %v8002
        %v8039 = vmul.f32 %v7925, %v7994
        %v8040 = vmul.f32 %v7926, %v7998
        %v8041 = vmul.f32 %v7927, %v8002
        %v8042 = vmul.f32 %v7928, %v7994
        %v8043 = vmul.f32 %v7929, %v7998
        %v8044 = vmul.f32 %v7930, %v8002
        %v8045 = vmul.f32 %v7931, %v7994
        %v8046 = vmul.f32 %v7932, %v7998
        %v8047 = vmul.f32 %v7933, %v8002
        %v8048 = vmul.f32 %v7934, %v7994
        %v8049 = vmul.f32 %v7935, %v7998
        %v8050 = vmul.f32 %v7936, %v8002
        %v8051 = vmul.f32 %v7937, %v7994
        %v8052 = vmul.f32 %v7938, %v7998
        %v8053 = vmul.f32 %v7939, %v8002
        %v8054 = vmul.f32 %v7940, %v7994
        %v8055 = vmul.f32 %v7941, %v7998
        %v8056 = vmul.f32 %v7942, %v8002
        %v8057 = vmul.f32 %v7943, %v7994
        %v8058 = vmul.f32 %v7944, %v7998
        %v8059 = vmul.f32 %v7945, %v8002
        %v8060 = vmul.f32 %v7946, %v7994
        %v8061 = vmul.f32 %v7947, %v7998
        %v8062 = vmul.f32 %v7948, %v8002
        %v8063 = vmul.f32 %v7949, %v7994
        %v8064 = vmul.f32 %v7950, %v7998
        %v8065 = vmul.f32 %v7951, %v8002
        %v8066 = vmul.f32 %v7952, %v7994
        %v8067 = vmul.f32 %v7953, %v7998
        %v8068 = vmul.f32 %v7954, %v8002
        %v8069 = vmul.f32 %v7955, %v7994
        %v8070 = vmul.f32 %v7956, %v7998
        %v8071 = vmul.f32 %v7957, %v8002
        %v8072 = vmul.f32 %v7958, %v7994
        %v8073 = vmul.f32 %v7959, %v7998
        %v8074 = vmul.f32 %v7960, %v8002
        %v8075 = vmul.f32 %v7961, %v7994
        %v8076 = vmul.f32 %v7962, %v7998
        %v8077 = vmul.f32 %v7963, %v8002
        %v8078 = vmul.f32 %v7964, %v7994
        %v8079 = vmul.f32 %v7965, %v7998
        %v8080 = vmul.f32 %v7966, %v8002
        %v8081 = vmul.f32 %v7967, %v7994
        %v8082 = vmul.f32 %v7968, %v7998
        %v8083 = vmul.f32 %v7969, %v8002
        %v8084 = vmul.f32 %v7970, %v7994
        %v8085 = vmul.f32 %v7971, %v7998
        %v8086 = vmul.f32 %v7972, %v8002
        %v8087 = vmul.f32 %v7973, %v7994
        %v8088 = vmul.f32 %v7974, %v7998
        %v8089 = vmul.f32 %v7975, %v8002
        %v8090 = vmul.f32 %v7976, %v7994
        %v8091 = vmul.f32 %v7977, %v7998
        %v8092 = vmul.f32 %v7978, %v8002
        %v8093 = vmul.f32 %v7979, %v7994
        %v8094 = vmul.f32 %v7980, %v7998
        %v8095 = vmul.f32 %v7981, %v8002
        %v8096 = vmul.f32 %v7982, %v7994
        %v8097 = vmul.f32 %v7983, %v7998
        %v8098 = vmul.f32 %v7984, %v8002
        %v8099 = vmul.f32 %v7985, %v7994
        %v8100 = vmul.f32 %v7986, %v7998
        %v8101 = vmul.f32 %v7987, %v8002
        %v8102 = vadd.f32 %v8006, %v8007
        %v8103 = vadd.f32 %v8102, %v8008
        %8104 = vadd.xlane.f32.xlu0 %v8103
        %v8105 = vpop.xlane.xlu0 %8104
        %v8106 = vadd.f32 %v8009, %v8010
        %v8107 = vadd.f32 %v8106, %v8011
        %8108 = vadd.xlane.f32.xlu0 %v8107
        %v8109 = vpop.xlane.xlu0 %8108
        %v8110 = vadd.f32 %v8012, %v8013
        %v8111 = vadd.f32 %v8110, %v8014
        %8112 = vadd.xlane.f32.xlu0 %v8111
        %v8113 = vpop.xlane.xlu0 %8112
        %v8114 = vadd.f32 %v8015, %v8016
        %v8115 = vadd.f32 %v8114, %v8017
        %8116 = vadd.xlane.f32.xlu0 %v8115
        %v8117 = vpop.xlane.xlu0 %8116
        %v8118 = vadd.f32 %v8018, %v8019
        %v8119 = vadd.f32 %v8118, %v8020
        %8120 = vadd.xlane.f32.xlu0 %v8119
        %v8121 = vpop.xlane.xlu0 %8120
        %v8122 = vadd.f32 %v8021, %v8022
        %v8123 = vadd.f32 %v8122, %v8023
        %8124 = vadd.xlane.f32.xlu0 %v8123
        %v8125 = vpop.xlane.xlu0 %8124
        %v8126 = vadd.f32 %v8024, %v8025
        %v8127 = vadd.f32 %v8126, %v8026
        %8128 = vadd.xlane.f32.xlu0 %v8127
        %v8129 = vpop.xlane.xlu0 %8128
        %v8130 = vadd.f32 %v8027, %v8028
        %v8131 = vadd.f32 %v8130, %v8029
        %8132 = vadd.xlane.f32.xlu0 %v8131
        %v8133 = vpop.xlane.xlu0 %8132
        %v8134 = vadd.f32 %v8030, %v8031
        %v8135 = vadd.f32 %v8134, %v8032
        %8136 = vadd.xlane.f32.xlu0 %v8135
        %v8137 = vpop.xlane.xlu0 %8136
        %v8138 = vadd.f32 %v8033, %v8034
        %v8139 = vadd.f32 %v8138, %v8035
        %8140 = vadd.xlane.f32.xlu0 %v8139
        %v8141 = vpop.xlane.xlu0 %8140
        %v8142 = vadd.f32 %v8036, %v8037
        %v8143 = vadd.f32 %v8142, %v8038
        %8144 = vadd.xlane.f32.xlu0 %v8143
        %v8145 = vpop.xlane.xlu0 %8144
        %v8146 = vadd.f32 %v8039, %v8040
        %v8147 = vadd.f32 %v8146, %v8041
        %8148 = vadd.xlane.f32.xlu0 %v8147
        %v8149 = vpop.xlane.xlu0 %8148
        %v8150 = vadd.f32 %v8042, %v8043
        %v8151 = vadd.f32 %v8150, %v8044
        %8152 = vadd.xlane.f32.xlu0 %v8151
        %v8153 = vpop.xlane.xlu0 %8152
        %v8154 = vadd.f32 %v8045, %v8046
        %v8155 = vadd.f32 %v8154, %v8047
        %8156 = vadd.xlane.f32.xlu0 %v8155
        %v8157 = vpop.xlane.xlu0 %8156
        %v8158 = vadd.f32 %v8048, %v8049
        %v8159 = vadd.f32 %v8158, %v8050
        %8160 = vadd.xlane.f32.xlu0 %v8159
        %v8161 = vpop.xlane.xlu0 %8160
        %v8162 = vadd.f32 %v8051, %v8052
        %v8163 = vadd.f32 %v8162, %v8053
        %8164 = vadd.xlane.f32.xlu0 %v8163
        %v8165 = vpop.xlane.xlu0 %8164
        %v8166 = vadd.f32 %v8054, %v8055
        %v8167 = vadd.f32 %v8166, %v8056
        %8168 = vadd.xlane.f32.xlu0 %v8167
        %v8169 = vpop.xlane.xlu0 %8168
        %v8170 = vadd.f32 %v8057, %v8058
        %v8171 = vadd.f32 %v8170, %v8059
        %8172 = vadd.xlane.f32.xlu0 %v8171
        %v8173 = vpop.xlane.xlu0 %8172
        %v8174 = vadd.f32 %v8060, %v8061
        %v8175 = vadd.f32 %v8174, %v8062
        %8176 = vadd.xlane.f32.xlu0 %v8175
        %v8177 = vpop.xlane.xlu0 %8176
        %v8178 = vadd.f32 %v8063, %v8064
        %v8179 = vadd.f32 %v8178, %v8065
        %8180 = vadd.xlane.f32.xlu0 %v8179
        %v8181 = vpop.xlane.xlu0 %8180
        %v8182 = vadd.f32 %v8066, %v8067
        %v8183 = vadd.f32 %v8182, %v8068
        %8184 = vadd.xlane.f32.xlu0 %v8183
        %v8185 = vpop.xlane.xlu0 %8184
        %v8186 = vadd.f32 %v8069, %v8070
        %v8187 = vadd.f32 %v8186, %v8071
        %8188 = vadd.xlane.f32.xlu0 %v8187
        %v8189 = vpop.xlane.xlu0 %8188
        %v8190 = vadd.f32 %v8072, %v8073
        %v8191 = vadd.f32 %v8190, %v8074
        %8192 = vadd.xlane.f32.xlu0 %v8191
        %v8193 = vpop.xlane.xlu0 %8192
        %v8194 = vadd.f32 %v8075, %v8076
        %v8195 = vadd.f32 %v8194, %v8077
        %8196 = vadd.xlane.f32.xlu0 %v8195
        %v8197 = vpop.xlane.xlu0 %8196
        %v8198 = vadd.f32 %v8078, %v8079
        %v8199 = vadd.f32 %v8198, %v8080
        %8200 = vadd.xlane.f32.xlu0 %v8199
        %v8201 = vpop.xlane.xlu0 %8200
        %v8202 = vadd.f32 %v8081, %v8082
        %v8203 = vadd.f32 %v8202, %v8083
        %8204 = vadd.xlane.f32.xlu0 %v8203
        %v8205 = vpop.xlane.xlu0 %8204
        %v8206 = vadd.f32 %v8084, %v8085
        %v8207 = vadd.f32 %v8206, %v8086
        %8208 = vadd.xlane.f32.xlu0 %v8207
        %v8209 = vpop.xlane.xlu0 %8208
        %v8210 = vadd.f32 %v8087, %v8088
        %v8211 = vadd.f32 %v8210, %v8089
        %8212 = vadd.xlane.f32.xlu0 %v8211
        %v8213 = vpop.xlane.xlu0 %8212
        %v8214 = vadd.f32 %v8090, %v8091
        %v8215 = vadd.f32 %v8214, %v8092
        %8216 = vadd.xlane.f32.xlu0 %v8215
        %v8217 = vpop.xlane.xlu0 %8216
        %v8218 = vadd.f32 %v8093, %v8094
        %v8219 = vadd.f32 %v8218, %v8095
        %8220 = vadd.xlane.f32.xlu0 %v8219
        %v8221 = vpop.xlane.xlu0 %8220
        %v8222 = vadd.f32 %v8096, %v8097
        %v8223 = vadd.f32 %v8222, %v8098
        %8224 = vadd.xlane.f32.xlu0 %v8223
        %v8225 = vpop.xlane.xlu0 %8224
        %v8226 = vadd.f32 %v8099, %v8100
        %v8227 = vadd.f32 %v8226, %v8101
        %8228 = vadd.xlane.f32.xlu0 %v8227
        %v8229 = vpop.xlane.xlu0 %8228
        %v8230 = vadd.f32 %v7766, %v8105
        %v8231 = vadd.f32 %v7770, %v8109
        %v8232 = vadd.f32 %v7774, %v8113
        %v8233 = vadd.f32 %v7778, %v8117
        %v8234 = vadd.f32 %v7782, %v8121
        %v8235 = vadd.f32 %v7786, %v8125
        %v8236 = vadd.f32 %v7790, %v8129
        %v8237 = vadd.f32 %v7794, %v8133
        %v8238 = vadd.f32 %v7798, %v8137
        %v8239 = vadd.f32 %v7802, %v8141
        %v8240 = vadd.f32 %v7806, %v8145
        %v8241 = vadd.f32 %v7810, %v8149
        %v8242 = vadd.f32 %v7814, %v8153
        %v8243 = vadd.f32 %v7818, %v8157
        %v8244 = vadd.f32 %v7822, %v8161
        %v8245 = vadd.f32 %v7826, %v8165
        %v8246 = vadd.f32 %v7830, %v8169
        %v8247 = vadd.f32 %v7834, %v8173
        %v8248 = vadd.f32 %v7838, %v8177
        %v8249 = vadd.f32 %v7842, %v8181
        %v8250 = vadd.f32 %v7846, %v8185
        %v8251 = vadd.f32 %v7850, %v8189
        %v8252 = vadd.f32 %v7854, %v8193
        %v8253 = vadd.f32 %v7858, %v8197
        %v8254 = vadd.f32 %v7862, %v8201
        %v8255 = vadd.f32 %v7866, %v8205
        %v8256 = vadd.f32 %v7870, %v8209
        %v8257 = vadd.f32 %v7874, %v8213
        %v8258 = vadd.f32 %v7878, %v8217
        %v8259 = vadd.f32 %v7882, %v8221
        %v8260 = vadd.f32 %v7886, %v8225
        %v8261 = vadd.f32 %v7890, %v8229
        %s8262 = scalar_lea.vmem [#allocation6], 96
        %v8263 = vld [vmem:[%s8262] sm:$0xff]
        %v8264 = vld [vmem:[%s8262 + $0x8] sm:$0xff]
        %v8265 = vld [vmem:[%s8262 + $0x10] sm:$0xff]
        %v8266 = vld [vmem:[%s8262 + $0x18] sm:$0xff]
        %v8267 = vld [vmem:[%s8262 + $0x20] sm:$0xff]
        %v8268 = vld [vmem:[%s8262 + $0x28] sm:$0xff]
        %v8269 = vld [vmem:[%s8262 + $0x30] sm:$0xff]
        %v8270 = vld [vmem:[%s8262 + $0x38] sm:$0xff]
        %v8271 = vld [vmem:[%s8262 + $0x40] sm:$0xff]
        %v8272 = vld [vmem:[%s8262 + $0x48] sm:$0xff]
        %v8273 = vld [vmem:[%s8262 + $0x50] sm:$0xff]
        %v8274 = vld [vmem:[%s8262 + $0x58] sm:$0xff]
        %v8275 = vld [vmem:[%s8262 + $0x60] sm:$0xff]
        %v8276 = vld [vmem:[%s8262 + $0x68] sm:$0xff]
        %v8277 = vld [vmem:[%s8262 + $0x70] sm:$0xff]
        %v8278 = vld [vmem:[%s8262 + $0x78] sm:$0xff]
        %v8279 = vld [vmem:[%s8262 + $0x80] sm:$0xff]
        %v8280 = vld [vmem:[%s8262 + $0x88] sm:$0xff]
        %v8281 = vld [vmem:[%s8262 + $0x90] sm:$0xff]
        %v8282 = vld [vmem:[%s8262 + $0x98] sm:$0xff]
        %v8283 = vld [vmem:[%s8262 + $0xa0] sm:$0xff]
        %v8284 = vld [vmem:[%s8262 + $0xa8] sm:$0xff]
        %v8285 = vld [vmem:[%s8262 + $0xb0] sm:$0xff]
        %v8286 = vld [vmem:[%s8262 + $0xb8] sm:$0xff]
        %v8287 = vld [vmem:[%s8262 + $0xc0] sm:$0xff]
        %v8288 = vld [vmem:[%s8262 + $0xc8] sm:$0xff]
        %v8289 = vld [vmem:[%s8262 + $0xd0] sm:$0xff]
        %v8290 = vld [vmem:[%s8262 + $0xd8] sm:$0xff]
        %v8291 = vld [vmem:[%s8262 + $0xe0] sm:$0xff]
        %v8292 = vld [vmem:[%s8262 + $0xe8] sm:$0xff]
        %v8293 = vld [vmem:[%s8262 + $0xf0] sm:$0xff]
        %v8294 = vld [vmem:[%s8262 + $0xf8] sm:$0xff]
        %v8295 = vld [vmem:[%s8262 + $0x100] sm:$0xff]
        %v8296 = vld [vmem:[%s8262 + $0x108] sm:$0xff]
        %v8297 = vld [vmem:[%s8262 + $0x110] sm:$0xff]
        %v8298 = vld [vmem:[%s8262 + $0x118] sm:$0xff]
        %v8299 = vld [vmem:[%s8262 + $0x120] sm:$0xff]
        %v8300 = vld [vmem:[%s8262 + $0x128] sm:$0xff]
        %v8301 = vld [vmem:[%s8262 + $0x130] sm:$0xff]
        %v8302 = vld [vmem:[%s8262 + $0x138] sm:$0xff]
        %v8303 = vld [vmem:[%s8262 + $0x140] sm:$0xff]
        %v8304 = vld [vmem:[%s8262 + $0x148] sm:$0xff]
        %v8305 = vld [vmem:[%s8262 + $0x150] sm:$0xff]
        %v8306 = vld [vmem:[%s8262 + $0x158] sm:$0xff]
        %v8307 = vld [vmem:[%s8262 + $0x160] sm:$0xff]
        %v8308 = vld [vmem:[%s8262 + $0x168] sm:$0xff]
        %v8309 = vld [vmem:[%s8262 + $0x170] sm:$0xff]
        %v8310 = vld [vmem:[%s8262 + $0x178] sm:$0xff]
        %v8311 = vld [vmem:[%s8262 + $0x180] sm:$0xff]
        %v8312 = vld [vmem:[%s8262 + $0x188] sm:$0xff]
        %v8313 = vld [vmem:[%s8262 + $0x190] sm:$0xff]
        %v8314 = vld [vmem:[%s8262 + $0x198] sm:$0xff]
        %v8315 = vld [vmem:[%s8262 + $0x1a0] sm:$0xff]
        %v8316 = vld [vmem:[%s8262 + $0x1a8] sm:$0xff]
        %v8317 = vld [vmem:[%s8262 + $0x1b0] sm:$0xff]
        %v8318 = vld [vmem:[%s8262 + $0x1b8] sm:$0xff]
        %v8319 = vld [vmem:[%s8262 + $0x1c0] sm:$0xff]
        %v8320 = vld [vmem:[%s8262 + $0x1c8] sm:$0xff]
        %v8321 = vld [vmem:[%s8262 + $0x1d0] sm:$0xff]
        %v8322 = vld [vmem:[%s8262 + $0x1d8] sm:$0xff]
        %v8323 = vld [vmem:[%s8262 + $0x1e0] sm:$0xff]
        %v8324 = vld [vmem:[%s8262 + $0x1e8] sm:$0xff]
        %v8325 = vld [vmem:[%s8262 + $0x1f0] sm:$0xff]
        %v8326 = vld [vmem:[%s8262 + $0x1f8] sm:$0xff]
        %v8327 = vld [vmem:[%s8262 + $0x200] sm:$0xff]
        %v8328 = vld [vmem:[%s8262 + $0x208] sm:$0xff]
        %v8329 = vld [vmem:[%s8262 + $0x210] sm:$0xff]
        %v8330 = vld [vmem:[%s8262 + $0x218] sm:$0xff]
        %v8331 = vld [vmem:[%s8262 + $0x220] sm:$0xff]
        %v8332 = vld [vmem:[%s8262 + $0x228] sm:$0xff]
        %v8333 = vld [vmem:[%s8262 + $0x230] sm:$0xff]
        %v8334 = vld [vmem:[%s8262 + $0x238] sm:$0xff]
        %v8335 = vld [vmem:[%s8262 + $0x240] sm:$0xff]
        %v8336 = vld [vmem:[%s8262 + $0x248] sm:$0xff]
        %v8337 = vld [vmem:[%s8262 + $0x250] sm:$0xff]
        %v8338 = vld [vmem:[%s8262 + $0x258] sm:$0xff]
        %v8339 = vld [vmem:[%s8262 + $0x260] sm:$0xff]
        %v8340 = vld [vmem:[%s8262 + $0x268] sm:$0xff]
        %v8341 = vld [vmem:[%s8262 + $0x270] sm:$0xff]
        %v8342 = vld [vmem:[%s8262 + $0x278] sm:$0xff]
        %v8343 = vld [vmem:[%s8262 + $0x280] sm:$0xff]
        %v8344 = vld [vmem:[%s8262 + $0x288] sm:$0xff]
        %v8345 = vld [vmem:[%s8262 + $0x290] sm:$0xff]
        %v8346 = vld [vmem:[%s8262 + $0x298] sm:$0xff]
        %v8347 = vld [vmem:[%s8262 + $0x2a0] sm:$0xff]
        %v8348 = vld [vmem:[%s8262 + $0x2a8] sm:$0xff]
        %v8349 = vld [vmem:[%s8262 + $0x2b0] sm:$0xff]
        %v8350 = vld [vmem:[%s8262 + $0x2b8] sm:$0xff]
        %v8351 = vld [vmem:[%s8262 + $0x2c0] sm:$0xff]
        %v8352 = vld [vmem:[%s8262 + $0x2c8] sm:$0xff]
        %v8353 = vld [vmem:[%s8262 + $0x2d0] sm:$0xff]
        %v8354 = vld [vmem:[%s8262 + $0x2d8] sm:$0xff]
        %v8355 = vld [vmem:[%s8262 + $0x2e0] sm:$0xff]
        %v8356 = vld [vmem:[%s8262 + $0x2e8] sm:$0xff]
        %v8357 = vld [vmem:[%s8262 + $0x2f0] sm:$0xff]
        %v8358 = vld [vmem:[%s8262 + $0x2f8] sm:$0xff]
        %s8359 = scalar_lea.vmem %s4, 2
        %v8360 = vld [vmem:[%s8359] ss:$4 sm:$0x7]
        %v8362 = vlaneseq
        %v8363 = vshrl.u32 %v8362, 7
        %v8364 = vsub.s32 0, %v8363
        %v8365 = vrot.slane %v8360, %v8364
        %v8366 = vlaneseq
        %v8367 = vshrl.u32 %v8366, 7
        %v8368 = vsub.s32 1, %v8367
        %v8369 = vrot.slane %v8360, %v8368
        %v8370 = vlaneseq
        %v8371 = vshrl.u32 %v8370, 7
        %v8372 = vsub.s32 2, %v8371
        %v8373 = vrot.slane %v8360, %v8372
        %v8377 = vmul.f32 %v8263, %v8365
        %v8378 = vmul.f32 %v8264, %v8369
        %v8379 = vmul.f32 %v8265, %v8373
        %v8380 = vmul.f32 %v8266, %v8365
        %v8381 = vmul.f32 %v8267, %v8369
        %v8382 = vmul.f32 %v8268, %v8373
        %v8383 = vmul.f32 %v8269, %v8365
        %v8384 = vmul.f32 %v8270, %v8369
        %v8385 = vmul.f32 %v8271, %v8373
        %v8386 = vmul.f32 %v8272, %v8365
        %v8387 = vmul.f32 %v8273, %v8369
        %v8388 = vmul.f32 %v8274, %v8373
        %v8389 = vmul.f32 %v8275, %v8365
        %v8390 = vmul.f32 %v8276, %v8369
        %v8391 = vmul.f32 %v8277, %v8373
        %v8392 = vmul.f32 %v8278, %v8365
        %v8393 = vmul.f32 %v8279, %v8369
        %v8394 = vmul.f32 %v8280, %v8373
        %v8395 = vmul.f32 %v8281, %v8365
        %v8396 = vmul.f32 %v8282, %v8369
        %v8397 = vmul.f32 %v8283, %v8373
        %v8398 = vmul.f32 %v8284, %v8365
        %v8399 = vmul.f32 %v8285, %v8369
        %v8400 = vmul.f32 %v8286, %v8373
        %v8401 = vmul.f32 %v8287, %v8365
        %v8402 = vmul.f32 %v8288, %v8369
        %v8403 = vmul.f32 %v8289, %v8373
        %v8404 = vmul.f32 %v8290, %v8365
        %v8405 = vmul.f32 %v8291, %v8369
        %v8406 = vmul.f32 %v8292, %v8373
        %v8407 = vmul.f32 %v8293, %v8365
        %v8408 = vmul.f32 %v8294, %v8369
        %v8409 = vmul.f32 %v8295, %v8373
        %v8410 = vmul.f32 %v8296, %v8365
        %v8411 = vmul.f32 %v8297, %v8369
        %v8412 = vmul.f32 %v8298, %v8373
        %v8413 = vmul.f32 %v8299, %v8365
        %v8414 = vmul.f32 %v8300, %v8369
        %v8415 = vmul.f32 %v8301, %v8373
        %v8416 = vmul.f32 %v8302, %v8365
        %v8417 = vmul.f32 %v8303, %v8369
        %v8418 = vmul.f32 %v8304, %v8373
        %v8419 = vmul.f32 %v8305, %v8365
        %v8420 = vmul.f32 %v8306, %v8369
        %v8421 = vmul.f32 %v8307, %v8373
        %v8422 = vmul.f32 %v8308, %v8365
        %v8423 = vmul.f32 %v8309, %v8369
        %v8424 = vmul.f32 %v8310, %v8373
        %v8425 = vmul.f32 %v8311, %v8365
        %v8426 = vmul.f32 %v8312, %v8369
        %v8427 = vmul.f32 %v8313, %v8373
        %v8428 = vmul.f32 %v8314, %v8365
        %v8429 = vmul.f32 %v8315, %v8369
        %v8430 = vmul.f32 %v8316, %v8373
        %v8431 = vmul.f32 %v8317, %v8365
        %v8432 = vmul.f32 %v8318, %v8369
        %v8433 = vmul.f32 %v8319, %v8373
        %v8434 = vmul.f32 %v8320, %v8365
        %v8435 = vmul.f32 %v8321, %v8369
        %v8436 = vmul.f32 %v8322, %v8373
        %v8437 = vmul.f32 %v8323, %v8365
        %v8438 = vmul.f32 %v8324, %v8369
        %v8439 = vmul.f32 %v8325, %v8373
        %v8440 = vmul.f32 %v8326, %v8365
        %v8441 = vmul.f32 %v8327, %v8369
        %v8442 = vmul.f32 %v8328, %v8373
        %v8443 = vmul.f32 %v8329, %v8365
        %v8444 = vmul.f32 %v8330, %v8369
        %v8445 = vmul.f32 %v8331, %v8373
        %v8446 = vmul.f32 %v8332, %v8365
        %v8447 = vmul.f32 %v8333, %v8369
        %v8448 = vmul.f32 %v8334, %v8373
        %v8449 = vmul.f32 %v8335, %v8365
        %v8450 = vmul.f32 %v8336, %v8369
        %v8451 = vmul.f32 %v8337, %v8373
        %v8452 = vmul.f32 %v8338, %v8365
        %v8453 = vmul.f32 %v8339, %v8369
        %v8454 = vmul.f32 %v8340, %v8373
        %v8455 = vmul.f32 %v8341, %v8365
        %v8456 = vmul.f32 %v8342, %v8369
        %v8457 = vmul.f32 %v8343, %v8373
        %v8458 = vmul.f32 %v8344, %v8365
        %v8459 = vmul.f32 %v8345, %v8369
        %v8460 = vmul.f32 %v8346, %v8373
        %v8461 = vmul.f32 %v8347, %v8365
        %v8462 = vmul.f32 %v8348, %v8369
        %v8463 = vmul.f32 %v8349, %v8373
        %v8464 = vmul.f32 %v8350, %v8365
        %v8465 = vmul.f32 %v8351, %v8369
        %v8466 = vmul.f32 %v8352, %v8373
        %v8467 = vmul.f32 %v8353, %v8365
        %v8468 = vmul.f32 %v8354, %v8369
        %v8469 = vmul.f32 %v8355, %v8373
        %v8470 = vmul.f32 %v8356, %v8365
        %v8471 = vmul.f32 %v8357, %v8369
        %v8472 = vmul.f32 %v8358, %v8373
        %v8473 = vadd.f32 %v8377, %v8378
        %v8474 = vadd.f32 %v8473, %v8379
        %8475 = vadd.xlane.f32.xlu0 %v8474
        %v8476 = vpop.xlane.xlu0 %8475
        %v8477 = vadd.f32 %v8380, %v8381
        %v8478 = vadd.f32 %v8477, %v8382
        %8479 = vadd.xlane.f32.xlu0 %v8478
        %v8480 = vpop.xlane.xlu0 %8479
        %v8481 = vadd.f32 %v8383, %v8384
        %v8482 = vadd.f32 %v8481, %v8385
        %8483 = vadd.xlane.f32.xlu0 %v8482
        %v8484 = vpop.xlane.xlu0 %8483
        %v8485 = vadd.f32 %v8386, %v8387
        %v8486 = vadd.f32 %v8485, %v8388
        %8487 = vadd.xlane.f32.xlu0 %v8486
        %v8488 = vpop.xlane.xlu0 %8487
        %v8489 = vadd.f32 %v8389, %v8390
        %v8490 = vadd.f32 %v8489, %v8391
        %8491 = vadd.xlane.f32.xlu0 %v8490
        %v8492 = vpop.xlane.xlu0 %8491
        %v8493 = vadd.f32 %v8392, %v8393
        %v8494 = vadd.f32 %v8493, %v8394
        %8495 = vadd.xlane.f32.xlu0 %v8494
        %v8496 = vpop.xlane.xlu0 %8495
        %v8497 = vadd.f32 %v8395, %v8396
        %v8498 = vadd.f32 %v8497, %v8397
        %8499 = vadd.xlane.f32.xlu0 %v8498
        %v8500 = vpop.xlane.xlu0 %8499
        %v8501 = vadd.f32 %v8398, %v8399
        %v8502 = vadd.f32 %v8501, %v8400
        %8503 = vadd.xlane.f32.xlu0 %v8502
        %v8504 = vpop.xlane.xlu0 %8503
        %v8505 = vadd.f32 %v8401, %v8402
        %v8506 = vadd.f32 %v8505, %v8403
        %8507 = vadd.xlane.f32.xlu0 %v8506
        %v8508 = vpop.xlane.xlu0 %8507
        %v8509 = vadd.f32 %v8404, %v8405
        %v8510 = vadd.f32 %v8509, %v8406
        %8511 = vadd.xlane.f32.xlu0 %v8510
        %v8512 = vpop.xlane.xlu0 %8511
        %v8513 = vadd.f32 %v8407, %v8408
        %v8514 = vadd.f32 %v8513, %v8409
        %8515 = vadd.xlane.f32.xlu0 %v8514
        %v8516 = vpop.xlane.xlu0 %8515
        %v8517 = vadd.f32 %v8410, %v8411
        %v8518 = vadd.f32 %v8517, %v8412
        %8519 = vadd.xlane.f32.xlu0 %v8518
        %v8520 = vpop.xlane.xlu0 %8519
        %v8521 = vadd.f32 %v8413, %v8414
        %v8522 = vadd.f32 %v8521, %v8415
        %8523 = vadd.xlane.f32.xlu0 %v8522
        %v8524 = vpop.xlane.xlu0 %8523
        %v8525 = vadd.f32 %v8416, %v8417
        %v8526 = vadd.f32 %v8525, %v8418
        %8527 = vadd.xlane.f32.xlu0 %v8526
        %v8528 = vpop.xlane.xlu0 %8527
        %v8529 = vadd.f32 %v8419, %v8420
        %v8530 = vadd.f32 %v8529, %v8421
        %8531 = vadd.xlane.f32.xlu0 %v8530
        %v8532 = vpop.xlane.xlu0 %8531
        %v8533 = vadd.f32 %v8422, %v8423
        %v8534 = vadd.f32 %v8533, %v8424
        %8535 = vadd.xlane.f32.xlu0 %v8534
        %v8536 = vpop.xlane.xlu0 %8535
        %v8537 = vadd.f32 %v8425, %v8426
        %v8538 = vadd.f32 %v8537, %v8427
        %8539 = vadd.xlane.f32.xlu0 %v8538
        %v8540 = vpop.xlane.xlu0 %8539
        %v8541 = vadd.f32 %v8428, %v8429
        %v8542 = vadd.f32 %v8541, %v8430
        %8543 = vadd.xlane.f32.xlu0 %v8542
        %v8544 = vpop.xlane.xlu0 %8543
        %v8545 = vadd.f32 %v8431, %v8432
        %v8546 = vadd.f32 %v8545, %v8433
        %8547 = vadd.xlane.f32.xlu0 %v8546
        %v8548 = vpop.xlane.xlu0 %8547
        %v8549 = vadd.f32 %v8434, %v8435
        %v8550 = vadd.f32 %v8549, %v8436
        %8551 = vadd.xlane.f32.xlu0 %v8550
        %v8552 = vpop.xlane.xlu0 %8551
        %v8553 = vadd.f32 %v8437, %v8438
        %v8554 = vadd.f32 %v8553, %v8439
        %8555 = vadd.xlane.f32.xlu0 %v8554
        %v8556 = vpop.xlane.xlu0 %8555
        %v8557 = vadd.f32 %v8440, %v8441
        %v8558 = vadd.f32 %v8557, %v8442
        %8559 = vadd.xlane.f32.xlu0 %v8558
        %v8560 = vpop.xlane.xlu0 %8559
        %v8561 = vadd.f32 %v8443, %v8444
        %v8562 = vadd.f32 %v8561, %v8445
        %8563 = vadd.xlane.f32.xlu0 %v8562
        %v8564 = vpop.xlane.xlu0 %8563
        %v8565 = vadd.f32 %v8446, %v8447
        %v8566 = vadd.f32 %v8565, %v8448
        %8567 = vadd.xlane.f32.xlu0 %v8566
        %v8568 = vpop.xlane.xlu0 %8567
        %v8569 = vadd.f32 %v8449, %v8450
        %v8570 = vadd.f32 %v8569, %v8451
        %8571 = vadd.xlane.f32.xlu0 %v8570
        %v8572 = vpop.xlane.xlu0 %8571
        %v8573 = vadd.f32 %v8452, %v8453
        %v8574 = vadd.f32 %v8573, %v8454
        %8575 = vadd.xlane.f32.xlu0 %v8574
        %v8576 = vpop.xlane.xlu0 %8575
        %v8577 = vadd.f32 %v8455, %v8456
        %v8578 = vadd.f32 %v8577, %v8457
        %8579 = vadd.xlane.f32.xlu0 %v8578
        %v8580 = vpop.xlane.xlu0 %8579
        %v8581 = vadd.f32 %v8458, %v8459
        %v8582 = vadd.f32 %v8581, %v8460
        %8583 = vadd.xlane.f32.xlu0 %v8582
        %v8584 = vpop.xlane.xlu0 %8583
        %v8585 = vadd.f32 %v8461, %v8462
        %v8586 = vadd.f32 %v8585, %v8463
        %8587 = vadd.xlane.f32.xlu0 %v8586
        %v8588 = vpop.xlane.xlu0 %8587
        %v8589 = vadd.f32 %v8464, %v8465
        %v8590 = vadd.f32 %v8589, %v8466
        %8591 = vadd.xlane.f32.xlu0 %v8590
        %v8592 = vpop.xlane.xlu0 %8591
        %v8593 = vadd.f32 %v8467, %v8468
        %v8594 = vadd.f32 %v8593, %v8469
        %8595 = vadd.xlane.f32.xlu0 %v8594
        %v8596 = vpop.xlane.xlu0 %8595
        %v8597 = vadd.f32 %v8470, %v8471
        %v8598 = vadd.f32 %v8597, %v8472
        %8599 = vadd.xlane.f32.xlu0 %v8598
        %v8600 = vpop.xlane.xlu0 %8599
        %v8601 = vadd.f32 %v8230, %v8476
        %v8602 = vadd.f32 %v8231, %v8480
        %v8603 = vadd.f32 %v8232, %v8484
        %v8604 = vadd.f32 %v8233, %v8488
        %v8605 = vadd.f32 %v8234, %v8492
        %v8606 = vadd.f32 %v8235, %v8496
        %v8607 = vadd.f32 %v8236, %v8500
        %v8608 = vadd.f32 %v8237, %v8504
        %v8609 = vadd.f32 %v8238, %v8508
        %v8610 = vadd.f32 %v8239, %v8512
        %v8611 = vadd.f32 %v8240, %v8516
        %v8612 = vadd.f32 %v8241, %v8520
        %v8613 = vadd.f32 %v8242, %v8524
        %v8614 = vadd.f32 %v8243, %v8528
        %v8615 = vadd.f32 %v8244, %v8532
        %v8616 = vadd.f32 %v8245, %v8536
        %v8617 = vadd.f32 %v8246, %v8540
        %v8618 = vadd.f32 %v8247, %v8544
        %v8619 = vadd.f32 %v8248, %v8548
        %v8620 = vadd.f32 %v8249, %v8552
        %v8621 = vadd.f32 %v8250, %v8556
        %v8622 = vadd.f32 %v8251, %v8560
        %v8623 = vadd.f32 %v8252, %v8564
        %v8624 = vadd.f32 %v8253, %v8568
        %v8625 = vadd.f32 %v8254, %v8572
        %v8626 = vadd.f32 %v8255, %v8576
        %v8627 = vadd.f32 %v8256, %v8580
        %v8628 = vadd.f32 %v8257, %v8584
        %v8629 = vadd.f32 %v8258, %v8588
        %v8630 = vadd.f32 %v8259, %v8592
        %v8631 = vadd.f32 %v8260, %v8596
        %v8632 = vadd.f32 %v8261, %v8600
        %v8633 = vld [vmem:[%s252] sm:$0xff]
        %v8634 = vld [vmem:[%s252 + $0x8] sm:$0xff]
        %v8637 = vlaneseq
        %v8638 = vshrl.u32 %v8637, 7
        %v8639 = vsub.s32 0, %v8638
        %v8640 = vrot.slane %v8633, %v8639
        %8642 = vbcast.lane.b32.xlu0 %v8640, 256
        %v8643 = vpop.permute.xlu0 %8642
        %s8645 = sor.u32 256, 8
        %8646 = vbcast.lane.b32.xlu0 %v8640, %s8645
        %v8647 = vpop.permute.xlu0 %8646
        %v8648 = vlaneseq
        %v8649 = vshrl.u32 %v8648, 7
        %v8650 = vsub.s32 1, %v8649
        %v8651 = vrot.slane %v8633, %v8650
        %8653 = vbcast.lane.b32.xlu0 %v8651, 256
        %v8654 = vpop.permute.xlu0 %8653
        %s8656 = sor.u32 256, 8
        %8657 = vbcast.lane.b32.xlu0 %v8651, %s8656
        %v8658 = vpop.permute.xlu0 %8657
        %v8659 = vlaneseq
        %v8660 = vshrl.u32 %v8659, 7
        %v8661 = vsub.s32 2, %v8660
        %v8662 = vrot.slane %v8633, %v8661
        %8664 = vbcast.lane.b32.xlu0 %v8662, 256
        %v8665 = vpop.permute.xlu0 %8664
        %s8667 = sor.u32 256, 8
        %8668 = vbcast.lane.b32.xlu0 %v8662, %s8667
        %v8669 = vpop.permute.xlu0 %8668
        %v8670 = vlaneseq
        %v8671 = vshrl.u32 %v8670, 7
        %v8672 = vsub.s32 3, %v8671
        %v8673 = vrot.slane %v8633, %v8672
        %8675 = vbcast.lane.b32.xlu0 %v8673, 256
        %v8676 = vpop.permute.xlu0 %8675
        %s8678 = sor.u32 256, 8
        %8679 = vbcast.lane.b32.xlu0 %v8673, %s8678
        %v8680 = vpop.permute.xlu0 %8679
        %v8681 = vlaneseq
        %v8682 = vshrl.u32 %v8681, 7
        %v8683 = vsub.s32 4, %v8682
        %v8684 = vrot.slane %v8633, %v8683
        %8686 = vbcast.lane.b32.xlu0 %v8684, 256
        %v8687 = vpop.permute.xlu0 %8686
        %s8689 = sor.u32 256, 8
        %8690 = vbcast.lane.b32.xlu0 %v8684, %s8689
        %v8691 = vpop.permute.xlu0 %8690
        %v8692 = vlaneseq
        %v8693 = vshrl.u32 %v8692, 7
        %v8694 = vsub.s32 5, %v8693
        %v8695 = vrot.slane %v8633, %v8694
        %8697 = vbcast.lane.b32.xlu0 %v8695, 256
        %v8698 = vpop.permute.xlu0 %8697
        %s8700 = sor.u32 256, 8
        %8701 = vbcast.lane.b32.xlu0 %v8695, %s8700
        %v8702 = vpop.permute.xlu0 %8701
        %v8703 = vlaneseq
        %v8704 = vshrl.u32 %v8703, 7
        %v8705 = vsub.s32 6, %v8704
        %v8706 = vrot.slane %v8633, %v8705
        %8708 = vbcast.lane.b32.xlu0 %v8706, 256
        %v8709 = vpop.permute.xlu0 %8708
        %s8711 = sor.u32 256, 8
        %8712 = vbcast.lane.b32.xlu0 %v8706, %s8711
        %v8713 = vpop.permute.xlu0 %8712
        %v8714 = vlaneseq
        %v8715 = vshrl.u32 %v8714, 7
        %v8716 = vsub.s32 7, %v8715
        %v8717 = vrot.slane %v8633, %v8716
        %8719 = vbcast.lane.b32.xlu0 %v8717, 256
        %v8720 = vpop.permute.xlu0 %8719
        %s8722 = sor.u32 256, 8
        %8723 = vbcast.lane.b32.xlu0 %v8717, %s8722
        %v8724 = vpop.permute.xlu0 %8723
        %v8725 = vlaneseq
        %v8726 = vshrl.u32 %v8725, 7
        %v8727 = vsub.s32 0, %v8726
        %v8728 = vrot.slane %v8634, %v8727
        %8730 = vbcast.lane.b32.xlu0 %v8728, 256
        %v8731 = vpop.permute.xlu0 %8730
        %s8733 = sor.u32 256, 8
        %8734 = vbcast.lane.b32.xlu0 %v8728, %s8733
        %v8735 = vpop.permute.xlu0 %8734
        %v8736 = vlaneseq
        %v8737 = vshrl.u32 %v8736, 7
        %v8738 = vsub.s32 1, %v8737
        %v8739 = vrot.slane %v8634, %v8738
        %8741 = vbcast.lane.b32.xlu0 %v8739, 256
        %v8742 = vpop.permute.xlu0 %8741
        %s8744 = sor.u32 256, 8
        %8745 = vbcast.lane.b32.xlu0 %v8739, %s8744
        %v8746 = vpop.permute.xlu0 %8745
        %v8747 = vlaneseq
        %v8748 = vshrl.u32 %v8747, 7
        %v8749 = vsub.s32 2, %v8748
        %v8750 = vrot.slane %v8634, %v8749
        %8752 = vbcast.lane.b32.xlu0 %v8750, 256
        %v8753 = vpop.permute.xlu0 %8752
        %s8755 = sor.u32 256, 8
        %8756 = vbcast.lane.b32.xlu0 %v8750, %s8755
        %v8757 = vpop.permute.xlu0 %8756
        %v8758 = vlaneseq
        %v8759 = vshrl.u32 %v8758, 7
        %v8760 = vsub.s32 3, %v8759
        %v8761 = vrot.slane %v8634, %v8760
        %8763 = vbcast.lane.b32.xlu0 %v8761, 256
        %v8764 = vpop.permute.xlu0 %8763
        %s8766 = sor.u32 256, 8
        %8767 = vbcast.lane.b32.xlu0 %v8761, %s8766
        %v8768 = vpop.permute.xlu0 %8767
        %v8769 = vlaneseq
        %v8770 = vshrl.u32 %v8769, 7
        %v8771 = vsub.s32 4, %v8770
        %v8772 = vrot.slane %v8634, %v8771
        %8774 = vbcast.lane.b32.xlu0 %v8772, 256
        %v8775 = vpop.permute.xlu0 %8774
        %s8777 = sor.u32 256, 8
        %8778 = vbcast.lane.b32.xlu0 %v8772, %s8777
        %v8779 = vpop.permute.xlu0 %8778
        %v8780 = vlaneseq
        %v8781 = vshrl.u32 %v8780, 7
        %v8782 = vsub.s32 5, %v8781
        %v8783 = vrot.slane %v8634, %v8782
        %8785 = vbcast.lane.b32.xlu0 %v8783, 256
        %v8786 = vpop.permute.xlu0 %8785
        %s8788 = sor.u32 256, 8
        %8789 = vbcast.lane.b32.xlu0 %v8783, %s8788
        %v8790 = vpop.permute.xlu0 %8789
        %v8791 = vlaneseq
        %v8792 = vshrl.u32 %v8791, 7
        %v8793 = vsub.s32 6, %v8792
        %v8794 = vrot.slane %v8634, %v8793
        %8796 = vbcast.lane.b32.xlu0 %v8794, 256
        %v8797 = vpop.permute.xlu0 %8796
        %s8799 = sor.u32 256, 8
        %8800 = vbcast.lane.b32.xlu0 %v8794, %s8799
        %v8801 = vpop.permute.xlu0 %8800
        %v8802 = vlaneseq
        %v8803 = vshrl.u32 %v8802, 7
        %v8804 = vsub.s32 7, %v8803
        %v8805 = vrot.slane %v8634, %v8804
        %8807 = vbcast.lane.b32.xlu0 %v8805, 256
        %v8808 = vpop.permute.xlu0 %8807
        %s8810 = sor.u32 256, 8
        %8811 = vbcast.lane.b32.xlu0 %v8805, %s8810
        %v8812 = vpop.permute.xlu0 %8811
        %v8845 = vadd.f32 %v8601, %v8643
        %v8846 = vadd.f32 %v8602, %v8647
        %v8847 = vadd.f32 %v8603, %v8654
        %v8848 = vadd.f32 %v8604, %v8658
        %v8849 = vadd.f32 %v8605, %v8665
        %v8850 = vadd.f32 %v8606, %v8669
        %v8851 = vadd.f32 %v8607, %v8676
        %v8852 = vadd.f32 %v8608, %v8680
        %v8853 = vadd.f32 %v8609, %v8687
        %v8854 = vadd.f32 %v8610, %v8691
        %v8855 = vadd.f32 %v8611, %v8698
        %v8856 = vadd.f32 %v8612, %v8702
        %v8857 = vadd.f32 %v8613, %v8709
        %v8858 = vadd.f32 %v8614, %v8713
        %v8859 = vadd.f32 %v8615, %v8720
        %v8860 = vadd.f32 %v8616, %v8724
        %v8861 = vadd.f32 %v8617, %v8731
        %v8862 = vadd.f32 %v8618, %v8735
        %v8863 = vadd.f32 %v8619, %v8742
        %v8864 = vadd.f32 %v8620, %v8746
        %v8865 = vadd.f32 %v8621, %v8753
        %v8866 = vadd.f32 %v8622, %v8757
        %v8867 = vadd.f32 %v8623, %v8764
        %v8868 = vadd.f32 %v8624, %v8768
        %v8869 = vadd.f32 %v8625, %v8775
        %v8870 = vadd.f32 %v8626, %v8779
        %v8871 = vadd.f32 %v8627, %v8786
        %v8872 = vadd.f32 %v8628, %v8790
        %v8873 = vadd.f32 %v8629, %v8797
        %v8874 = vadd.f32 %v8630, %v8801
        %v8875 = vadd.f32 %v8631, %v8808
        %v8876 = vadd.f32 %v8632, %v8812
        %8909 = vset.pattern.permute.xlu0 0
        %8910 = vperm.xlu0 %8909, %v8845
        %v8911 = vpop.permute.xlu0 %8910
        %8912 = vset.pattern.permute.xlu0 0
        %8913 = vperm.xlu0 %8912, %v8846
        %v8914 = vpop.permute.xlu0 %8913
        %8915 = vset.pattern.permute.xlu0 0
        %8916 = vperm.xlu0 %8915, %v8847
        %v8917 = vpop.permute.xlu0 %8916
        %8918 = vset.pattern.permute.xlu0 0
        %8919 = vperm.xlu0 %8918, %v8848
        %v8920 = vpop.permute.xlu0 %8919
        %8921 = vset.pattern.permute.xlu0 0
        %8922 = vperm.xlu0 %8921, %v8849
        %v8923 = vpop.permute.xlu0 %8922
        %8924 = vset.pattern.permute.xlu0 0
        %8925 = vperm.xlu0 %8924, %v8850
        %v8926 = vpop.permute.xlu0 %8925
        %8927 = vset.pattern.permute.xlu0 0
        %8928 = vperm.xlu0 %8927, %v8851
        %v8929 = vpop.permute.xlu0 %8928
        %8930 = vset.pattern.permute.xlu0 0
        %8931 = vperm.xlu0 %8930, %v8852
        %v8932 = vpop.permute.xlu0 %8931
        %8933 = vset.pattern.permute.xlu0 0
        %8934 = vperm.xlu0 %8933, %v8853
        %v8935 = vpop.permute.xlu0 %8934
        %8936 = vset.pattern.permute.xlu0 0
        %8937 = vperm.xlu0 %8936, %v8854
        %v8938 = vpop.permute.xlu0 %8937
        %8939 = vset.pattern.permute.xlu0 0
        %8940 = vperm.xlu0 %8939, %v8855
        %v8941 = vpop.permute.xlu0 %8940
        %8942 = vset.pattern.permute.xlu0 0
        %8943 = vperm.xlu0 %8942, %v8856
        %v8944 = vpop.permute.xlu0 %8943
        %8945 = vset.pattern.permute.xlu0 0
        %8946 = vperm.xlu0 %8945, %v8857
        %v8947 = vpop.permute.xlu0 %8946
        %8948 = vset.pattern.permute.xlu0 0
        %8949 = vperm.xlu0 %8948, %v8858
        %v8950 = vpop.permute.xlu0 %8949
        %8951 = vset.pattern.permute.xlu0 0
        %8952 = vperm.xlu0 %8951, %v8859
        %v8953 = vpop.permute.xlu0 %8952
        %8954 = vset.pattern.permute.xlu0 0
        %8955 = vperm.xlu0 %8954, %v8860
        %v8956 = vpop.permute.xlu0 %8955
        %8957 = vset.pattern.permute.xlu0 0
        %8958 = vperm.xlu0 %8957, %v8861
        %v8959 = vpop.permute.xlu0 %8958
        %8960 = vset.pattern.permute.xlu0 0
        %8961 = vperm.xlu0 %8960, %v8862
        %v8962 = vpop.permute.xlu0 %8961
        %8963 = vset.pattern.permute.xlu0 0
        %8964 = vperm.xlu0 %8963, %v8863
        %v8965 = vpop.permute.xlu0 %8964
        %8966 = vset.pattern.permute.xlu0 0
        %8967 = vperm.xlu0 %8966, %v8864
        %v8968 = vpop.permute.xlu0 %8967
        %8969 = vset.pattern.permute.xlu0 0
        %8970 = vperm.xlu0 %8969, %v8865
        %v8971 = vpop.permute.xlu0 %8970
        %8972 = vset.pattern.permute.xlu0 0
        %8973 = vperm.xlu0 %8972, %v8866
        %v8974 = vpop.permute.xlu0 %8973
        %8975 = vset.pattern.permute.xlu0 0
        %8976 = vperm.xlu0 %8975, %v8867
        %v8977 = vpop.permute.xlu0 %8976
        %8978 = vset.pattern.permute.xlu0 0
        %8979 = vperm.xlu0 %8978, %v8868
        %v8980 = vpop.permute.xlu0 %8979
        %8981 = vset.pattern.permute.xlu0 0
        %8982 = vperm.xlu0 %8981, %v8869
        %v8983 = vpop.permute.xlu0 %8982
        %8984 = vset.pattern.permute.xlu0 0
        %8985 = vperm.xlu0 %8984, %v8870
        %v8986 = vpop.permute.xlu0 %8985
        %8987 = vset.pattern.permute.xlu0 0
        %8988 = vperm.xlu0 %8987, %v8871
        %v8989 = vpop.permute.xlu0 %8988
        %8990 = vset.pattern.permute.xlu0 0
        %8991 = vperm.xlu0 %8990, %v8872
        %v8992 = vpop.permute.xlu0 %8991
        %8993 = vset.pattern.permute.xlu0 0
        %8994 = vperm.xlu0 %8993, %v8873
        %v8995 = vpop.permute.xlu0 %8994
        %8996 = vset.pattern.permute.xlu0 0
        %8997 = vperm.xlu0 %8996, %v8874
        %v8998 = vpop.permute.xlu0 %8997
        %8999 = vset.pattern.permute.xlu0 0
        %9000 = vperm.xlu0 %8999, %v8875
        %v9001 = vpop.permute.xlu0 %9000
        %9002 = vset.pattern.permute.xlu0 0
        %9003 = vperm.xlu0 %9002, %v8876
        %v9004 = vpop.permute.xlu0 %9003
        %v9005 = vlaneseq
        %v9006 = vand.u32 %v9005, 127
        %v9007 = vlaneseq
        %v9008 = vshrl.u32 %v9007, 7
        %v9009 = vsub.s32 %v9006, %v9008
        %v9010 = vrot.slane %v8911, %v9009
        %v9011 = vadd.s32 %v9006, 4294967288
        %v9012 = vlaneseq
        %v9013 = vshrl.u32 %v9012, 7
        %v9014 = vsub.s32 %v9011, %v9013
        %v9015 = vrot.slane %v8914, %v9014
        %vm9016 = vcmask 130112
        %v9017 = vsel %vm9016, %v9015, %v9010
        %v9018 = vlaneseq
        %v9019 = vshrl.u32 %v9018, 7
        %v9020 = vsub.s32 %v9006, %v9019
        %v9021 = vrot.slane %v8917, %v9020
        %v9022 = vlaneseq
        %v9023 = vshrl.u32 %v9022, 7
        %v9024 = vsub.s32 %v9011, %v9023
        %v9025 = vrot.slane %v8920, %v9024
        %v9026 = vsel %vm9016, %v9025, %v9021
        %v9027 = vlaneseq
        %v9028 = vshrl.u32 %v9027, 7
        %v9029 = vsub.s32 %v9006, %v9028
        %v9030 = vrot.slane %v8923, %v9029
        %v9031 = vlaneseq
        %v9032 = vshrl.u32 %v9031, 7
        %v9033 = vsub.s32 %v9011, %v9032
        %v9034 = vrot.slane %v8926, %v9033
        %v9035 = vsel %vm9016, %v9034, %v9030
        %v9036 = vlaneseq
        %v9037 = vshrl.u32 %v9036, 7
        %v9038 = vsub.s32 %v9006, %v9037
        %v9039 = vrot.slane %v8929, %v9038
        %v9040 = vlaneseq
        %v9041 = vshrl.u32 %v9040, 7
        %v9042 = vsub.s32 %v9011, %v9041
        %v9043 = vrot.slane %v8932, %v9042
        %v9044 = vsel %vm9016, %v9043, %v9039
        %v9045 = vlaneseq
        %v9046 = vshrl.u32 %v9045, 7
        %v9047 = vsub.s32 %v9006, %v9046
        %v9048 = vrot.slane %v8935, %v9047
        %v9049 = vlaneseq
        %v9050 = vshrl.u32 %v9049, 7
        %v9051 = vsub.s32 %v9011, %v9050
        %v9052 = vrot.slane %v8938, %v9051
        %v9053 = vsel %vm9016, %v9052, %v9048
        %v9054 = vlaneseq
        %v9055 = vshrl.u32 %v9054, 7
        %v9056 = vsub.s32 %v9006, %v9055
        %v9057 = vrot.slane %v8941, %v9056
        %v9058 = vlaneseq
        %v9059 = vshrl.u32 %v9058, 7
        %v9060 = vsub.s32 %v9011, %v9059
        %v9061 = vrot.slane %v8944, %v9060
        %v9062 = vsel %vm9016, %v9061, %v9057
        %v9063 = vlaneseq
        %v9064 = vshrl.u32 %v9063, 7
        %v9065 = vsub.s32 %v9006, %v9064
        %v9066 = vrot.slane %v8947, %v9065
        %v9067 = vlaneseq
        %v9068 = vshrl.u32 %v9067, 7
        %v9069 = vsub.s32 %v9011, %v9068
        %v9070 = vrot.slane %v8950, %v9069
        %v9071 = vsel %vm9016, %v9070, %v9066
        %v9072 = vlaneseq
        %v9073 = vshrl.u32 %v9072, 7
        %v9074 = vsub.s32 %v9006, %v9073
        %v9075 = vrot.slane %v8953, %v9074
        %v9076 = vlaneseq
        %v9077 = vshrl.u32 %v9076, 7
        %v9078 = vsub.s32 %v9011, %v9077
        %v9079 = vrot.slane %v8956, %v9078
        %v9080 = vsel %vm9016, %v9079, %v9075
        %v9081 = vlaneseq
        %v9082 = vshrl.u32 %v9081, 7
        %v9083 = vsub.s32 %v9006, %v9082
        %v9084 = vrot.slane %v8959, %v9083
        %v9085 = vlaneseq
        %v9086 = vshrl.u32 %v9085, 7
        %v9087 = vsub.s32 %v9011, %v9086
        %v9088 = vrot.slane %v8962, %v9087
        %v9089 = vsel %vm9016, %v9088, %v9084
        %v9090 = vlaneseq
        %v9091 = vshrl.u32 %v9090, 7
        %v9092 = vsub.s32 %v9006, %v9091
        %v9093 = vrot.slane %v8965, %v9092
        %v9094 = vlaneseq
        %v9095 = vshrl.u32 %v9094, 7
        %v9096 = vsub.s32 %v9011, %v9095
        %v9097 = vrot.slane %v8968, %v9096
        %v9098 = vsel %vm9016, %v9097, %v9093
        %v9099 = vlaneseq
        %v9100 = vshrl.u32 %v9099, 7
        %v9101 = vsub.s32 %v9006, %v9100
        %v9102 = vrot.slane %v8971, %v9101
        %v9103 = vlaneseq
        %v9104 = vshrl.u32 %v9103, 7
        %v9105 = vsub.s32 %v9011, %v9104
        %v9106 = vrot.slane %v8974, %v9105
        %v9107 = vsel %vm9016, %v9106, %v9102
        %v9108 = vlaneseq
        %v9109 = vshrl.u32 %v9108, 7
        %v9110 = vsub.s32 %v9006, %v9109
        %v9111 = vrot.slane %v8977, %v9110
        %v9112 = vlaneseq
        %v9113 = vshrl.u32 %v9112, 7
        %v9114 = vsub.s32 %v9011, %v9113
        %v9115 = vrot.slane %v8980, %v9114
        %v9116 = vsel %vm9016, %v9115, %v9111
        %v9117 = vlaneseq
        %v9118 = vshrl.u32 %v9117, 7
        %v9119 = vsub.s32 %v9006, %v9118
        %v9120 = vrot.slane %v8983, %v9119
        %v9121 = vlaneseq
        %v9122 = vshrl.u32 %v9121, 7
        %v9123 = vsub.s32 %v9011, %v9122
        %v9124 = vrot.slane %v8986, %v9123
        %v9125 = vsel %vm9016, %v9124, %v9120
        %v9126 = vlaneseq
        %v9127 = vshrl.u32 %v9126, 7
        %v9128 = vsub.s32 %v9006, %v9127
        %v9129 = vrot.slane %v8989, %v9128
        %v9130 = vlaneseq
        %v9131 = vshrl.u32 %v9130, 7
        %v9132 = vsub.s32 %v9011, %v9131
        %v9133 = vrot.slane %v8992, %v9132
        %v9134 = vsel %vm9016, %v9133, %v9129
        %v9135 = vlaneseq
        %v9136 = vshrl.u32 %v9135, 7
        %v9137 = vsub.s32 %v9006, %v9136
        %v9138 = vrot.slane %v8995, %v9137
        %v9139 = vlaneseq
        %v9140 = vshrl.u32 %v9139, 7
        %v9141 = vsub.s32 %v9011, %v9140
        %v9142 = vrot.slane %v8998, %v9141
        %v9143 = vsel %vm9016, %v9142, %v9138
        %v9144 = vlaneseq
        %v9145 = vshrl.u32 %v9144, 7
        %v9146 = vsub.s32 %v9006, %v9145
        %v9147 = vrot.slane %v9001, %v9146
        %v9148 = vlaneseq
        %v9149 = vshrl.u32 %v9148, 7
        %v9150 = vsub.s32 %v9011, %v9149
        %v9151 = vrot.slane %v9004, %v9150
        %v9152 = vsel %vm9016, %v9151, %v9147
        %vm9153 = vcmask 1041409
        %v9154 = vsel %vm9153, %v9026, %v9017
        %vm9155 = vcmask 1042434
        %v9156 = vsel %vm9155, %v9035, %v9154
        %vm9157 = vcmask 1043459
        %v9158 = vsel %vm9157, %v9044, %v9156
        %vm9159 = vcmask 1044484
        %v9160 = vsel %vm9159, %v9053, %v9158
        %vm9161 = vcmask 1045509
        %v9162 = vsel %vm9161, %v9062, %v9160
        %vm9163 = vcmask 1046534
        %v9164 = vsel %vm9163, %v9071, %v9162
        %vm9165 = vcmask 1047559
        %v9166 = vsel %vm9165, %v9080, %v9164
        %v9167 = vsel %vm9153, %v9098, %v9089
        %v9168 = vsel %vm9155, %v9107, %v9167
        %v9169 = vsel %vm9157, %v9116, %v9168
        %v9170 = vsel %vm9159, %v9125, %v9169
        %v9171 = vsel %vm9161, %v9134, %v9170
        %v9172 = vsel %vm9163, %v9143, %v9171
        %v9173 = vsel %vm9165, %v9152, %v9172
        %vm9176 = vcmask 130048
        %9177 = vst.msk [vmem:[%s247] sm:$0xff] %vm9176, %v9166
        %9178 = vst.msk [vmem:[%s247 + $0x8] sm:$0xff] %vm9176, %v9173
        %s9179 = sand.u32 %s139, 1
        %s9180 = scalar_lea.sflag [#allocation9], %s9179
        %s9181 = sand.u32 %s139, 1
        %s9182 = smul.addr %s9181, 16
        %s9183 = scalar_lea.vmem [#allocation12], %s9182
        // Predicated region
        $region56: #{drrn_forward.1} parent=39 // pred_check
          %p9184 = pneg %p149
        $region57: #{drrn_forward.1} parent=39 // pred_check_branch
          %9186 = sbr.rel (%p9184) target = $region59
        $region58: #{drrn_forward.1} parent=39 // pred_region
          %s9188 = ssub.s32 256, 256
          %9189 = vsyncadd %s9180, %s9188
          %s9190 = smul.addr %s21, 2
          %s9191 = smul.addr %s9190, 128
          %s9192 = scalar_lea.hbm %s5, %s9191
          %s9193 = sshll.u32 %s9183, 4
          %s9194 = int_to_ptr.vmem [resolvable:$true] %s9193
          %9199 = dma.vmem_to_hbm [thread:$0]  %s9194, 256, %s9192, %s9180, 128, 128, 8
        $region59: #{drrn_forward.1} parent=39 // pred_fallthru
          _
      $region40: #{drrn_forward.1} parent=5 // pred_fallthru
        _
      %p9200 = scmp.le.s32.totalorder 2, %s16
      // Predicated region
      $region60: #{drrn_forward.1} parent=5 // pred_check
        %p9201 = pneg %p9200
      $region61: #{drrn_forward.1} parent=5 // pred_check_branch
        %9203 = sbr.rel (%p9201) target = $region63
      $region62: #{drrn_forward.1} parent=5 // pred_region
        %s9204 = ssub.s32 %s16, 2
        // Predicated region
        $region64: #{drrn_forward.1} parent=62 // pred_check
          %p9205 = pneg %p155
        $region65: #{drrn_forward.1} parent=62 // pred_check_branch
          %9207 = sbr.rel (%p9205) target = $region67
        $region66: #{drrn_forward.1} parent=62 // pred_region
          %s9208 = sand.u32 %s140, 1
          %s9209 = scalar_lea.sflag [#allocation9], %s9208
          %s9210 = sand.u32 %s140, 1
          %s9211 = smul.addr %s9210, 16
          %s9212 = scalar_lea.vmem [#allocation12], %s9211
          %9213 = dma.done %s9209, 256
        $region67: #{drrn_forward.1} parent=62 // pred_fallthru
          _
      $region63: #{drrn_forward.1} parent=5 // pred_fallthru
        _
    $region6: #{drrn_forward.1} parent=1 // loop_footer
      %s20 = sadd.s32 1, %s16
    $region7: #{drrn_forward.1} parent=1 // loop_footer_branch
      %15 = sbr.rel target = $region3
    $region8: #{drrn_forward.1} parent=1 // loop_exit
      _
    %9214 = vsyncpa [#allocation8], 1
    %s9215 = scalar_lea.sflag [#allocation8], 1
    %9216 = vsyncpa %s9215, 1
    %9217 = vsyncpa [#allocation11], 1
    %9218 = vsyncpa [#allocation9], 1
    %s9219 = scalar_lea.sflag [#allocation9], 1
    %9220 = vsyncpa %s9219, 1

</llo_original>
